<compile_context>
chip_gen: v7x
topology: tpu7x:2x2x1
jax: 0.10.0
libtpu: 0.0.40
codegen_flags: <defaults>
</compile_context>

<pallas_src>
import functools
import math

import numpy as np
import jax
import jax.numpy as jnp
from jax.experimental import pallas as pl
from jax.experimental.pallas import tpu as pltpu

NUM_HEADS = 2
NUM_LAYERS = 2
DIM_FF = 2048          # nn.TransformerEncoderLayer default dim_feedforward
LN_EPS = 1e-5          # nn.LayerNorm default eps
LANE = 128
VMEM = pltpu.MemorySpace.VMEM

N_LAYER_REFS = 16      # refs per transformer layer passed to the kernel


def _round_up(x, m):
    return (x + m - 1) // m * m


# ------------------------- fused transformer kernel -------------------------

def _transformer_kernel(*refs, bb, S, E, H, num_layers):
    """One grid step = `bb` whole sequences (bb*S rows).

    Inputs (refs): x tile (bb*S, E), then per layer
      [wq, wk, wv, bq, bk, bv, wo, bo, ln1_g, ln1_b,
       ff_w1, ff_b1, ff_w2, ff_b2, ln2_g, ln2_b],
    then attr_w (E, FA_pad), attr_b (1, FA_pad).
    Outputs: states (bb*S, E), user_emb (bb, E), attr_logits (bb, FA_pad).
    """
    x_ref = refs[0]
    layer_refs = [refs[1 + l * N_LAYER_REFS: 1 + (l + 1) * N_LAYER_REFS]
                  for l in range(num_layers)]
    base = 1 + num_layers * N_LAYER_REFS
    attr_w_ref, attr_b_ref = refs[base:base + 2]
    states_ref, user_emb_ref, attr_ref = refs[base + 2:base + 5]

    Dh = E // H
    scale = 1.0 / math.sqrt(Dh)
    R = bb * S

    def layernorm(z, g, b):
        mu = jnp.mean(z, axis=-1, keepdims=True)
        var = jnp.mean(jnp.square(z - mu), axis=-1, keepdims=True)
        return (z - mu) * jax.lax.rsqrt(var + LN_EPS) * g + b

    def mm(a, w_bf16, bias=None):
        # bf16 MXU operands, f32 accumulation; elementwise math stays f32.
        y = jnp.dot(a.astype(jnp.bfloat16), w_bf16,
                    preferred_element_type=jnp.float32)
        return y if bias is None else y + bias

    x = x_ref[...].astype(jnp.float32)                       # (R, E)

    for lp in layer_refs:
        (wq, wk, wv, bq, bk, bv, wo, bo, ln1_g, ln1_b,
         ff_w1, ff_b1, ff_w2, ff_b2, ln2_g, ln2_b) = lp

        # Multi-head self-attention. Per-head weight blocks were pre-split in
        # the wrapper, so there are no lane slices / concatenate in-kernel:
        # attn = sum_h (softmax(q_h k_h^T / sqrt(Dh)) v_h) @ Wo_h + bo.
        contribs = []
        for h in range(H):                                   # H=2, static unroll
            q = mm(x, wq[h], bq[h]).reshape(bb, S, Dh)
            k = mm(x, wk[h], bk[h]).reshape(bb, S, Dh)
            v = mm(x, wv[h], bv[h]).reshape(bb, S, Dh)
            s = jnp.einsum("bqd,bkd->bqk", q, k,
                           preferred_element_type=jnp.float32) * scale
            s = s - jnp.max(s, axis=-1, keepdims=True)
            p = jnp.exp(s)
            p = p * pl.reciprocal(jnp.sum(p, axis=-1, keepdims=True), approx=True)
            ho = jnp.einsum("bqk,bkd->bqd", p, v,
                            preferred_element_type=jnp.float32)
            contribs.append(mm(ho.reshape(R, Dh), wo[h]))
        attn = sum(contribs) + bo[...]

        # post-norm residual 1
        x = layernorm(x + attn, ln1_g[...], ln1_b[...])

        # feed-forward (ReLU)
        ff = jnp.maximum(mm(x, ff_w1[...], ff_b1[...]), 0.0)
        ff = mm(ff, ff_w2[...], ff_b2[...])

        # post-norm residual 2
        x = layernorm(x + ff, ln2_g[...], ln2_b[...])

    states_ref[...] = x.astype(states_ref.dtype)

    # user embedding: max over the sequence axis
    user_emb = jnp.max(x.reshape(bb, S, E), axis=1)          # (bb, E)
    user_emb_ref[...] = user_emb.astype(user_emb_ref.dtype)

    # all user-attr heads as one lane-dense (padded-to-128) concatenated linear
    attr_ref[...] = mm(user_emb, attr_w_ref[...], attr_b_ref[...]
                       ).astype(attr_ref.dtype)


# --------------------------- item head kernel -------------------------------

def _item_head_kernel(x_ref, w_ref, b_ref, o_ref):
    # (K_pad, E) @ (E, N_pad) + bias, lane-dense padded output.
    o_ref[...] = (jnp.dot(x_ref[...].astype(jnp.bfloat16), w_ref[...],
                          preferred_element_type=jnp.float32)
                  + b_ref[...]).astype(o_ref.dtype)


# ------------------------------- wrappers ------------------------------------

def _prep_layer_inputs(lp, E, H):
    """Split fused QKV / out-proj weights per head OUTSIDE the kernel."""
    Dh = E // H

    def split_heads(w):        # (E, E) -> (H, E, Dh)
        return jnp.transpose(w.reshape(E, H, Dh), (1, 0, 2))

    def split_bias(b):         # (1, E) -> (H, 1, Dh)
        return jnp.transpose(b.reshape(1, H, Dh), (1, 0, 2))

    in_w, in_b = lp["in_proj_w_t"], lp["in_proj_b"]
    wq = split_heads(in_w[:, :E]).astype(jnp.bfloat16)
    wk = split_heads(in_w[:, E:2 * E]).astype(jnp.bfloat16)
    wv = split_heads(in_w[:, 2 * E:]).astype(jnp.bfloat16)
    bq = split_bias(in_b[:, :E])
    bk = split_bias(in_b[:, E:2 * E])
    bv = split_bias(in_b[:, 2 * E:])
    # out-proj split per head along its input (head-concat) dim: (H, Dh, E)
    wo = lp["out_proj_w_t"].reshape(H, Dh, E).astype(jnp.bfloat16)

    return [wq, wk, wv, bq, bk, bv, wo, lp["out_proj_b"],
            lp["ln1_g"], lp["ln1_b"],
            lp["ff_w1_t"].astype(jnp.bfloat16), lp["ff_b1"],
            lp["ff_w2_t"].astype(jnp.bfloat16), lp["ff_b2"],
            lp["ln2_g"], lp["ln2_b"]]


def transformer_forward(params, x2d, B, S):
    E = x2d.shape[1]
    F, A = params["attr_w_cat"].shape[1], params["attr_w_cat"].shape[2]
    FA = F * A
    FA_pad = _round_up(FA, LANE)
    attr_w = jnp.pad(params["attr_w_cat"].reshape(E, FA),
                     ((0, 0), (0, FA_pad - FA))).astype(jnp.bfloat16)
    attr_b = jnp.pad(params["attr_b_cat"].reshape(1, FA),
                     ((0, 0), (0, FA_pad - FA)))

    # Batch-tile grid over whole sequences ('parallel' -> both v7x TensorCores
    # at scale). At toy sizes this is a single grid step.
    rows_target = 128
    bb = B if B * S <= rows_target else max(1, rows_target // S)
    while B % bb:
        bb -= 1
    nbt = B // bb
    R = bb * S
    # TODO(synk): at production sizes pad B so bb is a multiple of 8 and add a
    # flash-style KV loop if S grows beyond ~128.

    inputs = [x2d]
    for lp in params["layers"]:
        inputs.extend(_prep_layer_inputs(lp, E, NUM_HEADS))
    inputs.extend([attr_w, attr_b])

    def resident(shape):
        zeros = (0,) * len(shape)
        return pl.BlockSpec(shape, lambda i: zeros)   # DMA'd once, stays in VMEM

    in_specs = [pl.BlockSpec((R, E), lambda i: (i, 0))]
    in_specs += [resident(a.shape) for a in inputs[1:]]

    out_shape = (
        jax.ShapeDtypeStruct((B * S, E), jnp.float32),   # transformer states
        jax.ShapeDtypeStruct((B, E), jnp.float32),       # user embedding
        jax.ShapeDtypeStruct((B, FA_pad), jnp.float32),  # padded attr logits
    )
    out_specs = (
        pl.BlockSpec((R, E), lambda i: (i, 0)),
        pl.BlockSpec((bb, E), lambda i: (i, 0)),
        pl.BlockSpec((bb, FA_pad), lambda i: (i, 0)),
    )

    kernel = functools.partial(
        _transformer_kernel, bb=bb, S=S, E=E, H=NUM_HEADS,
        num_layers=len(params["layers"]))

    # advisory cost estimate
    Rt = B * S
    Dh = E // NUM_HEADS
    flops = 0
    for _ in range(NUM_LAYERS):
        flops += 2 * Rt * E * (3 * E)                 # q, k, v projections
        flops += 2 * Rt * E * E                       # out projection
        flops += 4 * B * NUM_HEADS * S * S * Dh       # scores + PV
        flops += 4 * Rt * E * DIM_FF                  # FF1 + FF2
    flops += 2 * B * E * FA_pad                       # user-attr heads
    transcendentals = NUM_LAYERS * (B * NUM_HEADS * S * S + 2 * Rt)
    bytes_accessed = (sum(int(np.prod(a.shape)) * a.dtype.itemsize for a in inputs)
                      + sum(int(np.prod(s.shape)) * 4 for s in out_shape))
    cost = pl.CostEstimate(flops=int(flops),
                           transcendentals=int(transcendentals),
                           bytes_accessed=int(bytes_accessed))

    # scoped-VMEM budget: resident weights + per-tile activations (×2 buffers)
    weight_bytes = sum(int(np.prod(a.shape)) * a.dtype.itemsize for a in inputs[1:])
    act_bytes = 4 * R * (8 * E + DIM_FF)
    io_bytes = 4 * (2 * R * E + bb * (E + FA_pad))
    vmem_limit = int(min(32 * 2 ** 20,
                         max(16 * 2 ** 20,
                             2 * (weight_bytes + act_bytes + io_bytes))))

    states, user_emb, attr_pad = pl.pallas_call(
        kernel,
        grid=(nbt,),
        out_shape=out_shape,
        in_specs=in_specs,
        out_specs=out_specs,
        compiler_params=pltpu.CompilerParams(
            dimension_semantics=("parallel",),
            vmem_limit_bytes=vmem_limit),
        cost_estimate=cost,
    )(*inputs)

    user_attr_logits = attr_pad[:, :FA].reshape(B, F, A)
    return states, user_emb, user_attr_logits


def item_head_forward(params, rows, num_items):
    """Item prediction head on the (already gathered) masked rows only."""
    k_pad = rows.shape[0]
    n_pad = _round_up(num_items, LANE)
    w = jnp.pad(params["item_w_t"],
                ((0, 0), (0, n_pad - num_items))).astype(jnp.bfloat16)
    b = jnp.pad(params["item_b"], ((0, 0), (0, n_pad - num_items)))
    out = pl.pallas_call(
        _item_head_kernel,
        out_shape=jax.ShapeDtypeStruct((k_pad, n_pad), jnp.float32),
        in_specs=[pl.BlockSpec(memory_space=VMEM)] * 3,
        out_specs=pl.BlockSpec(memory_space=VMEM),
    )(rows, w, b)
    return out[:, :num_items]


# ------------------------------ model forward -------------------------------

def forward(params, input_ids, mask_flat_idx):
    """Returns (masked_item_logits, user_attr_logits, user_emb)."""
    B, S = input_ids.shape
    E = params["attr_emb"].shape[1]
    num_items = params["item_w_t"].shape[1]

    # embedding lookups (glue); attr_embedding has padding_idx=0 (row 0 is zero)
    attr_emb = jnp.take(params["attr_emb"], input_ids, axis=0)      # (B, S, E)
    pos_emb = params["pos_emb"][:S]                                 # (S, E)
    seq_emb = attr_emb + pos_emb[None, :, :]
    # self.dropout(seq_emb): identity in eval mode.
    x2d = seq_emb.reshape(B * S, E).astype(jnp.float32)

    states, user_emb, user_attr_logits = transformer_forward(params, x2d, B, S)

    masked_item_logits = None
    if mask_flat_idx is not None:
        # gather ONLY the masked rows (padded to a sublane multiple), then run
        # the item head on them — avoids the (B*S, num_items) writeback.
        K = int(mask_flat_idx.shape[0])
        K_pad = _round_up(max(K, 1), 8)
        idx_pad = jnp.concatenate(
            [mask_flat_idx.astype(jnp.int32),
             jnp.zeros((K_pad - K,), jnp.int32)])
        rows = jnp.take(states, idx_pad, axis=0)                    # (K_pad, E)
        masked_item_logits = item_head_forward(params, rows, num_items)[:K]

    return masked_item_logits, user_attr_logits, user_emb


# ------------------------------ param init ----------------------------------

def init_params(key, *, attr_num, num_items, embed_dim, max_seq_len,
                user_attr_num, user_attr_ft_num):
    E = embed_dim
    state = {"key": key}

    def w(shape, scale=0.02):
        state["key"], sub = jax.random.split(state["key"])
        return (scale * jax.random.normal(sub, shape)).astype(jnp.float32)

    attr_emb = w((attr_num, E)).at[0].set(0.0)      # padding_idx=0
    pos_emb = w((max_seq_len + 2, E))

    layers = []
    for _ in range(NUM_LAYERS):
        layers.append(dict(
            in_proj_w_t=w((E, 3 * E)),  in_proj_b=w((1, 3 * E)),
            out_proj_w_t=w((E, E)),     out_proj_b=w((1, E)),
            ln1_g=jnp.ones((1, E), jnp.float32), ln1_b=jnp.zeros((1, E), jnp.float32),
            ff_w1_t=w((E, DIM_FF)),     ff_b1=w((1, DIM_FF)),
            ff_w2_t=w((DIM_FF, E)),     ff_b2=w((1, E)),
            ln2_g=jnp.ones((1, E), jnp.float32), ln2_b=jnp.zeros((1, E), jnp.float32),
        ))

    item_w_t = w((E, num_items))
    item_b = w((1, num_items))
    # user-attr heads stored stacked so they run as one concatenated linear
    attr_w_cat = w((E, user_attr_ft_num, user_attr_num))
    attr_b_cat = w((user_attr_ft_num, user_attr_num))

    return dict(attr_emb=attr_emb, pos_emb=pos_emb, layers=layers,
                item_w_t=item_w_t, item_b=item_b,
                attr_w_cat=attr_w_cat, attr_b_cat=attr_b_cat)


# ---------------------------------- main -------------------------------------

if __name__ == "__main__":
    attr_num, num_items, embed_dim = 50, 40, 32
    max_seq_len, user_attr_num, user_attr_ft_num = 8, 6, 3
    B, S = 2, 8

    key = jax.random.PRNGKey(0)
    pkey, ikey = jax.random.split(key)
    params = init_params(pkey, attr_num=attr_num, num_items=num_items,
                         embed_dim=embed_dim, max_seq_len=max_seq_len,
                         user_attr_num=user_attr_num,
                         user_attr_ft_num=user_attr_ft_num)

    input_ids = jax.random.randint(ikey, (B, S), 0, attr_num, dtype=jnp.int32)

    mask_positions = np.zeros((B, S), dtype=bool)
    mask_positions[0, 2] = True
    mask_positions[0, 5] = True
    mask_positions[1, 3] = True
    # torch boolean indexing -> row-major flat indices of True entries
    mask_flat_idx = jnp.asarray(np.nonzero(mask_positions.reshape(-1))[0],
                                dtype=jnp.int32)

    fwd = jax.jit(forward)
    masked_item_logits, user_attr_logits, user_emb = fwd(
        params, input_ids, mask_flat_idx)
    jax.block_until_ready((masked_item_logits, user_attr_logits, user_emb))

    assert masked_item_logits.shape == (int(mask_positions.sum()), num_items)
    assert user_attr_logits.shape == (B, user_attr_ft_num, user_attr_num)
    assert user_emb.shape == (B, embed_dim)
    assert all(bool(jnp.isfinite(t).all()) for t in
               (masked_item_logits, user_attr_logits, user_emb))
    print("KERNEL_OK")
</pallas_src>

<mosaic_0001>
module attributes {stable_mosaic.version = 11 : i64} {
  func.func @_transformer_kernel(%arg0: i32, %arg1: memref<16x32xf32, #tpu.memory_space<vmem>>, %arg2: memref<2x32x16xbf16, #tpu.memory_space<vmem>>, %arg3: memref<2x32x16xbf16, #tpu.memory_space<vmem>>, %arg4: memref<2x32x16xbf16, #tpu.memory_space<vmem>>, %arg5: memref<2x1x16xf32, #tpu.memory_space<vmem>>, %arg6: memref<2x1x16xf32, #tpu.memory_space<vmem>>, %arg7: memref<2x1x16xf32, #tpu.memory_space<vmem>>, %arg8: memref<2x16x32xbf16, #tpu.memory_space<vmem>>, %arg9: memref<1x32xf32, #tpu.memory_space<vmem>>, %arg10: memref<1x32xf32, #tpu.memory_space<vmem>>, %arg11: memref<1x32xf32, #tpu.memory_space<vmem>>, %arg12: memref<32x2048xbf16, #tpu.memory_space<vmem>>, %arg13: memref<1x2048xf32, #tpu.memory_space<vmem>>, %arg14: memref<2048x32xbf16, #tpu.memory_space<vmem>>, %arg15: memref<1x32xf32, #tpu.memory_space<vmem>>, %arg16: memref<1x32xf32, #tpu.memory_space<vmem>>, %arg17: memref<1x32xf32, #tpu.memory_space<vmem>>, %arg18: memref<2x32x16xbf16, #tpu.memory_space<vmem>>, %arg19: memref<2x32x16xbf16, #tpu.memory_space<vmem>>, %arg20: memref<2x32x16xbf16, #tpu.memory_space<vmem>>, %arg21: memref<2x1x16xf32, #tpu.memory_space<vmem>>, %arg22: memref<2x1x16xf32, #tpu.memory_space<vmem>>, %arg23: memref<2x1x16xf32, #tpu.memory_space<vmem>>, %arg24: memref<2x16x32xbf16, #tpu.memory_space<vmem>>, %arg25: memref<1x32xf32, #tpu.memory_space<vmem>>, %arg26: memref<1x32xf32, #tpu.memory_space<vmem>>, %arg27: memref<1x32xf32, #tpu.memory_space<vmem>>, %arg28: memref<32x2048xbf16, #tpu.memory_space<vmem>>, %arg29: memref<1x2048xf32, #tpu.memory_space<vmem>>, %arg30: memref<2048x32xbf16, #tpu.memory_space<vmem>>, %arg31: memref<1x32xf32, #tpu.memory_space<vmem>>, %arg32: memref<1x32xf32, #tpu.memory_space<vmem>>, %arg33: memref<1x32xf32, #tpu.memory_space<vmem>>, %arg34: memref<32x128xbf16, #tpu.memory_space<vmem>>, %arg35: memref<1x128xf32, #tpu.memory_space<vmem>>, %arg36: memref<16x32xf32, #tpu.memory_space<vmem>>, %arg37: memref<2x32xf32, #tpu.memory_space<vmem>>, %arg38: memref<2x128xf32, #tpu.memory_space<vmem>>) attributes {dimension_semantics = [#tpu.dimension_semantics<parallel>], iteration_bounds = array<i64: 1>, scalar_prefetch = 0 : i64, scratch_operands = 0 : i64, tpu.core_type = #tpu.core_type<tc>, window_params = [{transform_indices = @transform_0, window_bounds = array<i64: 16, 32>}, {pipeline_mode = #tpu.pipeline_mode<synchronous>, transform_indices = @transform_1, window_bounds = array<i64: 2, 32, 16>}, {pipeline_mode = #tpu.pipeline_mode<synchronous>, transform_indices = @transform_2, window_bounds = array<i64: 2, 32, 16>}, {pipeline_mode = #tpu.pipeline_mode<synchronous>, transform_indices = @transform_3, window_bounds = array<i64: 2, 32, 16>}, {pipeline_mode = #tpu.pipeline_mode<synchronous>, transform_indices = @transform_4, window_bounds = array<i64: 2, 1, 16>}, {pipeline_mode = #tpu.pipeline_mode<synchronous>, transform_indices = @transform_5, window_bounds = array<i64: 2, 1, 16>}, {pipeline_mode = #tpu.pipeline_mode<synchronous>, transform_indices = @transform_6, window_bounds = array<i64: 2, 1, 16>}, {pipeline_mode = #tpu.pipeline_mode<synchronous>, transform_indices = @transform_7, window_bounds = array<i64: 2, 16, 32>}, {pipeline_mode = #tpu.pipeline_mode<synchronous>, transform_indices = @transform_8, window_bounds = array<i64: 1, 32>}, {pipeline_mode = #tpu.pipeline_mode<synchronous>, transform_indices = @transform_9, window_bounds = array<i64: 1, 32>}, {pipeline_mode = #tpu.pipeline_mode<synchronous>, transform_indices = @transform_10, window_bounds = array<i64: 1, 32>}, {pipeline_mode = #tpu.pipeline_mode<synchronous>, transform_indices = @transform_11, window_bounds = array<i64: 32, 2048>}, {pipeline_mode = #tpu.pipeline_mode<synchronous>, transform_indices = @transform_12, window_bounds = array<i64: 1, 2048>}, {pipeline_mode = #tpu.pipeline_mode<synchronous>, transform_indices = @transform_13, window_bounds = array<i64: 2048, 32>}, {pipeline_mode = #tpu.pipeline_mode<synchronous>, transform_indices = @transform_14, window_bounds = array<i64: 1, 32>}, {pipeline_mode = #tpu.pipeline_mode<synchronous>, transform_indices = @transform_15, window_bounds = array<i64: 1, 32>}, {pipeline_mode = #tpu.pipeline_mode<synchronous>, transform_indices = @transform_16, window_bounds = array<i64: 1, 32>}, {pipeline_mode = #tpu.pipeline_mode<synchronous>, transform_indices = @transform_17, window_bounds = array<i64: 2, 32, 16>}, {pipeline_mode = #tpu.pipeline_mode<synchronous>, transform_indices = @transform_18, window_bounds = array<i64: 2, 32, 16>}, {pipeline_mode = #tpu.pipeline_mode<synchronous>, transform_indices = @transform_19, window_bounds = array<i64: 2, 32, 16>}, {pipeline_mode = #tpu.pipeline_mode<synchronous>, transform_indices = @transform_20, window_bounds = array<i64: 2, 1, 16>}, {pipeline_mode = #tpu.pipeline_mode<synchronous>, transform_indices = @transform_21, window_bounds = array<i64: 2, 1, 16>}, {pipeline_mode = #tpu.pipeline_mode<synchronous>, transform_indices = @transform_22, window_bounds = array<i64: 2, 1, 16>}, {pipeline_mode = #tpu.pipeline_mode<synchronous>, transform_indices = @transform_23, window_bounds = array<i64: 2, 16, 32>}, {pipeline_mode = #tpu.pipeline_mode<synchronous>, transform_indices = @transform_24, window_bounds = array<i64: 1, 32>}, {pipeline_mode = #tpu.pipeline_mode<synchronous>, transform_indices = @transform_25, window_bounds = array<i64: 1, 32>}, {pipeline_mode = #tpu.pipeline_mode<synchronous>, transform_indices = @transform_26, window_bounds = array<i64: 1, 32>}, {pipeline_mode = #tpu.pipeline_mode<synchronous>, transform_indices = @transform_27, window_bounds = array<i64: 32, 2048>}, {pipeline_mode = #tpu.pipeline_mode<synchronous>, transform_indices = @transform_28, window_bounds = array<i64: 1, 2048>}, {pipeline_mode = #tpu.pipeline_mode<synchronous>, transform_indices = @transform_29, window_bounds = array<i64: 2048, 32>}, {pipeline_mode = #tpu.pipeline_mode<synchronous>, transform_indices = @transform_30, window_bounds = array<i64: 1, 32>}, {pipeline_mode = #tpu.pipeline_mode<synchronous>, transform_indices = @transform_31, window_bounds = array<i64: 1, 32>}, {pipeline_mode = #tpu.pipeline_mode<synchronous>, transform_indices = @transform_32, window_bounds = array<i64: 1, 32>}, {pipeline_mode = #tpu.pipeline_mode<synchronous>, transform_indices = @transform_33, window_bounds = array<i64: 32, 128>}, {pipeline_mode = #tpu.pipeline_mode<synchronous>, transform_indices = @transform_34, window_bounds = array<i64: 1, 128>}, {transform_indices = @transform_35, window_bounds = array<i64: 16, 32>}, {transform_indices = @transform_36, window_bounds = array<i64: 2, 32>}, {transform_indices = @transform_37, window_bounds = array<i64: 2, 128>}]} {
    %c0 = arith.constant 0 : index
    %c0_0 = arith.constant 0 : index
    %0 = vector.load %arg1[%c0, %c0_0] : memref<16x32xf32, #tpu.memory_space<vmem>>, vector<16x32xf32>
    %c0_1 = arith.constant 0 : index
    %c0_2 = arith.constant 0 : index
    %c0_3 = arith.constant 0 : index
    %1 = vector.load %arg2[%c0_1, %c0_2, %c0_3] : memref<2x32x16xbf16, #tpu.memory_space<vmem>>, vector<1x32x16xbf16>
    %2 = vector.shape_cast %1 : vector<1x32x16xbf16> to vector<32x16xbf16>
    %c0_4 = arith.constant 0 : index
    %c0_5 = arith.constant 0 : index
    %c0_6 = arith.constant 0 : index
    %3 = vector.load %arg5[%c0_4, %c0_5, %c0_6] : memref<2x1x16xf32, #tpu.memory_space<vmem>>, vector<1x1x16xf32>
    %4 = vector.shape_cast %3 : vector<1x1x16xf32> to vector<1x16xf32>
    %5 = arith.truncf %0 : vector<16x32xf32> to vector<16x32xbf16>
    %cst = arith.constant dense<0.000000e+00> : vector<16x16xf32>
    %6 = tpu.matmul %5, %2, %cst {dimension_numbers = #tpu.dot_dimension_numbers<[1], [0], [0], [1], [0, 0, 1, 1], [], []>} : vector<16x32xbf16>, vector<32x16xbf16>, vector<16x16xf32> -> vector<16x16xf32>
    %7 = vector.broadcast %4 : vector<1x16xf32> to vector<16x16xf32>
    %8 = arith.addf %6, %7 : vector<16x16xf32>
    %9 = vector.shape_cast %8 : vector<16x16xf32> to vector<2x8x16xf32>
    %c0_7 = arith.constant 0 : index
    %c0_8 = arith.constant 0 : index
    %c0_9 = arith.constant 0 : index
    %10 = vector.load %arg3[%c0_7, %c0_8, %c0_9] : memref<2x32x16xbf16, #tpu.memory_space<vmem>>, vector<1x32x16xbf16>
    %11 = vector.shape_cast %10 : vector<1x32x16xbf16> to vector<32x16xbf16>
    %c0_10 = arith.constant 0 : index
    %c0_11 = arith.constant 0 : index
    %c0_12 = arith.constant 0 : index
    %12 = vector.load %arg6[%c0_10, %c0_11, %c0_12] : memref<2x1x16xf32, #tpu.memory_space<vmem>>, vector<1x1x16xf32>
    %13 = vector.shape_cast %12 : vector<1x1x16xf32> to vector<1x16xf32>
    %14 = arith.truncf %0 : vector<16x32xf32> to vector<16x32xbf16>
    %cst_13 = arith.constant dense<0.000000e+00> : vector<16x16xf32>
    %15 = tpu.matmul %14, %11, %cst_13 {dimension_numbers = #tpu.dot_dimension_numbers<[1], [0], [0], [1], [0, 0, 1, 1], [], []>} : vector<16x32xbf16>, vector<32x16xbf16>, vector<16x16xf32> -> vector<16x16xf32>
    %16 = vector.broadcast %13 : vector<1x16xf32> to vector<16x16xf32>
    %17 = arith.addf %15, %16 : vector<16x16xf32>
    %18 = vector.shape_cast %17 : vector<16x16xf32> to vector<2x8x16xf32>
    %c0_14 = arith.constant 0 : index
    %c0_15 = arith.constant 0 : index
    %c0_16 = arith.constant 0 : index
    %19 = vector.load %arg4[%c0_14, %c0_15, %c0_16] : memref<2x32x16xbf16, #tpu.memory_space<vmem>>, vector<1x32x16xbf16>
    %20 = vector.shape_cast %19 : vector<1x32x16xbf16> to vector<32x16xbf16>
    %c0_17 = arith.constant 0 : index
    %c0_18 = arith.constant 0 : index
    %c0_19 = arith.constant 0 : index
    %21 = vector.load %arg7[%c0_17, %c0_18, %c0_19] : memref<2x1x16xf32, #tpu.memory_space<vmem>>, vector<1x1x16xf32>
    %22 = vector.shape_cast %21 : vector<1x1x16xf32> to vector<1x16xf32>
    %23 = arith.truncf %0 : vector<16x32xf32> to vector<16x32xbf16>
    %cst_20 = arith.constant dense<0.000000e+00> : vector<16x16xf32>
    %24 = tpu.matmul %23, %20, %cst_20 {dimension_numbers = #tpu.dot_dimension_numbers<[1], [0], [0], [1], [0, 0, 1, 1], [], []>} : vector<16x32xbf16>, vector<32x16xbf16>, vector<16x16xf32> -> vector<16x16xf32>
    %25 = vector.broadcast %22 : vector<1x16xf32> to vector<16x16xf32>
    %26 = arith.addf %24, %25 : vector<16x16xf32>
    %27 = vector.shape_cast %26 : vector<16x16xf32> to vector<2x8x16xf32>
    "tpu.trace_start"() <{level = 10 : i32, message = "bqd,bkd->bqk"}> : () -> ()
    %cst_21 = arith.constant dense<0.000000e+00> : vector<2x8x8xf32>
    %28 = tpu.matmul %9, %18, %cst_21 {dimension_numbers = #tpu.dot_dimension_numbers<[2], [2], [1], [1], [0, 0, 0, 1, 1, 1], [0], [0]>} : vector<2x8x16xf32>, vector<2x8x16xf32>, vector<2x8x8xf32> -> vector<2x8x8xf32>
    "tpu.trace_stop"() : () -> ()
    %cst_22 = arith.constant 2.500000e-01 : f32
    %29 = vector.broadcast %cst_22 : f32 to vector<2x8x8xf32>
    %30 = arith.mulf %28, %29 : vector<2x8x8xf32>
    %cst_23 = arith.constant dense<0xFF800000> : vector<2x8xf32>
    %31 = vector.multi_reduction <maximumf>, %30, %cst_23 [2] : vector<2x8x8xf32> to vector<2x8xf32>
    %32 = vector.shape_cast %31 : vector<2x8xf32> to vector<2x8x1xf32>
    %33 = vector.broadcast %32 : vector<2x8x1xf32> to vector<2x8x8xf32>
    %34 = arith.subf %30, %33 : vector<2x8x8xf32>
    %35 = math.exp %34 : vector<2x8x8xf32>
    %cst_24 = arith.constant dense<0.000000e+00> : vector<2x8xf32>
    %36 = vector.multi_reduction <add>, %35, %cst_24 [2] : vector<2x8x8xf32> to vector<2x8xf32>
    %37 = vector.shape_cast %36 : vector<2x8xf32> to vector<2x8x1xf32>
    %38 = tpu.reciprocal %37 {approx = true} : vector<2x8x1xf32> -> vector<2x8x1xf32>
    %39 = vector.broadcast %38 : vector<2x8x1xf32> to vector<2x8x8xf32>
    %40 = arith.mulf %35, %39 : vector<2x8x8xf32>
    "tpu.trace_start"() <{level = 10 : i32, message = "bqk,bkd->bqd"}> : () -> ()
    %cst_25 = arith.constant dense<0.000000e+00> : vector<2x8x16xf32>
    %41 = tpu.matmul %40, %27, %cst_25 {dimension_numbers = #tpu.dot_dimension_numbers<[2], [1], [1], [2], [0, 0, 0, 1, 1, 2], [0], [0]>} : vector<2x8x8xf32>, vector<2x8x16xf32>, vector<2x8x16xf32> -> vector<2x8x16xf32>
    "tpu.trace_stop"() : () -> ()
    %42 = vector.shape_cast %41 : vector<2x8x16xf32> to vector<16x16xf32>
    %c0_26 = arith.constant 0 : index
    %c0_27 = arith.constant 0 : index
    %c0_28 = arith.constant 0 : index
    %43 = vector.load %arg8[%c0_26, %c0_27, %c0_28] : memref<2x16x32xbf16, #tpu.memory_space<vmem>>, vector<1x16x32xbf16>
    %44 = vector.shape_cast %43 : vector<1x16x32xbf16> to vector<16x32xbf16>
    %45 = arith.truncf %42 : vector<16x16xf32> to vector<16x16xbf16>
    %cst_29 = arith.constant dense<0.000000e+00> : vector<16x32xf32>
    %46 = tpu.matmul %45, %44, %cst_29 {dimension_numbers = #tpu.dot_dimension_numbers<[1], [0], [0], [1], [0, 0, 1, 1], [], []>} : vector<16x16xbf16>, vector<16x32xbf16>, vector<16x32xf32> -> vector<16x32xf32>
    %c1 = arith.constant 1 : index
    %c0_30 = arith.constant 0 : index
    %c0_31 = arith.constant 0 : index
    %47 = vector.load %arg2[%c1, %c0_30, %c0_31] : memref<2x32x16xbf16, #tpu.memory_space<vmem>>, vector<1x32x16xbf16>
    %48 = vector.shape_cast %47 : vector<1x32x16xbf16> to vector<32x16xbf16>
    %c1_32 = arith.constant 1 : index
    %c0_33 = arith.constant 0 : index
    %c0_34 = arith.constant 0 : index
    %49 = vector.load %arg5[%c1_32, %c0_33, %c0_34] : memref<2x1x16xf32, #tpu.memory_space<vmem>>, vector<1x1x16xf32>
    %50 = vector.shape_cast %49 : vector<1x1x16xf32> to vector<1x16xf32>
    %51 = arith.truncf %0 : vector<16x32xf32> to vector<16x32xbf16>
    %cst_35 = arith.constant dense<0.000000e+00> : vector<16x16xf32>
    %52 = tpu.matmul %51, %48, %cst_35 {dimension_numbers = #tpu.dot_dimension_numbers<[1], [0], [0], [1], [0, 0, 1, 1], [], []>} : vector<16x32xbf16>, vector<32x16xbf16>, vector<16x16xf32> -> vector<16x16xf32>
    %53 = vector.broadcast %50 : vector<1x16xf32> to vector<16x16xf32>
    %54 = arith.addf %52, %53 : vector<16x16xf32>
    %55 = vector.shape_cast %54 : vector<16x16xf32> to vector<2x8x16xf32>
    %c1_36 = arith.constant 1 : index
    %c0_37 = arith.constant 0 : index
    %c0_38 = arith.constant 0 : index
    %56 = vector.load %arg3[%c1_36, %c0_37, %c0_38] : memref<2x32x16xbf16, #tpu.memory_space<vmem>>, vector<1x32x16xbf16>
    %57 = vector.shape_cast %56 : vector<1x32x16xbf16> to vector<32x16xbf16>
    %c1_39 = arith.constant 1 : index
    %c0_40 = arith.constant 0 : index
    %c0_41 = arith.constant 0 : index
    %58 = vector.load %arg6[%c1_39, %c0_40, %c0_41] : memref<2x1x16xf32, #tpu.memory_space<vmem>>, vector<1x1x16xf32>
    %59 = vector.shape_cast %58 : vector<1x1x16xf32> to vector<1x16xf32>
    %60 = arith.truncf %0 : vector<16x32xf32> to vector<16x32xbf16>
    %cst_42 = arith.constant dense<0.000000e+00> : vector<16x16xf32>
    %61 = tpu.matmul %60, %57, %cst_42 {dimension_numbers = #tpu.dot_dimension_numbers<[1], [0], [0], [1], [0, 0, 1, 1], [], []>} : vector<16x32xbf16>, vector<32x16xbf16>, vector<16x16xf32> -> vector<16x16xf32>
    %62 = vector.broadcast %59 : vector<1x16xf32> to vector<16x16xf32>
    %63 = arith.addf %61, %62 : vector<16x16xf32>
    %64 = vector.shape_cast %63 : vector<16x16xf32> to vector<2x8x16xf32>
    %c1_43 = arith.constant 1 : index
    %c0_44 = arith.constant 0 : index
    %c0_45 = arith.constant 0 : index
    %65 = vector.load %arg4[%c1_43, %c0_44, %c0_45] : memref<2x32x16xbf16, #tpu.memory_space<vmem>>, vector<1x32x16xbf16>
    %66 = vector.shape_cast %65 : vector<1x32x16xbf16> to vector<32x16xbf16>
    %c1_46 = arith.constant 1 : index
    %c0_47 = arith.constant 0 : index
    %c0_48 = arith.constant 0 : index
    %67 = vector.load %arg7[%c1_46, %c0_47, %c0_48] : memref<2x1x16xf32, #tpu.memory_space<vmem>>, vector<1x1x16xf32>
    %68 = vector.shape_cast %67 : vector<1x1x16xf32> to vector<1x16xf32>
    %69 = arith.truncf %0 : vector<16x32xf32> to vector<16x32xbf16>
    %cst_49 = arith.constant dense<0.000000e+00> : vector<16x16xf32>
    %70 = tpu.matmul %69, %66, %cst_49 {dimension_numbers = #tpu.dot_dimension_numbers<[1], [0], [0], [1], [0, 0, 1, 1], [], []>} : vector<16x32xbf16>, vector<32x16xbf16>, vector<16x16xf32> -> vector<16x16xf32>
    %71 = vector.broadcast %68 : vector<1x16xf32> to vector<16x16xf32>
    %72 = arith.addf %70, %71 : vector<16x16xf32>
    %73 = vector.shape_cast %72 : vector<16x16xf32> to vector<2x8x16xf32>
    "tpu.trace_start"() <{level = 10 : i32, message = "bqd,bkd->bqk"}> : () -> ()
    %cst_50 = arith.constant dense<0.000000e+00> : vector<2x8x8xf32>
    %74 = tpu.matmul %55, %64, %cst_50 {dimension_numbers = #tpu.dot_dimension_numbers<[2], [2], [1], [1], [0, 0, 0, 1, 1, 1], [0], [0]>} : vector<2x8x16xf32>, vector<2x8x16xf32>, vector<2x8x8xf32> -> vector<2x8x8xf32>
    "tpu.trace_stop"() : () -> ()
    %cst_51 = arith.constant 2.500000e-01 : f32
    %75 = vector.broadcast %cst_51 : f32 to vector<2x8x8xf32>
    %76 = arith.mulf %74, %75 : vector<2x8x8xf32>
    %cst_52 = arith.constant dense<0xFF800000> : vector<2x8xf32>
    %77 = vector.multi_reduction <maximumf>, %76, %cst_52 [2] : vector<2x8x8xf32> to vector<2x8xf32>
    %78 = vector.shape_cast %77 : vector<2x8xf32> to vector<2x8x1xf32>
    %79 = vector.broadcast %78 : vector<2x8x1xf32> to vector<2x8x8xf32>
    %80 = arith.subf %76, %79 : vector<2x8x8xf32>
    %81 = math.exp %80 : vector<2x8x8xf32>
    %cst_53 = arith.constant dense<0.000000e+00> : vector<2x8xf32>
    %82 = vector.multi_reduction <add>, %81, %cst_53 [2] : vector<2x8x8xf32> to vector<2x8xf32>
    %83 = vector.shape_cast %82 : vector<2x8xf32> to vector<2x8x1xf32>
    %84 = tpu.reciprocal %83 {approx = true} : vector<2x8x1xf32> -> vector<2x8x1xf32>
    %85 = vector.broadcast %84 : vector<2x8x1xf32> to vector<2x8x8xf32>
    %86 = arith.mulf %81, %85 : vector<2x8x8xf32>
    "tpu.trace_start"() <{level = 10 : i32, message = "bqk,bkd->bqd"}> : () -> ()
    %cst_54 = arith.constant dense<0.000000e+00> : vector<2x8x16xf32>
    %87 = tpu.matmul %86, %73, %cst_54 {dimension_numbers = #tpu.dot_dimension_numbers<[2], [1], [1], [2], [0, 0, 0, 1, 1, 2], [0], [0]>} : vector<2x8x8xf32>, vector<2x8x16xf32>, vector<2x8x16xf32> -> vector<2x8x16xf32>
    "tpu.trace_stop"() : () -> ()
    %88 = vector.shape_cast %87 : vector<2x8x16xf32> to vector<16x16xf32>
    %c1_55 = arith.constant 1 : index
    %c0_56 = arith.constant 0 : index
    %c0_57 = arith.constant 0 : index
    %89 = vector.load %arg8[%c1_55, %c0_56, %c0_57] : memref<2x16x32xbf16, #tpu.memory_space<vmem>>, vector<1x16x32xbf16>
    %90 = vector.shape_cast %89 : vector<1x16x32xbf16> to vector<16x32xbf16>
    %91 = arith.truncf %88 : vector<16x16xf32> to vector<16x16xbf16>
    %cst_58 = arith.constant dense<0.000000e+00> : vector<16x32xf32>
    %92 = tpu.matmul %91, %90, %cst_58 {dimension_numbers = #tpu.dot_dimension_numbers<[1], [0], [0], [1], [0, 0, 1, 1], [], []>} : vector<16x16xbf16>, vector<16x32xbf16>, vector<16x32xf32> -> vector<16x32xf32>
    %cst_59 = arith.constant 0.000000e+00 : f32
    %93 = vector.broadcast %cst_59 : f32 to vector<16x32xf32>
    %94 = arith.addf %93, %46 : vector<16x32xf32>
    %95 = arith.addf %94, %92 : vector<16x32xf32>
    %c0_60 = arith.constant 0 : index
    %c0_61 = arith.constant 0 : index
    %96 = vector.load %arg9[%c0_60, %c0_61] : memref<1x32xf32, #tpu.memory_space<vmem>>, vector<1x32xf32>
    %97 = vector.broadcast %96 : vector<1x32xf32> to vector<16x32xf32>
    %98 = arith.addf %95, %97 : vector<16x32xf32>
    %99 = arith.addf %0, %98 : vector<16x32xf32>
    %c0_62 = arith.constant 0 : index
    %c0_63 = arith.constant 0 : index
    %100 = vector.load %arg10[%c0_62, %c0_63] : memref<1x32xf32, #tpu.memory_space<vmem>>, vector<1x32xf32>
    %c0_64 = arith.constant 0 : index
    %c0_65 = arith.constant 0 : index
    %101 = vector.load %arg11[%c0_64, %c0_65] : memref<1x32xf32, #tpu.memory_space<vmem>>, vector<1x32xf32>
    %cst_66 = arith.constant dense<0.000000e+00> : vector<16xf32>
    %102 = vector.multi_reduction <add>, %99, %cst_66 [1] : vector<16x32xf32> to vector<16xf32>
    %103 = vector.shape_cast %102 : vector<16xf32> to vector<16x1xf32>
    %cst_67 = arith.constant 3.200000e+01 : f32
    %104 = vector.broadcast %cst_67 : f32 to vector<16x1xf32>
    %105 = arith.divf %103, %104 : vector<16x1xf32>
    %106 = vector.broadcast %105 : vector<16x1xf32> to vector<16x32xf32>
    %107 = arith.subf %99, %106 : vector<16x32xf32>
    %108 = arith.mulf %107, %107 : vector<16x32xf32>
    %cst_68 = arith.constant dense<0.000000e+00> : vector<16xf32>
    %109 = vector.multi_reduction <add>, %108, %cst_68 [1] : vector<16x32xf32> to vector<16xf32>
    %110 = vector.shape_cast %109 : vector<16xf32> to vector<16x1xf32>
    %cst_69 = arith.constant 3.200000e+01 : f32
    %111 = vector.broadcast %cst_69 : f32 to vector<16x1xf32>
    %112 = arith.divf %110, %111 : vector<16x1xf32>
    %113 = vector.broadcast %105 : vector<16x1xf32> to vector<16x32xf32>
    %114 = arith.subf %99, %113 : vector<16x32xf32>
    %cst_70 = arith.constant 9.99999974E-6 : f32
    %115 = vector.broadcast %cst_70 : f32 to vector<16x1xf32>
    %116 = arith.addf %112, %115 : vector<16x1xf32>
    %117 = math.rsqrt %116 : vector<16x1xf32>
    %118 = vector.broadcast %117 : vector<16x1xf32> to vector<16x32xf32>
    %119 = arith.mulf %114, %118 : vector<16x32xf32>
    %120 = vector.broadcast %100 : vector<1x32xf32> to vector<16x32xf32>
    %121 = arith.mulf %119, %120 : vector<16x32xf32>
    %122 = vector.broadcast %101 : vector<1x32xf32> to vector<16x32xf32>
    %123 = arith.addf %121, %122 : vector<16x32xf32>
    %c0_71 = arith.constant 0 : index
    %c0_72 = arith.constant 0 : index
    %124 = vector.load %arg12[%c0_71, %c0_72] : memref<32x2048xbf16, #tpu.memory_space<vmem>>, vector<32x2048xbf16>
    %c0_73 = arith.constant 0 : index
    %c0_74 = arith.constant 0 : index
    %125 = vector.load %arg13[%c0_73, %c0_74] : memref<1x2048xf32, #tpu.memory_space<vmem>>, vector<1x2048xf32>
    %126 = arith.truncf %123 : vector<16x32xf32> to vector<16x32xbf16>
    %cst_75 = arith.constant dense<0.000000e+00> : vector<16x2048xf32>
    %127 = tpu.matmul %126, %124, %cst_75 {dimension_numbers = #tpu.dot_dimension_numbers<[1], [0], [0], [1], [0, 0, 1, 1], [], []>} : vector<16x32xbf16>, vector<32x2048xbf16>, vector<16x2048xf32> -> vector<16x2048xf32>
    %128 = vector.broadcast %125 : vector<1x2048xf32> to vector<16x2048xf32>
    %129 = arith.addf %127, %128 : vector<16x2048xf32>
    %cst_76 = arith.constant 0.000000e+00 : f32
    %130 = vector.broadcast %cst_76 : f32 to vector<16x2048xf32>
    %131 = arith.maximumf %129, %130 : vector<16x2048xf32>
    %c0_77 = arith.constant 0 : index
    %c0_78 = arith.constant 0 : index
    %132 = vector.load %arg14[%c0_77, %c0_78] : memref<2048x32xbf16, #tpu.memory_space<vmem>>, vector<2048x32xbf16>
    %c0_79 = arith.constant 0 : index
    %c0_80 = arith.constant 0 : index
    %133 = vector.load %arg15[%c0_79, %c0_80] : memref<1x32xf32, #tpu.memory_space<vmem>>, vector<1x32xf32>
    %134 = arith.truncf %131 : vector<16x2048xf32> to vector<16x2048xbf16>
    %cst_81 = arith.constant dense<0.000000e+00> : vector<16x32xf32>
    %135 = tpu.matmul %134, %132, %cst_81 {dimension_numbers = #tpu.dot_dimension_numbers<[1], [0], [0], [1], [0, 0, 1, 1], [], []>} : vector<16x2048xbf16>, vector<2048x32xbf16>, vector<16x32xf32> -> vector<16x32xf32>
    %136 = vector.broadcast %133 : vector<1x32xf32> to vector<16x32xf32>
    %137 = arith.addf %135, %136 : vector<16x32xf32>
    %138 = arith.addf %123, %137 : vector<16x32xf32>
    %c0_82 = arith.constant 0 : index
    %c0_83 = arith.constant 0 : index
    %139 = vector.load %arg16[%c0_82, %c0_83] : memref<1x32xf32, #tpu.memory_space<vmem>>, vector<1x32xf32>
    %c0_84 = arith.constant 0 : index
    %c0_85 = arith.constant 0 : index
    %140 = vector.load %arg17[%c0_84, %c0_85] : memref<1x32xf32, #tpu.memory_space<vmem>>, vector<1x32xf32>
    %cst_86 = arith.constant dense<0.000000e+00> : vector<16xf32>
    %141 = vector.multi_reduction <add>, %138, %cst_86 [1] : vector<16x32xf32> to vector<16xf32>
    %142 = vector.shape_cast %141 : vector<16xf32> to vector<16x1xf32>
    %cst_87 = arith.constant 3.200000e+01 : f32
    %143 = vector.broadcast %cst_87 : f32 to vector<16x1xf32>
    %144 = arith.divf %142, %143 : vector<16x1xf32>
    %145 = vector.broadcast %144 : vector<16x1xf32> to vector<16x32xf32>
    %146 = arith.subf %138, %145 : vector<16x32xf32>
    %147 = arith.mulf %146, %146 : vector<16x32xf32>
    %cst_88 = arith.constant dense<0.000000e+00> : vector<16xf32>
    %148 = vector.multi_reduction <add>, %147, %cst_88 [1] : vector<16x32xf32> to vector<16xf32>
    %149 = vector.shape_cast %148 : vector<16xf32> to vector<16x1xf32>
    %cst_89 = arith.constant 3.200000e+01 : f32
    %150 = vector.broadcast %cst_89 : f32 to vector<16x1xf32>
    %151 = arith.divf %149, %150 : vector<16x1xf32>
    %152 = vector.broadcast %144 : vector<16x1xf32> to vector<16x32xf32>
    %153 = arith.subf %138, %152 : vector<16x32xf32>
    %cst_90 = arith.constant 9.99999974E-6 : f32
    %154 = vector.broadcast %cst_90 : f32 to vector<16x1xf32>
    %155 = arith.addf %151, %154 : vector<16x1xf32>
    %156 = math.rsqrt %155 : vector<16x1xf32>
    %157 = vector.broadcast %156 : vector<16x1xf32> to vector<16x32xf32>
    %158 = arith.mulf %153, %157 : vector<16x32xf32>
    %159 = vector.broadcast %139 : vector<1x32xf32> to vector<16x32xf32>
    %160 = arith.mulf %158, %159 : vector<16x32xf32>
    %161 = vector.broadcast %140 : vector<1x32xf32> to vector<16x32xf32>
    %162 = arith.addf %160, %161 : vector<16x32xf32>
    %c0_91 = arith.constant 0 : index
    %c0_92 = arith.constant 0 : index
    %c0_93 = arith.constant 0 : index
    %163 = vector.load %arg18[%c0_91, %c0_92, %c0_93] : memref<2x32x16xbf16, #tpu.memory_space<vmem>>, vector<1x32x16xbf16>
    %164 = vector.shape_cast %163 : vector<1x32x16xbf16> to vector<32x16xbf16>
    %c0_94 = arith.constant 0 : index
    %c0_95 = arith.constant 0 : index
    %c0_96 = arith.constant 0 : index
    %165 = vector.load %arg21[%c0_94, %c0_95, %c0_96] : memref<2x1x16xf32, #tpu.memory_space<vmem>>, vector<1x1x16xf32>
    %166 = vector.shape_cast %165 : vector<1x1x16xf32> to vector<1x16xf32>
    %167 = arith.truncf %162 : vector<16x32xf32> to vector<16x32xbf16>
    %cst_97 = arith.constant dense<0.000000e+00> : vector<16x16xf32>
    %168 = tpu.matmul %167, %164, %cst_97 {dimension_numbers = #tpu.dot_dimension_numbers<[1], [0], [0], [1], [0, 0, 1, 1], [], []>} : vector<16x32xbf16>, vector<32x16xbf16>, vector<16x16xf32> -> vector<16x16xf32>
    %169 = vector.broadcast %166 : vector<1x16xf32> to vector<16x16xf32>
    %170 = arith.addf %168, %169 : vector<16x16xf32>
    %171 = vector.shape_cast %170 : vector<16x16xf32> to vector<2x8x16xf32>
    %c0_98 = arith.constant 0 : index
    %c0_99 = arith.constant 0 : index
    %c0_100 = arith.constant 0 : index
    %172 = vector.load %arg19[%c0_98, %c0_99, %c0_100] : memref<2x32x16xbf16, #tpu.memory_space<vmem>>, vector<1x32x16xbf16>
    %173 = vector.shape_cast %172 : vector<1x32x16xbf16> to vector<32x16xbf16>
    %c0_101 = arith.constant 0 : index
    %c0_102 = arith.constant 0 : index
    %c0_103 = arith.constant 0 : index
    %174 = vector.load %arg22[%c0_101, %c0_102, %c0_103] : memref<2x1x16xf32, #tpu.memory_space<vmem>>, vector<1x1x16xf32>
    %175 = vector.shape_cast %174 : vector<1x1x16xf32> to vector<1x16xf32>
    %176 = arith.truncf %162 : vector<16x32xf32> to vector<16x32xbf16>
    %cst_104 = arith.constant dense<0.000000e+00> : vector<16x16xf32>
    %177 = tpu.matmul %176, %173, %cst_104 {dimension_numbers = #tpu.dot_dimension_numbers<[1], [0], [0], [1], [0, 0, 1, 1], [], []>} : vector<16x32xbf16>, vector<32x16xbf16>, vector<16x16xf32> -> vector<16x16xf32>
    %178 = vector.broadcast %175 : vector<1x16xf32> to vector<16x16xf32>
    %179 = arith.addf %177, %178 : vector<16x16xf32>
    %180 = vector.shape_cast %179 : vector<16x16xf32> to vector<2x8x16xf32>
    %c0_105 = arith.constant 0 : index
    %c0_106 = arith.constant 0 : index
    %c0_107 = arith.constant 0 : index
    %181 = vector.load %arg20[%c0_105, %c0_106, %c0_107] : memref<2x32x16xbf16, #tpu.memory_space<vmem>>, vector<1x32x16xbf16>
    %182 = vector.shape_cast %181 : vector<1x32x16xbf16> to vector<32x16xbf16>
    %c0_108 = arith.constant 0 : index
    %c0_109 = arith.constant 0 : index
    %c0_110 = arith.constant 0 : index
    %183 = vector.load %arg23[%c0_108, %c0_109, %c0_110] : memref<2x1x16xf32, #tpu.memory_space<vmem>>, vector<1x1x16xf32>
    %184 = vector.shape_cast %183 : vector<1x1x16xf32> to vector<1x16xf32>
    %185 = arith.truncf %162 : vector<16x32xf32> to vector<16x32xbf16>
    %cst_111 = arith.constant dense<0.000000e+00> : vector<16x16xf32>
    %186 = tpu.matmul %185, %182, %cst_111 {dimension_numbers = #tpu.dot_dimension_numbers<[1], [0], [0], [1], [0, 0, 1, 1], [], []>} : vector<16x32xbf16>, vector<32x16xbf16>, vector<16x16xf32> -> vector<16x16xf32>
    %187 = vector.broadcast %184 : vector<1x16xf32> to vector<16x16xf32>
    %188 = arith.addf %186, %187 : vector<16x16xf32>
    %189 = vector.shape_cast %188 : vector<16x16xf32> to vector<2x8x16xf32>
    "tpu.trace_start"() <{level = 10 : i32, message = "bqd,bkd->bqk"}> : () -> ()
    %cst_112 = arith.constant dense<0.000000e+00> : vector<2x8x8xf32>
    %190 = tpu.matmul %171, %180, %cst_112 {dimension_numbers = #tpu.dot_dimension_numbers<[2], [2], [1], [1], [0, 0, 0, 1, 1, 1], [0], [0]>} : vector<2x8x16xf32>, vector<2x8x16xf32>, vector<2x8x8xf32> -> vector<2x8x8xf32>
    "tpu.trace_stop"() : () -> ()
    %cst_113 = arith.constant 2.500000e-01 : f32
    %191 = vector.broadcast %cst_113 : f32 to vector<2x8x8xf32>
    %192 = arith.mulf %190, %191 : vector<2x8x8xf32>
    %cst_114 = arith.constant dense<0xFF800000> : vector<2x8xf32>
    %193 = vector.multi_reduction <maximumf>, %192, %cst_114 [2] : vector<2x8x8xf32> to vector<2x8xf32>
    %194 = vector.shape_cast %193 : vector<2x8xf32> to vector<2x8x1xf32>
    %195 = vector.broadcast %194 : vector<2x8x1xf32> to vector<2x8x8xf32>
    %196 = arith.subf %192, %195 : vector<2x8x8xf32>
    %197 = math.exp %196 : vector<2x8x8xf32>
    %cst_115 = arith.constant dense<0.000000e+00> : vector<2x8xf32>
    %198 = vector.multi_reduction <add>, %197, %cst_115 [2] : vector<2x8x8xf32> to vector<2x8xf32>
    %199 = vector.shape_cast %198 : vector<2x8xf32> to vector<2x8x1xf32>
    %200 = tpu.reciprocal %199 {approx = true} : vector<2x8x1xf32> -> vector<2x8x1xf32>
    %201 = vector.broadcast %200 : vector<2x8x1xf32> to vector<2x8x8xf32>
    %202 = arith.mulf %197, %201 : vector<2x8x8xf32>
    "tpu.trace_start"() <{level = 10 : i32, message = "bqk,bkd->bqd"}> : () -> ()
    %cst_116 = arith.constant dense<0.000000e+00> : vector<2x8x16xf32>
    %203 = tpu.matmul %202, %189, %cst_116 {dimension_numbers = #tpu.dot_dimension_numbers<[2], [1], [1], [2], [0, 0, 0, 1, 1, 2], [0], [0]>} : vector<2x8x8xf32>, vector<2x8x16xf32>, vector<2x8x16xf32> -> vector<2x8x16xf32>
    "tpu.trace_stop"() : () -> ()
    %204 = vector.shape_cast %203 : vector<2x8x16xf32> to vector<16x16xf32>
    %c0_117 = arith.constant 0 : index
    %c0_118 = arith.constant 0 : index
    %c0_119 = arith.constant 0 : index
    %205 = vector.load %arg24[%c0_117, %c0_118, %c0_119] : memref<2x16x32xbf16, #tpu.memory_space<vmem>>, vector<1x16x32xbf16>
    %206 = vector.shape_cast %205 : vector<1x16x32xbf16> to vector<16x32xbf16>
    %207 = arith.truncf %204 : vector<16x16xf32> to vector<16x16xbf16>
    %cst_120 = arith.constant dense<0.000000e+00> : vector<16x32xf32>
    %208 = tpu.matmul %207, %206, %cst_120 {dimension_numbers = #tpu.dot_dimension_numbers<[1], [0], [0], [1], [0, 0, 1, 1], [], []>} : vector<16x16xbf16>, vector<16x32xbf16>, vector<16x32xf32> -> vector<16x32xf32>
    %c1_121 = arith.constant 1 : index
    %c0_122 = arith.constant 0 : index
    %c0_123 = arith.constant 0 : index
    %209 = vector.load %arg18[%c1_121, %c0_122, %c0_123] : memref<2x32x16xbf16, #tpu.memory_space<vmem>>, vector<1x32x16xbf16>
    %210 = vector.shape_cast %209 : vector<1x32x16xbf16> to vector<32x16xbf16>
    %c1_124 = arith.constant 1 : index
    %c0_125 = arith.constant 0 : index
    %c0_126 = arith.constant 0 : index
    %211 = vector.load %arg21[%c1_124, %c0_125, %c0_126] : memref<2x1x16xf32, #tpu.memory_space<vmem>>, vector<1x1x16xf32>
    %212 = vector.shape_cast %211 : vector<1x1x16xf32> to vector<1x16xf32>
    %213 = arith.truncf %162 : vector<16x32xf32> to vector<16x32xbf16>
    %cst_127 = arith.constant dense<0.000000e+00> : vector<16x16xf32>
    %214 = tpu.matmul %213, %210, %cst_127 {dimension_numbers = #tpu.dot_dimension_numbers<[1], [0], [0], [1], [0, 0, 1, 1], [], []>} : vector<16x32xbf16>, vector<32x16xbf16>, vector<16x16xf32> -> vector<16x16xf32>
    %215 = vector.broadcast %212 : vector<1x16xf32> to vector<16x16xf32>
    %216 = arith.addf %214, %215 : vector<16x16xf32>
    %217 = vector.shape_cast %216 : vector<16x16xf32> to vector<2x8x16xf32>
    %c1_128 = arith.constant 1 : index
    %c0_129 = arith.constant 0 : index
    %c0_130 = arith.constant 0 : index
    %218 = vector.load %arg19[%c1_128, %c0_129, %c0_130] : memref<2x32x16xbf16, #tpu.memory_space<vmem>>, vector<1x32x16xbf16>
    %219 = vector.shape_cast %218 : vector<1x32x16xbf16> to vector<32x16xbf16>
    %c1_131 = arith.constant 1 : index
    %c0_132 = arith.constant 0 : index
    %c0_133 = arith.constant 0 : index
    %220 = vector.load %arg22[%c1_131, %c0_132, %c0_133] : memref<2x1x16xf32, #tpu.memory_space<vmem>>, vector<1x1x16xf32>
    %221 = vector.shape_cast %220 : vector<1x1x16xf32> to vector<1x16xf32>
    %222 = arith.truncf %162 : vector<16x32xf32> to vector<16x32xbf16>
    %cst_134 = arith.constant dense<0.000000e+00> : vector<16x16xf32>
    %223 = tpu.matmul %222, %219, %cst_134 {dimension_numbers = #tpu.dot_dimension_numbers<[1], [0], [0], [1], [0, 0, 1, 1], [], []>} : vector<16x32xbf16>, vector<32x16xbf16>, vector<16x16xf32> -> vector<16x16xf32>
    %224 = vector.broadcast %221 : vector<1x16xf32> to vector<16x16xf32>
    %225 = arith.addf %223, %224 : vector<16x16xf32>
    %226 = vector.shape_cast %225 : vector<16x16xf32> to vector<2x8x16xf32>
    %c1_135 = arith.constant 1 : index
    %c0_136 = arith.constant 0 : index
    %c0_137 = arith.constant 0 : index
    %227 = vector.load %arg20[%c1_135, %c0_136, %c0_137] : memref<2x32x16xbf16, #tpu.memory_space<vmem>>, vector<1x32x16xbf16>
    %228 = vector.shape_cast %227 : vector<1x32x16xbf16> to vector<32x16xbf16>
    %c1_138 = arith.constant 1 : index
    %c0_139 = arith.constant 0 : index
    %c0_140 = arith.constant 0 : index
    %229 = vector.load %arg23[%c1_138, %c0_139, %c0_140] : memref<2x1x16xf32, #tpu.memory_space<vmem>>, vector<1x1x16xf32>
    %230 = vector.shape_cast %229 : vector<1x1x16xf32> to vector<1x16xf32>
    %231 = arith.truncf %162 : vector<16x32xf32> to vector<16x32xbf16>
    %cst_141 = arith.constant dense<0.000000e+00> : vector<16x16xf32>
    %232 = tpu.matmul %231, %228, %cst_141 {dimension_numbers = #tpu.dot_dimension_numbers<[1], [0], [0], [1], [0, 0, 1, 1], [], []>} : vector<16x32xbf16>, vector<32x16xbf16>, vector<16x16xf32> -> vector<16x16xf32>
    %233 = vector.broadcast %230 : vector<1x16xf32> to vector<16x16xf32>
    %234 = arith.addf %232, %233 : vector<16x16xf32>
    %235 = vector.shape_cast %234 : vector<16x16xf32> to vector<2x8x16xf32>
    "tpu.trace_start"() <{level = 10 : i32, message = "bqd,bkd->bqk"}> : () -> ()
    %cst_142 = arith.constant dense<0.000000e+00> : vector<2x8x8xf32>
    %236 = tpu.matmul %217, %226, %cst_142 {dimension_numbers = #tpu.dot_dimension_numbers<[2], [2], [1], [1], [0, 0, 0, 1, 1, 1], [0], [0]>} : vector<2x8x16xf32>, vector<2x8x16xf32>, vector<2x8x8xf32> -> vector<2x8x8xf32>
    "tpu.trace_stop"() : () -> ()
    %cst_143 = arith.constant 2.500000e-01 : f32
    %237 = vector.broadcast %cst_143 : f32 to vector<2x8x8xf32>
    %238 = arith.mulf %236, %237 : vector<2x8x8xf32>
    %cst_144 = arith.constant dense<0xFF800000> : vector<2x8xf32>
    %239 = vector.multi_reduction <maximumf>, %238, %cst_144 [2] : vector<2x8x8xf32> to vector<2x8xf32>
    %240 = vector.shape_cast %239 : vector<2x8xf32> to vector<2x8x1xf32>
    %241 = vector.broadcast %240 : vector<2x8x1xf32> to vector<2x8x8xf32>
    %242 = arith.subf %238, %241 : vector<2x8x8xf32>
    %243 = math.exp %242 : vector<2x8x8xf32>
    %cst_145 = arith.constant dense<0.000000e+00> : vector<2x8xf32>
    %244 = vector.multi_reduction <add>, %243, %cst_145 [2] : vector<2x8x8xf32> to vector<2x8xf32>
    %245 = vector.shape_cast %244 : vector<2x8xf32> to vector<2x8x1xf32>
    %246 = tpu.reciprocal %245 {approx = true} : vector<2x8x1xf32> -> vector<2x8x1xf32>
    %247 = vector.broadcast %246 : vector<2x8x1xf32> to vector<2x8x8xf32>
    %248 = arith.mulf %243, %247 : vector<2x8x8xf32>
    "tpu.trace_start"() <{level = 10 : i32, message = "bqk,bkd->bqd"}> : () -> ()
    %cst_146 = arith.constant dense<0.000000e+00> : vector<2x8x16xf32>
    %249 = tpu.matmul %248, %235, %cst_146 {dimension_numbers = #tpu.dot_dimension_numbers<[2], [1], [1], [2], [0, 0, 0, 1, 1, 2], [0], [0]>} : vector<2x8x8xf32>, vector<2x8x16xf32>, vector<2x8x16xf32> -> vector<2x8x16xf32>
    "tpu.trace_stop"() : () -> ()
    %250 = vector.shape_cast %249 : vector<2x8x16xf32> to vector<16x16xf32>
    %c1_147 = arith.constant 1 : index
    %c0_148 = arith.constant 0 : index
    %c0_149 = arith.constant 0 : index
    %251 = vector.load %arg24[%c1_147, %c0_148, %c0_149] : memref<2x16x32xbf16, #tpu.memory_space<vmem>>, vector<1x16x32xbf16>
    %252 = vector.shape_cast %251 : vector<1x16x32xbf16> to vector<16x32xbf16>
    %253 = arith.truncf %250 : vector<16x16xf32> to vector<16x16xbf16>
    %cst_150 = arith.constant dense<0.000000e+00> : vector<16x32xf32>
    %254 = tpu.matmul %253, %252, %cst_150 {dimension_numbers = #tpu.dot_dimension_numbers<[1], [0], [0], [1], [0, 0, 1, 1], [], []>} : vector<16x16xbf16>, vector<16x32xbf16>, vector<16x32xf32> -> vector<16x32xf32>
    %cst_151 = arith.constant 0.000000e+00 : f32
    %255 = vector.broadcast %cst_151 : f32 to vector<16x32xf32>
    %256 = arith.addf %255, %208 : vector<16x32xf32>
    %257 = arith.addf %256, %254 : vector<16x32xf32>
    %c0_152 = arith.constant 0 : index
    %c0_153 = arith.constant 0 : index
    %258 = vector.load %arg25[%c0_152, %c0_153] : memref<1x32xf32, #tpu.memory_space<vmem>>, vector<1x32xf32>
    %259 = vector.broadcast %258 : vector<1x32xf32> to vector<16x32xf32>
    %260 = arith.addf %257, %259 : vector<16x32xf32>
    %261 = arith.addf %162, %260 : vector<16x32xf32>
    %c0_154 = arith.constant 0 : index
    %c0_155 = arith.constant 0 : index
    %262 = vector.load %arg26[%c0_154, %c0_155] : memref<1x32xf32, #tpu.memory_space<vmem>>, vector<1x32xf32>
    %c0_156 = arith.constant 0 : index
    %c0_157 = arith.constant 0 : index
    %263 = vector.load %arg27[%c0_156, %c0_157] : memref<1x32xf32, #tpu.memory_space<vmem>>, vector<1x32xf32>
    %cst_158 = arith.constant dense<0.000000e+00> : vector<16xf32>
    %264 = vector.multi_reduction <add>, %261, %cst_158 [1] : vector<16x32xf32> to vector<16xf32>
    %265 = vector.shape_cast %264 : vector<16xf32> to vector<16x1xf32>
    %cst_159 = arith.constant 3.200000e+01 : f32
    %266 = vector.broadcast %cst_159 : f32 to vector<16x1xf32>
    %267 = arith.divf %265, %266 : vector<16x1xf32>
    %268 = vector.broadcast %267 : vector<16x1xf32> to vector<16x32xf32>
    %269 = arith.subf %261, %268 : vector<16x32xf32>
    %270 = arith.mulf %269, %269 : vector<16x32xf32>
    %cst_160 = arith.constant dense<0.000000e+00> : vector<16xf32>
    %271 = vector.multi_reduction <add>, %270, %cst_160 [1] : vector<16x32xf32> to vector<16xf32>
    %272 = vector.shape_cast %271 : vector<16xf32> to vector<16x1xf32>
    %cst_161 = arith.constant 3.200000e+01 : f32
    %273 = vector.broadcast %cst_161 : f32 to vector<16x1xf32>
    %274 = arith.divf %272, %273 : vector<16x1xf32>
    %275 = vector.broadcast %267 : vector<16x1xf32> to vector<16x32xf32>
    %276 = arith.subf %261, %275 : vector<16x32xf32>
    %cst_162 = arith.constant 9.99999974E-6 : f32
    %277 = vector.broadcast %cst_162 : f32 to vector<16x1xf32>
    %278 = arith.addf %274, %277 : vector<16x1xf32>
    %279 = math.rsqrt %278 : vector<16x1xf32>
    %280 = vector.broadcast %279 : vector<16x1xf32> to vector<16x32xf32>
    %281 = arith.mulf %276, %280 : vector<16x32xf32>
    %282 = vector.broadcast %262 : vector<1x32xf32> to vector<16x32xf32>
    %283 = arith.mulf %281, %282 : vector<16x32xf32>
    %284 = vector.broadcast %263 : vector<1x32xf32> to vector<16x32xf32>
    %285 = arith.addf %283, %284 : vector<16x32xf32>
    %c0_163 = arith.constant 0 : index
    %c0_164 = arith.constant 0 : index
    %286 = vector.load %arg28[%c0_163, %c0_164] : memref<32x2048xbf16, #tpu.memory_space<vmem>>, vector<32x2048xbf16>
    %c0_165 = arith.constant 0 : index
    %c0_166 = arith.constant 0 : index
    %287 = vector.load %arg29[%c0_165, %c0_166] : memref<1x2048xf32, #tpu.memory_space<vmem>>, vector<1x2048xf32>
    %288 = arith.truncf %285 : vector<16x32xf32> to vector<16x32xbf16>
    %cst_167 = arith.constant dense<0.000000e+00> : vector<16x2048xf32>
    %289 = tpu.matmul %288, %286, %cst_167 {dimension_numbers = #tpu.dot_dimension_numbers<[1], [0], [0], [1], [0, 0, 1, 1], [], []>} : vector<16x32xbf16>, vector<32x2048xbf16>, vector<16x2048xf32> -> vector<16x2048xf32>
    %290 = vector.broadcast %287 : vector<1x2048xf32> to vector<16x2048xf32>
    %291 = arith.addf %289, %290 : vector<16x2048xf32>
    %cst_168 = arith.constant 0.000000e+00 : f32
    %292 = vector.broadcast %cst_168 : f32 to vector<16x2048xf32>
    %293 = arith.maximumf %291, %292 : vector<16x2048xf32>
    %c0_169 = arith.constant 0 : index
    %c0_170 = arith.constant 0 : index
    %294 = vector.load %arg30[%c0_169, %c0_170] : memref<2048x32xbf16, #tpu.memory_space<vmem>>, vector<2048x32xbf16>
    %c0_171 = arith.constant 0 : index
    %c0_172 = arith.constant 0 : index
    %295 = vector.load %arg31[%c0_171, %c0_172] : memref<1x32xf32, #tpu.memory_space<vmem>>, vector<1x32xf32>
    %296 = arith.truncf %293 : vector<16x2048xf32> to vector<16x2048xbf16>
    %cst_173 = arith.constant dense<0.000000e+00> : vector<16x32xf32>
    %297 = tpu.matmul %296, %294, %cst_173 {dimension_numbers = #tpu.dot_dimension_numbers<[1], [0], [0], [1], [0, 0, 1, 1], [], []>} : vector<16x2048xbf16>, vector<2048x32xbf16>, vector<16x32xf32> -> vector<16x32xf32>
    %298 = vector.broadcast %295 : vector<1x32xf32> to vector<16x32xf32>
    %299 = arith.addf %297, %298 : vector<16x32xf32>
    %300 = arith.addf %285, %299 : vector<16x32xf32>
    %c0_174 = arith.constant 0 : index
    %c0_175 = arith.constant 0 : index
    %301 = vector.load %arg32[%c0_174, %c0_175] : memref<1x32xf32, #tpu.memory_space<vmem>>, vector<1x32xf32>
    %c0_176 = arith.constant 0 : index
    %c0_177 = arith.constant 0 : index
    %302 = vector.load %arg33[%c0_176, %c0_177] : memref<1x32xf32, #tpu.memory_space<vmem>>, vector<1x32xf32>
    %cst_178 = arith.constant dense<0.000000e+00> : vector<16xf32>
    %303 = vector.multi_reduction <add>, %300, %cst_178 [1] : vector<16x32xf32> to vector<16xf32>
    %304 = vector.shape_cast %303 : vector<16xf32> to vector<16x1xf32>
    %cst_179 = arith.constant 3.200000e+01 : f32
    %305 = vector.broadcast %cst_179 : f32 to vector<16x1xf32>
    %306 = arith.divf %304, %305 : vector<16x1xf32>
    %307 = vector.broadcast %306 : vector<16x1xf32> to vector<16x32xf32>
    %308 = arith.subf %300, %307 : vector<16x32xf32>
    %309 = arith.mulf %308, %308 : vector<16x32xf32>
    %cst_180 = arith.constant dense<0.000000e+00> : vector<16xf32>
    %310 = vector.multi_reduction <add>, %309, %cst_180 [1] : vector<16x32xf32> to vector<16xf32>
    %311 = vector.shape_cast %310 : vector<16xf32> to vector<16x1xf32>
    %cst_181 = arith.constant 3.200000e+01 : f32
    %312 = vector.broadcast %cst_181 : f32 to vector<16x1xf32>
    %313 = arith.divf %311, %312 : vector<16x1xf32>
    %314 = vector.broadcast %306 : vector<16x1xf32> to vector<16x32xf32>
    %315 = arith.subf %300, %314 : vector<16x32xf32>
    %cst_182 = arith.constant 9.99999974E-6 : f32
    %316 = vector.broadcast %cst_182 : f32 to vector<16x1xf32>
    %317 = arith.addf %313, %316 : vector<16x1xf32>
    %318 = math.rsqrt %317 : vector<16x1xf32>
    %319 = vector.broadcast %318 : vector<16x1xf32> to vector<16x32xf32>
    %320 = arith.mulf %315, %319 : vector<16x32xf32>
    %321 = vector.broadcast %301 : vector<1x32xf32> to vector<16x32xf32>
    %322 = arith.mulf %320, %321 : vector<16x32xf32>
    %323 = vector.broadcast %302 : vector<1x32xf32> to vector<16x32xf32>
    %324 = arith.addf %322, %323 : vector<16x32xf32>
    %c0_183 = arith.constant 0 : index
    %c0_184 = arith.constant 0 : index
    %325 = vector.load %arg36[%c0_183, %c0_184] : memref<16x32xf32, #tpu.memory_space<vmem>>, vector<16x32xf32>
    tpu.vector_store %arg36[%c0_183, %c0_184], %324 {strides = array<i32>} : memref<16x32xf32, #tpu.memory_space<vmem>>, vector<16x32xf32>,
    %326 = vector.shape_cast %324 : vector<16x32xf32> to vector<2x8x32xf32>
    %cst_185 = arith.constant dense<0xFF800000> : vector<2x32xf32>
    %327 = vector.multi_reduction <maximumf>, %326, %cst_185 [1] : vector<2x8x32xf32> to vector<2x32xf32>
    %c0_186 = arith.constant 0 : index
    %c0_187 = arith.constant 0 : index
    %328 = vector.load %arg37[%c0_186, %c0_187] : memref<2x32xf32, #tpu.memory_space<vmem>>, vector<2x32xf32>
    tpu.vector_store %arg37[%c0_186, %c0_187], %327 {strides = array<i32>} : memref<2x32xf32, #tpu.memory_space<vmem>>, vector<2x32xf32>,
    %c0_188 = arith.constant 0 : index
    %c0_189 = arith.constant 0 : index
    %329 = vector.load %arg34[%c0_188, %c0_189] : memref<32x128xbf16, #tpu.memory_space<vmem>>, vector<32x128xbf16>
    %c0_190 = arith.constant 0 : index
    %c0_191 = arith.constant 0 : index
    %330 = vector.load %arg35[%c0_190, %c0_191] : memref<1x128xf32, #tpu.memory_space<vmem>>, vector<1x128xf32>
    %331 = arith.truncf %327 : vector<2x32xf32> to vector<2x32xbf16>
    %cst_192 = arith.constant dense<0.000000e+00> : vector<2x128xf32>
    %332 = tpu.matmul %331, %329, %cst_192 {dimension_numbers = #tpu.dot_dimension_numbers<[1], [0], [0], [1], [0, 0, 1, 1], [], []>} : vector<2x32xbf16>, vector<32x128xbf16>, vector<2x128xf32> -> vector<2x128xf32>
    %333 = vector.broadcast %330 : vector<1x128xf32> to vector<2x128xf32>
    %334 = arith.addf %332, %333 : vector<2x128xf32>
    %c0_193 = arith.constant 0 : index
    %c0_194 = arith.constant 0 : index
    %335 = vector.load %arg38[%c0_193, %c0_194] : memref<2x128xf32, #tpu.memory_space<vmem>>, vector<2x128xf32>
    tpu.vector_store %arg38[%c0_193, %c0_194], %334 {strides = array<i32>} : memref<2x128xf32, #tpu.memory_space<vmem>>, vector<2x128xf32>,
    return
  }
  func.func @transform_0(%arg0: i32) -> (i32, i32) {
    %c0_i32 = arith.constant 0 : i32
    %c0_i32_0 = arith.constant 0 : i32
    return %arg0, %c0_i32 : i32, i32
  }
  func.func @transform_1(%arg0: i32) -> (i32, i32, i32) {
    %c0_i32 = arith.constant 0 : i32
    %c0_i32_0 = arith.constant 0 : i32
    %c0_i32_1 = arith.constant 0 : i32
    %c0_i32_2 = arith.constant 0 : i32
    return %c0_i32, %c0_i32_0, %c0_i32_1 : i32, i32, i32
  }
  func.func @transform_2(%arg0: i32) -> (i32, i32, i32) {
    %c0_i32 = arith.constant 0 : i32
    %c0_i32_0 = arith.constant 0 : i32
    %c0_i32_1 = arith.constant 0 : i32
    %c0_i32_2 = arith.constant 0 : i32
    return %c0_i32, %c0_i32_0, %c0_i32_1 : i32, i32, i32
  }
  func.func @transform_3(%arg0: i32) -> (i32, i32, i32) {
    %c0_i32 = arith.constant 0 : i32
    %c0_i32_0 = arith.constant 0 : i32
    %c0_i32_1 = arith.constant 0 : i32
    %c0_i32_2 = arith.constant 0 : i32
    return %c0_i32, %c0_i32_0, %c0_i32_1 : i32, i32, i32
  }
  func.func @transform_4(%arg0: i32) -> (i32, i32, i32) {
    %c0_i32 = arith.constant 0 : i32
    %c0_i32_0 = arith.constant 0 : i32
    %c0_i32_1 = arith.constant 0 : i32
    %c0_i32_2 = arith.constant 0 : i32
    return %c0_i32, %c0_i32_0, %c0_i32_1 : i32, i32, i32
  }
  func.func @transform_5(%arg0: i32) -> (i32, i32, i32) {
    %c0_i32 = arith.constant 0 : i32
    %c0_i32_0 = arith.constant 0 : i32
    %c0_i32_1 = arith.constant 0 : i32
    %c0_i32_2 = arith.constant 0 : i32
    return %c0_i32, %c0_i32_0, %c0_i32_1 : i32, i32, i32
  }
  func.func @transform_6(%arg0: i32) -> (i32, i32, i32) {
    %c0_i32 = arith.constant 0 : i32
    %c0_i32_0 = arith.constant 0 : i32
    %c0_i32_1 = arith.constant 0 : i32
    %c0_i32_2 = arith.constant 0 : i32
    return %c0_i32, %c0_i32_0, %c0_i32_1 : i32, i32, i32
  }
  func.func @transform_7(%arg0: i32) -> (i32, i32, i32) {
    %c0_i32 = arith.constant 0 : i32
    %c0_i32_0 = arith.constant 0 : i32
    %c0_i32_1 = arith.constant 0 : i32
    %c0_i32_2 = arith.constant 0 : i32
    return %c0_i32, %c0_i32_0, %c0_i32_1 : i32, i32, i32
  }
  func.func @transform_8(%arg0: i32) -> (i32, i32) {
    %c0_i32 = arith.constant 0 : i32
    %c0_i32_0 = arith.constant 0 : i32
    %c0_i32_1 = arith.constant 0 : i32
    return %c0_i32, %c0_i32_0 : i32, i32
  }
  func.func @transform_9(%arg0: i32) -> (i32, i32) {
    %c0_i32 = arith.constant 0 : i32
    %c0_i32_0 = arith.constant 0 : i32
    %c0_i32_1 = arith.constant 0 : i32
    return %c0_i32, %c0_i32_0 : i32, i32
  }
  func.func @transform_10(%arg0: i32) -> (i32, i32) {
    %c0_i32 = arith.constant 0 : i32
    %c0_i32_0 = arith.constant 0 : i32
    %c0_i32_1 = arith.constant 0 : i32
    return %c0_i32, %c0_i32_0 : i32, i32
  }
  func.func @transform_11(%arg0: i32) -> (i32, i32) {
    %c0_i32 = arith.constant 0 : i32
    %c0_i32_0 = arith.constant 0 : i32
    %c0_i32_1 = arith.constant 0 : i32
    return %c0_i32, %c0_i32_0 : i32, i32
  }
  func.func @transform_12(%arg0: i32) -> (i32, i32) {
    %c0_i32 = arith.constant 0 : i32
    %c0_i32_0 = arith.constant 0 : i32
    %c0_i32_1 = arith.constant 0 : i32
    return %c0_i32, %c0_i32_0 : i32, i32
  }
  func.func @transform_13(%arg0: i32) -> (i32, i32) {
    %c0_i32 = arith.constant 0 : i32
    %c0_i32_0 = arith.constant 0 : i32
    %c0_i32_1 = arith.constant 0 : i32
    return %c0_i32, %c0_i32_0 : i32, i32
  }
  func.func @transform_14(%arg0: i32) -> (i32, i32) {
    %c0_i32 = arith.constant 0 : i32
    %c0_i32_0 = arith.constant 0 : i32
    %c0_i32_1 = arith.constant 0 : i32
    return %c0_i32, %c0_i32_0 : i32, i32
  }
  func.func @transform_15(%arg0: i32) -> (i32, i32) {
    %c0_i32 = arith.constant 0 : i32
    %c0_i32_0 = arith.constant 0 : i32
    %c0_i32_1 = arith.constant 0 : i32
    return %c0_i32, %c0_i32_0 : i32, i32
  }
  func.func @transform_16(%arg0: i32) -> (i32, i32) {
    %c0_i32 = arith.constant 0 : i32
    %c0_i32_0 = arith.constant 0 : i32
    %c0_i32_1 = arith.constant 0 : i32
    return %c0_i32, %c0_i32_0 : i32, i32
  }
  func.func @transform_17(%arg0: i32) -> (i32, i32, i32) {
    %c0_i32 = arith.constant 0 : i32
    %c0_i32_0 = arith.constant 0 : i32
    %c0_i32_1 = arith.constant 0 : i32
    %c0_i32_2 = arith.constant 0 : i32
    return %c0_i32, %c0_i32_0, %c0_i32_1 : i32, i32, i32
  }
  func.func @transform_18(%arg0: i32) -> (i32, i32, i32) {
    %c0_i32 = arith.constant 0 : i32
    %c0_i32_0 = arith.constant 0 : i32
    %c0_i32_1 = arith.constant 0 : i32
    %c0_i32_2 = arith.constant 0 : i32
    return %c0_i32, %c0_i32_0, %c0_i32_1 : i32, i32, i32
  }
  func.func @transform_19(%arg0: i32) -> (i32, i32, i32) {
    %c0_i32 = arith.constant 0 : i32
    %c0_i32_0 = arith.constant 0 : i32
    %c0_i32_1 = arith.constant 0 : i32
    %c0_i32_2 = arith.constant 0 : i32
    return %c0_i32, %c0_i32_0, %c0_i32_1 : i32, i32, i32
  }
  func.func @transform_20(%arg0: i32) -> (i32, i32, i32) {
    %c0_i32 = arith.constant 0 : i32
    %c0_i32_0 = arith.constant 0 : i32
    %c0_i32_1 = arith.constant 0 : i32
    %c0_i32_2 = arith.constant 0 : i32
    return %c0_i32, %c0_i32_0, %c0_i32_1 : i32, i32, i32
  }
  func.func @transform_21(%arg0: i32) -> (i32, i32, i32) {
    %c0_i32 = arith.constant 0 : i32
    %c0_i32_0 = arith.constant 0 : i32
    %c0_i32_1 = arith.constant 0 : i32
    %c0_i32_2 = arith.constant 0 : i32
    return %c0_i32, %c0_i32_0, %c0_i32_1 : i32, i32, i32
  }
  func.func @transform_22(%arg0: i32) -> (i32, i32, i32) {
    %c0_i32 = arith.constant 0 : i32
    %c0_i32_0 = arith.constant 0 : i32
    %c0_i32_1 = arith.constant 0 : i32
    %c0_i32_2 = arith.constant 0 : i32
    return %c0_i32, %c0_i32_0, %c0_i32_1 : i32, i32, i32
  }
  func.func @transform_23(%arg0: i32) -> (i32, i32, i32) {
    %c0_i32 = arith.constant 0 : i32
    %c0_i32_0 = arith.constant 0 : i32
    %c0_i32_1 = arith.constant 0 : i32
    %c0_i32_2 = arith.constant 0 : i32
    return %c0_i32, %c0_i32_0, %c0_i32_1 : i32, i32, i32
  }
  func.func @transform_24(%arg0: i32) -> (i32, i32) {
    %c0_i32 = arith.constant 0 : i32
    %c0_i32_0 = arith.constant 0 : i32
    %c0_i32_1 = arith.constant 0 : i32
    return %c0_i32, %c0_i32_0 : i32, i32
  }
  func.func @transform_25(%arg0: i32) -> (i32, i32) {
    %c0_i32 = arith.constant 0 : i32
    %c0_i32_0 = arith.constant 0 : i32
    %c0_i32_1 = arith.constant 0 : i32
    return %c0_i32, %c0_i32_0 : i32, i32
  }
  func.func @transform_26(%arg0: i32) -> (i32, i32) {
    %c0_i32 = arith.constant 0 : i32
    %c0_i32_0 = arith.constant 0 : i32
    %c0_i32_1 = arith.constant 0 : i32
    return %c0_i32, %c0_i32_0 : i32, i32
  }
  func.func @transform_27(%arg0: i32) -> (i32, i32) {
    %c0_i32 = arith.constant 0 : i32
    %c0_i32_0 = arith.constant 0 : i32
    %c0_i32_1 = arith.constant 0 : i32
    return %c0_i32, %c0_i32_0 : i32, i32
  }
  func.func @transform_28(%arg0: i32) -> (i32, i32) {
    %c0_i32 = arith.constant 0 : i32
    %c0_i32_0 = arith.constant 0 : i32
    %c0_i32_1 = arith.constant 0 : i32
    return %c0_i32, %c0_i32_0 : i32, i32
  }
  func.func @transform_29(%arg0: i32) -> (i32, i32) {
    %c0_i32 = arith.constant 0 : i32
    %c0_i32_0 = arith.constant 0 : i32
    %c0_i32_1 = arith.constant 0 : i32
    return %c0_i32, %c0_i32_0 : i32, i32
  }
  func.func @transform_30(%arg0: i32) -> (i32, i32) {
    %c0_i32 = arith.constant 0 : i32
    %c0_i32_0 = arith.constant 0 : i32
    %c0_i32_1 = arith.constant 0 : i32
    return %c0_i32, %c0_i32_0 : i32, i32
  }
  func.func @transform_31(%arg0: i32) -> (i32, i32) {
    %c0_i32 = arith.constant 0 : i32
    %c0_i32_0 = arith.constant 0 : i32
    %c0_i32_1 = arith.constant 0 : i32
    return %c0_i32, %c0_i32_0 : i32, i32
  }
  func.func @transform_32(%arg0: i32) -> (i32, i32) {
    %c0_i32 = arith.constant 0 : i32
    %c0_i32_0 = arith.constant 0 : i32
    %c0_i32_1 = arith.constant 0 : i32
    return %c0_i32, %c0_i32_0 : i32, i32
  }
  func.func @transform_33(%arg0: i32) -> (i32, i32) {
    %c0_i32 = arith.constant 0 : i32
    %c0_i32_0 = arith.constant 0 : i32
    %c0_i32_1 = arith.constant 0 : i32
    return %c0_i32, %c0_i32_0 : i32, i32
  }
  func.func @transform_34(%arg0: i32) -> (i32, i32) {
    %c0_i32 = arith.constant 0 : i32
    %c0_i32_0 = arith.constant 0 : i32
    %c0_i32_1 = arith.constant 0 : i32
    return %c0_i32, %c0_i32_0 : i32, i32
  }
  func.func @transform_35(%arg0: i32) -> (i32, i32) {
    %c0_i32 = arith.constant 0 : i32
    %c0_i32_0 = arith.constant 0 : i32
    return %arg0, %c0_i32 : i32, i32
  }
  func.func @transform_36(%arg0: i32) -> (i32, i32) {
    %c0_i32 = arith.constant 0 : i32
    %c0_i32_0 = arith.constant 0 : i32
    return %arg0, %c0_i32 : i32, i32
  }
  func.func @transform_37(%arg0: i32) -> (i32, i32) {
    %c0_i32 = arith.constant 0 : i32
    %c0_i32_0 = arith.constant 0 : i32
    return %arg0, %c0_i32 : i32, i32
  }
}

module attributes {stable_mosaic.version = 11 : i64} {
  func.func @_item_head_kernel(%arg0: memref<8x32xf32, #tpu.memory_space<vmem>>, %arg1: memref<32x128xbf16, #tpu.memory_space<vmem>>, %arg2: memref<1x128xf32, #tpu.memory_space<vmem>>, %arg3: memref<8x128xf32, #tpu.memory_space<vmem>>) attributes {dimension_semantics = [], scalar_prefetch = 0 : i64, scratch_operands = 0 : i64, tpu.core_type = #tpu.core_type<tc>} {
    %c0 = arith.constant 0 : index
    %c0_0 = arith.constant 0 : index
    %0 = vector.load %arg0[%c0, %c0_0] : memref<8x32xf32, #tpu.memory_space<vmem>>, vector<8x32xf32>
    %1 = arith.truncf %0 : vector<8x32xf32> to vector<8x32xbf16>
    %c0_1 = arith.constant 0 : index
    %c0_2 = arith.constant 0 : index
    %2 = vector.load %arg1[%c0_1, %c0_2] : memref<32x128xbf16, #tpu.memory_space<vmem>>, vector<32x128xbf16>
    %cst = arith.constant dense<0.000000e+00> : vector<8x128xf32>
    %3 = tpu.matmul %1, %2, %cst {dimension_numbers = #tpu.dot_dimension_numbers<[1], [0], [0], [1], [0, 0, 1, 1], [], []>} : vector<8x32xbf16>, vector<32x128xbf16>, vector<8x128xf32> -> vector<8x128xf32>
    %c0_3 = arith.constant 0 : index
    %c0_4 = arith.constant 0 : index
    %4 = vector.load %arg2[%c0_3, %c0_4] : memref<1x128xf32, #tpu.memory_space<vmem>>, vector<1x128xf32>
    %5 = vector.broadcast %4 : vector<1x128xf32> to vector<8x128xf32>
    %6 = arith.addf %3, %5 : vector<8x128xf32>
    %c0_5 = arith.constant 0 : index
    %c0_6 = arith.constant 0 : index
    %7 = vector.load %arg3[%c0_5, %c0_6] : memref<8x128xf32, #tpu.memory_space<vmem>>, vector<8x128xf32>
    tpu.vector_store %arg3[%c0_5, %c0_6], %6 {strides = array<i32>} : memref<8x128xf32, #tpu.memory_space<vmem>>, vector<8x128xf32>,
    return
  }
}

</mosaic_0001>

<llo_original>
// kernel: forward.3
$region0: #{forward.3}
  #allocation0 [shape = 'u32[]', space=smem, size = 0x4, offset = 0x4, fixed_abs, tag = 'smem constant byte address 0x4 - core index']
  #allocation1 [shape = 'u32[144,128]{1,0:T(1,128)}', space=vmem, size = 0x12000, scoped, tag = 'internal scratch']
  %s0 = inlined_call_operand.vmem [shape: f32[8,32], index: 0, kind: input, shape index: {}]
  %s1 = inlined_call_operand.vmem [shape: bf16[32,128], index: 1, kind: input, shape index: {}]
  %s2 = inlined_call_operand.vmem [shape: f32[1,128], index: 2, kind: input, shape index: {}]
  %s3 = inlined_call_operand.vmem [shape: f32[8,128], index: 3, kind: output, shape index: {}]
  %s4 = sld [smem:[#allocation0]]
  $region22: #{forward.3} parent=0
    _
  %s6 = ssub.s32 1, %s4
  %s7 = scalar_select 0, %s6, %s4
  // Predicated region
  $region2: #{forward.3} parent=0 // pred_check
    _
  $region3: #{forward.3} parent=0 // pred_check_branch
    %9 = sbr.rel (0) target = $region5
  $region4: #{forward.3} parent=0 // pred_region
    _
  $region5: #{forward.3} parent=0 // pred_fallthru
    _
  // Predicated region
  $region6: #{forward.3} parent=0 // pred_check
    _
  $region7: #{forward.3} parent=0 // pred_check_branch
    %11 = sbr.rel (0) target = $region9
  $region8: #{forward.3} parent=0 // pred_region
    _
  $region9: #{forward.3} parent=0 // pred_fallthru
    _
  // Predicated region
  $region10: #{forward.3} parent=0 // pred_check
    _
  $region11: #{forward.3} parent=0 // pred_check_branch
    %13 = sbr.rel (0) target = $region13
  $region12: #{forward.3} parent=0 // pred_region
    _
  $region13: #{forward.3} parent=0 // pred_fallthru
    _
  %v15 = vld [vmem:[%s0] sm:$0xff]
  %v16 = vpack.c.bf16 %v15, %v15
  %v17 = vld [vmem:[%s1] sm:$0xf]
  %v18 = vld [vmem:[%s1 + $0x4] sm:$0xf]
  %v19 = vld [vmem:[%s1 + $0x8] sm:$0xf]
  %v20 = vld [vmem:[%s1 + $0xc] sm:$0xf]
  %v21 = vld [vmem:[%s2] sm:$0x1]
  %v23 = vlaneseq
  %v24 = vshrl.u32 %v23, 7
  %v25 = vsub.s32 0, %v24
  %v26 = vrot.slane %v21, %v25
  %v32 = vunpack.c.l.b16 %v17
  %v33 = vunpack.c.l.b16 %v18
  %v34 = vunpack.c.l.b16 %v19
  %v35 = vunpack.c.l.b16 %v20
  %v36 = vpack.c.b16 %v33, %v32
  %v37 = vpack.c.b16 %v35, %v34
  %vm40 = vcmask 261120
  %v42 = vsel %vm40, %v16, 0
  %44 = vmatprep.subr.bf16.mxu0 0
  %45 = vmatpush1.bf16.msra.mxu0 %v36
  %46 = vmatprep.subr.bf16.mxu0 0
  %47 = vmatpush1.bf16.msra.mxu0 %v37
  %48 = vmatprep.subr.bf16.mxu0 0
  %49 = vmatpush1.bf16.msra.mxu0 0
  %50 = vmatprep.subr.bf16.mxu0 0
  %51 = vmatpush1.bf16.msra.mxu0 0
  %52 = vmatprep.subr.bf16.mxu0 0
  %53 = vmatpush1.bf16.msra.mxu0 0
  %54 = vmatprep.subr.bf16.mxu0 0
  %55 = vmatpush1.bf16.msra.mxu0 0
  %56 = vmatprep.subr.bf16.mxu0 0
  %57 = vmatpush1.bf16.msra.mxu0 0
  %58 = vmatprep.subr.bf16.mxu0 0
  %59 = vmatpush1.bf16.msra.mxu0 0
  %60 = vmatprep.subr.bf16.mxu0 0
  %61 = vmatpush1.bf16.msra.mxu0 0
  %62 = vmatprep.subr.bf16.mxu0 0
  %63 = vmatpush1.bf16.msra.mxu0 0
  %64 = vmatprep.subr.bf16.mxu0 0
  %65 = vmatpush1.bf16.msra.mxu0 0
  %66 = vmatprep.subr.bf16.mxu0 0
  %67 = vmatpush1.bf16.msra.mxu0 0
  %68 = vmatprep.subr.bf16.mxu0 0
  %69 = vmatpush1.bf16.msra.mxu0 0
  %70 = vmatprep.subr.bf16.mxu0 0
  %71 = vmatpush1.bf16.msra.mxu0 0
  %72 = vmatprep.subr.bf16.mxu0 0
  %73 = vmatpush1.bf16.msra.mxu0 0
  %74 = vmatprep.subr.bf16.mxu0 0
  %75 = vmatpush1.bf16.msra.mxu0 0
  %76 = vmatprep.mubr.bf16.mxu0 0
  %77 = vmatmul.mubr.bf16.gmra.mrb[0].mxu0 %v42
  %v78 = vpop.f32.mrb[0].mxu0
  %v79 = vadd.f32 %v26, %v78
  %v80 = vpop.f32.mrb[0].mxu0
  %v81 = vpop.f32.mrb[0].mxu0
  %v82 = vpop.f32.mrb[0].mxu0
  %83 = vdwg.mxu0
  %84 = vst [vmem:[%s3] sm:$0xff] %v79
  // Predicated region
  $region14: #{forward.3} parent=0 // pred_check
    _
  $region15: #{forward.3} parent=0 // pred_check_branch
    %86 = sbr.rel (0) target = $region17
  $region16: #{forward.3} parent=0 // pred_region
    _
  $region17: #{forward.3} parent=0 // pred_fallthru
    _
  // Predicated region
  $region18: #{forward.3} parent=0 // pred_check
    _
  $region19: #{forward.3} parent=0 // pred_check_branch
    %88 = sbr.rel (0) target = $region21
  $region20: #{forward.3} parent=0 // pred_region
    _
  $region21: #{forward.3} parent=0 // pred_fallthru
    _

// kernel: forward.2
$region0: #{forward.2}
  #allocation0 [shape = 'u32[]', space=smem, size = 0x4, offset = 0x4, fixed_abs, tag = 'smem constant byte address 0x4 - core index']
  #allocation1 [shape = 'u32[144,128]{1,0:T(1,128)}', space=vmem, size = 0x12000, scoped, tag = 'internal scratch']
  %s0 = inlined_call_operand.smem [shape: u32[38], index: -1, kind: input, shape index: {}]
  %s1 = sld [smem:[%s0]]
  %s2 = scalar_lea.smem %s0, 1
  %s3 = sld [smem:[%s2]]
  %s4 = scalar_lea.smem %s0, 2
  %s5 = sld [smem:[%s4]]
  %s6 = scalar_lea.smem %s0, 3
  %s7 = sld [smem:[%s6]]
  %s8 = scalar_lea.smem %s0, 4
  %s9 = sld [smem:[%s8]]
  %s10 = scalar_lea.smem %s0, 5
  %s11 = sld [smem:[%s10]]
  %s12 = scalar_lea.smem %s0, 6
  %s13 = sld [smem:[%s12]]
  %s14 = scalar_lea.smem %s0, 7
  %s15 = sld [smem:[%s14]]
  %s16 = scalar_lea.smem %s0, 8
  %s17 = sld [smem:[%s16]]
  %s18 = scalar_lea.smem %s0, 9
  %s19 = sld [smem:[%s18]]
  %s20 = scalar_lea.smem %s0, 10
  %s21 = sld [smem:[%s20]]
  %s22 = scalar_lea.smem %s0, 11
  %s23 = sld [smem:[%s22]]
  %s24 = scalar_lea.smem %s0, 12
  %s25 = sld [smem:[%s24]]
  %s26 = scalar_lea.smem %s0, 13
  %s27 = sld [smem:[%s26]]
  %s28 = scalar_lea.smem %s0, 14
  %s29 = sld [smem:[%s28]]
  %s30 = scalar_lea.smem %s0, 15
  %s31 = sld [smem:[%s30]]
  %s32 = scalar_lea.smem %s0, 16
  %s33 = sld [smem:[%s32]]
  %s34 = scalar_lea.smem %s0, 17
  %s35 = sld [smem:[%s34]]
  %s36 = scalar_lea.smem %s0, 18
  %s37 = sld [smem:[%s36]]
  %s38 = scalar_lea.smem %s0, 19
  %s39 = sld [smem:[%s38]]
  %s40 = scalar_lea.smem %s0, 20
  %s41 = sld [smem:[%s40]]
  %s42 = scalar_lea.smem %s0, 21
  %s43 = sld [smem:[%s42]]
  %s44 = scalar_lea.smem %s0, 22
  %s45 = sld [smem:[%s44]]
  %s46 = scalar_lea.smem %s0, 23
  %s47 = sld [smem:[%s46]]
  %s48 = scalar_lea.smem %s0, 24
  %s49 = sld [smem:[%s48]]
  %s50 = scalar_lea.smem %s0, 25
  %s51 = sld [smem:[%s50]]
  %s52 = scalar_lea.smem %s0, 26
  %s53 = sld [smem:[%s52]]
  %s54 = scalar_lea.smem %s0, 27
  %s55 = sld [smem:[%s54]]
  %s56 = scalar_lea.smem %s0, 28
  %s57 = sld [smem:[%s56]]
  %s58 = scalar_lea.smem %s0, 29
  %s59 = sld [smem:[%s58]]
  %s60 = scalar_lea.smem %s0, 30
  %s61 = sld [smem:[%s60]]
  %s62 = scalar_lea.smem %s0, 31
  %s63 = sld [smem:[%s62]]
  %s64 = scalar_lea.smem %s0, 32
  %s65 = sld [smem:[%s64]]
  %s66 = scalar_lea.smem %s0, 33
  %s67 = sld [smem:[%s66]]
  %s68 = scalar_lea.smem %s0, 34
  %s69 = sld [smem:[%s68]]
  %s70 = scalar_lea.smem %s0, 35
  %s71 = sld [smem:[%s70]]
  %s72 = scalar_lea.smem %s0, 36
  %s73 = sld [smem:[%s72]]
  %s74 = scalar_lea.smem %s0, 37
  %s75 = sld [smem:[%s74]]
  %76 = xla_tuple %s71, %s73, %s75
  %s77 = sld [smem:[#allocation0]]
  $region166: #{forward.2} parent=0
    _
  %s79 = ssub.s32 1, %s77
  %s80 = scalar_select 0, %s79, %s77
  $region1: #{forward.2} parent=0
    #allocation2 [shape = 'u8[1024]{0}', space=vmem, size = 0x400, scoped, tag = 'output window, operand 1, single buffered']
    #allocation3 [shape = 's32[1]{0}', space=sflag, size = 0x4, scoped, tag = 'scoped memory for forward.2']
    %81 = vsyncpa [#allocation3], 0
    // Predicated region
    $region2: #{forward.2} parent=1 // pred_check
      _
    $region3: #{forward.2} parent=1 // pred_check_branch
      %83 = sbr.rel (0) target = $region5
    $region4: #{forward.2} parent=1 // pred_region
      _
    $region5: #{forward.2} parent=1 // pred_fallthru
      _
    // Predicated region
    $region6: #{forward.2} parent=1 // pred_check
      _
    $region7: #{forward.2} parent=1 // pred_check_branch
      %85 = sbr.rel (0) target = $region9
    $region8: #{forward.2} parent=1 // pred_region
      _
    $region9: #{forward.2} parent=1 // pred_fallthru
      _
    // Predicated region
    $region10: #{forward.2} parent=1 // pred_check
      _
    $region11: #{forward.2} parent=1 // pred_check_branch
      %87 = sbr.rel (0) target = $region13
    $region12: #{forward.2} parent=1 // pred_region
      _
    $region13: #{forward.2} parent=1 // pred_fallthru
      _
    // Predicated region
    $region14: #{forward.2} parent=1 // pred_check
      _
    $region15: #{forward.2} parent=1 // pred_check_branch
      %89 = sbr.rel (0) target = $region17
    $region16: #{forward.2} parent=1 // pred_region
      _
    $region17: #{forward.2} parent=1 // pred_fallthru
      _
    // Predicated region
    $region18: #{forward.2} parent=1 // pred_check
      _
    $region19: #{forward.2} parent=1 // pred_check_branch
      %91 = sbr.rel (0) target = $region21
    $region20: #{forward.2} parent=1 // pred_region
      _
    $region21: #{forward.2} parent=1 // pred_fallthru
      _
    // Predicated region
    $region22: #{forward.2} parent=1 // pred_check
      _
    $region23: #{forward.2} parent=1 // pred_check_branch
      %93 = sbr.rel (0) target = $region25
    $region24: #{forward.2} parent=1 // pred_region
      _
    $region25: #{forward.2} parent=1 // pred_fallthru
      _
    // Predicated region
    $region26: #{forward.2} parent=1 // pred_check
      _
    $region27: #{forward.2} parent=1 // pred_check_branch
      %95 = sbr.rel (0) target = $region29
    $region28: #{forward.2} parent=1 // pred_region
      _
    $region29: #{forward.2} parent=1 // pred_fallthru
      _
    // Predicated region
    $region30: #{forward.2} parent=1 // pred_check
      _
    $region31: #{forward.2} parent=1 // pred_check_branch
      %97 = sbr.rel (0) target = $region33
    $region32: #{forward.2} parent=1 // pred_region
      _
    $region33: #{forward.2} parent=1 // pred_fallthru
      _
    // Predicated region
    $region34: #{forward.2} parent=1 // pred_check
      _
    $region35: #{forward.2} parent=1 // pred_check_branch
      %99 = sbr.rel (0) target = $region37
    $region36: #{forward.2} parent=1 // pred_region
      _
    $region37: #{forward.2} parent=1 // pred_fallthru
      _
    // Predicated region
    $region38: #{forward.2} parent=1 // pred_check
      _
    $region39: #{forward.2} parent=1 // pred_check_branch
      %101 = sbr.rel (0) target = $region41
    $region40: #{forward.2} parent=1 // pred_region
      _
    $region41: #{forward.2} parent=1 // pred_fallthru
      _
    // Predicated region
    $region42: #{forward.2} parent=1 // pred_check
      _
    $region43: #{forward.2} parent=1 // pred_check_branch
      %103 = sbr.rel (0) target = $region45
    $region44: #{forward.2} parent=1 // pred_region
      _
    $region45: #{forward.2} parent=1 // pred_fallthru
      _
    // Predicated region
    $region46: #{forward.2} parent=1 // pred_check
      _
    $region47: #{forward.2} parent=1 // pred_check_branch
      %105 = sbr.rel (0) target = $region49
    $region48: #{forward.2} parent=1 // pred_region
      _
    $region49: #{forward.2} parent=1 // pred_fallthru
      _
    // Predicated region
    $region50: #{forward.2} parent=1 // pred_check
      _
    $region51: #{forward.2} parent=1 // pred_check_branch
      %107 = sbr.rel (0) target = $region53
    $region52: #{forward.2} parent=1 // pred_region
      _
    $region53: #{forward.2} parent=1 // pred_fallthru
      _
    // Predicated region
    $region54: #{forward.2} parent=1 // pred_check
      _
    $region55: #{forward.2} parent=1 // pred_check_branch
      %109 = sbr.rel (0) target = $region57
    $region56: #{forward.2} parent=1 // pred_region
      _
    $region57: #{forward.2} parent=1 // pred_fallthru
      _
    // Predicated region
    $region58: #{forward.2} parent=1 // pred_check
      _
    $region59: #{forward.2} parent=1 // pred_check_branch
      %111 = sbr.rel (0) target = $region61
    $region60: #{forward.2} parent=1 // pred_region
      _
    $region61: #{forward.2} parent=1 // pred_fallthru
      _
    // Predicated region
    $region62: #{forward.2} parent=1 // pred_check
      _
    $region63: #{forward.2} parent=1 // pred_check_branch
      %113 = sbr.rel (0) target = $region65
    $region64: #{forward.2} parent=1 // pred_region
      _
    $region65: #{forward.2} parent=1 // pred_fallthru
      _
    // Predicated region
    $region66: #{forward.2} parent=1 // pred_check
      _
    $region67: #{forward.2} parent=1 // pred_check_branch
      %115 = sbr.rel (0) target = $region69
    $region68: #{forward.2} parent=1 // pred_region
      _
    $region69: #{forward.2} parent=1 // pred_fallthru
      _
    // Predicated region
    $region70: #{forward.2} parent=1 // pred_check
      _
    $region71: #{forward.2} parent=1 // pred_check_branch
      %117 = sbr.rel (0) target = $region73
    $region72: #{forward.2} parent=1 // pred_region
      _
    $region73: #{forward.2} parent=1 // pred_fallthru
      _
    // Predicated region
    $region74: #{forward.2} parent=1 // pred_check
      _
    $region75: #{forward.2} parent=1 // pred_check_branch
      %119 = sbr.rel (0) target = $region77
    $region76: #{forward.2} parent=1 // pred_region
      _
    $region77: #{forward.2} parent=1 // pred_fallthru
      _
    // Predicated region
    $region78: #{forward.2} parent=1 // pred_check
      _
    $region79: #{forward.2} parent=1 // pred_check_branch
      %121 = sbr.rel (0) target = $region81
    $region80: #{forward.2} parent=1 // pred_region
      _
    $region81: #{forward.2} parent=1 // pred_fallthru
      _
    // Predicated region
    $region82: #{forward.2} parent=1 // pred_check
      _
    $region83: #{forward.2} parent=1 // pred_check_branch
      %123 = sbr.rel (0) target = $region85
    $region84: #{forward.2} parent=1 // pred_region
      _
    $region85: #{forward.2} parent=1 // pred_fallthru
      _
    // Predicated region
    $region86: #{forward.2} parent=1 // pred_check
      _
    $region87: #{forward.2} parent=1 // pred_check_branch
      %125 = sbr.rel (0) target = $region89
    $region88: #{forward.2} parent=1 // pred_region
      _
    $region89: #{forward.2} parent=1 // pred_fallthru
      _
    // Predicated region
    $region90: #{forward.2} parent=1 // pred_check
      _
    $region91: #{forward.2} parent=1 // pred_check_branch
      %127 = sbr.rel (0) target = $region93
    $region92: #{forward.2} parent=1 // pred_region
      _
    $region93: #{forward.2} parent=1 // pred_fallthru
      _
    // Predicated region
    $region94: #{forward.2} parent=1 // pred_check
      _
    $region95: #{forward.2} parent=1 // pred_check_branch
      %129 = sbr.rel (0) target = $region97
    $region96: #{forward.2} parent=1 // pred_region
      _
    $region97: #{forward.2} parent=1 // pred_fallthru
      _
    // Predicated region
    $region98: #{forward.2} parent=1 // pred_check
      _
    $region99: #{forward.2} parent=1 // pred_check_branch
      %131 = sbr.rel (0) target = $region101
    $region100: #{forward.2} parent=1 // pred_region
      _
    $region101: #{forward.2} parent=1 // pred_fallthru
      _
    // Predicated region
    $region102: #{forward.2} parent=1 // pred_check
      _
    $region103: #{forward.2} parent=1 // pred_check_branch
      %133 = sbr.rel (0) target = $region105
    $region104: #{forward.2} parent=1 // pred_region
      _
    $region105: #{forward.2} parent=1 // pred_fallthru
      _
    // Predicated region
    $region106: #{forward.2} parent=1 // pred_check
      _
    $region107: #{forward.2} parent=1 // pred_check_branch
      %135 = sbr.rel (0) target = $region109
    $region108: #{forward.2} parent=1 // pred_region
      _
    $region109: #{forward.2} parent=1 // pred_fallthru
      _
    // Predicated region
    $region110: #{forward.2} parent=1 // pred_check
      _
    $region111: #{forward.2} parent=1 // pred_check_branch
      %137 = sbr.rel (0) target = $region113
    $region112: #{forward.2} parent=1 // pred_region
      _
    $region113: #{forward.2} parent=1 // pred_fallthru
      _
    // Predicated region
    $region114: #{forward.2} parent=1 // pred_check
      _
    $region115: #{forward.2} parent=1 // pred_check_branch
      %139 = sbr.rel (0) target = $region117
    $region116: #{forward.2} parent=1 // pred_region
      _
    $region117: #{forward.2} parent=1 // pred_fallthru
      _
    // Predicated region
    $region118: #{forward.2} parent=1 // pred_check
      _
    $region119: #{forward.2} parent=1 // pred_check_branch
      %141 = sbr.rel (0) target = $region121
    $region120: #{forward.2} parent=1 // pred_region
      _
    $region121: #{forward.2} parent=1 // pred_fallthru
      _
    // Predicated region
    $region122: #{forward.2} parent=1 // pred_check
      _
    $region123: #{forward.2} parent=1 // pred_check_branch
      %143 = sbr.rel (0) target = $region125
    $region124: #{forward.2} parent=1 // pred_region
      _
    $region125: #{forward.2} parent=1 // pred_fallthru
      _
    // Predicated region
    $region126: #{forward.2} parent=1 // pred_check
      _
    $region127: #{forward.2} parent=1 // pred_check_branch
      %145 = sbr.rel (0) target = $region129
    $region128: #{forward.2} parent=1 // pred_region
      _
    $region129: #{forward.2} parent=1 // pred_fallthru
      _
    // Predicated region
    $region130: #{forward.2} parent=1 // pred_check
      _
    $region131: #{forward.2} parent=1 // pred_check_branch
      %147 = sbr.rel (0) target = $region133
    $region132: #{forward.2} parent=1 // pred_region
      _
    $region133: #{forward.2} parent=1 // pred_fallthru
      _
    // Predicated region
    $region134: #{forward.2} parent=1 // pred_check
      _
    $region135: #{forward.2} parent=1 // pred_check_branch
      %149 = sbr.rel (0) target = $region137
    $region136: #{forward.2} parent=1 // pred_region
      _
    $region137: #{forward.2} parent=1 // pred_fallthru
      _
    // Predicated region
    $region138: #{forward.2} parent=1 // pred_check
      _
    $region139: #{forward.2} parent=1 // pred_check_branch
      %151 = sbr.rel (0) target = $region141
    $region140: #{forward.2} parent=1 // pred_region
      _
    $region141: #{forward.2} parent=1 // pred_fallthru
      _
    %v153 = vld [vmem:[%s1] sm:$0xff]
    %v154 = vld [vmem:[%s1 + $0x8] sm:$0xff]
    %v155 = vld [vmem:[%s3] sm:$0xf]
    %v156 = vld [vmem:[%s3 + $0x4] sm:$0xf]
    %v157 = vld [vmem:[%s3 + $0x8] sm:$0xf]
    %v158 = vld [vmem:[%s3 + $0xc] sm:$0xf]
    %v159 = vld [vmem:[%s9] sm:$0x1]
    %v160 = vpack.c.bf16 %v154, %v153
    %v162 = vlaneseq
    %v163 = vshrl.u32 %v162, 7
    %v164 = vsub.s32 0, %v163
    %v165 = vrot.slane %v159, %v164
    %v171 = vunpack.c.l.b16 %v155
    %v172 = vunpack.c.l.b16 %v156
    %v173 = vunpack.c.l.b16 %v157
    %v174 = vunpack.c.l.b16 %v158
    %v175 = vpack.c.b16 %v172, %v171
    %v176 = vpack.c.b16 %v174, %v173
    %vm179 = vcmask 261120
    %v181 = vsel %vm179, %v160, 0
    %183 = vmatprep.subr.bf16.mxu0 0
    %184 = vmatpush1.bf16.msra.mxu0 %v175
    %185 = vmatprep.subr.bf16.mxu0 0
    %186 = vmatpush1.bf16.msra.mxu0 %v176
    %187 = vmatprep.subr.bf16.mxu0 0
    %188 = vmatpush1.bf16.msra.mxu0 0
    %189 = vmatprep.subr.bf16.mxu0 0
    %190 = vmatpush1.bf16.msra.mxu0 0
    %191 = vmatprep.subr.bf16.mxu0 0
    %192 = vmatpush1.bf16.msra.mxu0 0
    %193 = vmatprep.subr.bf16.mxu0 0
    %194 = vmatpush1.bf16.msra.mxu0 0
    %195 = vmatprep.subr.bf16.mxu0 0
    %196 = vmatpush1.bf16.msra.mxu0 0
    %197 = vmatprep.subr.bf16.mxu0 0
    %198 = vmatpush1.bf16.msra.mxu0 0
    %199 = vmatprep.subr.bf16.mxu0 0
    %200 = vmatpush1.bf16.msra.mxu0 0
    %201 = vmatprep.subr.bf16.mxu0 0
    %202 = vmatpush1.bf16.msra.mxu0 0
    %203 = vmatprep.subr.bf16.mxu0 0
    %204 = vmatpush1.bf16.msra.mxu0 0
    %205 = vmatprep.subr.bf16.mxu0 0
    %206 = vmatpush1.bf16.msra.mxu0 0
    %207 = vmatprep.subr.bf16.mxu0 0
    %208 = vmatpush1.bf16.msra.mxu0 0
    %209 = vmatprep.subr.bf16.mxu0 0
    %210 = vmatpush1.bf16.msra.mxu0 0
    %211 = vmatprep.subr.bf16.mxu0 0
    %212 = vmatpush1.bf16.msra.mxu0 0
    %213 = vmatprep.subr.bf16.mxu0 0
    %214 = vmatpush1.bf16.msra.mxu0 0
    %215 = vmatprep.mubr.bf16.mxu0 0
    %216 = vmatmul.mubr.bf16.gmra.mrb[0].mxu0 %v181
    %v217 = vpop.f32.mrb[0].mxu0
    %v218 = vadd.f32 %v165, %v217
    %v219 = vpop.f32.mrb[0].mxu0
    %v220 = vpop.f32.mrb[0].mxu0
    %v221 = vadd.f32 %v165, %v220
    %v222 = vpop.f32.mrb[0].mxu0
    %223 = vdwg.mxu0
    %v224 = vld [vmem:[%s5] sm:$0xf]
    %v225 = vld [vmem:[%s5 + $0x4] sm:$0xf]
    %v226 = vld [vmem:[%s5 + $0x8] sm:$0xf]
    %v227 = vld [vmem:[%s5 + $0xc] sm:$0xf]
    %v228 = vld [vmem:[%s11] sm:$0x1]
    %v230 = vlaneseq
    %v231 = vshrl.u32 %v230, 7
    %v232 = vsub.s32 0, %v231
    %v233 = vrot.slane %v228, %v232
    %v239 = vunpack.c.l.b16 %v224
    %v240 = vunpack.c.l.b16 %v225
    %v241 = vunpack.c.l.b16 %v226
    %v242 = vunpack.c.l.b16 %v227
    %v243 = vpack.c.b16 %v240, %v239
    %v244 = vpack.c.b16 %v242, %v241
    %247 = vmatprep.subr.bf16.mxu0 0
    %248 = vmatpush1.bf16.msra.mxu0 %v243
    %249 = vmatprep.subr.bf16.mxu0 0
    %250 = vmatpush1.bf16.msra.mxu0 %v244
    %251 = vmatprep.subr.bf16.mxu0 0
    %252 = vmatpush1.bf16.msra.mxu0 0
    %253 = vmatprep.subr.bf16.mxu0 0
    %254 = vmatpush1.bf16.msra.mxu0 0
    %255 = vmatprep.subr.bf16.mxu0 0
    %256 = vmatpush1.bf16.msra.mxu0 0
    %257 = vmatprep.subr.bf16.mxu0 0
    %258 = vmatpush1.bf16.msra.mxu0 0
    %259 = vmatprep.subr.bf16.mxu0 0
    %260 = vmatpush1.bf16.msra.mxu0 0
    %261 = vmatprep.subr.bf16.mxu0 0
    %262 = vmatpush1.bf16.msra.mxu0 0
    %263 = vmatprep.subr.bf16.mxu0 0
    %264 = vmatpush1.bf16.msra.mxu0 0
    %265 = vmatprep.subr.bf16.mxu0 0
    %266 = vmatpush1.bf16.msra.mxu0 0
    %267 = vmatprep.subr.bf16.mxu0 0
    %268 = vmatpush1.bf16.msra.mxu0 0
    %269 = vmatprep.subr.bf16.mxu0 0
    %270 = vmatpush1.bf16.msra.mxu0 0
    %271 = vmatprep.subr.bf16.mxu0 0
    %272 = vmatpush1.bf16.msra.mxu0 0
    %273 = vmatprep.subr.bf16.mxu0 0
    %274 = vmatpush1.bf16.msra.mxu0 0
    %275 = vmatprep.subr.bf16.mxu0 0
    %276 = vmatpush1.bf16.msra.mxu0 0
    %277 = vmatprep.subr.bf16.mxu0 0
    %278 = vmatpush1.bf16.msra.mxu0 0
    %279 = vmatprep.mubr.bf16.mxu0 0
    %280 = vmatmul.mubr.bf16.gmra.mrb[0].mxu0 %v181
    %v281 = vpop.f32.mrb[0].mxu0
    %v282 = vadd.f32 %v233, %v281
    %v283 = vpop.f32.mrb[0].mxu0
    %v284 = vpop.f32.mrb[0].mxu0
    %v285 = vadd.f32 %v233, %v284
    %v286 = vpop.f32.mrb[0].mxu0
    %287 = vdwg.mxu0
    %v288 = vld [vmem:[%s7] sm:$0xf]
    %v289 = vld [vmem:[%s7 + $0x4] sm:$0xf]
    %v290 = vld [vmem:[%s7 + $0x8] sm:$0xf]
    %v291 = vld [vmem:[%s7 + $0xc] sm:$0xf]
    %v292 = vld [vmem:[%s13] sm:$0x1]
    %v294 = vlaneseq
    %v295 = vshrl.u32 %v294, 7
    %v296 = vsub.s32 0, %v295
    %v297 = vrot.slane %v292, %v296
    %v303 = vunpack.c.l.b16 %v288
    %v304 = vunpack.c.l.b16 %v289
    %v305 = vunpack.c.l.b16 %v290
    %v306 = vunpack.c.l.b16 %v291
    %v307 = vpack.c.b16 %v304, %v303
    %v308 = vpack.c.b16 %v306, %v305
    %311 = vmatprep.subr.bf16.mxu0 0
    %312 = vmatpush1.bf16.msra.mxu0 %v307
    %313 = vmatprep.subr.bf16.mxu0 0
    %314 = vmatpush1.bf16.msra.mxu0 %v308
    %315 = vmatprep.subr.bf16.mxu0 0
    %316 = vmatpush1.bf16.msra.mxu0 0
    %317 = vmatprep.subr.bf16.mxu0 0
    %318 = vmatpush1.bf16.msra.mxu0 0
    %319 = vmatprep.subr.bf16.mxu0 0
    %320 = vmatpush1.bf16.msra.mxu0 0
    %321 = vmatprep.subr.bf16.mxu0 0
    %322 = vmatpush1.bf16.msra.mxu0 0
    %323 = vmatprep.subr.bf16.mxu0 0
    %324 = vmatpush1.bf16.msra.mxu0 0
    %325 = vmatprep.subr.bf16.mxu0 0
    %326 = vmatpush1.bf16.msra.mxu0 0
    %327 = vmatprep.subr.bf16.mxu0 0
    %328 = vmatpush1.bf16.msra.mxu0 0
    %329 = vmatprep.subr.bf16.mxu0 0
    %330 = vmatpush1.bf16.msra.mxu0 0
    %331 = vmatprep.subr.bf16.mxu0 0
    %332 = vmatpush1.bf16.msra.mxu0 0
    %333 = vmatprep.subr.bf16.mxu0 0
    %334 = vmatpush1.bf16.msra.mxu0 0
    %335 = vmatprep.subr.bf16.mxu0 0
    %336 = vmatpush1.bf16.msra.mxu0 0
    %337 = vmatprep.subr.bf16.mxu0 0
    %338 = vmatpush1.bf16.msra.mxu0 0
    %339 = vmatprep.subr.bf16.mxu0 0
    %340 = vmatpush1.bf16.msra.mxu0 0
    %341 = vmatprep.subr.bf16.mxu0 0
    %342 = vmatpush1.bf16.msra.mxu0 0
    %343 = vmatprep.mubr.bf16.mxu0 0
    %344 = vmatmul.mubr.bf16.gmra.mrb[0].mxu0 %v181
    %v345 = vpop.f32.mrb[0].mxu0
    %v346 = vadd.f32 %v297, %v345
    %v347 = vpop.f32.mrb[0].mxu0
    %v348 = vpop.f32.mrb[0].mxu0
    %v349 = vadd.f32 %v297, %v348
    %v350 = vpop.f32.mrb[0].mxu0
    %351 = vdwg.mxu0
    %vm352 = vcmask 130048
    %v354 = vsel %vm352, %v218, 0
    %v357 = vsel %vm352, %v282, 0
    %359 = vmatprep.subr.mxu0 0.0
    %360 = vmatpush1.xpose.msra.mxu0 %v357
    %361 = vmatprep.subr.mxu0 0.0
    %362 = vmatpush1.xpose.msra.mxu0 0.0
    %363 = vmatprep.subr.mxu0 0.0
    %364 = vmatpush1.xpose.msra.mxu0 0.0
    %365 = vmatprep.subr.mxu0 0.0
    %366 = vmatpush1.xpose.msra.mxu0 0.0
    %367 = vmatprep.subr.mxu0 0.0
    %368 = vmatpush1.xpose.msra.mxu0 0.0
    %369 = vmatprep.subr.mxu0 0.0
    %370 = vmatpush1.xpose.msra.mxu0 0.0
    %371 = vmatprep.subr.mxu0 0.0
    %372 = vmatpush1.xpose.msra.mxu0 0.0
    %373 = vmatprep.subr.mxu0 0.0
    %374 = vmatpush1.xpose.msra.mxu0 0.0
    %375 = vmatprep.subr.mxu0 0.0
    %376 = vmatpush1.xpose.msra.mxu0 0.0
    %377 = vmatprep.subr.mxu0 0.0
    %378 = vmatpush1.xpose.msra.mxu0 0.0
    %379 = vmatprep.subr.mxu0 0.0
    %380 = vmatpush1.xpose.msra.mxu0 0.0
    %381 = vmatprep.subr.mxu0 0.0
    %382 = vmatpush1.xpose.msra.mxu0 0.0
    %383 = vmatprep.subr.mxu0 0.0
    %384 = vmatpush1.xpose.msra.mxu0 0.0
    %385 = vmatprep.subr.mxu0 0.0
    %386 = vmatpush1.xpose.msra.mxu0 0.0
    %387 = vmatprep.subr.mxu0 0.0
    %388 = vmatpush1.xpose.msra.mxu0 0.0
    %389 = vmatprep.subr.mxu0 0.0
    %390 = vmatpush1.xpose.msra.mxu0 0.0
    %391 = vmatprep.subr.mxu0 0.0
    %392 = vmatpush1.xpose.msra.mxu0 0.0
    %393 = vmatprep.subr.mxu0 0.0
    %394 = vmatpush1.xpose.msra.mxu0 0.0
    %395 = vmatprep.subr.mxu0 0.0
    %396 = vmatpush1.xpose.msra.mxu0 0.0
    %397 = vmatprep.subr.mxu0 0.0
    %398 = vmatpush1.xpose.msra.mxu0 0.0
    %399 = vmatprep.subr.mxu0 0.0
    %400 = vmatpush1.xpose.msra.mxu0 0.0
    %401 = vmatprep.subr.mxu0 0.0
    %402 = vmatpush1.xpose.msra.mxu0 0.0
    %403 = vmatprep.subr.mxu0 0.0
    %404 = vmatpush1.xpose.msra.mxu0 0.0
    %405 = vmatprep.subr.mxu0 0.0
    %406 = vmatpush1.xpose.msra.mxu0 0.0
    %407 = vmatprep.subr.mxu0 0.0
    %408 = vmatpush1.xpose.msra.mxu0 0.0
    %409 = vmatprep.subr.mxu0 0.0
    %410 = vmatpush1.xpose.msra.mxu0 0.0
    %411 = vmatprep.subr.mxu0 0.0
    %412 = vmatpush1.xpose.msra.mxu0 0.0
    %413 = vmatprep.subr.mxu0 0.0
    %414 = vmatpush1.xpose.msra.mxu0 0.0
    %415 = vmatprep.subr.mxu0 0.0
    %416 = vmatpush1.xpose.msra.mxu0 0.0
    %417 = vmatprep.subr.mxu0 0.0
    %418 = vmatpush1.xpose.msra.mxu0 0.0
    %419 = vmatprep.subr.mxu0 0.0
    %420 = vmatpush1.xpose.msra.mxu0 0.0
    %421 = vmatprep.subr.mxu0 0.0
    %422 = vmatpush1.xpose.msra.mxu0 0.0
    %423 = vmatprep.mubr.f32.mxu0 0.0
    %424 = vmatmul.mubr.f32.gmra.mrb[0].mxu0 %v354
    %v425 = vpop.f32.mrb[0].mxu0
    %v426 = vadd.f32 0.0, %v425
    %v427 = vpop.f32.mrb[0].mxu0
    %428 = vdwg.mxu0
    %v430 = vsel %vm352, %v221, 0
    %v433 = vsel %vm352, %v285, 0
    %435 = vmatprep.subr.mxu0 0.0
    %436 = vmatpush1.xpose.msra.mxu0 %v433
    %437 = vmatprep.subr.mxu0 0.0
    %438 = vmatpush1.xpose.msra.mxu0 0.0
    %439 = vmatprep.subr.mxu0 0.0
    %440 = vmatpush1.xpose.msra.mxu0 0.0
    %441 = vmatprep.subr.mxu0 0.0
    %442 = vmatpush1.xpose.msra.mxu0 0.0
    %443 = vmatprep.subr.mxu0 0.0
    %444 = vmatpush1.xpose.msra.mxu0 0.0
    %445 = vmatprep.subr.mxu0 0.0
    %446 = vmatpush1.xpose.msra.mxu0 0.0
    %447 = vmatprep.subr.mxu0 0.0
    %448 = vmatpush1.xpose.msra.mxu0 0.0
    %449 = vmatprep.subr.mxu0 0.0
    %450 = vmatpush1.xpose.msra.mxu0 0.0
    %451 = vmatprep.subr.mxu0 0.0
    %452 = vmatpush1.xpose.msra.mxu0 0.0
    %453 = vmatprep.subr.mxu0 0.0
    %454 = vmatpush1.xpose.msra.mxu0 0.0
    %455 = vmatprep.subr.mxu0 0.0
    %456 = vmatpush1.xpose.msra.mxu0 0.0
    %457 = vmatprep.subr.mxu0 0.0
    %458 = vmatpush1.xpose.msra.mxu0 0.0
    %459 = vmatprep.subr.mxu0 0.0
    %460 = vmatpush1.xpose.msra.mxu0 0.0
    %461 = vmatprep.subr.mxu0 0.0
    %462 = vmatpush1.xpose.msra.mxu0 0.0
    %463 = vmatprep.subr.mxu0 0.0
    %464 = vmatpush1.xpose.msra.mxu0 0.0
    %465 = vmatprep.subr.mxu0 0.0
    %466 = vmatpush1.xpose.msra.mxu0 0.0
    %467 = vmatprep.subr.mxu0 0.0
    %468 = vmatpush1.xpose.msra.mxu0 0.0
    %469 = vmatprep.subr.mxu0 0.0
    %470 = vmatpush1.xpose.msra.mxu0 0.0
    %471 = vmatprep.subr.mxu0 0.0
    %472 = vmatpush1.xpose.msra.mxu0 0.0
    %473 = vmatprep.subr.mxu0 0.0
    %474 = vmatpush1.xpose.msra.mxu0 0.0
    %475 = vmatprep.subr.mxu0 0.0
    %476 = vmatpush1.xpose.msra.mxu0 0.0
    %477 = vmatprep.subr.mxu0 0.0
    %478 = vmatpush1.xpose.msra.mxu0 0.0
    %479 = vmatprep.subr.mxu0 0.0
    %480 = vmatpush1.xpose.msra.mxu0 0.0
    %481 = vmatprep.subr.mxu0 0.0
    %482 = vmatpush1.xpose.msra.mxu0 0.0
    %483 = vmatprep.subr.mxu0 0.0
    %484 = vmatpush1.xpose.msra.mxu0 0.0
    %485 = vmatprep.subr.mxu0 0.0
    %486 = vmatpush1.xpose.msra.mxu0 0.0
    %487 = vmatprep.subr.mxu0 0.0
    %488 = vmatpush1.xpose.msra.mxu0 0.0
    %489 = vmatprep.subr.mxu0 0.0
    %490 = vmatpush1.xpose.msra.mxu0 0.0
    %491 = vmatprep.subr.mxu0 0.0
    %492 = vmatpush1.xpose.msra.mxu0 0.0
    %493 = vmatprep.subr.mxu0 0.0
    %494 = vmatpush1.xpose.msra.mxu0 0.0
    %495 = vmatprep.subr.mxu0 0.0
    %496 = vmatpush1.xpose.msra.mxu0 0.0
    %497 = vmatprep.subr.mxu0 0.0
    %498 = vmatpush1.xpose.msra.mxu0 0.0
    %499 = vmatprep.mubr.f32.mxu0 0.0
    %500 = vmatmul.mubr.f32.gmra.mrb[0].mxu0 %v430
    %v501 = vpop.f32.mrb[0].mxu0
    %v502 = vadd.f32 0.0, %v501
    %v503 = vpop.f32.mrb[0].mxu0
    %504 = vdwg.mxu0
    %v505 = vmul.f32 %v426, 0.25
    %v506 = vmul.f32 %v502, 0.25
    %vm507 = vcmask 64512
    %v508 = vsel %vm507, %v505, -inf
    %509 = vmax.xlane.f32.xlu0 %v508
    %v510 = vpop.xlane.xlu0 %509
    %v511 = vsel %vm507, %v506, -inf
    %512 = vmax.xlane.f32.xlu0 %v511
    %v513 = vpop.xlane.xlu0 %512
    %v514 = vsub.f32 %v505, %v510
    %v515 = vsub.f32 %v506, %v513
    %v516 = vmul.f32 %v514, 1.442695
    %v517 = vpow.pop %v516
    %v518 = vmul.f32 %v515, 1.442695
    %v519 = vpow.pop %v518
    %v520 = vsel %vm507, %v517, 0.0
    %521 = vadd.xlane.f32.xlu0 %v520
    %v522 = vpop.xlane.xlu0 %521
    %v523 = vsel %vm507, %v519, 0.0
    %524 = vadd.xlane.f32.xlu0 %v523
    %v525 = vpop.xlane.xlu0 %524
    %v526 = vrcp.pop %v522
    %v527 = vrcp.pop %v525
    %v528 = vmul.f32 %v517, %v526
    %v529 = vmul.f32 %v519, %v527
    %v531 = vsel %vm507, %v528, 0
    %533 = vmatprep.subr.mxu0 0.0
    %534 = vmatpush1.msra.mxu0 %v346
    %535 = vmatprep.subr.mxu0 0.0
    %536 = vmatpush1.msra.mxu0 0.0
    %537 = vmatprep.subr.mxu0 0.0
    %538 = vmatpush1.msra.mxu0 0.0
    %539 = vmatprep.subr.mxu0 0.0
    %540 = vmatpush1.msra.mxu0 0.0
    %541 = vmatprep.subr.mxu0 0.0
    %542 = vmatpush1.msra.mxu0 0.0
    %543 = vmatprep.subr.mxu0 0.0
    %544 = vmatpush1.msra.mxu0 0.0
    %545 = vmatprep.subr.mxu0 0.0
    %546 = vmatpush1.msra.mxu0 0.0
    %547 = vmatprep.subr.mxu0 0.0
    %548 = vmatpush1.msra.mxu0 0.0
    %549 = vmatprep.subr.mxu0 0.0
    %550 = vmatpush1.msra.mxu0 0.0
    %551 = vmatprep.subr.mxu0 0.0
    %552 = vmatpush1.msra.mxu0 0.0
    %553 = vmatprep.subr.mxu0 0.0
    %554 = vmatpush1.msra.mxu0 0.0
    %555 = vmatprep.subr.mxu0 0.0
    %556 = vmatpush1.msra.mxu0 0.0
    %557 = vmatprep.subr.mxu0 0.0
    %558 = vmatpush1.msra.mxu0 0.0
    %559 = vmatprep.subr.mxu0 0.0
    %560 = vmatpush1.msra.mxu0 0.0
    %561 = vmatprep.subr.mxu0 0.0
    %562 = vmatpush1.msra.mxu0 0.0
    %563 = vmatprep.subr.mxu0 0.0
    %564 = vmatpush1.msra.mxu0 0.0
    %565 = vmatprep.subr.mxu0 0.0
    %566 = vmatpush1.msra.mxu0 0.0
    %567 = vmatprep.subr.mxu0 0.0
    %568 = vmatpush1.msra.mxu0 0.0
    %569 = vmatprep.subr.mxu0 0.0
    %570 = vmatpush1.msra.mxu0 0.0
    %571 = vmatprep.subr.mxu0 0.0
    %572 = vmatpush1.msra.mxu0 0.0
    %573 = vmatprep.subr.mxu0 0.0
    %574 = vmatpush1.msra.mxu0 0.0
    %575 = vmatprep.subr.mxu0 0.0
    %576 = vmatpush1.msra.mxu0 0.0
    %577 = vmatprep.subr.mxu0 0.0
    %578 = vmatpush1.msra.mxu0 0.0
    %579 = vmatprep.subr.mxu0 0.0
    %580 = vmatpush1.msra.mxu0 0.0
    %581 = vmatprep.subr.mxu0 0.0
    %582 = vmatpush1.msra.mxu0 0.0
    %583 = vmatprep.subr.mxu0 0.0
    %584 = vmatpush1.msra.mxu0 0.0
    %585 = vmatprep.subr.mxu0 0.0
    %586 = vmatpush1.msra.mxu0 0.0
    %587 = vmatprep.subr.mxu0 0.0
    %588 = vmatpush1.msra.mxu0 0.0
    %589 = vmatprep.subr.mxu0 0.0
    %590 = vmatpush1.msra.mxu0 0.0
    %591 = vmatprep.subr.mxu0 0.0
    %592 = vmatpush1.msra.mxu0 0.0
    %593 = vmatprep.subr.mxu0 0.0
    %594 = vmatpush1.msra.mxu0 0.0
    %595 = vmatprep.subr.mxu0 0.0
    %596 = vmatpush1.msra.mxu0 0.0
    %597 = vmatprep.mubr.f32.mxu0 0.0
    %598 = vmatmul.mubr.f32.gmra.mrb[0].mxu0 %v531
    %v599 = vpop.f32.mrb[0].mxu0
    %v600 = vadd.f32 0.0, %v599
    %v601 = vpop.f32.mrb[0].mxu0
    %602 = vdwg.mxu0
    %v604 = vsel %vm507, %v529, 0
    %606 = vmatprep.subr.mxu0 0.0
    %607 = vmatpush1.msra.mxu0 %v349
    %608 = vmatprep.subr.mxu0 0.0
    %609 = vmatpush1.msra.mxu0 0.0
    %610 = vmatprep.subr.mxu0 0.0
    %611 = vmatpush1.msra.mxu0 0.0
    %612 = vmatprep.subr.mxu0 0.0
    %613 = vmatpush1.msra.mxu0 0.0
    %614 = vmatprep.subr.mxu0 0.0
    %615 = vmatpush1.msra.mxu0 0.0
    %616 = vmatprep.subr.mxu0 0.0
    %617 = vmatpush1.msra.mxu0 0.0
    %618 = vmatprep.subr.mxu0 0.0
    %619 = vmatpush1.msra.mxu0 0.0
    %620 = vmatprep.subr.mxu0 0.0
    %621 = vmatpush1.msra.mxu0 0.0
    %622 = vmatprep.subr.mxu0 0.0
    %623 = vmatpush1.msra.mxu0 0.0
    %624 = vmatprep.subr.mxu0 0.0
    %625 = vmatpush1.msra.mxu0 0.0
    %626 = vmatprep.subr.mxu0 0.0
    %627 = vmatpush1.msra.mxu0 0.0
    %628 = vmatprep.subr.mxu0 0.0
    %629 = vmatpush1.msra.mxu0 0.0
    %630 = vmatprep.subr.mxu0 0.0
    %631 = vmatpush1.msra.mxu0 0.0
    %632 = vmatprep.subr.mxu0 0.0
    %633 = vmatpush1.msra.mxu0 0.0
    %634 = vmatprep.subr.mxu0 0.0
    %635 = vmatpush1.msra.mxu0 0.0
    %636 = vmatprep.subr.mxu0 0.0
    %637 = vmatpush1.msra.mxu0 0.0
    %638 = vmatprep.subr.mxu0 0.0
    %639 = vmatpush1.msra.mxu0 0.0
    %640 = vmatprep.subr.mxu0 0.0
    %641 = vmatpush1.msra.mxu0 0.0
    %642 = vmatprep.subr.mxu0 0.0
    %643 = vmatpush1.msra.mxu0 0.0
    %644 = vmatprep.subr.mxu0 0.0
    %645 = vmatpush1.msra.mxu0 0.0
    %646 = vmatprep.subr.mxu0 0.0
    %647 = vmatpush1.msra.mxu0 0.0
    %648 = vmatprep.subr.mxu0 0.0
    %649 = vmatpush1.msra.mxu0 0.0
    %650 = vmatprep.subr.mxu0 0.0
    %651 = vmatpush1.msra.mxu0 0.0
    %652 = vmatprep.subr.mxu0 0.0
    %653 = vmatpush1.msra.mxu0 0.0
    %654 = vmatprep.subr.mxu0 0.0
    %655 = vmatpush1.msra.mxu0 0.0
    %656 = vmatprep.subr.mxu0 0.0
    %657 = vmatpush1.msra.mxu0 0.0
    %658 = vmatprep.subr.mxu0 0.0
    %659 = vmatpush1.msra.mxu0 0.0
    %660 = vmatprep.subr.mxu0 0.0
    %661 = vmatpush1.msra.mxu0 0.0
    %662 = vmatprep.subr.mxu0 0.0
    %663 = vmatpush1.msra.mxu0 0.0
    %664 = vmatprep.subr.mxu0 0.0
    %665 = vmatpush1.msra.mxu0 0.0
    %666 = vmatprep.subr.mxu0 0.0
    %667 = vmatpush1.msra.mxu0 0.0
    %668 = vmatprep.subr.mxu0 0.0
    %669 = vmatpush1.msra.mxu0 0.0
    %670 = vmatprep.mubr.f32.mxu0 0.0
    %671 = vmatmul.mubr.f32.gmra.mrb[0].mxu0 %v604
    %v672 = vpop.f32.mrb[0].mxu0
    %v673 = vadd.f32 0.0, %v672
    %v674 = vpop.f32.mrb[0].mxu0
    %675 = vdwg.mxu0
    %v676 = vld [vmem:[%s15] sm:$0xf]
    %v677 = vld [vmem:[%s15 + $0x4] sm:$0xf]
    %v678 = vpack.c.bf16 %v673, %v600
    %s679 = scalar_lea.vmem %s3, 16
    %v680 = vld [vmem:[%s679] sm:$0xf]
    %v681 = vld [vmem:[%s679 + $0x4] sm:$0xf]
    %v682 = vld [vmem:[%s679 + $0x8] sm:$0xf]
    %v683 = vld [vmem:[%s679 + $0xc] sm:$0xf]
    %s684 = scalar_lea.vmem %s9, 1
    %v685 = vld [vmem:[%s684] sm:$0x1]
    %v687 = vlaneseq
    %v688 = vshrl.u32 %v687, 7
    %v689 = vsub.s32 0, %v688
    %v690 = vrot.slane %v685, %v689
    %v696 = vunpack.c.l.b16 %v680
    %v697 = vunpack.c.l.b16 %v681
    %v698 = vunpack.c.l.b16 %v682
    %v699 = vunpack.c.l.b16 %v683
    %v700 = vpack.c.b16 %v697, %v696
    %v701 = vpack.c.b16 %v699, %v698
    %704 = vmatprep.subr.bf16.mxu0 0
    %705 = vmatpush1.bf16.msra.mxu0 %v700
    %706 = vmatprep.subr.bf16.mxu0 0
    %707 = vmatpush1.bf16.msra.mxu0 %v701
    %708 = vmatprep.subr.bf16.mxu0 0
    %709 = vmatpush1.bf16.msra.mxu0 0
    %710 = vmatprep.subr.bf16.mxu0 0
    %711 = vmatpush1.bf16.msra.mxu0 0
    %712 = vmatprep.subr.bf16.mxu0 0
    %713 = vmatpush1.bf16.msra.mxu0 0
    %714 = vmatprep.subr.bf16.mxu0 0
    %715 = vmatpush1.bf16.msra.mxu0 0
    %716 = vmatprep.subr.bf16.mxu0 0
    %717 = vmatpush1.bf16.msra.mxu0 0
    %718 = vmatprep.subr.bf16.mxu0 0
    %719 = vmatpush1.bf16.msra.mxu0 0
    %720 = vmatprep.subr.bf16.mxu0 0
    %721 = vmatpush1.bf16.msra.mxu0 0
    %722 = vmatprep.subr.bf16.mxu0 0
    %723 = vmatpush1.bf16.msra.mxu0 0
    %724 = vmatprep.subr.bf16.mxu0 0
    %725 = vmatpush1.bf16.msra.mxu0 0
    %726 = vmatprep.subr.bf16.mxu0 0
    %727 = vmatpush1.bf16.msra.mxu0 0
    %728 = vmatprep.subr.bf16.mxu0 0
    %729 = vmatpush1.bf16.msra.mxu0 0
    %730 = vmatprep.subr.bf16.mxu0 0
    %731 = vmatpush1.bf16.msra.mxu0 0
    %732 = vmatprep.subr.bf16.mxu0 0
    %733 = vmatpush1.bf16.msra.mxu0 0
    %734 = vmatprep.subr.bf16.mxu0 0
    %735 = vmatpush1.bf16.msra.mxu0 0
    %736 = vmatprep.mubr.bf16.mxu0 0
    %737 = vmatmul.mubr.bf16.gmra.mrb[0].mxu0 %v181
    %v738 = vpop.f32.mrb[0].mxu0
    %v739 = vadd.f32 %v690, %v738
    %v740 = vpop.f32.mrb[0].mxu0
    %v741 = vpop.f32.mrb[0].mxu0
    %v742 = vadd.f32 %v690, %v741
    %v743 = vpop.f32.mrb[0].mxu0
    %744 = vdwg.mxu0
    %s745 = scalar_lea.vmem %s5, 16
    %v746 = vld [vmem:[%s745] sm:$0xf]
    %v747 = vld [vmem:[%s745 + $0x4] sm:$0xf]
    %v748 = vld [vmem:[%s745 + $0x8] sm:$0xf]
    %v749 = vld [vmem:[%s745 + $0xc] sm:$0xf]
    %s750 = scalar_lea.vmem %s11, 1
    %v751 = vld [vmem:[%s750] sm:$0x1]
    %v753 = vlaneseq
    %v754 = vshrl.u32 %v753, 7
    %v755 = vsub.s32 0, %v754
    %v756 = vrot.slane %v751, %v755
    %v762 = vunpack.c.l.b16 %v746
    %v763 = vunpack.c.l.b16 %v747
    %v764 = vunpack.c.l.b16 %v748
    %v765 = vunpack.c.l.b16 %v749
    %v766 = vpack.c.b16 %v763, %v762
    %v767 = vpack.c.b16 %v765, %v764
    %770 = vmatprep.subr.bf16.mxu0 0
    %771 = vmatpush1.bf16.msra.mxu0 %v766
    %772 = vmatprep.subr.bf16.mxu0 0
    %773 = vmatpush1.bf16.msra.mxu0 %v767
    %774 = vmatprep.subr.bf16.mxu0 0
    %775 = vmatpush1.bf16.msra.mxu0 0
    %776 = vmatprep.subr.bf16.mxu0 0
    %777 = vmatpush1.bf16.msra.mxu0 0
    %778 = vmatprep.subr.bf16.mxu0 0
    %779 = vmatpush1.bf16.msra.mxu0 0
    %780 = vmatprep.subr.bf16.mxu0 0
    %781 = vmatpush1.bf16.msra.mxu0 0
    %782 = vmatprep.subr.bf16.mxu0 0
    %783 = vmatpush1.bf16.msra.mxu0 0
    %784 = vmatprep.subr.bf16.mxu0 0
    %785 = vmatpush1.bf16.msra.mxu0 0
    %786 = vmatprep.subr.bf16.mxu0 0
    %787 = vmatpush1.bf16.msra.mxu0 0
    %788 = vmatprep.subr.bf16.mxu0 0
    %789 = vmatpush1.bf16.msra.mxu0 0
    %790 = vmatprep.subr.bf16.mxu0 0
    %791 = vmatpush1.bf16.msra.mxu0 0
    %792 = vmatprep.subr.bf16.mxu0 0
    %793 = vmatpush1.bf16.msra.mxu0 0
    %794 = vmatprep.subr.bf16.mxu0 0
    %795 = vmatpush1.bf16.msra.mxu0 0
    %796 = vmatprep.subr.bf16.mxu0 0
    %797 = vmatpush1.bf16.msra.mxu0 0
    %798 = vmatprep.subr.bf16.mxu0 0
    %799 = vmatpush1.bf16.msra.mxu0 0
    %800 = vmatprep.subr.bf16.mxu0 0
    %801 = vmatpush1.bf16.msra.mxu0 0
    %802 = vmatprep.mubr.bf16.mxu0 0
    %803 = vmatmul.mubr.bf16.gmra.mrb[0].mxu0 %v181
    %v804 = vpop.f32.mrb[0].mxu0
    %v805 = vadd.f32 %v756, %v804
    %v806 = vpop.f32.mrb[0].mxu0
    %v807 = vpop.f32.mrb[0].mxu0
    %v808 = vadd.f32 %v756, %v807
    %v809 = vpop.f32.mrb[0].mxu0
    %810 = vdwg.mxu0
    %s811 = scalar_lea.vmem %s7, 16
    %v812 = vld [vmem:[%s811] sm:$0xf]
    %v813 = vld [vmem:[%s811 + $0x4] sm:$0xf]
    %v814 = vld [vmem:[%s811 + $0x8] sm:$0xf]
    %v815 = vld [vmem:[%s811 + $0xc] sm:$0xf]
    %s816 = scalar_lea.vmem %s13, 1
    %v817 = vld [vmem:[%s816] sm:$0x1]
    %v819 = vlaneseq
    %v820 = vshrl.u32 %v819, 7
    %v821 = vsub.s32 0, %v820
    %v822 = vrot.slane %v817, %v821
    %v828 = vunpack.c.l.b16 %v812
    %v829 = vunpack.c.l.b16 %v813
    %v830 = vunpack.c.l.b16 %v814
    %v831 = vunpack.c.l.b16 %v815
    %v832 = vpack.c.b16 %v829, %v828
    %v833 = vpack.c.b16 %v831, %v830
    %836 = vmatprep.subr.bf16.mxu0 0
    %837 = vmatpush1.bf16.msra.mxu0 %v832
    %838 = vmatprep.subr.bf16.mxu0 0
    %839 = vmatpush1.bf16.msra.mxu0 %v833
    %840 = vmatprep.subr.bf16.mxu0 0
    %841 = vmatpush1.bf16.msra.mxu0 0
    %842 = vmatprep.subr.bf16.mxu0 0
    %843 = vmatpush1.bf16.msra.mxu0 0
    %844 = vmatprep.subr.bf16.mxu0 0
    %845 = vmatpush1.bf16.msra.mxu0 0
    %846 = vmatprep.subr.bf16.mxu0 0
    %847 = vmatpush1.bf16.msra.mxu0 0
    %848 = vmatprep.subr.bf16.mxu0 0
    %849 = vmatpush1.bf16.msra.mxu0 0
    %850 = vmatprep.subr.bf16.mxu0 0
    %851 = vmatpush1.bf16.msra.mxu0 0
    %852 = vmatprep.subr.bf16.mxu0 0
    %853 = vmatpush1.bf16.msra.mxu0 0
    %854 = vmatprep.subr.bf16.mxu0 0
    %855 = vmatpush1.bf16.msra.mxu0 0
    %856 = vmatprep.subr.bf16.mxu0 0
    %857 = vmatpush1.bf16.msra.mxu0 0
    %858 = vmatprep.subr.bf16.mxu0 0
    %859 = vmatpush1.bf16.msra.mxu0 0
    %860 = vmatprep.subr.bf16.mxu0 0
    %861 = vmatpush1.bf16.msra.mxu0 0
    %862 = vmatprep.subr.bf16.mxu0 0
    %863 = vmatpush1.bf16.msra.mxu0 0
    %864 = vmatprep.subr.bf16.mxu0 0
    %865 = vmatpush1.bf16.msra.mxu0 0
    %866 = vmatprep.subr.bf16.mxu0 0
    %867 = vmatpush1.bf16.msra.mxu0 0
    %868 = vmatprep.mubr.bf16.mxu0 0
    %869 = vmatmul.mubr.bf16.gmra.mrb[0].mxu0 %v181
    %v870 = vpop.f32.mrb[0].mxu0
    %v871 = vadd.f32 %v822, %v870
    %v872 = vpop.f32.mrb[0].mxu0
    %v873 = vpop.f32.mrb[0].mxu0
    %v874 = vadd.f32 %v822, %v873
    %v875 = vpop.f32.mrb[0].mxu0
    %876 = vdwg.mxu0
    %v878 = vsel %vm352, %v739, 0
    %v881 = vsel %vm352, %v805, 0
    %883 = vmatprep.subr.mxu0 0.0
    %884 = vmatpush1.xpose.msra.mxu0 %v881
    %885 = vmatprep.subr.mxu0 0.0
    %886 = vmatpush1.xpose.msra.mxu0 0.0
    %887 = vmatprep.subr.mxu0 0.0
    %888 = vmatpush1.xpose.msra.mxu0 0.0
    %889 = vmatprep.subr.mxu0 0.0
    %890 = vmatpush1.xpose.msra.mxu0 0.0
    %891 = vmatprep.subr.mxu0 0.0
    %892 = vmatpush1.xpose.msra.mxu0 0.0
    %893 = vmatprep.subr.mxu0 0.0
    %894 = vmatpush1.xpose.msra.mxu0 0.0
    %895 = vmatprep.subr.mxu0 0.0
    %896 = vmatpush1.xpose.msra.mxu0 0.0
    %897 = vmatprep.subr.mxu0 0.0
    %898 = vmatpush1.xpose.msra.mxu0 0.0
    %899 = vmatprep.subr.mxu0 0.0
    %900 = vmatpush1.xpose.msra.mxu0 0.0
    %901 = vmatprep.subr.mxu0 0.0
    %902 = vmatpush1.xpose.msra.mxu0 0.0
    %903 = vmatprep.subr.mxu0 0.0
    %904 = vmatpush1.xpose.msra.mxu0 0.0
    %905 = vmatprep.subr.mxu0 0.0
    %906 = vmatpush1.xpose.msra.mxu0 0.0
    %907 = vmatprep.subr.mxu0 0.0
    %908 = vmatpush1.xpose.msra.mxu0 0.0
    %909 = vmatprep.subr.mxu0 0.0
    %910 = vmatpush1.xpose.msra.mxu0 0.0
    %911 = vmatprep.subr.mxu0 0.0
    %912 = vmatpush1.xpose.msra.mxu0 0.0
    %913 = vmatprep.subr.mxu0 0.0
    %914 = vmatpush1.xpose.msra.mxu0 0.0
    %915 = vmatprep.subr.mxu0 0.0
    %916 = vmatpush1.xpose.msra.mxu0 0.0
    %917 = vmatprep.subr.mxu0 0.0
    %918 = vmatpush1.xpose.msra.mxu0 0.0
    %919 = vmatprep.subr.mxu0 0.0
    %920 = vmatpush1.xpose.msra.mxu0 0.0
    %921 = vmatprep.subr.mxu0 0.0
    %922 = vmatpush1.xpose.msra.mxu0 0.0
    %923 = vmatprep.subr.mxu0 0.0
    %924 = vmatpush1.xpose.msra.mxu0 0.0
    %925 = vmatprep.subr.mxu0 0.0
    %926 = vmatpush1.xpose.msra.mxu0 0.0
    %927 = vmatprep.subr.mxu0 0.0
    %928 = vmatpush1.xpose.msra.mxu0 0.0
    %929 = vmatprep.subr.mxu0 0.0
    %930 = vmatpush1.xpose.msra.mxu0 0.0
    %931 = vmatprep.subr.mxu0 0.0
    %932 = vmatpush1.xpose.msra.mxu0 0.0
    %933 = vmatprep.subr.mxu0 0.0
    %934 = vmatpush1.xpose.msra.mxu0 0.0
    %935 = vmatprep.subr.mxu0 0.0
    %936 = vmatpush1.xpose.msra.mxu0 0.0
    %937 = vmatprep.subr.mxu0 0.0
    %938 = vmatpush1.xpose.msra.mxu0 0.0
    %939 = vmatprep.subr.mxu0 0.0
    %940 = vmatpush1.xpose.msra.mxu0 0.0
    %941 = vmatprep.subr.mxu0 0.0
    %942 = vmatpush1.xpose.msra.mxu0 0.0
    %943 = vmatprep.subr.mxu0 0.0
    %944 = vmatpush1.xpose.msra.mxu0 0.0
    %945 = vmatprep.subr.mxu0 0.0
    %946 = vmatpush1.xpose.msra.mxu0 0.0
    %947 = vmatprep.mubr.f32.mxu0 0.0
    %948 = vmatmul.mubr.f32.gmra.mrb[0].mxu0 %v878
    %v949 = vpop.f32.mrb[0].mxu0
    %v950 = vadd.f32 0.0, %v949
    %v951 = vpop.f32.mrb[0].mxu0
    %952 = vdwg.mxu0
    %v954 = vsel %vm352, %v742, 0
    %v957 = vsel %vm352, %v808, 0
    %959 = vmatprep.subr.mxu0 0.0
    %960 = vmatpush1.xpose.msra.mxu0 %v957
    %961 = vmatprep.subr.mxu0 0.0
    %962 = vmatpush1.xpose.msra.mxu0 0.0
    %963 = vmatprep.subr.mxu0 0.0
    %964 = vmatpush1.xpose.msra.mxu0 0.0
    %965 = vmatprep.subr.mxu0 0.0
    %966 = vmatpush1.xpose.msra.mxu0 0.0
    %967 = vmatprep.subr.mxu0 0.0
    %968 = vmatpush1.xpose.msra.mxu0 0.0
    %969 = vmatprep.subr.mxu0 0.0
    %970 = vmatpush1.xpose.msra.mxu0 0.0
    %971 = vmatprep.subr.mxu0 0.0
    %972 = vmatpush1.xpose.msra.mxu0 0.0
    %973 = vmatprep.subr.mxu0 0.0
    %974 = vmatpush1.xpose.msra.mxu0 0.0
    %975 = vmatprep.subr.mxu0 0.0
    %976 = vmatpush1.xpose.msra.mxu0 0.0
    %977 = vmatprep.subr.mxu0 0.0
    %978 = vmatpush1.xpose.msra.mxu0 0.0
    %979 = vmatprep.subr.mxu0 0.0
    %980 = vmatpush1.xpose.msra.mxu0 0.0
    %981 = vmatprep.subr.mxu0 0.0
    %982 = vmatpush1.xpose.msra.mxu0 0.0
    %983 = vmatprep.subr.mxu0 0.0
    %984 = vmatpush1.xpose.msra.mxu0 0.0
    %985 = vmatprep.subr.mxu0 0.0
    %986 = vmatpush1.xpose.msra.mxu0 0.0
    %987 = vmatprep.subr.mxu0 0.0
    %988 = vmatpush1.xpose.msra.mxu0 0.0
    %989 = vmatprep.subr.mxu0 0.0
    %990 = vmatpush1.xpose.msra.mxu0 0.0
    %991 = vmatprep.subr.mxu0 0.0
    %992 = vmatpush1.xpose.msra.mxu0 0.0
    %993 = vmatprep.subr.mxu0 0.0
    %994 = vmatpush1.xpose.msra.mxu0 0.0
    %995 = vmatprep.subr.mxu0 0.0
    %996 = vmatpush1.xpose.msra.mxu0 0.0
    %997 = vmatprep.subr.mxu0 0.0
    %998 = vmatpush1.xpose.msra.mxu0 0.0
    %999 = vmatprep.subr.mxu0 0.0
    %1000 = vmatpush1.xpose.msra.mxu0 0.0
    %1001 = vmatprep.subr.mxu0 0.0
    %1002 = vmatpush1.xpose.msra.mxu0 0.0
    %1003 = vmatprep.subr.mxu0 0.0
    %1004 = vmatpush1.xpose.msra.mxu0 0.0
    %1005 = vmatprep.subr.mxu0 0.0
    %1006 = vmatpush1.xpose.msra.mxu0 0.0
    %1007 = vmatprep.subr.mxu0 0.0
    %1008 = vmatpush1.xpose.msra.mxu0 0.0
    %1009 = vmatprep.subr.mxu0 0.0
    %1010 = vmatpush1.xpose.msra.mxu0 0.0
    %1011 = vmatprep.subr.mxu0 0.0
    %1012 = vmatpush1.xpose.msra.mxu0 0.0
    %1013 = vmatprep.subr.mxu0 0.0
    %1014 = vmatpush1.xpose.msra.mxu0 0.0
    %1015 = vmatprep.subr.mxu0 0.0
    %1016 = vmatpush1.xpose.msra.mxu0 0.0
    %1017 = vmatprep.subr.mxu0 0.0
    %1018 = vmatpush1.xpose.msra.mxu0 0.0
    %1019 = vmatprep.subr.mxu0 0.0
    %1020 = vmatpush1.xpose.msra.mxu0 0.0
    %1021 = vmatprep.subr.mxu0 0.0
    %1022 = vmatpush1.xpose.msra.mxu0 0.0
    %1023 = vmatprep.mubr.f32.mxu0 0.0
    %1024 = vmatmul.mubr.f32.gmra.mrb[0].mxu0 %v954
    %v1025 = vpop.f32.mrb[0].mxu0
    %v1026 = vadd.f32 0.0, %v1025
    %v1027 = vpop.f32.mrb[0].mxu0
    %1028 = vdwg.mxu0
    %v1029 = vmul.f32 %v950, 0.25
    %v1030 = vmul.f32 %v1026, 0.25
    %v1031 = vsel %vm507, %v1029, -inf
    %1032 = vmax.xlane.f32.xlu0 %v1031
    %v1033 = vpop.xlane.xlu0 %1032
    %v1034 = vsel %vm507, %v1030, -inf
    %1035 = vmax.xlane.f32.xlu0 %v1034
    %v1036 = vpop.xlane.xlu0 %1035
    %v1037 = vsub.f32 %v1029, %v1033
    %v1038 = vsub.f32 %v1030, %v1036
    %v1039 = vmul.f32 %v1037, 1.442695
    %v1040 = vpow.pop %v1039
    %v1041 = vmul.f32 %v1038, 1.442695
    %v1042 = vpow.pop %v1041
    %v1043 = vsel %vm507, %v1040, 0.0
    %1044 = vadd.xlane.f32.xlu0 %v1043
    %v1045 = vpop.xlane.xlu0 %1044
    %v1046 = vsel %vm507, %v1042, 0.0
    %1047 = vadd.xlane.f32.xlu0 %v1046
    %v1048 = vpop.xlane.xlu0 %1047
    %v1049 = vrcp.pop %v1045
    %v1050 = vrcp.pop %v1048
    %v1051 = vmul.f32 %v1040, %v1049
    %v1052 = vmul.f32 %v1042, %v1050
    %v1054 = vsel %vm507, %v1051, 0
    %1056 = vmatprep.subr.mxu0 0.0
    %1057 = vmatpush1.msra.mxu0 %v871
    %1058 = vmatprep.subr.mxu0 0.0
    %1059 = vmatpush1.msra.mxu0 0.0
    %1060 = vmatprep.subr.mxu0 0.0
    %1061 = vmatpush1.msra.mxu0 0.0
    %1062 = vmatprep.subr.mxu0 0.0
    %1063 = vmatpush1.msra.mxu0 0.0
    %1064 = vmatprep.subr.mxu0 0.0
    %1065 = vmatpush1.msra.mxu0 0.0
    %1066 = vmatprep.subr.mxu0 0.0
    %1067 = vmatpush1.msra.mxu0 0.0
    %1068 = vmatprep.subr.mxu0 0.0
    %1069 = vmatpush1.msra.mxu0 0.0
    %1070 = vmatprep.subr.mxu0 0.0
    %1071 = vmatpush1.msra.mxu0 0.0
    %1072 = vmatprep.subr.mxu0 0.0
    %1073 = vmatpush1.msra.mxu0 0.0
    %1074 = vmatprep.subr.mxu0 0.0
    %1075 = vmatpush1.msra.mxu0 0.0
    %1076 = vmatprep.subr.mxu0 0.0
    %1077 = vmatpush1.msra.mxu0 0.0
    %1078 = vmatprep.subr.mxu0 0.0
    %1079 = vmatpush1.msra.mxu0 0.0
    %1080 = vmatprep.subr.mxu0 0.0
    %1081 = vmatpush1.msra.mxu0 0.0
    %1082 = vmatprep.subr.mxu0 0.0
    %1083 = vmatpush1.msra.mxu0 0.0
    %1084 = vmatprep.subr.mxu0 0.0
    %1085 = vmatpush1.msra.mxu0 0.0
    %1086 = vmatprep.subr.mxu0 0.0
    %1087 = vmatpush1.msra.mxu0 0.0
    %1088 = vmatprep.subr.mxu0 0.0
    %1089 = vmatpush1.msra.mxu0 0.0
    %1090 = vmatprep.subr.mxu0 0.0
    %1091 = vmatpush1.msra.mxu0 0.0
    %1092 = vmatprep.subr.mxu0 0.0
    %1093 = vmatpush1.msra.mxu0 0.0
    %1094 = vmatprep.subr.mxu0 0.0
    %1095 = vmatpush1.msra.mxu0 0.0
    %1096 = vmatprep.subr.mxu0 0.0
    %1097 = vmatpush1.msra.mxu0 0.0
    %1098 = vmatprep.subr.mxu0 0.0
    %1099 = vmatpush1.msra.mxu0 0.0
    %1100 = vmatprep.subr.mxu0 0.0
    %1101 = vmatpush1.msra.mxu0 0.0
    %1102 = vmatprep.subr.mxu0 0.0
    %1103 = vmatpush1.msra.mxu0 0.0
    %1104 = vmatprep.subr.mxu0 0.0
    %1105 = vmatpush1.msra.mxu0 0.0
    %1106 = vmatprep.subr.mxu0 0.0
    %1107 = vmatpush1.msra.mxu0 0.0
    %1108 = vmatprep.subr.mxu0 0.0
    %1109 = vmatpush1.msra.mxu0 0.0
    %1110 = vmatprep.subr.mxu0 0.0
    %1111 = vmatpush1.msra.mxu0 0.0
    %1112 = vmatprep.subr.mxu0 0.0
    %1113 = vmatpush1.msra.mxu0 0.0
    %1114 = vmatprep.subr.mxu0 0.0
    %1115 = vmatpush1.msra.mxu0 0.0
    %1116 = vmatprep.subr.mxu0 0.0
    %1117 = vmatpush1.msra.mxu0 0.0
    %1118 = vmatprep.subr.mxu0 0.0
    %1119 = vmatpush1.msra.mxu0 0.0
    %1120 = vmatprep.mubr.f32.mxu0 0.0
    %1121 = vmatmul.mubr.f32.gmra.mrb[0].mxu0 %v1054
    %v1122 = vpop.f32.mrb[0].mxu0
    %v1123 = vadd.f32 0.0, %v1122
    %v1124 = vpop.f32.mrb[0].mxu0
    %1125 = vdwg.mxu0
    %v1127 = vsel %vm507, %v1052, 0
    %1129 = vmatprep.subr.mxu0 0.0
    %1130 = vmatpush1.msra.mxu0 %v874
    %1131 = vmatprep.subr.mxu0 0.0
    %1132 = vmatpush1.msra.mxu0 0.0
    %1133 = vmatprep.subr.mxu0 0.0
    %1134 = vmatpush1.msra.mxu0 0.0
    %1135 = vmatprep.subr.mxu0 0.0
    %1136 = vmatpush1.msra.mxu0 0.0
    %1137 = vmatprep.subr.mxu0 0.0
    %1138 = vmatpush1.msra.mxu0 0.0
    %1139 = vmatprep.subr.mxu0 0.0
    %1140 = vmatpush1.msra.mxu0 0.0
    %1141 = vmatprep.subr.mxu0 0.0
    %1142 = vmatpush1.msra.mxu0 0.0
    %1143 = vmatprep.subr.mxu0 0.0
    %1144 = vmatpush1.msra.mxu0 0.0
    %1145 = vmatprep.subr.mxu0 0.0
    %1146 = vmatpush1.msra.mxu0 0.0
    %1147 = vmatprep.subr.mxu0 0.0
    %1148 = vmatpush1.msra.mxu0 0.0
    %1149 = vmatprep.subr.mxu0 0.0
    %1150 = vmatpush1.msra.mxu0 0.0
    %1151 = vmatprep.subr.mxu0 0.0
    %1152 = vmatpush1.msra.mxu0 0.0
    %1153 = vmatprep.subr.mxu0 0.0
    %1154 = vmatpush1.msra.mxu0 0.0
    %1155 = vmatprep.subr.mxu0 0.0
    %1156 = vmatpush1.msra.mxu0 0.0
    %1157 = vmatprep.subr.mxu0 0.0
    %1158 = vmatpush1.msra.mxu0 0.0
    %1159 = vmatprep.subr.mxu0 0.0
    %1160 = vmatpush1.msra.mxu0 0.0
    %1161 = vmatprep.subr.mxu0 0.0
    %1162 = vmatpush1.msra.mxu0 0.0
    %1163 = vmatprep.subr.mxu0 0.0
    %1164 = vmatpush1.msra.mxu0 0.0
    %1165 = vmatprep.subr.mxu0 0.0
    %1166 = vmatpush1.msra.mxu0 0.0
    %1167 = vmatprep.subr.mxu0 0.0
    %1168 = vmatpush1.msra.mxu0 0.0
    %1169 = vmatprep.subr.mxu0 0.0
    %1170 = vmatpush1.msra.mxu0 0.0
    %1171 = vmatprep.subr.mxu0 0.0
    %1172 = vmatpush1.msra.mxu0 0.0
    %1173 = vmatprep.subr.mxu0 0.0
    %1174 = vmatpush1.msra.mxu0 0.0
    %1175 = vmatprep.subr.mxu0 0.0
    %1176 = vmatpush1.msra.mxu0 0.0
    %1177 = vmatprep.subr.mxu0 0.0
    %1178 = vmatpush1.msra.mxu0 0.0
    %1179 = vmatprep.subr.mxu0 0.0
    %1180 = vmatpush1.msra.mxu0 0.0
    %1181 = vmatprep.subr.mxu0 0.0
    %1182 = vmatpush1.msra.mxu0 0.0
    %1183 = vmatprep.subr.mxu0 0.0
    %1184 = vmatpush1.msra.mxu0 0.0
    %1185 = vmatprep.subr.mxu0 0.0
    %1186 = vmatpush1.msra.mxu0 0.0
    %1187 = vmatprep.subr.mxu0 0.0
    %1188 = vmatpush1.msra.mxu0 0.0
    %1189 = vmatprep.subr.mxu0 0.0
    %1190 = vmatpush1.msra.mxu0 0.0
    %1191 = vmatprep.subr.mxu0 0.0
    %1192 = vmatpush1.msra.mxu0 0.0
    %1193 = vmatprep.mubr.f32.mxu0 0.0
    %1194 = vmatmul.mubr.f32.gmra.mrb[0].mxu0 %v1127
    %v1195 = vpop.f32.mrb[0].mxu0
    %v1196 = vadd.f32 0.0, %v1195
    %v1197 = vpop.f32.mrb[0].mxu0
    %1198 = vdwg.mxu0
    %s1199 = scalar_lea.vmem %s15, 8
    %v1200 = vld [vmem:[%s1199] sm:$0xf]
    %v1201 = vld [vmem:[%s1199 + $0x4] sm:$0xf]
    %v1202 = vpack.c.bf16 %v1196, %v1123
    %v1205 = vunpack.c.l.b16 %v1200
    %v1206 = vunpack.c.l.b16 %v1201
    %v1207 = vpack.c.b16 %v1206, %v1205
    %v1210 = vsel %vm352, %v1202, 0
    %1212 = vmatprep.subr.bf16.mxu0 0
    %1213 = vmatpush1.bf16.msra.mxu0 %v1207
    %1214 = vmatprep.subr.bf16.mxu0 0
    %1215 = vmatpush1.bf16.msra.mxu0 0
    %1216 = vmatprep.subr.bf16.mxu0 0
    %1217 = vmatpush1.bf16.msra.mxu0 0
    %1218 = vmatprep.subr.bf16.mxu0 0
    %1219 = vmatpush1.bf16.msra.mxu0 0
    %1220 = vmatprep.subr.bf16.mxu0 0
    %1221 = vmatpush1.bf16.msra.mxu0 0
    %1222 = vmatprep.subr.bf16.mxu0 0
    %1223 = vmatpush1.bf16.msra.mxu0 0
    %1224 = vmatprep.subr.bf16.mxu0 0
    %1225 = vmatpush1.bf16.msra.mxu0 0
    %1226 = vmatprep.subr.bf16.mxu0 0
    %1227 = vmatpush1.bf16.msra.mxu0 0
    %1228 = vmatprep.subr.bf16.mxu0 0
    %1229 = vmatpush1.bf16.msra.mxu0 0
    %1230 = vmatprep.subr.bf16.mxu0 0
    %1231 = vmatpush1.bf16.msra.mxu0 0
    %1232 = vmatprep.subr.bf16.mxu0 0
    %1233 = vmatpush1.bf16.msra.mxu0 0
    %1234 = vmatprep.subr.bf16.mxu0 0
    %1235 = vmatpush1.bf16.msra.mxu0 0
    %1236 = vmatprep.subr.bf16.mxu0 0
    %1237 = vmatpush1.bf16.msra.mxu0 0
    %1238 = vmatprep.subr.bf16.mxu0 0
    %1239 = vmatpush1.bf16.msra.mxu0 0
    %1240 = vmatprep.subr.bf16.mxu0 0
    %1241 = vmatpush1.bf16.msra.mxu0 0
    %1242 = vmatprep.subr.bf16.mxu0 0
    %1243 = vmatpush1.bf16.msra.mxu0 0
    %1244 = vmatprep.mubr.bf16.mxu0 0
    %1245 = vmatmul.mubr.bf16.gmra.mrb[0].mxu0 %v1210
    %v1246 = vpop.f32.mrb[0].mxu0
    %v1247 = vadd.f32 0.0, %v1246
    %v1248 = vpop.f32.mrb[0].mxu0
    %v1249 = vpop.f32.mrb[0].mxu0
    %v1250 = vadd.f32 0.0, %v1249
    %v1251 = vpop.f32.mrb[0].mxu0
    %1252 = vdwg.mxu0
    %v1255 = vunpack.c.l.b16 %v676
    %v1256 = vunpack.c.l.b16 %v677
    %v1257 = vpack.c.b16 %v1256, %v1255
    %v1260 = vsel %vm352, %v678, 0
    %1262 = vmatprep.subr.bf16.mxu0 0
    %1263 = vmatpush1.bf16.msra.mxu0 %v1257
    %1264 = vmatprep.subr.bf16.mxu0 0
    %1265 = vmatpush1.bf16.msra.mxu0 0
    %1266 = vmatprep.subr.bf16.mxu0 0
    %1267 = vmatpush1.bf16.msra.mxu0 0
    %1268 = vmatprep.subr.bf16.mxu0 0
    %1269 = vmatpush1.bf16.msra.mxu0 0
    %1270 = vmatprep.subr.bf16.mxu0 0
    %1271 = vmatpush1.bf16.msra.mxu0 0
    %1272 = vmatprep.subr.bf16.mxu0 0
    %1273 = vmatpush1.bf16.msra.mxu0 0
    %1274 = vmatprep.subr.bf16.mxu0 0
    %1275 = vmatpush1.bf16.msra.mxu0 0
    %1276 = vmatprep.subr.bf16.mxu0 0
    %1277 = vmatpush1.bf16.msra.mxu0 0
    %1278 = vmatprep.subr.bf16.mxu0 0
    %1279 = vmatpush1.bf16.msra.mxu0 0
    %1280 = vmatprep.subr.bf16.mxu0 0
    %1281 = vmatpush1.bf16.msra.mxu0 0
    %1282 = vmatprep.subr.bf16.mxu0 0
    %1283 = vmatpush1.bf16.msra.mxu0 0
    %1284 = vmatprep.subr.bf16.mxu0 0
    %1285 = vmatpush1.bf16.msra.mxu0 0
    %1286 = vmatprep.subr.bf16.mxu0 0
    %1287 = vmatpush1.bf16.msra.mxu0 0
    %1288 = vmatprep.subr.bf16.mxu0 0
    %1289 = vmatpush1.bf16.msra.mxu0 0
    %1290 = vmatprep.subr.bf16.mxu0 0
    %1291 = vmatpush1.bf16.msra.mxu0 0
    %1292 = vmatprep.subr.bf16.mxu0 0
    %1293 = vmatpush1.bf16.msra.mxu0 0
    %1294 = vmatprep.mubr.bf16.mxu0 0
    %1295 = vmatmul.mubr.bf16.gmra.mrb[0].mxu0 %v1260
    %v1296 = vpop.f32.mrb[0].mxu0
    %v1297 = vadd.f32 %v1247, %v1296
    %v1298 = vpop.f32.mrb[0].mxu0
    %v1299 = vpop.f32.mrb[0].mxu0
    %v1300 = vadd.f32 %v1250, %v1299
    %v1301 = vpop.f32.mrb[0].mxu0
    %1302 = vdwg.mxu0
    %v1303 = vld [vmem:[%s17] sm:$0x1]
    %v1305 = vlaneseq
    %v1306 = vshrl.u32 %v1305, 7
    %v1307 = vsub.s32 0, %v1306
    %v1308 = vrot.slane %v1303, %v1307
    %v1310 = vadd.f32 %v1297, %v1308
    %v1311 = vadd.f32 %v1300, %v1308
    %v1312 = vadd.f32 %v153, %v1310
    %v1313 = vadd.f32 %v154, %v1311
    %v1314 = vld [vmem:[%s19] sm:$0x1]
    %v1315 = vld [vmem:[%s21] sm:$0x1]
    %v1316 = vsel %vm179, %v1312, 0.0
    %1317 = vadd.xlane.f32.xlu0 %v1316
    %v1318 = vpop.xlane.xlu0 %1317
    %v1319 = vsel %vm179, %v1313, 0.0
    %1320 = vadd.xlane.f32.xlu0 %v1319
    %v1321 = vpop.xlane.xlu0 %1320
    %v1322 = vrcp.pop 32.0
    %v1323 = vmul.f32 %v1318, %v1322
    %v1324 = vmul.f32 %v1321, %v1322
    %v1325 = vsub.f32 %v1312, %v1323
    %v1326 = vsub.f32 %v1313, %v1324
    %v1327 = vmul.f32 %v1325, %v1325
    %v1328 = vmul.f32 %v1326, %v1326
    %v1329 = vsel %vm179, %v1327, 0.0
    %1330 = vadd.xlane.f32.xlu0 %v1329
    %v1331 = vpop.xlane.xlu0 %1330
    %v1332 = vsel %vm179, %v1328, 0.0
    %1333 = vadd.xlane.f32.xlu0 %v1332
    %v1334 = vpop.xlane.xlu0 %1333
    %v1335 = vmul.f32 %v1331, %v1322
    %v1336 = vmul.f32 %v1334, %v1322
    %v1337 = vadd.f32 %v1335, 1e-05
    %v1338 = vadd.f32 %v1336, 1e-05
    %v1339 = vrsqrt.pop %v1337
    %v1340 = vrsqrt.pop %v1338
    %v1341 = vmul.f32 %v1325, %v1339
    %v1342 = vmul.f32 %v1326, %v1340
    %v1344 = vlaneseq
    %v1345 = vshrl.u32 %v1344, 7
    %v1346 = vsub.s32 0, %v1345
    %v1347 = vrot.slane %v1314, %v1346
    %v1349 = vmul.f32 %v1341, %v1347
    %v1350 = vmul.f32 %v1342, %v1347
    %v1352 = vlaneseq
    %v1353 = vshrl.u32 %v1352, 7
    %v1354 = vsub.s32 0, %v1353
    %v1355 = vrot.slane %v1315, %v1354
    %v1357 = vadd.f32 %v1349, %v1355
    %v1358 = vadd.f32 %v1350, %v1355
    %v1359 = vld [vmem:[%s23] sm:$0xff]
    %v1360 = vld [vmem:[%s23 + $0x8] sm:$0xff]
    %v1361 = vld [vmem:[%s23 + $0x10] sm:$0xff]
    %v1362 = vld [vmem:[%s23 + $0x18] sm:$0xff]
    %v1363 = vld [vmem:[%s23 + $0x20] sm:$0xff]
    %v1364 = vld [vmem:[%s23 + $0x28] sm:$0xff]
    %v1365 = vld [vmem:[%s23 + $0x30] sm:$0xff]
    %v1366 = vld [vmem:[%s23 + $0x38] sm:$0xff]
    %v1367 = vld [vmem:[%s23 + $0x40] sm:$0xff]
    %v1368 = vld [vmem:[%s23 + $0x48] sm:$0xff]
    %v1369 = vld [vmem:[%s23 + $0x50] sm:$0xff]
    %v1370 = vld [vmem:[%s23 + $0x58] sm:$0xff]
    %v1371 = vld [vmem:[%s23 + $0x60] sm:$0xff]
    %v1372 = vld [vmem:[%s23 + $0x68] sm:$0xff]
    %v1373 = vld [vmem:[%s23 + $0x70] sm:$0xff]
    %v1374 = vld [vmem:[%s23 + $0x78] sm:$0xff]
    %v1375 = vld [vmem:[%s23 + $0x80] sm:$0xff]
    %v1376 = vld [vmem:[%s23 + $0x88] sm:$0xff]
    %v1377 = vld [vmem:[%s23 + $0x90] sm:$0xff]
    %v1378 = vld [vmem:[%s23 + $0x98] sm:$0xff]
    %v1379 = vld [vmem:[%s23 + $0xa0] sm:$0xff]
    %v1380 = vld [vmem:[%s23 + $0xa8] sm:$0xff]
    %v1381 = vld [vmem:[%s23 + $0xb0] sm:$0xff]
    %v1382 = vld [vmem:[%s23 + $0xb8] sm:$0xff]
    %v1383 = vld [vmem:[%s23 + $0xc0] sm:$0xff]
    %v1384 = vld [vmem:[%s23 + $0xc8] sm:$0xff]
    %v1385 = vld [vmem:[%s23 + $0xd0] sm:$0xff]
    %v1386 = vld [vmem:[%s23 + $0xd8] sm:$0xff]
    %v1387 = vld [vmem:[%s23 + $0xe0] sm:$0xff]
    %v1388 = vld [vmem:[%s23 + $0xe8] sm:$0xff]
    %v1389 = vld [vmem:[%s23 + $0xf0] sm:$0xff]
    %v1390 = vld [vmem:[%s23 + $0xf8] sm:$0xff]
    %v1391 = vld [vmem:[%s25] sm:$0xff]
    %v1392 = vld [vmem:[%s25 + $0x8] sm:$0xff]
    %v1393 = vpack.c.bf16 %v1358, %v1357
    %v1396 = vlaneseq
    %v1397 = vshrl.u32 %v1396, 7
    %v1398 = vsub.s32 0, %v1397
    %v1399 = vrot.slane %v1391, %v1398
    %v1400 = vlaneseq
    %v1401 = vshrl.u32 %v1400, 7
    %v1402 = vsub.s32 1, %v1401
    %v1403 = vrot.slane %v1391, %v1402
    %v1404 = vlaneseq
    %v1405 = vshrl.u32 %v1404, 7
    %v1406 = vsub.s32 2, %v1405
    %v1407 = vrot.slane %v1391, %v1406
    %v1408 = vlaneseq
    %v1409 = vshrl.u32 %v1408, 7
    %v1410 = vsub.s32 3, %v1409
    %v1411 = vrot.slane %v1391, %v1410
    %v1412 = vlaneseq
    %v1413 = vshrl.u32 %v1412, 7
    %v1414 = vsub.s32 4, %v1413
    %v1415 = vrot.slane %v1391, %v1414
    %v1416 = vlaneseq
    %v1417 = vshrl.u32 %v1416, 7
    %v1418 = vsub.s32 5, %v1417
    %v1419 = vrot.slane %v1391, %v1418
    %v1420 = vlaneseq
    %v1421 = vshrl.u32 %v1420, 7
    %v1422 = vsub.s32 6, %v1421
    %v1423 = vrot.slane %v1391, %v1422
    %v1424 = vlaneseq
    %v1425 = vshrl.u32 %v1424, 7
    %v1426 = vsub.s32 7, %v1425
    %v1427 = vrot.slane %v1391, %v1426
    %v1428 = vlaneseq
    %v1429 = vshrl.u32 %v1428, 7
    %v1430 = vsub.s32 0, %v1429
    %v1431 = vrot.slane %v1392, %v1430
    %v1432 = vlaneseq
    %v1433 = vshrl.u32 %v1432, 7
    %v1434 = vsub.s32 1, %v1433
    %v1435 = vrot.slane %v1392, %v1434
    %v1436 = vlaneseq
    %v1437 = vshrl.u32 %v1436, 7
    %v1438 = vsub.s32 2, %v1437
    %v1439 = vrot.slane %v1392, %v1438
    %v1440 = vlaneseq
    %v1441 = vshrl.u32 %v1440, 7
    %v1442 = vsub.s32 3, %v1441
    %v1443 = vrot.slane %v1392, %v1442
    %v1444 = vlaneseq
    %v1445 = vshrl.u32 %v1444, 7
    %v1446 = vsub.s32 4, %v1445
    %v1447 = vrot.slane %v1392, %v1446
    %v1448 = vlaneseq
    %v1449 = vshrl.u32 %v1448, 7
    %v1450 = vsub.s32 5, %v1449
    %v1451 = vrot.slane %v1392, %v1450
    %v1452 = vlaneseq
    %v1453 = vshrl.u32 %v1452, 7
    %v1454 = vsub.s32 6, %v1453
    %v1455 = vrot.slane %v1392, %v1454
    %v1456 = vlaneseq
    %v1457 = vshrl.u32 %v1456, 7
    %v1458 = vsub.s32 7, %v1457
    %v1459 = vrot.slane %v1392, %v1458
    %v1508 = vunpack.c.l.b16 %v1359
    %v1509 = vunpack.c.h.b16 %v1359
    %v1510 = vunpack.c.l.b16 %v1360
    %v1511 = vunpack.c.h.b16 %v1360
    %v1512 = vunpack.c.l.b16 %v1361
    %v1513 = vunpack.c.h.b16 %v1361
    %v1514 = vunpack.c.l.b16 %v1362
    %v1515 = vunpack.c.h.b16 %v1362
    %v1516 = vunpack.c.l.b16 %v1363
    %v1517 = vunpack.c.h.b16 %v1363
    %v1518 = vunpack.c.l.b16 %v1364
    %v1519 = vunpack.c.h.b16 %v1364
    %v1520 = vunpack.c.l.b16 %v1365
    %v1521 = vunpack.c.h.b16 %v1365
    %v1522 = vunpack.c.l.b16 %v1366
    %v1523 = vunpack.c.h.b16 %v1366
    %v1524 = vunpack.c.l.b16 %v1367
    %v1525 = vunpack.c.h.b16 %v1367
    %v1526 = vunpack.c.l.b16 %v1368
    %v1527 = vunpack.c.h.b16 %v1368
    %v1528 = vunpack.c.l.b16 %v1369
    %v1529 = vunpack.c.h.b16 %v1369
    %v1530 = vunpack.c.l.b16 %v1370
    %v1531 = vunpack.c.h.b16 %v1370
    %v1532 = vunpack.c.l.b16 %v1371
    %v1533 = vunpack.c.h.b16 %v1371
    %v1534 = vunpack.c.l.b16 %v1372
    %v1535 = vunpack.c.h.b16 %v1372
    %v1536 = vunpack.c.l.b16 %v1373
    %v1537 = vunpack.c.h.b16 %v1373
    %v1538 = vunpack.c.l.b16 %v1374
    %v1539 = vunpack.c.h.b16 %v1374
    %v1540 = vunpack.c.l.b16 %v1375
    %v1541 = vunpack.c.h.b16 %v1375
    %v1542 = vunpack.c.l.b16 %v1376
    %v1543 = vunpack.c.h.b16 %v1376
    %v1544 = vunpack.c.l.b16 %v1377
    %v1545 = vunpack.c.h.b16 %v1377
    %v1546 = vunpack.c.l.b16 %v1378
    %v1547 = vunpack.c.h.b16 %v1378
    %v1548 = vunpack.c.l.b16 %v1379
    %v1549 = vunpack.c.h.b16 %v1379
    %v1550 = vunpack.c.l.b16 %v1380
    %v1551 = vunpack.c.h.b16 %v1380
    %v1552 = vunpack.c.l.b16 %v1381
    %v1553 = vunpack.c.h.b16 %v1381
    %v1554 = vunpack.c.l.b16 %v1382
    %v1555 = vunpack.c.h.b16 %v1382
    %v1556 = vunpack.c.l.b16 %v1383
    %v1557 = vunpack.c.h.b16 %v1383
    %v1558 = vunpack.c.l.b16 %v1384
    %v1559 = vunpack.c.h.b16 %v1384
    %v1560 = vunpack.c.l.b16 %v1385
    %v1561 = vunpack.c.h.b16 %v1385
    %v1562 = vunpack.c.l.b16 %v1386
    %v1563 = vunpack.c.h.b16 %v1386
    %v1564 = vunpack.c.l.b16 %v1387
    %v1565 = vunpack.c.h.b16 %v1387
    %v1566 = vunpack.c.l.b16 %v1388
    %v1567 = vunpack.c.h.b16 %v1388
    %v1568 = vunpack.c.l.b16 %v1389
    %v1569 = vunpack.c.h.b16 %v1389
    %v1570 = vunpack.c.l.b16 %v1390
    %v1571 = vunpack.c.h.b16 %v1390
    %v1572 = vpack.c.b16 %v1524, %v1508
    %v1573 = vpack.c.b16 %v1525, %v1509
    %v1574 = vpack.c.b16 %v1526, %v1510
    %v1575 = vpack.c.b16 %v1527, %v1511
    %v1576 = vpack.c.b16 %v1528, %v1512
    %v1577 = vpack.c.b16 %v1529, %v1513
    %v1578 = vpack.c.b16 %v1530, %v1514
    %v1579 = vpack.c.b16 %v1531, %v1515
    %v1580 = vpack.c.b16 %v1532, %v1516
    %v1581 = vpack.c.b16 %v1533, %v1517
    %v1582 = vpack.c.b16 %v1534, %v1518
    %v1583 = vpack.c.b16 %v1535, %v1519
    %v1584 = vpack.c.b16 %v1536, %v1520
    %v1585 = vpack.c.b16 %v1537, %v1521
    %v1586 = vpack.c.b16 %v1538, %v1522
    %v1587 = vpack.c.b16 %v1539, %v1523
    %v1588 = vpack.c.b16 %v1556, %v1540
    %v1589 = vpack.c.b16 %v1557, %v1541
    %v1590 = vpack.c.b16 %v1558, %v1542
    %v1591 = vpack.c.b16 %v1559, %v1543
    %v1592 = vpack.c.b16 %v1560, %v1544
    %v1593 = vpack.c.b16 %v1561, %v1545
    %v1594 = vpack.c.b16 %v1562, %v1546
    %v1595 = vpack.c.b16 %v1563, %v1547
    %v1596 = vpack.c.b16 %v1564, %v1548
    %v1597 = vpack.c.b16 %v1565, %v1549
    %v1598 = vpack.c.b16 %v1566, %v1550
    %v1599 = vpack.c.b16 %v1567, %v1551
    %v1600 = vpack.c.b16 %v1568, %v1552
    %v1601 = vpack.c.b16 %v1569, %v1553
    %v1602 = vpack.c.b16 %v1570, %v1554
    %v1603 = vpack.c.b16 %v1571, %v1555
    %v1637 = vsel %vm179, %v1393, 0
    %1639 = vmatprep.subr.bf16.mxu0 %v1573
    %1640 = vmatpush1.bf16.msra.mxu0 %v1572
    %1641 = vmatprep.subr.bf16.mxu0 %v1589
    %1642 = vmatpush1.bf16.msra.mxu0 %v1588
    %1643 = vmatprep.subr.bf16.mxu0 0
    %1644 = vmatpush1.bf16.msra.mxu0 0
    %1645 = vmatprep.subr.bf16.mxu0 0
    %1646 = vmatpush1.bf16.msra.mxu0 0
    %1647 = vmatprep.subr.bf16.mxu0 0
    %1648 = vmatpush1.bf16.msra.mxu0 0
    %1649 = vmatprep.subr.bf16.mxu0 0
    %1650 = vmatpush1.bf16.msra.mxu0 0
    %1651 = vmatprep.subr.bf16.mxu0 0
    %1652 = vmatpush1.bf16.msra.mxu0 0
    %1653 = vmatprep.subr.bf16.mxu0 0
    %1654 = vmatpush1.bf16.msra.mxu0 0
    %1655 = vmatprep.subr.bf16.mxu0 0
    %1656 = vmatpush1.bf16.msra.mxu0 0
    %1657 = vmatprep.subr.bf16.mxu0 0
    %1658 = vmatpush1.bf16.msra.mxu0 0
    %1659 = vmatprep.subr.bf16.mxu0 0
    %1660 = vmatpush1.bf16.msra.mxu0 0
    %1661 = vmatprep.subr.bf16.mxu0 0
    %1662 = vmatpush1.bf16.msra.mxu0 0
    %1663 = vmatprep.subr.bf16.mxu0 0
    %1664 = vmatpush1.bf16.msra.mxu0 0
    %1665 = vmatprep.subr.bf16.mxu0 0
    %1666 = vmatpush1.bf16.msra.mxu0 0
    %1667 = vmatprep.subr.bf16.mxu0 0
    %1668 = vmatpush1.bf16.msra.mxu0 0
    %1669 = vmatprep.subr.bf16.mxu0 0
    %1670 = vmatpush1.bf16.msra.mxu0 0
    %1671 = vmatprep.mubr.bf16.mxu0 0
    %1672 = vmatmul.mubr.bf16.gmra.mrb[0].mxu0 %v1637
    %v1673 = vpop.f32.mrb[0].mxu0
    %v1674 = vadd.f32 %v1399, %v1673
    %v1675 = vpop.f32.mrb[0].mxu0
    %v1676 = vadd.f32 %v1403, %v1675
    %v1677 = vpop.f32.mrb[0].mxu0
    %v1678 = vadd.f32 %v1399, %v1677
    %v1679 = vpop.f32.mrb[0].mxu0
    %v1680 = vadd.f32 %v1403, %v1679
    %1681 = vdwg.mxu0
    %1682 = vmatprep.subr.bf16.mxu0 %v1575
    %1683 = vmatpush1.bf16.msra.mxu0 %v1574
    %1684 = vmatprep.subr.bf16.mxu0 %v1591
    %1685 = vmatpush1.bf16.msra.mxu0 %v1590
    %1686 = vmatprep.subr.bf16.mxu0 0
    %1687 = vmatpush1.bf16.msra.mxu0 0
    %1688 = vmatprep.subr.bf16.mxu0 0
    %1689 = vmatpush1.bf16.msra.mxu0 0
    %1690 = vmatprep.subr.bf16.mxu0 0
    %1691 = vmatpush1.bf16.msra.mxu0 0
    %1692 = vmatprep.subr.bf16.mxu0 0
    %1693 = vmatpush1.bf16.msra.mxu0 0
    %1694 = vmatprep.subr.bf16.mxu0 0
    %1695 = vmatpush1.bf16.msra.mxu0 0
    %1696 = vmatprep.subr.bf16.mxu0 0
    %1697 = vmatpush1.bf16.msra.mxu0 0
    %1698 = vmatprep.subr.bf16.mxu0 0
    %1699 = vmatpush1.bf16.msra.mxu0 0
    %1700 = vmatprep.subr.bf16.mxu0 0
    %1701 = vmatpush1.bf16.msra.mxu0 0
    %1702 = vmatprep.subr.bf16.mxu0 0
    %1703 = vmatpush1.bf16.msra.mxu0 0
    %1704 = vmatprep.subr.bf16.mxu0 0
    %1705 = vmatpush1.bf16.msra.mxu0 0
    %1706 = vmatprep.subr.bf16.mxu0 0
    %1707 = vmatpush1.bf16.msra.mxu0 0
    %1708 = vmatprep.subr.bf16.mxu0 0
    %1709 = vmatpush1.bf16.msra.mxu0 0
    %1710 = vmatprep.subr.bf16.mxu0 0
    %1711 = vmatpush1.bf16.msra.mxu0 0
    %1712 = vmatprep.subr.bf16.mxu0 0
    %1713 = vmatpush1.bf16.msra.mxu0 0
    %1714 = vmatprep.mubr.bf16.mxu0 0
    %1715 = vmatmul.mubr.bf16.gmra.mrb[0].mxu0 %v1637
    %v1716 = vpop.f32.mrb[0].mxu0
    %v1717 = vadd.f32 %v1407, %v1716
    %v1718 = vpop.f32.mrb[0].mxu0
    %v1719 = vadd.f32 %v1411, %v1718
    %v1720 = vpop.f32.mrb[0].mxu0
    %v1721 = vadd.f32 %v1407, %v1720
    %v1722 = vpop.f32.mrb[0].mxu0
    %v1723 = vadd.f32 %v1411, %v1722
    %1724 = vdwg.mxu0
    %1725 = vmatprep.subr.bf16.mxu0 %v1577
    %1726 = vmatpush1.bf16.msra.mxu0 %v1576
    %1727 = vmatprep.subr.bf16.mxu0 %v1593
    %1728 = vmatpush1.bf16.msra.mxu0 %v1592
    %1729 = vmatprep.subr.bf16.mxu0 0
    %1730 = vmatpush1.bf16.msra.mxu0 0
    %1731 = vmatprep.subr.bf16.mxu0 0
    %1732 = vmatpush1.bf16.msra.mxu0 0
    %1733 = vmatprep.subr.bf16.mxu0 0
    %1734 = vmatpush1.bf16.msra.mxu0 0
    %1735 = vmatprep.subr.bf16.mxu0 0
    %1736 = vmatpush1.bf16.msra.mxu0 0
    %1737 = vmatprep.subr.bf16.mxu0 0
    %1738 = vmatpush1.bf16.msra.mxu0 0
    %1739 = vmatprep.subr.bf16.mxu0 0
    %1740 = vmatpush1.bf16.msra.mxu0 0
    %1741 = vmatprep.subr.bf16.mxu0 0
    %1742 = vmatpush1.bf16.msra.mxu0 0
    %1743 = vmatprep.subr.bf16.mxu0 0
    %1744 = vmatpush1.bf16.msra.mxu0 0
    %1745 = vmatprep.subr.bf16.mxu0 0
    %1746 = vmatpush1.bf16.msra.mxu0 0
    %1747 = vmatprep.subr.bf16.mxu0 0
    %1748 = vmatpush1.bf16.msra.mxu0 0
    %1749 = vmatprep.subr.bf16.mxu0 0
    %1750 = vmatpush1.bf16.msra.mxu0 0
    %1751 = vmatprep.subr.bf16.mxu0 0
    %1752 = vmatpush1.bf16.msra.mxu0 0
    %1753 = vmatprep.subr.bf16.mxu0 0
    %1754 = vmatpush1.bf16.msra.mxu0 0
    %1755 = vmatprep.subr.bf16.mxu0 0
    %1756 = vmatpush1.bf16.msra.mxu0 0
    %1757 = vmatprep.mubr.bf16.mxu0 0
    %1758 = vmatmul.mubr.bf16.gmra.mrb[0].mxu0 %v1637
    %v1759 = vpop.f32.mrb[0].mxu0
    %v1760 = vadd.f32 %v1415, %v1759
    %v1761 = vpop.f32.mrb[0].mxu0
    %v1762 = vadd.f32 %v1419, %v1761
    %v1763 = vpop.f32.mrb[0].mxu0
    %v1764 = vadd.f32 %v1415, %v1763
    %v1765 = vpop.f32.mrb[0].mxu0
    %v1766 = vadd.f32 %v1419, %v1765
    %1767 = vdwg.mxu0
    %1768 = vmatprep.subr.bf16.mxu0 %v1579
    %1769 = vmatpush1.bf16.msra.mxu0 %v1578
    %1770 = vmatprep.subr.bf16.mxu0 %v1595
    %1771 = vmatpush1.bf16.msra.mxu0 %v1594
    %1772 = vmatprep.subr.bf16.mxu0 0
    %1773 = vmatpush1.bf16.msra.mxu0 0
    %1774 = vmatprep.subr.bf16.mxu0 0
    %1775 = vmatpush1.bf16.msra.mxu0 0
    %1776 = vmatprep.subr.bf16.mxu0 0
    %1777 = vmatpush1.bf16.msra.mxu0 0
    %1778 = vmatprep.subr.bf16.mxu0 0
    %1779 = vmatpush1.bf16.msra.mxu0 0
    %1780 = vmatprep.subr.bf16.mxu0 0
    %1781 = vmatpush1.bf16.msra.mxu0 0
    %1782 = vmatprep.subr.bf16.mxu0 0
    %1783 = vmatpush1.bf16.msra.mxu0 0
    %1784 = vmatprep.subr.bf16.mxu0 0
    %1785 = vmatpush1.bf16.msra.mxu0 0
    %1786 = vmatprep.subr.bf16.mxu0 0
    %1787 = vmatpush1.bf16.msra.mxu0 0
    %1788 = vmatprep.subr.bf16.mxu0 0
    %1789 = vmatpush1.bf16.msra.mxu0 0
    %1790 = vmatprep.subr.bf16.mxu0 0
    %1791 = vmatpush1.bf16.msra.mxu0 0
    %1792 = vmatprep.subr.bf16.mxu0 0
    %1793 = vmatpush1.bf16.msra.mxu0 0
    %1794 = vmatprep.subr.bf16.mxu0 0
    %1795 = vmatpush1.bf16.msra.mxu0 0
    %1796 = vmatprep.subr.bf16.mxu0 0
    %1797 = vmatpush1.bf16.msra.mxu0 0
    %1798 = vmatprep.subr.bf16.mxu0 0
    %1799 = vmatpush1.bf16.msra.mxu0 0
    %1800 = vmatprep.mubr.bf16.mxu0 0
    %1801 = vmatmul.mubr.bf16.gmra.mrb[0].mxu0 %v1637
    %v1802 = vpop.f32.mrb[0].mxu0
    %v1803 = vadd.f32 %v1423, %v1802
    %v1804 = vpop.f32.mrb[0].mxu0
    %v1805 = vadd.f32 %v1427, %v1804
    %v1806 = vpop.f32.mrb[0].mxu0
    %v1807 = vadd.f32 %v1423, %v1806
    %v1808 = vpop.f32.mrb[0].mxu0
    %v1809 = vadd.f32 %v1427, %v1808
    %1810 = vdwg.mxu0
    %1811 = vmatprep.subr.bf16.mxu0 %v1581
    %1812 = vmatpush1.bf16.msra.mxu0 %v1580
    %1813 = vmatprep.subr.bf16.mxu0 %v1597
    %1814 = vmatpush1.bf16.msra.mxu0 %v1596
    %1815 = vmatprep.subr.bf16.mxu0 0
    %1816 = vmatpush1.bf16.msra.mxu0 0
    %1817 = vmatprep.subr.bf16.mxu0 0
    %1818 = vmatpush1.bf16.msra.mxu0 0
    %1819 = vmatprep.subr.bf16.mxu0 0
    %1820 = vmatpush1.bf16.msra.mxu0 0
    %1821 = vmatprep.subr.bf16.mxu0 0
    %1822 = vmatpush1.bf16.msra.mxu0 0
    %1823 = vmatprep.subr.bf16.mxu0 0
    %1824 = vmatpush1.bf16.msra.mxu0 0
    %1825 = vmatprep.subr.bf16.mxu0 0
    %1826 = vmatpush1.bf16.msra.mxu0 0
    %1827 = vmatprep.subr.bf16.mxu0 0
    %1828 = vmatpush1.bf16.msra.mxu0 0
    %1829 = vmatprep.subr.bf16.mxu0 0
    %1830 = vmatpush1.bf16.msra.mxu0 0
    %1831 = vmatprep.subr.bf16.mxu0 0
    %1832 = vmatpush1.bf16.msra.mxu0 0
    %1833 = vmatprep.subr.bf16.mxu0 0
    %1834 = vmatpush1.bf16.msra.mxu0 0
    %1835 = vmatprep.subr.bf16.mxu0 0
    %1836 = vmatpush1.bf16.msra.mxu0 0
    %1837 = vmatprep.subr.bf16.mxu0 0
    %1838 = vmatpush1.bf16.msra.mxu0 0
    %1839 = vmatprep.subr.bf16.mxu0 0
    %1840 = vmatpush1.bf16.msra.mxu0 0
    %1841 = vmatprep.subr.bf16.mxu0 0
    %1842 = vmatpush1.bf16.msra.mxu0 0
    %1843 = vmatprep.mubr.bf16.mxu0 0
    %1844 = vmatmul.mubr.bf16.gmra.mrb[0].mxu0 %v1637
    %v1845 = vpop.f32.mrb[0].mxu0
    %v1846 = vadd.f32 %v1431, %v1845
    %v1847 = vpop.f32.mrb[0].mxu0
    %v1848 = vadd.f32 %v1435, %v1847
    %v1849 = vpop.f32.mrb[0].mxu0
    %v1850 = vadd.f32 %v1431, %v1849
    %v1851 = vpop.f32.mrb[0].mxu0
    %v1852 = vadd.f32 %v1435, %v1851
    %1853 = vdwg.mxu0
    %1854 = vmatprep.subr.bf16.mxu0 %v1583
    %1855 = vmatpush1.bf16.msra.mxu0 %v1582
    %1856 = vmatprep.subr.bf16.mxu0 %v1599
    %1857 = vmatpush1.bf16.msra.mxu0 %v1598
    %1858 = vmatprep.subr.bf16.mxu0 0
    %1859 = vmatpush1.bf16.msra.mxu0 0
    %1860 = vmatprep.subr.bf16.mxu0 0
    %1861 = vmatpush1.bf16.msra.mxu0 0
    %1862 = vmatprep.subr.bf16.mxu0 0
    %1863 = vmatpush1.bf16.msra.mxu0 0
    %1864 = vmatprep.subr.bf16.mxu0 0
    %1865 = vmatpush1.bf16.msra.mxu0 0
    %1866 = vmatprep.subr.bf16.mxu0 0
    %1867 = vmatpush1.bf16.msra.mxu0 0
    %1868 = vmatprep.subr.bf16.mxu0 0
    %1869 = vmatpush1.bf16.msra.mxu0 0
    %1870 = vmatprep.subr.bf16.mxu0 0
    %1871 = vmatpush1.bf16.msra.mxu0 0
    %1872 = vmatprep.subr.bf16.mxu0 0
    %1873 = vmatpush1.bf16.msra.mxu0 0
    %1874 = vmatprep.subr.bf16.mxu0 0
    %1875 = vmatpush1.bf16.msra.mxu0 0
    %1876 = vmatprep.subr.bf16.mxu0 0
    %1877 = vmatpush1.bf16.msra.mxu0 0
    %1878 = vmatprep.subr.bf16.mxu0 0
    %1879 = vmatpush1.bf16.msra.mxu0 0
    %1880 = vmatprep.subr.bf16.mxu0 0
    %1881 = vmatpush1.bf16.msra.mxu0 0
    %1882 = vmatprep.subr.bf16.mxu0 0
    %1883 = vmatpush1.bf16.msra.mxu0 0
    %1884 = vmatprep.subr.bf16.mxu0 0
    %1885 = vmatpush1.bf16.msra.mxu0 0
    %1886 = vmatprep.mubr.bf16.mxu0 0
    %1887 = vmatmul.mubr.bf16.gmra.mrb[0].mxu0 %v1637
    %v1888 = vpop.f32.mrb[0].mxu0
    %v1889 = vadd.f32 %v1439, %v1888
    %v1890 = vpop.f32.mrb[0].mxu0
    %v1891 = vadd.f32 %v1443, %v1890
    %v1892 = vpop.f32.mrb[0].mxu0
    %v1893 = vadd.f32 %v1439, %v1892
    %v1894 = vpop.f32.mrb[0].mxu0
    %v1895 = vadd.f32 %v1443, %v1894
    %1896 = vdwg.mxu0
    %1897 = vmatprep.subr.bf16.mxu0 %v1585
    %1898 = vmatpush1.bf16.msra.mxu0 %v1584
    %1899 = vmatprep.subr.bf16.mxu0 %v1601
    %1900 = vmatpush1.bf16.msra.mxu0 %v1600
    %1901 = vmatprep.subr.bf16.mxu0 0
    %1902 = vmatpush1.bf16.msra.mxu0 0
    %1903 = vmatprep.subr.bf16.mxu0 0
    %1904 = vmatpush1.bf16.msra.mxu0 0
    %1905 = vmatprep.subr.bf16.mxu0 0
    %1906 = vmatpush1.bf16.msra.mxu0 0
    %1907 = vmatprep.subr.bf16.mxu0 0
    %1908 = vmatpush1.bf16.msra.mxu0 0
    %1909 = vmatprep.subr.bf16.mxu0 0
    %1910 = vmatpush1.bf16.msra.mxu0 0
    %1911 = vmatprep.subr.bf16.mxu0 0
    %1912 = vmatpush1.bf16.msra.mxu0 0
    %1913 = vmatprep.subr.bf16.mxu0 0
    %1914 = vmatpush1.bf16.msra.mxu0 0
    %1915 = vmatprep.subr.bf16.mxu0 0
    %1916 = vmatpush1.bf16.msra.mxu0 0
    %1917 = vmatprep.subr.bf16.mxu0 0
    %1918 = vmatpush1.bf16.msra.mxu0 0
    %1919 = vmatprep.subr.bf16.mxu0 0
    %1920 = vmatpush1.bf16.msra.mxu0 0
    %1921 = vmatprep.subr.bf16.mxu0 0
    %1922 = vmatpush1.bf16.msra.mxu0 0
    %1923 = vmatprep.subr.bf16.mxu0 0
    %1924 = vmatpush1.bf16.msra.mxu0 0
    %1925 = vmatprep.subr.bf16.mxu0 0
    %1926 = vmatpush1.bf16.msra.mxu0 0
    %1927 = vmatprep.subr.bf16.mxu0 0
    %1928 = vmatpush1.bf16.msra.mxu0 0
    %1929 = vmatprep.mubr.bf16.mxu0 0
    %1930 = vmatmul.mubr.bf16.gmra.mrb[0].mxu0 %v1637
    %v1931 = vpop.f32.mrb[0].mxu0
    %v1932 = vadd.f32 %v1447, %v1931
    %v1933 = vpop.f32.mrb[0].mxu0
    %v1934 = vadd.f32 %v1451, %v1933
    %v1935 = vpop.f32.mrb[0].mxu0
    %v1936 = vadd.f32 %v1447, %v1935
    %v1937 = vpop.f32.mrb[0].mxu0
    %v1938 = vadd.f32 %v1451, %v1937
    %1939 = vdwg.mxu0
    %1940 = vmatprep.subr.bf16.mxu0 %v1587
    %1941 = vmatpush1.bf16.msra.mxu0 %v1586
    %1942 = vmatprep.subr.bf16.mxu0 %v1603
    %1943 = vmatpush1.bf16.msra.mxu0 %v1602
    %1944 = vmatprep.subr.bf16.mxu0 0
    %1945 = vmatpush1.bf16.msra.mxu0 0
    %1946 = vmatprep.subr.bf16.mxu0 0
    %1947 = vmatpush1.bf16.msra.mxu0 0
    %1948 = vmatprep.subr.bf16.mxu0 0
    %1949 = vmatpush1.bf16.msra.mxu0 0
    %1950 = vmatprep.subr.bf16.mxu0 0
    %1951 = vmatpush1.bf16.msra.mxu0 0
    %1952 = vmatprep.subr.bf16.mxu0 0
    %1953 = vmatpush1.bf16.msra.mxu0 0
    %1954 = vmatprep.subr.bf16.mxu0 0
    %1955 = vmatpush1.bf16.msra.mxu0 0
    %1956 = vmatprep.subr.bf16.mxu0 0
    %1957 = vmatpush1.bf16.msra.mxu0 0
    %1958 = vmatprep.subr.bf16.mxu0 0
    %1959 = vmatpush1.bf16.msra.mxu0 0
    %1960 = vmatprep.subr.bf16.mxu0 0
    %1961 = vmatpush1.bf16.msra.mxu0 0
    %1962 = vmatprep.subr.bf16.mxu0 0
    %1963 = vmatpush1.bf16.msra.mxu0 0
    %1964 = vmatprep.subr.bf16.mxu0 0
    %1965 = vmatpush1.bf16.msra.mxu0 0
    %1966 = vmatprep.subr.bf16.mxu0 0
    %1967 = vmatpush1.bf16.msra.mxu0 0
    %1968 = vmatprep.subr.bf16.mxu0 0
    %1969 = vmatpush1.bf16.msra.mxu0 0
    %1970 = vmatprep.subr.bf16.mxu0 0
    %1971 = vmatpush1.bf16.msra.mxu0 0
    %1972 = vmatprep.mubr.bf16.mxu0 0
    %1973 = vmatmul.mubr.bf16.gmra.mrb[0].mxu0 %v1637
    %v1974 = vpop.f32.mrb[0].mxu0
    %v1975 = vadd.f32 %v1455, %v1974
    %v1976 = vpop.f32.mrb[0].mxu0
    %v1977 = vadd.f32 %v1459, %v1976
    %v1978 = vpop.f32.mrb[0].mxu0
    %v1979 = vadd.f32 %v1455, %v1978
    %v1980 = vpop.f32.mrb[0].mxu0
    %v1981 = vadd.f32 %v1459, %v1980
    %1982 = vdwg.mxu0
    %v1983 = vmax.f32 %v1674, 0.0
    %v1984 = vmax.f32 %v1676, 0.0
    %v1985 = vmax.f32 %v1717, 0.0
    %v1986 = vmax.f32 %v1719, 0.0
    %v1987 = vmax.f32 %v1760, 0.0
    %v1988 = vmax.f32 %v1762, 0.0
    %v1989 = vmax.f32 %v1803, 0.0
    %v1990 = vmax.f32 %v1805, 0.0
    %v1991 = vmax.f32 %v1846, 0.0
    %v1992 = vmax.f32 %v1848, 0.0
    %v1993 = vmax.f32 %v1889, 0.0
    %v1994 = vmax.f32 %v1891, 0.0
    %v1995 = vmax.f32 %v1932, 0.0
    %v1996 = vmax.f32 %v1934, 0.0
    %v1997 = vmax.f32 %v1975, 0.0
    %v1998 = vmax.f32 %v1977, 0.0
    %v1999 = vmax.f32 %v1678, 0.0
    %v2000 = vmax.f32 %v1680, 0.0
    %v2001 = vmax.f32 %v1721, 0.0
    %v2002 = vmax.f32 %v1723, 0.0
    %v2003 = vmax.f32 %v1764, 0.0
    %v2004 = vmax.f32 %v1766, 0.0
    %v2005 = vmax.f32 %v1807, 0.0
    %v2006 = vmax.f32 %v1809, 0.0
    %v2007 = vmax.f32 %v1850, 0.0
    %v2008 = vmax.f32 %v1852, 0.0
    %v2009 = vmax.f32 %v1893, 0.0
    %v2010 = vmax.f32 %v1895, 0.0
    %v2011 = vmax.f32 %v1936, 0.0
    %v2012 = vmax.f32 %v1938, 0.0
    %v2013 = vmax.f32 %v1979, 0.0
    %v2014 = vmax.f32 %v1981, 0.0
    %v2015 = vld [vmem:[%s27] sm:$0xf]
    %v2016 = vld [vmem:[%s27 + $0x4] sm:$0xf]
    %v2017 = vld [vmem:[%s27 + $0x8] sm:$0xf]
    %v2018 = vld [vmem:[%s27 + $0xc] sm:$0xf]
    %v2019 = vld [vmem:[%s27 + $0x10] sm:$0xf]
    %v2020 = vld [vmem:[%s27 + $0x14] sm:$0xf]
    %v2021 = vld [vmem:[%s27 + $0x18] sm:$0xf]
    %v2022 = vld [vmem:[%s27 + $0x1c] sm:$0xf]
    %v2023 = vld [vmem:[%s27 + $0x20] sm:$0xf]
    %v2024 = vld [vmem:[%s27 + $0x24] sm:$0xf]
    %v2025 = vld [vmem:[%s27 + $0x28] sm:$0xf]
    %v2026 = vld [vmem:[%s27 + $0x2c] sm:$0xf]
    %v2027 = vld [vmem:[%s27 + $0x30] sm:$0xf]
    %v2028 = vld [vmem:[%s27 + $0x34] sm:$0xf]
    %v2029 = vld [vmem:[%s27 + $0x38] sm:$0xf]
    %v2030 = vld [vmem:[%s27 + $0x3c] sm:$0xf]
    %v2031 = vld [vmem:[%s27 + $0x40] sm:$0xf]
    %v2032 = vld [vmem:[%s27 + $0x44] sm:$0xf]
    %v2033 = vld [vmem:[%s27 + $0x48] sm:$0xf]
    %v2034 = vld [vmem:[%s27 + $0x4c] sm:$0xf]
    %v2035 = vld [vmem:[%s27 + $0x50] sm:$0xf]
    %v2036 = vld [vmem:[%s27 + $0x54] sm:$0xf]
    %v2037 = vld [vmem:[%s27 + $0x58] sm:$0xf]
    %v2038 = vld [vmem:[%s27 + $0x5c] sm:$0xf]
    %v2039 = vld [vmem:[%s27 + $0x60] sm:$0xf]
    %v2040 = vld [vmem:[%s27 + $0x64] sm:$0xf]
    %v2041 = vld [vmem:[%s27 + $0x68] sm:$0xf]
    %v2042 = vld [vmem:[%s27 + $0x6c] sm:$0xf]
    %v2043 = vld [vmem:[%s27 + $0x70] sm:$0xf]
    %v2044 = vld [vmem:[%s27 + $0x74] sm:$0xf]
    %v2045 = vld [vmem:[%s27 + $0x78] sm:$0xf]
    %v2046 = vld [vmem:[%s27 + $0x7c] sm:$0xf]
    %v2047 = vld [vmem:[%s27 + $0x80] sm:$0xf]
    %v2048 = vld [vmem:[%s27 + $0x84] sm:$0xf]
    %v2049 = vld [vmem:[%s27 + $0x88] sm:$0xf]
    %v2050 = vld [vmem:[%s27 + $0x8c] sm:$0xf]
    %v2051 = vld [vmem:[%s27 + $0x90] sm:$0xf]
    %v2052 = vld [vmem:[%s27 + $0x94] sm:$0xf]
    %v2053 = vld [vmem:[%s27 + $0x98] sm:$0xf]
    %v2054 = vld [vmem:[%s27 + $0x9c] sm:$0xf]
    %v2055 = vld [vmem:[%s27 + $0xa0] sm:$0xf]
    %v2056 = vld [vmem:[%s27 + $0xa4] sm:$0xf]
    %v2057 = vld [vmem:[%s27 + $0xa8] sm:$0xf]
    %v2058 = vld [vmem:[%s27 + $0xac] sm:$0xf]
    %v2059 = vld [vmem:[%s27 + $0xb0] sm:$0xf]
    %v2060 = vld [vmem:[%s27 + $0xb4] sm:$0xf]
    %v2061 = vld [vmem:[%s27 + $0xb8] sm:$0xf]
    %v2062 = vld [vmem:[%s27 + $0xbc] sm:$0xf]
    %v2063 = vld [vmem:[%s27 + $0xc0] sm:$0xf]
    %v2064 = vld [vmem:[%s27 + $0xc4] sm:$0xf]
    %v2065 = vld [vmem:[%s27 + $0xc8] sm:$0xf]
    %v2066 = vld [vmem:[%s27 + $0xcc] sm:$0xf]
    %v2067 = vld [vmem:[%s27 + $0xd0] sm:$0xf]
    %v2068 = vld [vmem:[%s27 + $0xd4] sm:$0xf]
    %v2069 = vld [vmem:[%s27 + $0xd8] sm:$0xf]
    %v2070 = vld [vmem:[%s27 + $0xdc] sm:$0xf]
    %v2071 = vld [vmem:[%s27 + $0xe0] sm:$0xf]
    %v2072 = vld [vmem:[%s27 + $0xe4] sm:$0xf]
    %v2073 = vld [vmem:[%s27 + $0xe8] sm:$0xf]
    %v2074 = vld [vmem:[%s27 + $0xec] sm:$0xf]
    %v2075 = vld [vmem:[%s27 + $0xf0] sm:$0xf]
    %v2076 = vld [vmem:[%s27 + $0xf4] sm:$0xf]
    %v2077 = vld [vmem:[%s27 + $0xf8] sm:$0xf]
    %v2078 = vld [vmem:[%s27 + $0xfc] sm:$0xf]
    %v2079 = vld [vmem:[%s27 + $0x100] sm:$0xf]
    %v2080 = vld [vmem:[%s27 + $0x104] sm:$0xf]
    %v2081 = vld [vmem:[%s27 + $0x108] sm:$0xf]
    %v2082 = vld [vmem:[%s27 + $0x10c] sm:$0xf]
    %v2083 = vld [vmem:[%s27 + $0x110] sm:$0xf]
    %v2084 = vld [vmem:[%s27 + $0x114] sm:$0xf]
    %v2085 = vld [vmem:[%s27 + $0x118] sm:$0xf]
    %v2086 = vld [vmem:[%s27 + $0x11c] sm:$0xf]
    %v2087 = vld [vmem:[%s27 + $0x120] sm:$0xf]
    %v2088 = vld [vmem:[%s27 + $0x124] sm:$0xf]
    %v2089 = vld [vmem:[%s27 + $0x128] sm:$0xf]
    %v2090 = vld [vmem:[%s27 + $0x12c] sm:$0xf]
    %v2091 = vld [vmem:[%s27 + $0x130] sm:$0xf]
    %v2092 = vld [vmem:[%s27 + $0x134] sm:$0xf]
    %v2093 = vld [vmem:[%s27 + $0x138] sm:$0xf]
    %v2094 = vld [vmem:[%s27 + $0x13c] sm:$0xf]
    %v2095 = vld [vmem:[%s27 + $0x140] sm:$0xf]
    %v2096 = vld [vmem:[%s27 + $0x144] sm:$0xf]
    %v2097 = vld [vmem:[%s27 + $0x148] sm:$0xf]
    %v2098 = vld [vmem:[%s27 + $0x14c] sm:$0xf]
    %v2099 = vld [vmem:[%s27 + $0x150] sm:$0xf]
    %v2100 = vld [vmem:[%s27 + $0x154] sm:$0xf]
    %v2101 = vld [vmem:[%s27 + $0x158] sm:$0xf]
    %v2102 = vld [vmem:[%s27 + $0x15c] sm:$0xf]
    %v2103 = vld [vmem:[%s27 + $0x160] sm:$0xf]
    %v2104 = vld [vmem:[%s27 + $0x164] sm:$0xf]
    %v2105 = vld [vmem:[%s27 + $0x168] sm:$0xf]
    %v2106 = vld [vmem:[%s27 + $0x16c] sm:$0xf]
    %v2107 = vld [vmem:[%s27 + $0x170] sm:$0xf]
    %v2108 = vld [vmem:[%s27 + $0x174] sm:$0xf]
    %v2109 = vld [vmem:[%s27 + $0x178] sm:$0xf]
    %v2110 = vld [vmem:[%s27 + $0x17c] sm:$0xf]
    %v2111 = vld [vmem:[%s27 + $0x180] sm:$0xf]
    %v2112 = vld [vmem:[%s27 + $0x184] sm:$0xf]
    %v2113 = vld [vmem:[%s27 + $0x188] sm:$0xf]
    %v2114 = vld [vmem:[%s27 + $0x18c] sm:$0xf]
    %v2115 = vld [vmem:[%s27 + $0x190] sm:$0xf]
    %v2116 = vld [vmem:[%s27 + $0x194] sm:$0xf]
    %v2117 = vld [vmem:[%s27 + $0x198] sm:$0xf]
    %v2118 = vld [vmem:[%s27 + $0x19c] sm:$0xf]
    %v2119 = vld [vmem:[%s27 + $0x1a0] sm:$0xf]
    %v2120 = vld [vmem:[%s27 + $0x1a4] sm:$0xf]
    %v2121 = vld [vmem:[%s27 + $0x1a8] sm:$0xf]
    %v2122 = vld [vmem:[%s27 + $0x1ac] sm:$0xf]
    %v2123 = vld [vmem:[%s27 + $0x1b0] sm:$0xf]
    %v2124 = vld [vmem:[%s27 + $0x1b4] sm:$0xf]
    %v2125 = vld [vmem:[%s27 + $0x1b8] sm:$0xf]
    %v2126 = vld [vmem:[%s27 + $0x1bc] sm:$0xf]
    %v2127 = vld [vmem:[%s27 + $0x1c0] sm:$0xf]
    %v2128 = vld [vmem:[%s27 + $0x1c4] sm:$0xf]
    %v2129 = vld [vmem:[%s27 + $0x1c8] sm:$0xf]
    %v2130 = vld [vmem:[%s27 + $0x1cc] sm:$0xf]
    %v2131 = vld [vmem:[%s27 + $0x1d0] sm:$0xf]
    %v2132 = vld [vmem:[%s27 + $0x1d4] sm:$0xf]
    %v2133 = vld [vmem:[%s27 + $0x1d8] sm:$0xf]
    %v2134 = vld [vmem:[%s27 + $0x1dc] sm:$0xf]
    %v2135 = vld [vmem:[%s27 + $0x1e0] sm:$0xf]
    %v2136 = vld [vmem:[%s27 + $0x1e4] sm:$0xf]
    %v2137 = vld [vmem:[%s27 + $0x1e8] sm:$0xf]
    %v2138 = vld [vmem:[%s27 + $0x1ec] sm:$0xf]
    %v2139 = vld [vmem:[%s27 + $0x1f0] sm:$0xf]
    %v2140 = vld [vmem:[%s27 + $0x1f4] sm:$0xf]
    %v2141 = vld [vmem:[%s27 + $0x1f8] sm:$0xf]
    %v2142 = vld [vmem:[%s27 + $0x1fc] sm:$0xf]
    %v2143 = vld [vmem:[%s27 + $0x200] sm:$0xf]
    %v2144 = vld [vmem:[%s27 + $0x204] sm:$0xf]
    %v2145 = vld [vmem:[%s27 + $0x208] sm:$0xf]
    %v2146 = vld [vmem:[%s27 + $0x20c] sm:$0xf]
    %v2147 = vld [vmem:[%s27 + $0x210] sm:$0xf]
    %v2148 = vld [vmem:[%s27 + $0x214] sm:$0xf]
    %v2149 = vld [vmem:[%s27 + $0x218] sm:$0xf]
    %v2150 = vld [vmem:[%s27 + $0x21c] sm:$0xf]
    %v2151 = vld [vmem:[%s27 + $0x220] sm:$0xf]
    %v2152 = vld [vmem:[%s27 + $0x224] sm:$0xf]
    %v2153 = vld [vmem:[%s27 + $0x228] sm:$0xf]
    %v2154 = vld [vmem:[%s27 + $0x22c] sm:$0xf]
    %v2155 = vld [vmem:[%s27 + $0x230] sm:$0xf]
    %v2156 = vld [vmem:[%s27 + $0x234] sm:$0xf]
    %v2157 = vld [vmem:[%s27 + $0x238] sm:$0xf]
    %v2158 = vld [vmem:[%s27 + $0x23c] sm:$0xf]
    %v2159 = vld [vmem:[%s27 + $0x240] sm:$0xf]
    %v2160 = vld [vmem:[%s27 + $0x244] sm:$0xf]
    %v2161 = vld [vmem:[%s27 + $0x248] sm:$0xf]
    %v2162 = vld [vmem:[%s27 + $0x24c] sm:$0xf]
    %v2163 = vld [vmem:[%s27 + $0x250] sm:$0xf]
    %v2164 = vld [vmem:[%s27 + $0x254] sm:$0xf]
    %v2165 = vld [vmem:[%s27 + $0x258] sm:$0xf]
    %v2166 = vld [vmem:[%s27 + $0x25c] sm:$0xf]
    %v2167 = vld [vmem:[%s27 + $0x260] sm:$0xf]
    %v2168 = vld [vmem:[%s27 + $0x264] sm:$0xf]
    %v2169 = vld [vmem:[%s27 + $0x268] sm:$0xf]
    %v2170 = vld [vmem:[%s27 + $0x26c] sm:$0xf]
    %v2171 = vld [vmem:[%s27 + $0x270] sm:$0xf]
    %v2172 = vld [vmem:[%s27 + $0x274] sm:$0xf]
    %v2173 = vld [vmem:[%s27 + $0x278] sm:$0xf]
    %v2174 = vld [vmem:[%s27 + $0x27c] sm:$0xf]
    %v2175 = vld [vmem:[%s27 + $0x280] sm:$0xf]
    %v2176 = vld [vmem:[%s27 + $0x284] sm:$0xf]
    %v2177 = vld [vmem:[%s27 + $0x288] sm:$0xf]
    %v2178 = vld [vmem:[%s27 + $0x28c] sm:$0xf]
    %v2179 = vld [vmem:[%s27 + $0x290] sm:$0xf]
    %v2180 = vld [vmem:[%s27 + $0x294] sm:$0xf]
    %v2181 = vld [vmem:[%s27 + $0x298] sm:$0xf]
    %v2182 = vld [vmem:[%s27 + $0x29c] sm:$0xf]
    %v2183 = vld [vmem:[%s27 + $0x2a0] sm:$0xf]
    %v2184 = vld [vmem:[%s27 + $0x2a4] sm:$0xf]
    %v2185 = vld [vmem:[%s27 + $0x2a8] sm:$0xf]
    %v2186 = vld [vmem:[%s27 + $0x2ac] sm:$0xf]
    %v2187 = vld [vmem:[%s27 + $0x2b0] sm:$0xf]
    %v2188 = vld [vmem:[%s27 + $0x2b4] sm:$0xf]
    %v2189 = vld [vmem:[%s27 + $0x2b8] sm:$0xf]
    %v2190 = vld [vmem:[%s27 + $0x2bc] sm:$0xf]
    %v2191 = vld [vmem:[%s27 + $0x2c0] sm:$0xf]
    %v2192 = vld [vmem:[%s27 + $0x2c4] sm:$0xf]
    %v2193 = vld [vmem:[%s27 + $0x2c8] sm:$0xf]
    %v2194 = vld [vmem:[%s27 + $0x2cc] sm:$0xf]
    %v2195 = vld [vmem:[%s27 + $0x2d0] sm:$0xf]
    %v2196 = vld [vmem:[%s27 + $0x2d4] sm:$0xf]
    %v2197 = vld [vmem:[%s27 + $0x2d8] sm:$0xf]
    %v2198 = vld [vmem:[%s27 + $0x2dc] sm:$0xf]
    %v2199 = vld [vmem:[%s27 + $0x2e0] sm:$0xf]
    %v2200 = vld [vmem:[%s27 + $0x2e4] sm:$0xf]
    %v2201 = vld [vmem:[%s27 + $0x2e8] sm:$0xf]
    %v2202 = vld [vmem:[%s27 + $0x2ec] sm:$0xf]
    %v2203 = vld [vmem:[%s27 + $0x2f0] sm:$0xf]
    %v2204 = vld [vmem:[%s27 + $0x2f4] sm:$0xf]
    %v2205 = vld [vmem:[%s27 + $0x2f8] sm:$0xf]
    %v2206 = vld [vmem:[%s27 + $0x2fc] sm:$0xf]
    %v2207 = vld [vmem:[%s27 + $0x300] sm:$0xf]
    %v2208 = vld [vmem:[%s27 + $0x304] sm:$0xf]
    %v2209 = vld [vmem:[%s27 + $0x308] sm:$0xf]
    %v2210 = vld [vmem:[%s27 + $0x30c] sm:$0xf]
    %v2211 = vld [vmem:[%s27 + $0x310] sm:$0xf]
    %v2212 = vld [vmem:[%s27 + $0x314] sm:$0xf]
    %v2213 = vld [vmem:[%s27 + $0x318] sm:$0xf]
    %v2214 = vld [vmem:[%s27 + $0x31c] sm:$0xf]
    %v2215 = vld [vmem:[%s27 + $0x320] sm:$0xf]
    %v2216 = vld [vmem:[%s27 + $0x324] sm:$0xf]
    %v2217 = vld [vmem:[%s27 + $0x328] sm:$0xf]
    %v2218 = vld [vmem:[%s27 + $0x32c] sm:$0xf]
    %v2219 = vld [vmem:[%s27 + $0x330] sm:$0xf]
    %v2220 = vld [vmem:[%s27 + $0x334] sm:$0xf]
    %v2221 = vld [vmem:[%s27 + $0x338] sm:$0xf]
    %v2222 = vld [vmem:[%s27 + $0x33c] sm:$0xf]
    %v2223 = vld [vmem:[%s27 + $0x340] sm:$0xf]
    %v2224 = vld [vmem:[%s27 + $0x344] sm:$0xf]
    %v2225 = vld [vmem:[%s27 + $0x348] sm:$0xf]
    %v2226 = vld [vmem:[%s27 + $0x34c] sm:$0xf]
    %v2227 = vld [vmem:[%s27 + $0x350] sm:$0xf]
    %v2228 = vld [vmem:[%s27 + $0x354] sm:$0xf]
    %v2229 = vld [vmem:[%s27 + $0x358] sm:$0xf]
    %v2230 = vld [vmem:[%s27 + $0x35c] sm:$0xf]
    %v2231 = vld [vmem:[%s27 + $0x360] sm:$0xf]
    %v2232 = vld [vmem:[%s27 + $0x364] sm:$0xf]
    %v2233 = vld [vmem:[%s27 + $0x368] sm:$0xf]
    %v2234 = vld [vmem:[%s27 + $0x36c] sm:$0xf]
    %v2235 = vld [vmem:[%s27 + $0x370] sm:$0xf]
    %v2236 = vld [vmem:[%s27 + $0x374] sm:$0xf]
    %v2237 = vld [vmem:[%s27 + $0x378] sm:$0xf]
    %v2238 = vld [vmem:[%s27 + $0x37c] sm:$0xf]
    %v2239 = vld [vmem:[%s27 + $0x380] sm:$0xf]
    %v2240 = vld [vmem:[%s27 + $0x384] sm:$0xf]
    %v2241 = vld [vmem:[%s27 + $0x388] sm:$0xf]
    %v2242 = vld [vmem:[%s27 + $0x38c] sm:$0xf]
    %v2243 = vld [vmem:[%s27 + $0x390] sm:$0xf]
    %v2244 = vld [vmem:[%s27 + $0x394] sm:$0xf]
    %v2245 = vld [vmem:[%s27 + $0x398] sm:$0xf]
    %v2246 = vld [vmem:[%s27 + $0x39c] sm:$0xf]
    %v2247 = vld [vmem:[%s27 + $0x3a0] sm:$0xf]
    %v2248 = vld [vmem:[%s27 + $0x3a4] sm:$0xf]
    %v2249 = vld [vmem:[%s27 + $0x3a8] sm:$0xf]
    %v2250 = vld [vmem:[%s27 + $0x3ac] sm:$0xf]
    %v2251 = vld [vmem:[%s27 + $0x3b0] sm:$0xf]
    %v2252 = vld [vmem:[%s27 + $0x3b4] sm:$0xf]
    %v2253 = vld [vmem:[%s27 + $0x3b8] sm:$0xf]
    %v2254 = vld [vmem:[%s27 + $0x3bc] sm:$0xf]
    %v2255 = vld [vmem:[%s27 + $0x3c0] sm:$0xf]
    %v2256 = vld [vmem:[%s27 + $0x3c4] sm:$0xf]
    %v2257 = vld [vmem:[%s27 + $0x3c8] sm:$0xf]
    %v2258 = vld [vmem:[%s27 + $0x3cc] sm:$0xf]
    %v2259 = vld [vmem:[%s27 + $0x3d0] sm:$0xf]
    %v2260 = vld [vmem:[%s27 + $0x3d4] sm:$0xf]
    %v2261 = vld [vmem:[%s27 + $0x3d8] sm:$0xf]
    %v2262 = vld [vmem:[%s27 + $0x3dc] sm:$0xf]
    %v2263 = vld [vmem:[%s27 + $0x3e0] sm:$0xf]
    %v2264 = vld [vmem:[%s27 + $0x3e4] sm:$0xf]
    %v2265 = vld [vmem:[%s27 + $0x3e8] sm:$0xf]
    %v2266 = vld [vmem:[%s27 + $0x3ec] sm:$0xf]
    %v2267 = vld [vmem:[%s27 + $0x3f0] sm:$0xf]
    %v2268 = vld [vmem:[%s27 + $0x3f4] sm:$0xf]
    %v2269 = vld [vmem:[%s27 + $0x3f8] sm:$0xf]
    %v2270 = vld [vmem:[%s27 + $0x3fc] sm:$0xf]
    %v2271 = vld [vmem:[%s29] sm:$0x1]
    %v2272 = vpack.c.bf16 %v1999, %v1983
    %v2273 = vpack.c.bf16 %v2000, %v1984
    %v2274 = vpack.c.bf16 %v2001, %v1985
    %v2275 = vpack.c.bf16 %v2002, %v1986
    %v2276 = vpack.c.bf16 %v2003, %v1987
    %v2277 = vpack.c.bf16 %v2004, %v1988
    %v2278 = vpack.c.bf16 %v2005, %v1989
    %v2279 = vpack.c.bf16 %v2006, %v1990
    %v2280 = vpack.c.bf16 %v2007, %v1991
    %v2281 = vpack.c.bf16 %v2008, %v1992
    %v2282 = vpack.c.bf16 %v2009, %v1993
    %v2283 = vpack.c.bf16 %v2010, %v1994
    %v2284 = vpack.c.bf16 %v2011, %v1995
    %v2285 = vpack.c.bf16 %v2012, %v1996
    %v2286 = vpack.c.bf16 %v2013, %v1997
    %v2287 = vpack.c.bf16 %v2014, %v1998
    %v2289 = vlaneseq
    %v2290 = vshrl.u32 %v2289, 7
    %v2291 = vsub.s32 0, %v2290
    %v2292 = vrot.slane %v2271, %v2291
    %v2550 = vunpack.c.l.b16 %v2015
    %v2551 = vunpack.c.l.b16 %v2016
    %v2552 = vunpack.c.l.b16 %v2017
    %v2553 = vunpack.c.l.b16 %v2018
    %v2554 = vunpack.c.l.b16 %v2019
    %v2555 = vunpack.c.l.b16 %v2020
    %v2556 = vunpack.c.l.b16 %v2021
    %v2557 = vunpack.c.l.b16 %v2022
    %v2558 = vunpack.c.l.b16 %v2023
    %v2559 = vunpack.c.l.b16 %v2024
    %v2560 = vunpack.c.l.b16 %v2025
    %v2561 = vunpack.c.l.b16 %v2026
    %v2562 = vunpack.c.l.b16 %v2027
    %v2563 = vunpack.c.l.b16 %v2028
    %v2564 = vunpack.c.l.b16 %v2029
    %v2565 = vunpack.c.l.b16 %v2030
    %v2566 = vunpack.c.l.b16 %v2031
    %v2567 = vunpack.c.l.b16 %v2032
    %v2568 = vunpack.c.l.b16 %v2033
    %v2569 = vunpack.c.l.b16 %v2034
    %v2570 = vunpack.c.l.b16 %v2035
    %v2571 = vunpack.c.l.b16 %v2036
    %v2572 = vunpack.c.l.b16 %v2037
    %v2573 = vunpack.c.l.b16 %v2038
    %v2574 = vunpack.c.l.b16 %v2039
    %v2575 = vunpack.c.l.b16 %v2040
    %v2576 = vunpack.c.l.b16 %v2041
    %v2577 = vunpack.c.l.b16 %v2042
    %v2578 = vunpack.c.l.b16 %v2043
    %v2579 = vunpack.c.l.b16 %v2044
    %v2580 = vunpack.c.l.b16 %v2045
    %v2581 = vunpack.c.l.b16 %v2046
    %v2582 = vunpack.c.l.b16 %v2047
    %v2583 = vunpack.c.l.b16 %v2048
    %v2584 = vunpack.c.l.b16 %v2049
    %v2585 = vunpack.c.l.b16 %v2050
    %v2586 = vunpack.c.l.b16 %v2051
    %v2587 = vunpack.c.l.b16 %v2052
    %v2588 = vunpack.c.l.b16 %v2053
    %v2589 = vunpack.c.l.b16 %v2054
    %v2590 = vunpack.c.l.b16 %v2055
    %v2591 = vunpack.c.l.b16 %v2056
    %v2592 = vunpack.c.l.b16 %v2057
    %v2593 = vunpack.c.l.b16 %v2058
    %v2594 = vunpack.c.l.b16 %v2059
    %v2595 = vunpack.c.l.b16 %v2060
    %v2596 = vunpack.c.l.b16 %v2061
    %v2597 = vunpack.c.l.b16 %v2062
    %v2598 = vunpack.c.l.b16 %v2063
    %v2599 = vunpack.c.l.b16 %v2064
    %v2600 = vunpack.c.l.b16 %v2065
    %v2601 = vunpack.c.l.b16 %v2066
    %v2602 = vunpack.c.l.b16 %v2067
    %v2603 = vunpack.c.l.b16 %v2068
    %v2604 = vunpack.c.l.b16 %v2069
    %v2605 = vunpack.c.l.b16 %v2070
    %v2606 = vunpack.c.l.b16 %v2071
    %v2607 = vunpack.c.l.b16 %v2072
    %v2608 = vunpack.c.l.b16 %v2073
    %v2609 = vunpack.c.l.b16 %v2074
    %v2610 = vunpack.c.l.b16 %v2075
    %v2611 = vunpack.c.l.b16 %v2076
    %v2612 = vunpack.c.l.b16 %v2077
    %v2613 = vunpack.c.l.b16 %v2078
    %v2614 = vunpack.c.l.b16 %v2079
    %v2615 = vunpack.c.l.b16 %v2080
    %v2616 = vunpack.c.l.b16 %v2081
    %v2617 = vunpack.c.l.b16 %v2082
    %v2618 = vunpack.c.l.b16 %v2083
    %v2619 = vunpack.c.l.b16 %v2084
    %v2620 = vunpack.c.l.b16 %v2085
    %v2621 = vunpack.c.l.b16 %v2086
    %v2622 = vunpack.c.l.b16 %v2087
    %v2623 = vunpack.c.l.b16 %v2088
    %v2624 = vunpack.c.l.b16 %v2089
    %v2625 = vunpack.c.l.b16 %v2090
    %v2626 = vunpack.c.l.b16 %v2091
    %v2627 = vunpack.c.l.b16 %v2092
    %v2628 = vunpack.c.l.b16 %v2093
    %v2629 = vunpack.c.l.b16 %v2094
    %v2630 = vunpack.c.l.b16 %v2095
    %v2631 = vunpack.c.l.b16 %v2096
    %v2632 = vunpack.c.l.b16 %v2097
    %v2633 = vunpack.c.l.b16 %v2098
    %v2634 = vunpack.c.l.b16 %v2099
    %v2635 = vunpack.c.l.b16 %v2100
    %v2636 = vunpack.c.l.b16 %v2101
    %v2637 = vunpack.c.l.b16 %v2102
    %v2638 = vunpack.c.l.b16 %v2103
    %v2639 = vunpack.c.l.b16 %v2104
    %v2640 = vunpack.c.l.b16 %v2105
    %v2641 = vunpack.c.l.b16 %v2106
    %v2642 = vunpack.c.l.b16 %v2107
    %v2643 = vunpack.c.l.b16 %v2108
    %v2644 = vunpack.c.l.b16 %v2109
    %v2645 = vunpack.c.l.b16 %v2110
    %v2646 = vunpack.c.l.b16 %v2111
    %v2647 = vunpack.c.l.b16 %v2112
    %v2648 = vunpack.c.l.b16 %v2113
    %v2649 = vunpack.c.l.b16 %v2114
    %v2650 = vunpack.c.l.b16 %v2115
    %v2651 = vunpack.c.l.b16 %v2116
    %v2652 = vunpack.c.l.b16 %v2117
    %v2653 = vunpack.c.l.b16 %v2118
    %v2654 = vunpack.c.l.b16 %v2119
    %v2655 = vunpack.c.l.b16 %v2120
    %v2656 = vunpack.c.l.b16 %v2121
    %v2657 = vunpack.c.l.b16 %v2122
    %v2658 = vunpack.c.l.b16 %v2123
    %v2659 = vunpack.c.l.b16 %v2124
    %v2660 = vunpack.c.l.b16 %v2125
    %v2661 = vunpack.c.l.b16 %v2126
    %v2662 = vunpack.c.l.b16 %v2127
    %v2663 = vunpack.c.l.b16 %v2128
    %v2664 = vunpack.c.l.b16 %v2129
    %v2665 = vunpack.c.l.b16 %v2130
    %v2666 = vunpack.c.l.b16 %v2131
    %v2667 = vunpack.c.l.b16 %v2132
    %v2668 = vunpack.c.l.b16 %v2133
    %v2669 = vunpack.c.l.b16 %v2134
    %v2670 = vunpack.c.l.b16 %v2135
    %v2671 = vunpack.c.l.b16 %v2136
    %v2672 = vunpack.c.l.b16 %v2137
    %v2673 = vunpack.c.l.b16 %v2138
    %v2674 = vunpack.c.l.b16 %v2139
    %v2675 = vunpack.c.l.b16 %v2140
    %v2676 = vunpack.c.l.b16 %v2141
    %v2677 = vunpack.c.l.b16 %v2142
    %v2678 = vunpack.c.l.b16 %v2143
    %v2679 = vunpack.c.l.b16 %v2144
    %v2680 = vunpack.c.l.b16 %v2145
    %v2681 = vunpack.c.l.b16 %v2146
    %v2682 = vunpack.c.l.b16 %v2147
    %v2683 = vunpack.c.l.b16 %v2148
    %v2684 = vunpack.c.l.b16 %v2149
    %v2685 = vunpack.c.l.b16 %v2150
    %v2686 = vunpack.c.l.b16 %v2151
    %v2687 = vunpack.c.l.b16 %v2152
    %v2688 = vunpack.c.l.b16 %v2153
    %v2689 = vunpack.c.l.b16 %v2154
    %v2690 = vunpack.c.l.b16 %v2155
    %v2691 = vunpack.c.l.b16 %v2156
    %v2692 = vunpack.c.l.b16 %v2157
    %v2693 = vunpack.c.l.b16 %v2158
    %v2694 = vunpack.c.l.b16 %v2159
    %v2695 = vunpack.c.l.b16 %v2160
    %v2696 = vunpack.c.l.b16 %v2161
    %v2697 = vunpack.c.l.b16 %v2162
    %v2698 = vunpack.c.l.b16 %v2163
    %v2699 = vunpack.c.l.b16 %v2164
    %v2700 = vunpack.c.l.b16 %v2165
    %v2701 = vunpack.c.l.b16 %v2166
    %v2702 = vunpack.c.l.b16 %v2167
    %v2703 = vunpack.c.l.b16 %v2168
    %v2704 = vunpack.c.l.b16 %v2169
    %v2705 = vunpack.c.l.b16 %v2170
    %v2706 = vunpack.c.l.b16 %v2171
    %v2707 = vunpack.c.l.b16 %v2172
    %v2708 = vunpack.c.l.b16 %v2173
    %v2709 = vunpack.c.l.b16 %v2174
    %v2710 = vunpack.c.l.b16 %v2175
    %v2711 = vunpack.c.l.b16 %v2176
    %v2712 = vunpack.c.l.b16 %v2177
    %v2713 = vunpack.c.l.b16 %v2178
    %v2714 = vunpack.c.l.b16 %v2179
    %v2715 = vunpack.c.l.b16 %v2180
    %v2716 = vunpack.c.l.b16 %v2181
    %v2717 = vunpack.c.l.b16 %v2182
    %v2718 = vunpack.c.l.b16 %v2183
    %v2719 = vunpack.c.l.b16 %v2184
    %v2720 = vunpack.c.l.b16 %v2185
    %v2721 = vunpack.c.l.b16 %v2186
    %v2722 = vunpack.c.l.b16 %v2187
    %v2723 = vunpack.c.l.b16 %v2188
    %v2724 = vunpack.c.l.b16 %v2189
    %v2725 = vunpack.c.l.b16 %v2190
    %v2726 = vunpack.c.l.b16 %v2191
    %v2727 = vunpack.c.l.b16 %v2192
    %v2728 = vunpack.c.l.b16 %v2193
    %v2729 = vunpack.c.l.b16 %v2194
    %v2730 = vunpack.c.l.b16 %v2195
    %v2731 = vunpack.c.l.b16 %v2196
    %v2732 = vunpack.c.l.b16 %v2197
    %v2733 = vunpack.c.l.b16 %v2198
    %v2734 = vunpack.c.l.b16 %v2199
    %v2735 = vunpack.c.l.b16 %v2200
    %v2736 = vunpack.c.l.b16 %v2201
    %v2737 = vunpack.c.l.b16 %v2202
    %v2738 = vunpack.c.l.b16 %v2203
    %v2739 = vunpack.c.l.b16 %v2204
    %v2740 = vunpack.c.l.b16 %v2205
    %v2741 = vunpack.c.l.b16 %v2206
    %v2742 = vunpack.c.l.b16 %v2207
    %v2743 = vunpack.c.l.b16 %v2208
    %v2744 = vunpack.c.l.b16 %v2209
    %v2745 = vunpack.c.l.b16 %v2210
    %v2746 = vunpack.c.l.b16 %v2211
    %v2747 = vunpack.c.l.b16 %v2212
    %v2748 = vunpack.c.l.b16 %v2213
    %v2749 = vunpack.c.l.b16 %v2214
    %v2750 = vunpack.c.l.b16 %v2215
    %v2751 = vunpack.c.l.b16 %v2216
    %v2752 = vunpack.c.l.b16 %v2217
    %v2753 = vunpack.c.l.b16 %v2218
    %v2754 = vunpack.c.l.b16 %v2219
    %v2755 = vunpack.c.l.b16 %v2220
    %v2756 = vunpack.c.l.b16 %v2221
    %v2757 = vunpack.c.l.b16 %v2222
    %v2758 = vunpack.c.l.b16 %v2223
    %v2759 = vunpack.c.l.b16 %v2224
    %v2760 = vunpack.c.l.b16 %v2225
    %v2761 = vunpack.c.l.b16 %v2226
    %v2762 = vunpack.c.l.b16 %v2227
    %v2763 = vunpack.c.l.b16 %v2228
    %v2764 = vunpack.c.l.b16 %v2229
    %v2765 = vunpack.c.l.b16 %v2230
    %v2766 = vunpack.c.l.b16 %v2231
    %v2767 = vunpack.c.l.b16 %v2232
    %v2768 = vunpack.c.l.b16 %v2233
    %v2769 = vunpack.c.l.b16 %v2234
    %v2770 = vunpack.c.l.b16 %v2235
    %v2771 = vunpack.c.l.b16 %v2236
    %v2772 = vunpack.c.l.b16 %v2237
    %v2773 = vunpack.c.l.b16 %v2238
    %v2774 = vunpack.c.l.b16 %v2239
    %v2775 = vunpack.c.l.b16 %v2240
    %v2776 = vunpack.c.l.b16 %v2241
    %v2777 = vunpack.c.l.b16 %v2242
    %v2778 = vunpack.c.l.b16 %v2243
    %v2779 = vunpack.c.l.b16 %v2244
    %v2780 = vunpack.c.l.b16 %v2245
    %v2781 = vunpack.c.l.b16 %v2246
    %v2782 = vunpack.c.l.b16 %v2247
    %v2783 = vunpack.c.l.b16 %v2248
    %v2784 = vunpack.c.l.b16 %v2249
    %v2785 = vunpack.c.l.b16 %v2250
    %v2786 = vunpack.c.l.b16 %v2251
    %v2787 = vunpack.c.l.b16 %v2252
    %v2788 = vunpack.c.l.b16 %v2253
    %v2789 = vunpack.c.l.b16 %v2254
    %v2790 = vunpack.c.l.b16 %v2255
    %v2791 = vunpack.c.l.b16 %v2256
    %v2792 = vunpack.c.l.b16 %v2257
    %v2793 = vunpack.c.l.b16 %v2258
    %v2794 = vunpack.c.l.b16 %v2259
    %v2795 = vunpack.c.l.b16 %v2260
    %v2796 = vunpack.c.l.b16 %v2261
    %v2797 = vunpack.c.l.b16 %v2262
    %v2798 = vunpack.c.l.b16 %v2263
    %v2799 = vunpack.c.l.b16 %v2264
    %v2800 = vunpack.c.l.b16 %v2265
    %v2801 = vunpack.c.l.b16 %v2266
    %v2802 = vunpack.c.l.b16 %v2267
    %v2803 = vunpack.c.l.b16 %v2268
    %v2804 = vunpack.c.l.b16 %v2269
    %v2805 = vunpack.c.l.b16 %v2270
    %v2806 = vpack.c.b16 %v2551, %v2550
    %v2807 = vpack.c.b16 %v2553, %v2552
    %v2808 = vpack.c.b16 %v2555, %v2554
    %v2809 = vpack.c.b16 %v2557, %v2556
    %v2810 = vpack.c.b16 %v2559, %v2558
    %v2811 = vpack.c.b16 %v2561, %v2560
    %v2812 = vpack.c.b16 %v2563, %v2562
    %v2813 = vpack.c.b16 %v2565, %v2564
    %v2814 = vpack.c.b16 %v2567, %v2566
    %v2815 = vpack.c.b16 %v2569, %v2568
    %v2816 = vpack.c.b16 %v2571, %v2570
    %v2817 = vpack.c.b16 %v2573, %v2572
    %v2818 = vpack.c.b16 %v2575, %v2574
    %v2819 = vpack.c.b16 %v2577, %v2576
    %v2820 = vpack.c.b16 %v2579, %v2578
    %v2821 = vpack.c.b16 %v2581, %v2580
    %v2822 = vpack.c.b16 %v2583, %v2582
    %v2823 = vpack.c.b16 %v2585, %v2584
    %v2824 = vpack.c.b16 %v2587, %v2586
    %v2825 = vpack.c.b16 %v2589, %v2588
    %v2826 = vpack.c.b16 %v2591, %v2590
    %v2827 = vpack.c.b16 %v2593, %v2592
    %v2828 = vpack.c.b16 %v2595, %v2594
    %v2829 = vpack.c.b16 %v2597, %v2596
    %v2830 = vpack.c.b16 %v2599, %v2598
    %v2831 = vpack.c.b16 %v2601, %v2600
    %v2832 = vpack.c.b16 %v2603, %v2602
    %v2833 = vpack.c.b16 %v2605, %v2604
    %v2834 = vpack.c.b16 %v2607, %v2606
    %v2835 = vpack.c.b16 %v2609, %v2608
    %v2836 = vpack.c.b16 %v2611, %v2610
    %v2837 = vpack.c.b16 %v2613, %v2612
    %v2838 = vpack.c.b16 %v2615, %v2614
    %v2839 = vpack.c.b16 %v2617, %v2616
    %v2840 = vpack.c.b16 %v2619, %v2618
    %v2841 = vpack.c.b16 %v2621, %v2620
    %v2842 = vpack.c.b16 %v2623, %v2622
    %v2843 = vpack.c.b16 %v2625, %v2624
    %v2844 = vpack.c.b16 %v2627, %v2626
    %v2845 = vpack.c.b16 %v2629, %v2628
    %v2846 = vpack.c.b16 %v2631, %v2630
    %v2847 = vpack.c.b16 %v2633, %v2632
    %v2848 = vpack.c.b16 %v2635, %v2634
    %v2849 = vpack.c.b16 %v2637, %v2636
    %v2850 = vpack.c.b16 %v2639, %v2638
    %v2851 = vpack.c.b16 %v2641, %v2640
    %v2852 = vpack.c.b16 %v2643, %v2642
    %v2853 = vpack.c.b16 %v2645, %v2644
    %v2854 = vpack.c.b16 %v2647, %v2646
    %v2855 = vpack.c.b16 %v2649, %v2648
    %v2856 = vpack.c.b16 %v2651, %v2650
    %v2857 = vpack.c.b16 %v2653, %v2652
    %v2858 = vpack.c.b16 %v2655, %v2654
    %v2859 = vpack.c.b16 %v2657, %v2656
    %v2860 = vpack.c.b16 %v2659, %v2658
    %v2861 = vpack.c.b16 %v2661, %v2660
    %v2862 = vpack.c.b16 %v2663, %v2662
    %v2863 = vpack.c.b16 %v2665, %v2664
    %v2864 = vpack.c.b16 %v2667, %v2666
    %v2865 = vpack.c.b16 %v2669, %v2668
    %v2866 = vpack.c.b16 %v2671, %v2670
    %v2867 = vpack.c.b16 %v2673, %v2672
    %v2868 = vpack.c.b16 %v2675, %v2674
    %v2869 = vpack.c.b16 %v2677, %v2676
    %v2870 = vpack.c.b16 %v2679, %v2678
    %v2871 = vpack.c.b16 %v2681, %v2680
    %v2872 = vpack.c.b16 %v2683, %v2682
    %v2873 = vpack.c.b16 %v2685, %v2684
    %v2874 = vpack.c.b16 %v2687, %v2686
    %v2875 = vpack.c.b16 %v2689, %v2688
    %v2876 = vpack.c.b16 %v2691, %v2690
    %v2877 = vpack.c.b16 %v2693, %v2692
    %v2878 = vpack.c.b16 %v2695, %v2694
    %v2879 = vpack.c.b16 %v2697, %v2696
    %v2880 = vpack.c.b16 %v2699, %v2698
    %v2881 = vpack.c.b16 %v2701, %v2700
    %v2882 = vpack.c.b16 %v2703, %v2702
    %v2883 = vpack.c.b16 %v2705, %v2704
    %v2884 = vpack.c.b16 %v2707, %v2706
    %v2885 = vpack.c.b16 %v2709, %v2708
    %v2886 = vpack.c.b16 %v2711, %v2710
    %v2887 = vpack.c.b16 %v2713, %v2712
    %v2888 = vpack.c.b16 %v2715, %v2714
    %v2889 = vpack.c.b16 %v2717, %v2716
    %v2890 = vpack.c.b16 %v2719, %v2718
    %v2891 = vpack.c.b16 %v2721, %v2720
    %v2892 = vpack.c.b16 %v2723, %v2722
    %v2893 = vpack.c.b16 %v2725, %v2724
    %v2894 = vpack.c.b16 %v2727, %v2726
    %v2895 = vpack.c.b16 %v2729, %v2728
    %v2896 = vpack.c.b16 %v2731, %v2730
    %v2897 = vpack.c.b16 %v2733, %v2732
    %v2898 = vpack.c.b16 %v2735, %v2734
    %v2899 = vpack.c.b16 %v2737, %v2736
    %v2900 = vpack.c.b16 %v2739, %v2738
    %v2901 = vpack.c.b16 %v2741, %v2740
    %v2902 = vpack.c.b16 %v2743, %v2742
    %v2903 = vpack.c.b16 %v2745, %v2744
    %v2904 = vpack.c.b16 %v2747, %v2746
    %v2905 = vpack.c.b16 %v2749, %v2748
    %v2906 = vpack.c.b16 %v2751, %v2750
    %v2907 = vpack.c.b16 %v2753, %v2752
    %v2908 = vpack.c.b16 %v2755, %v2754
    %v2909 = vpack.c.b16 %v2757, %v2756
    %v2910 = vpack.c.b16 %v2759, %v2758
    %v2911 = vpack.c.b16 %v2761, %v2760
    %v2912 = vpack.c.b16 %v2763, %v2762
    %v2913 = vpack.c.b16 %v2765, %v2764
    %v2914 = vpack.c.b16 %v2767, %v2766
    %v2915 = vpack.c.b16 %v2769, %v2768
    %v2916 = vpack.c.b16 %v2771, %v2770
    %v2917 = vpack.c.b16 %v2773, %v2772
    %v2918 = vpack.c.b16 %v2775, %v2774
    %v2919 = vpack.c.b16 %v2777, %v2776
    %v2920 = vpack.c.b16 %v2779, %v2778
    %v2921 = vpack.c.b16 %v2781, %v2780
    %v2922 = vpack.c.b16 %v2783, %v2782
    %v2923 = vpack.c.b16 %v2785, %v2784
    %v2924 = vpack.c.b16 %v2787, %v2786
    %v2925 = vpack.c.b16 %v2789, %v2788
    %v2926 = vpack.c.b16 %v2791, %v2790
    %v2927 = vpack.c.b16 %v2793, %v2792
    %v2928 = vpack.c.b16 %v2795, %v2794
    %v2929 = vpack.c.b16 %v2797, %v2796
    %v2930 = vpack.c.b16 %v2799, %v2798
    %v2931 = vpack.c.b16 %v2801, %v2800
    %v2932 = vpack.c.b16 %v2803, %v2802
    %v2933 = vpack.c.b16 %v2805, %v2804
    %3062 = vmatprep.subr.bf16.mxu0 0
    %3063 = vmatpush1.bf16.msra.mxu0 %v2806
    %3064 = vmatprep.subr.bf16.mxu0 0
    %3065 = vmatpush1.bf16.msra.mxu0 %v2807
    %3066 = vmatprep.subr.bf16.mxu0 0
    %3067 = vmatpush1.bf16.msra.mxu0 %v2808
    %3068 = vmatprep.subr.bf16.mxu0 0
    %3069 = vmatpush1.bf16.msra.mxu0 %v2809
    %3070 = vmatprep.subr.bf16.mxu0 0
    %3071 = vmatpush1.bf16.msra.mxu0 %v2810
    %3072 = vmatprep.subr.bf16.mxu0 0
    %3073 = vmatpush1.bf16.msra.mxu0 %v2811
    %3074 = vmatprep.subr.bf16.mxu0 0
    %3075 = vmatpush1.bf16.msra.mxu0 %v2812
    %3076 = vmatprep.subr.bf16.mxu0 0
    %3077 = vmatpush1.bf16.msra.mxu0 %v2813
    %3078 = vmatprep.subr.bf16.mxu0 0
    %3079 = vmatpush1.bf16.msra.mxu0 %v2814
    %3080 = vmatprep.subr.bf16.mxu0 0
    %3081 = vmatpush1.bf16.msra.mxu0 %v2815
    %3082 = vmatprep.subr.bf16.mxu0 0
    %3083 = vmatpush1.bf16.msra.mxu0 %v2816
    %3084 = vmatprep.subr.bf16.mxu0 0
    %3085 = vmatpush1.bf16.msra.mxu0 %v2817
    %3086 = vmatprep.subr.bf16.mxu0 0
    %3087 = vmatpush1.bf16.msra.mxu0 %v2818
    %3088 = vmatprep.subr.bf16.mxu0 0
    %3089 = vmatpush1.bf16.msra.mxu0 %v2819
    %3090 = vmatprep.subr.bf16.mxu0 0
    %3091 = vmatpush1.bf16.msra.mxu0 %v2820
    %3092 = vmatprep.subr.bf16.mxu0 0
    %3093 = vmatpush1.bf16.msra.mxu0 %v2821
    %3094 = vmatprep.mubr.bf16.mxu0 %v2273
    %3095 = vmatmul.mubr.bf16.gmra.mrb[0].mxu0 %v2272
    %v3096 = vpop.f32.mrb[0].mxu0
    %v3097 = vadd.f32 %v2292, %v3096
    %v3098 = vpop.f32.mrb[0].mxu0
    %v3099 = vpop.f32.mrb[0].mxu0
    %v3100 = vadd.f32 %v2292, %v3099
    %v3101 = vpop.f32.mrb[0].mxu0
    %3102 = vdwg.mxu0
    %3103 = vmatprep.subr.bf16.mxu0 0
    %3104 = vmatpush1.bf16.msra.mxu0 %v2822
    %3105 = vmatprep.subr.bf16.mxu0 0
    %3106 = vmatpush1.bf16.msra.mxu0 %v2823
    %3107 = vmatprep.subr.bf16.mxu0 0
    %3108 = vmatpush1.bf16.msra.mxu0 %v2824
    %3109 = vmatprep.subr.bf16.mxu0 0
    %3110 = vmatpush1.bf16.msra.mxu0 %v2825
    %3111 = vmatprep.subr.bf16.mxu0 0
    %3112 = vmatpush1.bf16.msra.mxu0 %v2826
    %3113 = vmatprep.subr.bf16.mxu0 0
    %3114 = vmatpush1.bf16.msra.mxu0 %v2827
    %3115 = vmatprep.subr.bf16.mxu0 0
    %3116 = vmatpush1.bf16.msra.mxu0 %v2828
    %3117 = vmatprep.subr.bf16.mxu0 0
    %3118 = vmatpush1.bf16.msra.mxu0 %v2829
    %3119 = vmatprep.subr.bf16.mxu0 0
    %3120 = vmatpush1.bf16.msra.mxu0 %v2830
    %3121 = vmatprep.subr.bf16.mxu0 0
    %3122 = vmatpush1.bf16.msra.mxu0 %v2831
    %3123 = vmatprep.subr.bf16.mxu0 0
    %3124 = vmatpush1.bf16.msra.mxu0 %v2832
    %3125 = vmatprep.subr.bf16.mxu0 0
    %3126 = vmatpush1.bf16.msra.mxu0 %v2833
    %3127 = vmatprep.subr.bf16.mxu0 0
    %3128 = vmatpush1.bf16.msra.mxu0 %v2834
    %3129 = vmatprep.subr.bf16.mxu0 0
    %3130 = vmatpush1.bf16.msra.mxu0 %v2835
    %3131 = vmatprep.subr.bf16.mxu0 0
    %3132 = vmatpush1.bf16.msra.mxu0 %v2836
    %3133 = vmatprep.subr.bf16.mxu0 0
    %3134 = vmatpush1.bf16.msra.mxu0 %v2837
    %3135 = vmatprep.mubr.bf16.mxu0 %v2275
    %3136 = vmatmul.mubr.bf16.gmra.mrb[0].mxu0 %v2274
    %v3137 = vpop.f32.mrb[0].mxu0
    %v3138 = vadd.f32 %v3097, %v3137
    %v3139 = vpop.f32.mrb[0].mxu0
    %v3140 = vpop.f32.mrb[0].mxu0
    %v3141 = vadd.f32 %v3100, %v3140
    %v3142 = vpop.f32.mrb[0].mxu0
    %3143 = vdwg.mxu0
    %3144 = vmatprep.subr.bf16.mxu0 0
    %3145 = vmatpush1.bf16.msra.mxu0 %v2838
    %3146 = vmatprep.subr.bf16.mxu0 0
    %3147 = vmatpush1.bf16.msra.mxu0 %v2839
    %3148 = vmatprep.subr.bf16.mxu0 0
    %3149 = vmatpush1.bf16.msra.mxu0 %v2840
    %3150 = vmatprep.subr.bf16.mxu0 0
    %3151 = vmatpush1.bf16.msra.mxu0 %v2841
    %3152 = vmatprep.subr.bf16.mxu0 0
    %3153 = vmatpush1.bf16.msra.mxu0 %v2842
    %3154 = vmatprep.subr.bf16.mxu0 0
    %3155 = vmatpush1.bf16.msra.mxu0 %v2843
    %3156 = vmatprep.subr.bf16.mxu0 0
    %3157 = vmatpush1.bf16.msra.mxu0 %v2844
    %3158 = vmatprep.subr.bf16.mxu0 0
    %3159 = vmatpush1.bf16.msra.mxu0 %v2845
    %3160 = vmatprep.subr.bf16.mxu0 0
    %3161 = vmatpush1.bf16.msra.mxu0 %v2846
    %3162 = vmatprep.subr.bf16.mxu0 0
    %3163 = vmatpush1.bf16.msra.mxu0 %v2847
    %3164 = vmatprep.subr.bf16.mxu0 0
    %3165 = vmatpush1.bf16.msra.mxu0 %v2848
    %3166 = vmatprep.subr.bf16.mxu0 0
    %3167 = vmatpush1.bf16.msra.mxu0 %v2849
    %3168 = vmatprep.subr.bf16.mxu0 0
    %3169 = vmatpush1.bf16.msra.mxu0 %v2850
    %3170 = vmatprep.subr.bf16.mxu0 0
    %3171 = vmatpush1.bf16.msra.mxu0 %v2851
    %3172 = vmatprep.subr.bf16.mxu0 0
    %3173 = vmatpush1.bf16.msra.mxu0 %v2852
    %3174 = vmatprep.subr.bf16.mxu0 0
    %3175 = vmatpush1.bf16.msra.mxu0 %v2853
    %3176 = vmatprep.mubr.bf16.mxu0 %v2277
    %3177 = vmatmul.mubr.bf16.gmra.mrb[0].mxu0 %v2276
    %v3178 = vpop.f32.mrb[0].mxu0
    %v3179 = vadd.f32 %v3138, %v3178
    %v3180 = vpop.f32.mrb[0].mxu0
    %v3181 = vpop.f32.mrb[0].mxu0
    %v3182 = vadd.f32 %v3141, %v3181
    %v3183 = vpop.f32.mrb[0].mxu0
    %3184 = vdwg.mxu0
    %3185 = vmatprep.subr.bf16.mxu0 0
    %3186 = vmatpush1.bf16.msra.mxu0 %v2854
    %3187 = vmatprep.subr.bf16.mxu0 0
    %3188 = vmatpush1.bf16.msra.mxu0 %v2855
    %3189 = vmatprep.subr.bf16.mxu0 0
    %3190 = vmatpush1.bf16.msra.mxu0 %v2856
    %3191 = vmatprep.subr.bf16.mxu0 0
    %3192 = vmatpush1.bf16.msra.mxu0 %v2857
    %3193 = vmatprep.subr.bf16.mxu0 0
    %3194 = vmatpush1.bf16.msra.mxu0 %v2858
    %3195 = vmatprep.subr.bf16.mxu0 0
    %3196 = vmatpush1.bf16.msra.mxu0 %v2859
    %3197 = vmatprep.subr.bf16.mxu0 0
    %3198 = vmatpush1.bf16.msra.mxu0 %v2860
    %3199 = vmatprep.subr.bf16.mxu0 0
    %3200 = vmatpush1.bf16.msra.mxu0 %v2861
    %3201 = vmatprep.subr.bf16.mxu0 0
    %3202 = vmatpush1.bf16.msra.mxu0 %v2862
    %3203 = vmatprep.subr.bf16.mxu0 0
    %3204 = vmatpush1.bf16.msra.mxu0 %v2863
    %3205 = vmatprep.subr.bf16.mxu0 0
    %3206 = vmatpush1.bf16.msra.mxu0 %v2864
    %3207 = vmatprep.subr.bf16.mxu0 0
    %3208 = vmatpush1.bf16.msra.mxu0 %v2865
    %3209 = vmatprep.subr.bf16.mxu0 0
    %3210 = vmatpush1.bf16.msra.mxu0 %v2866
    %3211 = vmatprep.subr.bf16.mxu0 0
    %3212 = vmatpush1.bf16.msra.mxu0 %v2867
    %3213 = vmatprep.subr.bf16.mxu0 0
    %3214 = vmatpush1.bf16.msra.mxu0 %v2868
    %3215 = vmatprep.subr.bf16.mxu0 0
    %3216 = vmatpush1.bf16.msra.mxu0 %v2869
    %3217 = vmatprep.mubr.bf16.mxu0 %v2279
    %3218 = vmatmul.mubr.bf16.gmra.mrb[0].mxu0 %v2278
    %v3219 = vpop.f32.mrb[0].mxu0
    %v3220 = vadd.f32 %v3179, %v3219
    %v3221 = vpop.f32.mrb[0].mxu0
    %v3222 = vpop.f32.mrb[0].mxu0
    %v3223 = vadd.f32 %v3182, %v3222
    %v3224 = vpop.f32.mrb[0].mxu0
    %3225 = vdwg.mxu0
    %3226 = vmatprep.subr.bf16.mxu0 0
    %3227 = vmatpush1.bf16.msra.mxu0 %v2870
    %3228 = vmatprep.subr.bf16.mxu0 0
    %3229 = vmatpush1.bf16.msra.mxu0 %v2871
    %3230 = vmatprep.subr.bf16.mxu0 0
    %3231 = vmatpush1.bf16.msra.mxu0 %v2872
    %3232 = vmatprep.subr.bf16.mxu0 0
    %3233 = vmatpush1.bf16.msra.mxu0 %v2873
    %3234 = vmatprep.subr.bf16.mxu0 0
    %3235 = vmatpush1.bf16.msra.mxu0 %v2874
    %3236 = vmatprep.subr.bf16.mxu0 0
    %3237 = vmatpush1.bf16.msra.mxu0 %v2875
    %3238 = vmatprep.subr.bf16.mxu0 0
    %3239 = vmatpush1.bf16.msra.mxu0 %v2876
    %3240 = vmatprep.subr.bf16.mxu0 0
    %3241 = vmatpush1.bf16.msra.mxu0 %v2877
    %3242 = vmatprep.subr.bf16.mxu0 0
    %3243 = vmatpush1.bf16.msra.mxu0 %v2878
    %3244 = vmatprep.subr.bf16.mxu0 0
    %3245 = vmatpush1.bf16.msra.mxu0 %v2879
    %3246 = vmatprep.subr.bf16.mxu0 0
    %3247 = vmatpush1.bf16.msra.mxu0 %v2880
    %3248 = vmatprep.subr.bf16.mxu0 0
    %3249 = vmatpush1.bf16.msra.mxu0 %v2881
    %3250 = vmatprep.subr.bf16.mxu0 0
    %3251 = vmatpush1.bf16.msra.mxu0 %v2882
    %3252 = vmatprep.subr.bf16.mxu0 0
    %3253 = vmatpush1.bf16.msra.mxu0 %v2883
    %3254 = vmatprep.subr.bf16.mxu0 0
    %3255 = vmatpush1.bf16.msra.mxu0 %v2884
    %3256 = vmatprep.subr.bf16.mxu0 0
    %3257 = vmatpush1.bf16.msra.mxu0 %v2885
    %3258 = vmatprep.mubr.bf16.mxu0 %v2281
    %3259 = vmatmul.mubr.bf16.gmra.mrb[0].mxu0 %v2280
    %v3260 = vpop.f32.mrb[0].mxu0
    %v3261 = vadd.f32 %v3220, %v3260
    %v3262 = vpop.f32.mrb[0].mxu0
    %v3263 = vpop.f32.mrb[0].mxu0
    %v3264 = vadd.f32 %v3223, %v3263
    %v3265 = vpop.f32.mrb[0].mxu0
    %3266 = vdwg.mxu0
    %3267 = vmatprep.subr.bf16.mxu0 0
    %3268 = vmatpush1.bf16.msra.mxu0 %v2886
    %3269 = vmatprep.subr.bf16.mxu0 0
    %3270 = vmatpush1.bf16.msra.mxu0 %v2887
    %3271 = vmatprep.subr.bf16.mxu0 0
    %3272 = vmatpush1.bf16.msra.mxu0 %v2888
    %3273 = vmatprep.subr.bf16.mxu0 0
    %3274 = vmatpush1.bf16.msra.mxu0 %v2889
    %3275 = vmatprep.subr.bf16.mxu0 0
    %3276 = vmatpush1.bf16.msra.mxu0 %v2890
    %3277 = vmatprep.subr.bf16.mxu0 0
    %3278 = vmatpush1.bf16.msra.mxu0 %v2891
    %3279 = vmatprep.subr.bf16.mxu0 0
    %3280 = vmatpush1.bf16.msra.mxu0 %v2892
    %3281 = vmatprep.subr.bf16.mxu0 0
    %3282 = vmatpush1.bf16.msra.mxu0 %v2893
    %3283 = vmatprep.subr.bf16.mxu0 0
    %3284 = vmatpush1.bf16.msra.mxu0 %v2894
    %3285 = vmatprep.subr.bf16.mxu0 0
    %3286 = vmatpush1.bf16.msra.mxu0 %v2895
    %3287 = vmatprep.subr.bf16.mxu0 0
    %3288 = vmatpush1.bf16.msra.mxu0 %v2896
    %3289 = vmatprep.subr.bf16.mxu0 0
    %3290 = vmatpush1.bf16.msra.mxu0 %v2897
    %3291 = vmatprep.subr.bf16.mxu0 0
    %3292 = vmatpush1.bf16.msra.mxu0 %v2898
    %3293 = vmatprep.subr.bf16.mxu0 0
    %3294 = vmatpush1.bf16.msra.mxu0 %v2899
    %3295 = vmatprep.subr.bf16.mxu0 0
    %3296 = vmatpush1.bf16.msra.mxu0 %v2900
    %3297 = vmatprep.subr.bf16.mxu0 0
    %3298 = vmatpush1.bf16.msra.mxu0 %v2901
    %3299 = vmatprep.mubr.bf16.mxu0 %v2283
    %3300 = vmatmul.mubr.bf16.gmra.mrb[0].mxu0 %v2282
    %v3301 = vpop.f32.mrb[0].mxu0
    %v3302 = vadd.f32 %v3261, %v3301
    %v3303 = vpop.f32.mrb[0].mxu0
    %v3304 = vpop.f32.mrb[0].mxu0
    %v3305 = vadd.f32 %v3264, %v3304
    %v3306 = vpop.f32.mrb[0].mxu0
    %3307 = vdwg.mxu0
    %3308 = vmatprep.subr.bf16.mxu0 0
    %3309 = vmatpush1.bf16.msra.mxu0 %v2902
    %3310 = vmatprep.subr.bf16.mxu0 0
    %3311 = vmatpush1.bf16.msra.mxu0 %v2903
    %3312 = vmatprep.subr.bf16.mxu0 0
    %3313 = vmatpush1.bf16.msra.mxu0 %v2904
    %3314 = vmatprep.subr.bf16.mxu0 0
    %3315 = vmatpush1.bf16.msra.mxu0 %v2905
    %3316 = vmatprep.subr.bf16.mxu0 0
    %3317 = vmatpush1.bf16.msra.mxu0 %v2906
    %3318 = vmatprep.subr.bf16.mxu0 0
    %3319 = vmatpush1.bf16.msra.mxu0 %v2907
    %3320 = vmatprep.subr.bf16.mxu0 0
    %3321 = vmatpush1.bf16.msra.mxu0 %v2908
    %3322 = vmatprep.subr.bf16.mxu0 0
    %3323 = vmatpush1.bf16.msra.mxu0 %v2909
    %3324 = vmatprep.subr.bf16.mxu0 0
    %3325 = vmatpush1.bf16.msra.mxu0 %v2910
    %3326 = vmatprep.subr.bf16.mxu0 0
    %3327 = vmatpush1.bf16.msra.mxu0 %v2911
    %3328 = vmatprep.subr.bf16.mxu0 0
    %3329 = vmatpush1.bf16.msra.mxu0 %v2912
    %3330 = vmatprep.subr.bf16.mxu0 0
    %3331 = vmatpush1.bf16.msra.mxu0 %v2913
    %3332 = vmatprep.subr.bf16.mxu0 0
    %3333 = vmatpush1.bf16.msra.mxu0 %v2914
    %3334 = vmatprep.subr.bf16.mxu0 0
    %3335 = vmatpush1.bf16.msra.mxu0 %v2915
    %3336 = vmatprep.subr.bf16.mxu0 0
    %3337 = vmatpush1.bf16.msra.mxu0 %v2916
    %3338 = vmatprep.subr.bf16.mxu0 0
    %3339 = vmatpush1.bf16.msra.mxu0 %v2917
    %3340 = vmatprep.mubr.bf16.mxu0 %v2285
    %3341 = vmatmul.mubr.bf16.gmra.mrb[0].mxu0 %v2284
    %v3342 = vpop.f32.mrb[0].mxu0
    %v3343 = vadd.f32 %v3302, %v3342
    %v3344 = vpop.f32.mrb[0].mxu0
    %v3345 = vpop.f32.mrb[0].mxu0
    %v3346 = vadd.f32 %v3305, %v3345
    %v3347 = vpop.f32.mrb[0].mxu0
    %3348 = vdwg.mxu0
    %3349 = vmatprep.subr.bf16.mxu0 0
    %3350 = vmatpush1.bf16.msra.mxu0 %v2918
    %3351 = vmatprep.subr.bf16.mxu0 0
    %3352 = vmatpush1.bf16.msra.mxu0 %v2919
    %3353 = vmatprep.subr.bf16.mxu0 0
    %3354 = vmatpush1.bf16.msra.mxu0 %v2920
    %3355 = vmatprep.subr.bf16.mxu0 0
    %3356 = vmatpush1.bf16.msra.mxu0 %v2921
    %3357 = vmatprep.subr.bf16.mxu0 0
    %3358 = vmatpush1.bf16.msra.mxu0 %v2922
    %3359 = vmatprep.subr.bf16.mxu0 0
    %3360 = vmatpush1.bf16.msra.mxu0 %v2923
    %3361 = vmatprep.subr.bf16.mxu0 0
    %3362 = vmatpush1.bf16.msra.mxu0 %v2924
    %3363 = vmatprep.subr.bf16.mxu0 0
    %3364 = vmatpush1.bf16.msra.mxu0 %v2925
    %3365 = vmatprep.subr.bf16.mxu0 0
    %3366 = vmatpush1.bf16.msra.mxu0 %v2926
    %3367 = vmatprep.subr.bf16.mxu0 0
    %3368 = vmatpush1.bf16.msra.mxu0 %v2927
    %3369 = vmatprep.subr.bf16.mxu0 0
    %3370 = vmatpush1.bf16.msra.mxu0 %v2928
    %3371 = vmatprep.subr.bf16.mxu0 0
    %3372 = vmatpush1.bf16.msra.mxu0 %v2929
    %3373 = vmatprep.subr.bf16.mxu0 0
    %3374 = vmatpush1.bf16.msra.mxu0 %v2930
    %3375 = vmatprep.subr.bf16.mxu0 0
    %3376 = vmatpush1.bf16.msra.mxu0 %v2931
    %3377 = vmatprep.subr.bf16.mxu0 0
    %3378 = vmatpush1.bf16.msra.mxu0 %v2932
    %3379 = vmatprep.subr.bf16.mxu0 0
    %3380 = vmatpush1.bf16.msra.mxu0 %v2933
    %3381 = vmatprep.mubr.bf16.mxu0 %v2287
    %3382 = vmatmul.mubr.bf16.gmra.mrb[0].mxu0 %v2286
    %v3383 = vpop.f32.mrb[0].mxu0
    %v3384 = vadd.f32 %v3343, %v3383
    %v3385 = vpop.f32.mrb[0].mxu0
    %v3386 = vpop.f32.mrb[0].mxu0
    %v3387 = vadd.f32 %v3346, %v3386
    %v3388 = vpop.f32.mrb[0].mxu0
    %3389 = vdwg.mxu0
    %v3390 = vadd.f32 %v1357, %v3384
    %v3391 = vadd.f32 %v1358, %v3387
    %v3392 = vld [vmem:[%s31] sm:$0x1]
    %v3393 = vld [vmem:[%s33] sm:$0x1]
    %v3394 = vsel %vm179, %v3390, 0.0
    %3395 = vadd.xlane.f32.xlu0 %v3394
    %v3396 = vpop.xlane.xlu0 %3395
    %v3397 = vsel %vm179, %v3391, 0.0
    %3398 = vadd.xlane.f32.xlu0 %v3397
    %v3399 = vpop.xlane.xlu0 %3398
    %v3400 = vmul.f32 %v3396, %v1322
    %v3401 = vmul.f32 %v3399, %v1322
    %v3402 = vsub.f32 %v3390, %v3400
    %v3403 = vsub.f32 %v3391, %v3401
    %v3404 = vmul.f32 %v3402, %v3402
    %v3405 = vmul.f32 %v3403, %v3403
    %v3406 = vsel %vm179, %v3404, 0.0
    %3407 = vadd.xlane.f32.xlu0 %v3406
    %v3408 = vpop.xlane.xlu0 %3407
    %v3409 = vsel %vm179, %v3405, 0.0
    %3410 = vadd.xlane.f32.xlu0 %v3409
    %v3411 = vpop.xlane.xlu0 %3410
    %v3412 = vmul.f32 %v3408, %v1322
    %v3413 = vmul.f32 %v3411, %v1322
    %v3414 = vadd.f32 %v3412, 1e-05
    %v3415 = vadd.f32 %v3413, 1e-05
    %v3416 = vrsqrt.pop %v3414
    %v3417 = vrsqrt.pop %v3415
    %v3418 = vmul.f32 %v3402, %v3416
    %v3419 = vmul.f32 %v3403, %v3417
    %v3421 = vlaneseq
    %v3422 = vshrl.u32 %v3421, 7
    %v3423 = vsub.s32 0, %v3422
    %v3424 = vrot.slane %v3392, %v3423
    %v3426 = vmul.f32 %v3418, %v3424
    %v3427 = vmul.f32 %v3419, %v3424
    %v3429 = vlaneseq
    %v3430 = vshrl.u32 %v3429, 7
    %v3431 = vsub.s32 0, %v3430
    %v3432 = vrot.slane %v3393, %v3431
    %v3434 = vadd.f32 %v3426, %v3432
    %v3435 = vadd.f32 %v3427, %v3432
    %v3436 = vld [vmem:[%s35] sm:$0xf]
    %v3437 = vld [vmem:[%s35 + $0x4] sm:$0xf]
    %v3438 = vld [vmem:[%s35 + $0x8] sm:$0xf]
    %v3439 = vld [vmem:[%s35 + $0xc] sm:$0xf]
    %v3440 = vld [vmem:[%s41] sm:$0x1]
    %v3441 = vpack.c.bf16 %v3435, %v3434
    %v3443 = vlaneseq
    %v3444 = vshrl.u32 %v3443, 7
    %v3445 = vsub.s32 0, %v3444
    %v3446 = vrot.slane %v3440, %v3445
    %v3452 = vunpack.c.l.b16 %v3436
    %v3453 = vunpack.c.l.b16 %v3437
    %v3454 = vunpack.c.l.b16 %v3438
    %v3455 = vunpack.c.l.b16 %v3439
    %v3456 = vpack.c.b16 %v3453, %v3452
    %v3457 = vpack.c.b16 %v3455, %v3454
    %v3461 = vsel %vm179, %v3441, 0
    %3463 = vmatprep.subr.bf16.mxu0 0
    %3464 = vmatpush1.bf16.msra.mxu0 %v3456
    %3465 = vmatprep.subr.bf16.mxu0 0
    %3466 = vmatpush1.bf16.msra.mxu0 %v3457
    %3467 = vmatprep.subr.bf16.mxu0 0
    %3468 = vmatpush1.bf16.msra.mxu0 0
    %3469 = vmatprep.subr.bf16.mxu0 0
    %3470 = vmatpush1.bf16.msra.mxu0 0
    %3471 = vmatprep.subr.bf16.mxu0 0
    %3472 = vmatpush1.bf16.msra.mxu0 0
    %3473 = vmatprep.subr.bf16.mxu0 0
    %3474 = vmatpush1.bf16.msra.mxu0 0
    %3475 = vmatprep.subr.bf16.mxu0 0
    %3476 = vmatpush1.bf16.msra.mxu0 0
    %3477 = vmatprep.subr.bf16.mxu0 0
    %3478 = vmatpush1.bf16.msra.mxu0 0
    %3479 = vmatprep.subr.bf16.mxu0 0
    %3480 = vmatpush1.bf16.msra.mxu0 0
    %3481 = vmatprep.subr.bf16.mxu0 0
    %3482 = vmatpush1.bf16.msra.mxu0 0
    %3483 = vmatprep.subr.bf16.mxu0 0
    %3484 = vmatpush1.bf16.msra.mxu0 0
    %3485 = vmatprep.subr.bf16.mxu0 0
    %3486 = vmatpush1.bf16.msra.mxu0 0
    %3487 = vmatprep.subr.bf16.mxu0 0
    %3488 = vmatpush1.bf16.msra.mxu0 0
    %3489 = vmatprep.subr.bf16.mxu0 0
    %3490 = vmatpush1.bf16.msra.mxu0 0
    %3491 = vmatprep.subr.bf16.mxu0 0
    %3492 = vmatpush1.bf16.msra.mxu0 0
    %3493 = vmatprep.subr.bf16.mxu0 0
    %3494 = vmatpush1.bf16.msra.mxu0 0
    %3495 = vmatprep.mubr.bf16.mxu0 0
    %3496 = vmatmul.mubr.bf16.gmra.mrb[0].mxu0 %v3461
    %v3497 = vpop.f32.mrb[0].mxu0
    %v3498 = vadd.f32 %v3446, %v3497
    %v3499 = vpop.f32.mrb[0].mxu0
    %v3500 = vpop.f32.mrb[0].mxu0
    %v3501 = vadd.f32 %v3446, %v3500
    %v3502 = vpop.f32.mrb[0].mxu0
    %3503 = vdwg.mxu0
    %v3504 = vld [vmem:[%s37] sm:$0xf]
    %v3505 = vld [vmem:[%s37 + $0x4] sm:$0xf]
    %v3506 = vld [vmem:[%s37 + $0x8] sm:$0xf]
    %v3507 = vld [vmem:[%s37 + $0xc] sm:$0xf]
    %v3508 = vld [vmem:[%s43] sm:$0x1]
    %v3510 = vlaneseq
    %v3511 = vshrl.u32 %v3510, 7
    %v3512 = vsub.s32 0, %v3511
    %v3513 = vrot.slane %v3508, %v3512
    %v3519 = vunpack.c.l.b16 %v3504
    %v3520 = vunpack.c.l.b16 %v3505
    %v3521 = vunpack.c.l.b16 %v3506
    %v3522 = vunpack.c.l.b16 %v3507
    %v3523 = vpack.c.b16 %v3520, %v3519
    %v3524 = vpack.c.b16 %v3522, %v3521
    %3527 = vmatprep.subr.bf16.mxu0 0
    %3528 = vmatpush1.bf16.msra.mxu0 %v3523
    %3529 = vmatprep.subr.bf16.mxu0 0
    %3530 = vmatpush1.bf16.msra.mxu0 %v3524
    %3531 = vmatprep.subr.bf16.mxu0 0
    %3532 = vmatpush1.bf16.msra.mxu0 0
    %3533 = vmatprep.subr.bf16.mxu0 0
    %3534 = vmatpush1.bf16.msra.mxu0 0
    %3535 = vmatprep.subr.bf16.mxu0 0
    %3536 = vmatpush1.bf16.msra.mxu0 0
    %3537 = vmatprep.subr.bf16.mxu0 0
    %3538 = vmatpush1.bf16.msra.mxu0 0
    %3539 = vmatprep.subr.bf16.mxu0 0
    %3540 = vmatpush1.bf16.msra.mxu0 0
    %3541 = vmatprep.subr.bf16.mxu0 0
    %3542 = vmatpush1.bf16.msra.mxu0 0
    %3543 = vmatprep.subr.bf16.mxu0 0
    %3544 = vmatpush1.bf16.msra.mxu0 0
    %3545 = vmatprep.subr.bf16.mxu0 0
    %3546 = vmatpush1.bf16.msra.mxu0 0
    %3547 = vmatprep.subr.bf16.mxu0 0
    %3548 = vmatpush1.bf16.msra.mxu0 0
    %3549 = vmatprep.subr.bf16.mxu0 0
    %3550 = vmatpush1.bf16.msra.mxu0 0
    %3551 = vmatprep.subr.bf16.mxu0 0
    %3552 = vmatpush1.bf16.msra.mxu0 0
    %3553 = vmatprep.subr.bf16.mxu0 0
    %3554 = vmatpush1.bf16.msra.mxu0 0
    %3555 = vmatprep.subr.bf16.mxu0 0
    %3556 = vmatpush1.bf16.msra.mxu0 0
    %3557 = vmatprep.subr.bf16.mxu0 0
    %3558 = vmatpush1.bf16.msra.mxu0 0
    %3559 = vmatprep.mubr.bf16.mxu0 0
    %3560 = vmatmul.mubr.bf16.gmra.mrb[0].mxu0 %v3461
    %v3561 = vpop.f32.mrb[0].mxu0
    %v3562 = vadd.f32 %v3513, %v3561
    %v3563 = vpop.f32.mrb[0].mxu0
    %v3564 = vpop.f32.mrb[0].mxu0
    %v3565 = vadd.f32 %v3513, %v3564
    %v3566 = vpop.f32.mrb[0].mxu0
    %3567 = vdwg.mxu0
    %v3568 = vld [vmem:[%s39] sm:$0xf]
    %v3569 = vld [vmem:[%s39 + $0x4] sm:$0xf]
    %v3570 = vld [vmem:[%s39 + $0x8] sm:$0xf]
    %v3571 = vld [vmem:[%s39 + $0xc] sm:$0xf]
    %v3572 = vld [vmem:[%s45] sm:$0x1]
    %v3574 = vlaneseq
    %v3575 = vshrl.u32 %v3574, 7
    %v3576 = vsub.s32 0, %v3575
    %v3577 = vrot.slane %v3572, %v3576
    %v3583 = vunpack.c.l.b16 %v3568
    %v3584 = vunpack.c.l.b16 %v3569
    %v3585 = vunpack.c.l.b16 %v3570
    %v3586 = vunpack.c.l.b16 %v3571
    %v3587 = vpack.c.b16 %v3584, %v3583
    %v3588 = vpack.c.b16 %v3586, %v3585
    %3591 = vmatprep.subr.bf16.mxu0 0
    %3592 = vmatpush1.bf16.msra.mxu0 %v3587
    %3593 = vmatprep.subr.bf16.mxu0 0
    %3594 = vmatpush1.bf16.msra.mxu0 %v3588
    %3595 = vmatprep.subr.bf16.mxu0 0
    %3596 = vmatpush1.bf16.msra.mxu0 0
    %3597 = vmatprep.subr.bf16.mxu0 0
    %3598 = vmatpush1.bf16.msra.mxu0 0
    %3599 = vmatprep.subr.bf16.mxu0 0
    %3600 = vmatpush1.bf16.msra.mxu0 0
    %3601 = vmatprep.subr.bf16.mxu0 0
    %3602 = vmatpush1.bf16.msra.mxu0 0
    %3603 = vmatprep.subr.bf16.mxu0 0
    %3604 = vmatpush1.bf16.msra.mxu0 0
    %3605 = vmatprep.subr.bf16.mxu0 0
    %3606 = vmatpush1.bf16.msra.mxu0 0
    %3607 = vmatprep.subr.bf16.mxu0 0
    %3608 = vmatpush1.bf16.msra.mxu0 0
    %3609 = vmatprep.subr.bf16.mxu0 0
    %3610 = vmatpush1.bf16.msra.mxu0 0
    %3611 = vmatprep.subr.bf16.mxu0 0
    %3612 = vmatpush1.bf16.msra.mxu0 0
    %3613 = vmatprep.subr.bf16.mxu0 0
    %3614 = vmatpush1.bf16.msra.mxu0 0
    %3615 = vmatprep.subr.bf16.mxu0 0
    %3616 = vmatpush1.bf16.msra.mxu0 0
    %3617 = vmatprep.subr.bf16.mxu0 0
    %3618 = vmatpush1.bf16.msra.mxu0 0
    %3619 = vmatprep.subr.bf16.mxu0 0
    %3620 = vmatpush1.bf16.msra.mxu0 0
    %3621 = vmatprep.subr.bf16.mxu0 0
    %3622 = vmatpush1.bf16.msra.mxu0 0
    %3623 = vmatprep.mubr.bf16.mxu0 0
    %3624 = vmatmul.mubr.bf16.gmra.mrb[0].mxu0 %v3461
    %v3625 = vpop.f32.mrb[0].mxu0
    %v3626 = vadd.f32 %v3577, %v3625
    %v3627 = vpop.f32.mrb[0].mxu0
    %v3628 = vpop.f32.mrb[0].mxu0
    %v3629 = vadd.f32 %v3577, %v3628
    %v3630 = vpop.f32.mrb[0].mxu0
    %3631 = vdwg.mxu0
    %v3633 = vsel %vm352, %v3498, 0
    %v3636 = vsel %vm352, %v3562, 0
    %3638 = vmatprep.subr.mxu0 0.0
    %3639 = vmatpush1.xpose.msra.mxu0 %v3636
    %3640 = vmatprep.subr.mxu0 0.0
    %3641 = vmatpush1.xpose.msra.mxu0 0.0
    %3642 = vmatprep.subr.mxu0 0.0
    %3643 = vmatpush1.xpose.msra.mxu0 0.0
    %3644 = vmatprep.subr.mxu0 0.0
    %3645 = vmatpush1.xpose.msra.mxu0 0.0
    %3646 = vmatprep.subr.mxu0 0.0
    %3647 = vmatpush1.xpose.msra.mxu0 0.0
    %3648 = vmatprep.subr.mxu0 0.0
    %3649 = vmatpush1.xpose.msra.mxu0 0.0
    %3650 = vmatprep.subr.mxu0 0.0
    %3651 = vmatpush1.xpose.msra.mxu0 0.0
    %3652 = vmatprep.subr.mxu0 0.0
    %3653 = vmatpush1.xpose.msra.mxu0 0.0
    %3654 = vmatprep.subr.mxu0 0.0
    %3655 = vmatpush1.xpose.msra.mxu0 0.0
    %3656 = vmatprep.subr.mxu0 0.0
    %3657 = vmatpush1.xpose.msra.mxu0 0.0
    %3658 = vmatprep.subr.mxu0 0.0
    %3659 = vmatpush1.xpose.msra.mxu0 0.0
    %3660 = vmatprep.subr.mxu0 0.0
    %3661 = vmatpush1.xpose.msra.mxu0 0.0
    %3662 = vmatprep.subr.mxu0 0.0
    %3663 = vmatpush1.xpose.msra.mxu0 0.0
    %3664 = vmatprep.subr.mxu0 0.0
    %3665 = vmatpush1.xpose.msra.mxu0 0.0
    %3666 = vmatprep.subr.mxu0 0.0
    %3667 = vmatpush1.xpose.msra.mxu0 0.0
    %3668 = vmatprep.subr.mxu0 0.0
    %3669 = vmatpush1.xpose.msra.mxu0 0.0
    %3670 = vmatprep.subr.mxu0 0.0
    %3671 = vmatpush1.xpose.msra.mxu0 0.0
    %3672 = vmatprep.subr.mxu0 0.0
    %3673 = vmatpush1.xpose.msra.mxu0 0.0
    %3674 = vmatprep.subr.mxu0 0.0
    %3675 = vmatpush1.xpose.msra.mxu0 0.0
    %3676 = vmatprep.subr.mxu0 0.0
    %3677 = vmatpush1.xpose.msra.mxu0 0.0
    %3678 = vmatprep.subr.mxu0 0.0
    %3679 = vmatpush1.xpose.msra.mxu0 0.0
    %3680 = vmatprep.subr.mxu0 0.0
    %3681 = vmatpush1.xpose.msra.mxu0 0.0
    %3682 = vmatprep.subr.mxu0 0.0
    %3683 = vmatpush1.xpose.msra.mxu0 0.0
    %3684 = vmatprep.subr.mxu0 0.0
    %3685 = vmatpush1.xpose.msra.mxu0 0.0
    %3686 = vmatprep.subr.mxu0 0.0
    %3687 = vmatpush1.xpose.msra.mxu0 0.0
    %3688 = vmatprep.subr.mxu0 0.0
    %3689 = vmatpush1.xpose.msra.mxu0 0.0
    %3690 = vmatprep.subr.mxu0 0.0
    %3691 = vmatpush1.xpose.msra.mxu0 0.0
    %3692 = vmatprep.subr.mxu0 0.0
    %3693 = vmatpush1.xpose.msra.mxu0 0.0
    %3694 = vmatprep.subr.mxu0 0.0
    %3695 = vmatpush1.xpose.msra.mxu0 0.0
    %3696 = vmatprep.subr.mxu0 0.0
    %3697 = vmatpush1.xpose.msra.mxu0 0.0
    %3698 = vmatprep.subr.mxu0 0.0
    %3699 = vmatpush1.xpose.msra.mxu0 0.0
    %3700 = vmatprep.subr.mxu0 0.0
    %3701 = vmatpush1.xpose.msra.mxu0 0.0
    %3702 = vmatprep.mubr.f32.mxu0 0.0
    %3703 = vmatmul.mubr.f32.gmra.mrb[0].mxu0 %v3633
    %v3704 = vpop.f32.mrb[0].mxu0
    %v3705 = vadd.f32 0.0, %v3704
    %v3706 = vpop.f32.mrb[0].mxu0
    %3707 = vdwg.mxu0
    %v3709 = vsel %vm352, %v3501, 0
    %v3712 = vsel %vm352, %v3565, 0
    %3714 = vmatprep.subr.mxu0 0.0
    %3715 = vmatpush1.xpose.msra.mxu0 %v3712
    %3716 = vmatprep.subr.mxu0 0.0
    %3717 = vmatpush1.xpose.msra.mxu0 0.0
    %3718 = vmatprep.subr.mxu0 0.0
    %3719 = vmatpush1.xpose.msra.mxu0 0.0
    %3720 = vmatprep.subr.mxu0 0.0
    %3721 = vmatpush1.xpose.msra.mxu0 0.0
    %3722 = vmatprep.subr.mxu0 0.0
    %3723 = vmatpush1.xpose.msra.mxu0 0.0
    %3724 = vmatprep.subr.mxu0 0.0
    %3725 = vmatpush1.xpose.msra.mxu0 0.0
    %3726 = vmatprep.subr.mxu0 0.0
    %3727 = vmatpush1.xpose.msra.mxu0 0.0
    %3728 = vmatprep.subr.mxu0 0.0
    %3729 = vmatpush1.xpose.msra.mxu0 0.0
    %3730 = vmatprep.subr.mxu0 0.0
    %3731 = vmatpush1.xpose.msra.mxu0 0.0
    %3732 = vmatprep.subr.mxu0 0.0
    %3733 = vmatpush1.xpose.msra.mxu0 0.0
    %3734 = vmatprep.subr.mxu0 0.0
    %3735 = vmatpush1.xpose.msra.mxu0 0.0
    %3736 = vmatprep.subr.mxu0 0.0
    %3737 = vmatpush1.xpose.msra.mxu0 0.0
    %3738 = vmatprep.subr.mxu0 0.0
    %3739 = vmatpush1.xpose.msra.mxu0 0.0
    %3740 = vmatprep.subr.mxu0 0.0
    %3741 = vmatpush1.xpose.msra.mxu0 0.0
    %3742 = vmatprep.subr.mxu0 0.0
    %3743 = vmatpush1.xpose.msra.mxu0 0.0
    %3744 = vmatprep.subr.mxu0 0.0
    %3745 = vmatpush1.xpose.msra.mxu0 0.0
    %3746 = vmatprep.subr.mxu0 0.0
    %3747 = vmatpush1.xpose.msra.mxu0 0.0
    %3748 = vmatprep.subr.mxu0 0.0
    %3749 = vmatpush1.xpose.msra.mxu0 0.0
    %3750 = vmatprep.subr.mxu0 0.0
    %3751 = vmatpush1.xpose.msra.mxu0 0.0
    %3752 = vmatprep.subr.mxu0 0.0
    %3753 = vmatpush1.xpose.msra.mxu0 0.0
    %3754 = vmatprep.subr.mxu0 0.0
    %3755 = vmatpush1.xpose.msra.mxu0 0.0
    %3756 = vmatprep.subr.mxu0 0.0
    %3757 = vmatpush1.xpose.msra.mxu0 0.0
    %3758 = vmatprep.subr.mxu0 0.0
    %3759 = vmatpush1.xpose.msra.mxu0 0.0
    %3760 = vmatprep.subr.mxu0 0.0
    %3761 = vmatpush1.xpose.msra.mxu0 0.0
    %3762 = vmatprep.subr.mxu0 0.0
    %3763 = vmatpush1.xpose.msra.mxu0 0.0
    %3764 = vmatprep.subr.mxu0 0.0
    %3765 = vmatpush1.xpose.msra.mxu0 0.0
    %3766 = vmatprep.subr.mxu0 0.0
    %3767 = vmatpush1.xpose.msra.mxu0 0.0
    %3768 = vmatprep.subr.mxu0 0.0
    %3769 = vmatpush1.xpose.msra.mxu0 0.0
    %3770 = vmatprep.subr.mxu0 0.0
    %3771 = vmatpush1.xpose.msra.mxu0 0.0
    %3772 = vmatprep.subr.mxu0 0.0
    %3773 = vmatpush1.xpose.msra.mxu0 0.0
    %3774 = vmatprep.subr.mxu0 0.0
    %3775 = vmatpush1.xpose.msra.mxu0 0.0
    %3776 = vmatprep.subr.mxu0 0.0
    %3777 = vmatpush1.xpose.msra.mxu0 0.0
    %3778 = vmatprep.mubr.f32.mxu0 0.0
    %3779 = vmatmul.mubr.f32.gmra.mrb[0].mxu0 %v3709
    %v3780 = vpop.f32.mrb[0].mxu0
    %v3781 = vadd.f32 0.0, %v3780
    %v3782 = vpop.f32.mrb[0].mxu0
    %3783 = vdwg.mxu0
    %v3784 = vmul.f32 %v3705, 0.25
    %v3785 = vmul.f32 %v3781, 0.25
    %v3786 = vsel %vm507, %v3784, -inf
    %3787 = vmax.xlane.f32.xlu0 %v3786
    %v3788 = vpop.xlane.xlu0 %3787
    %v3789 = vsel %vm507, %v3785, -inf
    %3790 = vmax.xlane.f32.xlu0 %v3789
    %v3791 = vpop.xlane.xlu0 %3790
    %v3792 = vsub.f32 %v3784, %v3788
    %v3793 = vsub.f32 %v3785, %v3791
    %v3794 = vmul.f32 %v3792, 1.442695
    %v3795 = vpow.pop %v3794
    %v3796 = vmul.f32 %v3793, 1.442695
    %v3797 = vpow.pop %v3796
    %v3798 = vsel %vm507, %v3795, 0.0
    %3799 = vadd.xlane.f32.xlu0 %v3798
    %v3800 = vpop.xlane.xlu0 %3799
    %v3801 = vsel %vm507, %v3797, 0.0
    %3802 = vadd.xlane.f32.xlu0 %v3801
    %v3803 = vpop.xlane.xlu0 %3802
    %v3804 = vrcp.pop %v3800
    %v3805 = vrcp.pop %v3803
    %v3806 = vmul.f32 %v3795, %v3804
    %v3807 = vmul.f32 %v3797, %v3805
    %v3809 = vsel %vm507, %v3806, 0
    %3811 = vmatprep.subr.mxu0 0.0
    %3812 = vmatpush1.msra.mxu0 %v3626
    %3813 = vmatprep.subr.mxu0 0.0
    %3814 = vmatpush1.msra.mxu0 0.0
    %3815 = vmatprep.subr.mxu0 0.0
    %3816 = vmatpush1.msra.mxu0 0.0
    %3817 = vmatprep.subr.mxu0 0.0
    %3818 = vmatpush1.msra.mxu0 0.0
    %3819 = vmatprep.subr.mxu0 0.0
    %3820 = vmatpush1.msra.mxu0 0.0
    %3821 = vmatprep.subr.mxu0 0.0
    %3822 = vmatpush1.msra.mxu0 0.0
    %3823 = vmatprep.subr.mxu0 0.0
    %3824 = vmatpush1.msra.mxu0 0.0
    %3825 = vmatprep.subr.mxu0 0.0
    %3826 = vmatpush1.msra.mxu0 0.0
    %3827 = vmatprep.subr.mxu0 0.0
    %3828 = vmatpush1.msra.mxu0 0.0
    %3829 = vmatprep.subr.mxu0 0.0
    %3830 = vmatpush1.msra.mxu0 0.0
    %3831 = vmatprep.subr.mxu0 0.0
    %3832 = vmatpush1.msra.mxu0 0.0
    %3833 = vmatprep.subr.mxu0 0.0
    %3834 = vmatpush1.msra.mxu0 0.0
    %3835 = vmatprep.subr.mxu0 0.0
    %3836 = vmatpush1.msra.mxu0 0.0
    %3837 = vmatprep.subr.mxu0 0.0
    %3838 = vmatpush1.msra.mxu0 0.0
    %3839 = vmatprep.subr.mxu0 0.0
    %3840 = vmatpush1.msra.mxu0 0.0
    %3841 = vmatprep.subr.mxu0 0.0
    %3842 = vmatpush1.msra.mxu0 0.0
    %3843 = vmatprep.subr.mxu0 0.0
    %3844 = vmatpush1.msra.mxu0 0.0
    %3845 = vmatprep.subr.mxu0 0.0
    %3846 = vmatpush1.msra.mxu0 0.0
    %3847 = vmatprep.subr.mxu0 0.0
    %3848 = vmatpush1.msra.mxu0 0.0
    %3849 = vmatprep.subr.mxu0 0.0
    %3850 = vmatpush1.msra.mxu0 0.0
    %3851 = vmatprep.subr.mxu0 0.0
    %3852 = vmatpush1.msra.mxu0 0.0
    %3853 = vmatprep.subr.mxu0 0.0
    %3854 = vmatpush1.msra.mxu0 0.0
    %3855 = vmatprep.subr.mxu0 0.0
    %3856 = vmatpush1.msra.mxu0 0.0
    %3857 = vmatprep.subr.mxu0 0.0
    %3858 = vmatpush1.msra.mxu0 0.0
    %3859 = vmatprep.subr.mxu0 0.0
    %3860 = vmatpush1.msra.mxu0 0.0
    %3861 = vmatprep.subr.mxu0 0.0
    %3862 = vmatpush1.msra.mxu0 0.0
    %3863 = vmatprep.subr.mxu0 0.0
    %3864 = vmatpush1.msra.mxu0 0.0
    %3865 = vmatprep.subr.mxu0 0.0
    %3866 = vmatpush1.msra.mxu0 0.0
    %3867 = vmatprep.subr.mxu0 0.0
    %3868 = vmatpush1.msra.mxu0 0.0
    %3869 = vmatprep.subr.mxu0 0.0
    %3870 = vmatpush1.msra.mxu0 0.0
    %3871 = vmatprep.subr.mxu0 0.0
    %3872 = vmatpush1.msra.mxu0 0.0
    %3873 = vmatprep.subr.mxu0 0.0
    %3874 = vmatpush1.msra.mxu0 0.0
    %3875 = vmatprep.mubr.f32.mxu0 0.0
    %3876 = vmatmul.mubr.f32.gmra.mrb[0].mxu0 %v3809
    %v3877 = vpop.f32.mrb[0].mxu0
    %v3878 = vadd.f32 0.0, %v3877
    %v3879 = vpop.f32.mrb[0].mxu0
    %3880 = vdwg.mxu0
    %v3882 = vsel %vm507, %v3807, 0
    %3884 = vmatprep.subr.mxu0 0.0
    %3885 = vmatpush1.msra.mxu0 %v3629
    %3886 = vmatprep.subr.mxu0 0.0
    %3887 = vmatpush1.msra.mxu0 0.0
    %3888 = vmatprep.subr.mxu0 0.0
    %3889 = vmatpush1.msra.mxu0 0.0
    %3890 = vmatprep.subr.mxu0 0.0
    %3891 = vmatpush1.msra.mxu0 0.0
    %3892 = vmatprep.subr.mxu0 0.0
    %3893 = vmatpush1.msra.mxu0 0.0
    %3894 = vmatprep.subr.mxu0 0.0
    %3895 = vmatpush1.msra.mxu0 0.0
    %3896 = vmatprep.subr.mxu0 0.0
    %3897 = vmatpush1.msra.mxu0 0.0
    %3898 = vmatprep.subr.mxu0 0.0
    %3899 = vmatpush1.msra.mxu0 0.0
    %3900 = vmatprep.subr.mxu0 0.0
    %3901 = vmatpush1.msra.mxu0 0.0
    %3902 = vmatprep.subr.mxu0 0.0
    %3903 = vmatpush1.msra.mxu0 0.0
    %3904 = vmatprep.subr.mxu0 0.0
    %3905 = vmatpush1.msra.mxu0 0.0
    %3906 = vmatprep.subr.mxu0 0.0
    %3907 = vmatpush1.msra.mxu0 0.0
    %3908 = vmatprep.subr.mxu0 0.0
    %3909 = vmatpush1.msra.mxu0 0.0
    %3910 = vmatprep.subr.mxu0 0.0
    %3911 = vmatpush1.msra.mxu0 0.0
    %3912 = vmatprep.subr.mxu0 0.0
    %3913 = vmatpush1.msra.mxu0 0.0
    %3914 = vmatprep.subr.mxu0 0.0
    %3915 = vmatpush1.msra.mxu0 0.0
    %3916 = vmatprep.subr.mxu0 0.0
    %3917 = vmatpush1.msra.mxu0 0.0
    %3918 = vmatprep.subr.mxu0 0.0
    %3919 = vmatpush1.msra.mxu0 0.0
    %3920 = vmatprep.subr.mxu0 0.0
    %3921 = vmatpush1.msra.mxu0 0.0
    %3922 = vmatprep.subr.mxu0 0.0
    %3923 = vmatpush1.msra.mxu0 0.0
    %3924 = vmatprep.subr.mxu0 0.0
    %3925 = vmatpush1.msra.mxu0 0.0
    %3926 = vmatprep.subr.mxu0 0.0
    %3927 = vmatpush1.msra.mxu0 0.0
    %3928 = vmatprep.subr.mxu0 0.0
    %3929 = vmatpush1.msra.mxu0 0.0
    %3930 = vmatprep.subr.mxu0 0.0
    %3931 = vmatpush1.msra.mxu0 0.0
    %3932 = vmatprep.subr.mxu0 0.0
    %3933 = vmatpush1.msra.mxu0 0.0
    %3934 = vmatprep.subr.mxu0 0.0
    %3935 = vmatpush1.msra.mxu0 0.0
    %3936 = vmatprep.subr.mxu0 0.0
    %3937 = vmatpush1.msra.mxu0 0.0
    %3938 = vmatprep.subr.mxu0 0.0
    %3939 = vmatpush1.msra.mxu0 0.0
    %3940 = vmatprep.subr.mxu0 0.0
    %3941 = vmatpush1.msra.mxu0 0.0
    %3942 = vmatprep.subr.mxu0 0.0
    %3943 = vmatpush1.msra.mxu0 0.0
    %3944 = vmatprep.subr.mxu0 0.0
    %3945 = vmatpush1.msra.mxu0 0.0
    %3946 = vmatprep.subr.mxu0 0.0
    %3947 = vmatpush1.msra.mxu0 0.0
    %3948 = vmatprep.mubr.f32.mxu0 0.0
    %3949 = vmatmul.mubr.f32.gmra.mrb[0].mxu0 %v3882
    %v3950 = vpop.f32.mrb[0].mxu0
    %v3951 = vadd.f32 0.0, %v3950
    %v3952 = vpop.f32.mrb[0].mxu0
    %3953 = vdwg.mxu0
    %v3954 = vld [vmem:[%s47] sm:$0xf]
    %v3955 = vld [vmem:[%s47 + $0x4] sm:$0xf]
    %v3956 = vpack.c.bf16 %v3951, %v3878
    %s3957 = scalar_lea.vmem %s35, 16
    %v3958 = vld [vmem:[%s3957] sm:$0xf]
    %v3959 = vld [vmem:[%s3957 + $0x4] sm:$0xf]
    %v3960 = vld [vmem:[%s3957 + $0x8] sm:$0xf]
    %v3961 = vld [vmem:[%s3957 + $0xc] sm:$0xf]
    %s3962 = scalar_lea.vmem %s41, 1
    %v3963 = vld [vmem:[%s3962] sm:$0x1]
    %v3965 = vlaneseq
    %v3966 = vshrl.u32 %v3965, 7
    %v3967 = vsub.s32 0, %v3966
    %v3968 = vrot.slane %v3963, %v3967
    %v3974 = vunpack.c.l.b16 %v3958
    %v3975 = vunpack.c.l.b16 %v3959
    %v3976 = vunpack.c.l.b16 %v3960
    %v3977 = vunpack.c.l.b16 %v3961
    %v3978 = vpack.c.b16 %v3975, %v3974
    %v3979 = vpack.c.b16 %v3977, %v3976
    %3982 = vmatprep.subr.bf16.mxu0 0
    %3983 = vmatpush1.bf16.msra.mxu0 %v3978
    %3984 = vmatprep.subr.bf16.mxu0 0
    %3985 = vmatpush1.bf16.msra.mxu0 %v3979
    %3986 = vmatprep.subr.bf16.mxu0 0
    %3987 = vmatpush1.bf16.msra.mxu0 0
    %3988 = vmatprep.subr.bf16.mxu0 0
    %3989 = vmatpush1.bf16.msra.mxu0 0
    %3990 = vmatprep.subr.bf16.mxu0 0
    %3991 = vmatpush1.bf16.msra.mxu0 0
    %3992 = vmatprep.subr.bf16.mxu0 0
    %3993 = vmatpush1.bf16.msra.mxu0 0
    %3994 = vmatprep.subr.bf16.mxu0 0
    %3995 = vmatpush1.bf16.msra.mxu0 0
    %3996 = vmatprep.subr.bf16.mxu0 0
    %3997 = vmatpush1.bf16.msra.mxu0 0
    %3998 = vmatprep.subr.bf16.mxu0 0
    %3999 = vmatpush1.bf16.msra.mxu0 0
    %4000 = vmatprep.subr.bf16.mxu0 0
    %4001 = vmatpush1.bf16.msra.mxu0 0
    %4002 = vmatprep.subr.bf16.mxu0 0
    %4003 = vmatpush1.bf16.msra.mxu0 0
    %4004 = vmatprep.subr.bf16.mxu0 0
    %4005 = vmatpush1.bf16.msra.mxu0 0
    %4006 = vmatprep.subr.bf16.mxu0 0
    %4007 = vmatpush1.bf16.msra.mxu0 0
    %4008 = vmatprep.subr.bf16.mxu0 0
    %4009 = vmatpush1.bf16.msra.mxu0 0
    %4010 = vmatprep.subr.bf16.mxu0 0
    %4011 = vmatpush1.bf16.msra.mxu0 0
    %4012 = vmatprep.subr.bf16.mxu0 0
    %4013 = vmatpush1.bf16.msra.mxu0 0
    %4014 = vmatprep.mubr.bf16.mxu0 0
    %4015 = vmatmul.mubr.bf16.gmra.mrb[0].mxu0 %v3461
    %v4016 = vpop.f32.mrb[0].mxu0
    %v4017 = vadd.f32 %v3968, %v4016
    %v4018 = vpop.f32.mrb[0].mxu0
    %v4019 = vpop.f32.mrb[0].mxu0
    %v4020 = vadd.f32 %v3968, %v4019
    %v4021 = vpop.f32.mrb[0].mxu0
    %4022 = vdwg.mxu0
    %s4023 = scalar_lea.vmem %s37, 16
    %v4024 = vld [vmem:[%s4023] sm:$0xf]
    %v4025 = vld [vmem:[%s4023 + $0x4] sm:$0xf]
    %v4026 = vld [vmem:[%s4023 + $0x8] sm:$0xf]
    %v4027 = vld [vmem:[%s4023 + $0xc] sm:$0xf]
    %s4028 = scalar_lea.vmem %s43, 1
    %v4029 = vld [vmem:[%s4028] sm:$0x1]
    %v4031 = vlaneseq
    %v4032 = vshrl.u32 %v4031, 7
    %v4033 = vsub.s32 0, %v4032
    %v4034 = vrot.slane %v4029, %v4033
    %v4040 = vunpack.c.l.b16 %v4024
    %v4041 = vunpack.c.l.b16 %v4025
    %v4042 = vunpack.c.l.b16 %v4026
    %v4043 = vunpack.c.l.b16 %v4027
    %v4044 = vpack.c.b16 %v4041, %v4040
    %v4045 = vpack.c.b16 %v4043, %v4042
    %4048 = vmatprep.subr.bf16.mxu0 0
    %4049 = vmatpush1.bf16.msra.mxu0 %v4044
    %4050 = vmatprep.subr.bf16.mxu0 0
    %4051 = vmatpush1.bf16.msra.mxu0 %v4045
    %4052 = vmatprep.subr.bf16.mxu0 0
    %4053 = vmatpush1.bf16.msra.mxu0 0
    %4054 = vmatprep.subr.bf16.mxu0 0
    %4055 = vmatpush1.bf16.msra.mxu0 0
    %4056 = vmatprep.subr.bf16.mxu0 0
    %4057 = vmatpush1.bf16.msra.mxu0 0
    %4058 = vmatprep.subr.bf16.mxu0 0
    %4059 = vmatpush1.bf16.msra.mxu0 0
    %4060 = vmatprep.subr.bf16.mxu0 0
    %4061 = vmatpush1.bf16.msra.mxu0 0
    %4062 = vmatprep.subr.bf16.mxu0 0
    %4063 = vmatpush1.bf16.msra.mxu0 0
    %4064 = vmatprep.subr.bf16.mxu0 0
    %4065 = vmatpush1.bf16.msra.mxu0 0
    %4066 = vmatprep.subr.bf16.mxu0 0
    %4067 = vmatpush1.bf16.msra.mxu0 0
    %4068 = vmatprep.subr.bf16.mxu0 0
    %4069 = vmatpush1.bf16.msra.mxu0 0
    %4070 = vmatprep.subr.bf16.mxu0 0
    %4071 = vmatpush1.bf16.msra.mxu0 0
    %4072 = vmatprep.subr.bf16.mxu0 0
    %4073 = vmatpush1.bf16.msra.mxu0 0
    %4074 = vmatprep.subr.bf16.mxu0 0
    %4075 = vmatpush1.bf16.msra.mxu0 0
    %4076 = vmatprep.subr.bf16.mxu0 0
    %4077 = vmatpush1.bf16.msra.mxu0 0
    %4078 = vmatprep.subr.bf16.mxu0 0
    %4079 = vmatpush1.bf16.msra.mxu0 0
    %4080 = vmatprep.mubr.bf16.mxu0 0
    %4081 = vmatmul.mubr.bf16.gmra.mrb[0].mxu0 %v3461
    %v4082 = vpop.f32.mrb[0].mxu0
    %v4083 = vadd.f32 %v4034, %v4082
    %v4084 = vpop.f32.mrb[0].mxu0
    %v4085 = vpop.f32.mrb[0].mxu0
    %v4086 = vadd.f32 %v4034, %v4085
    %v4087 = vpop.f32.mrb[0].mxu0
    %4088 = vdwg.mxu0
    %s4089 = scalar_lea.vmem %s39, 16
    %v4090 = vld [vmem:[%s4089] sm:$0xf]
    %v4091 = vld [vmem:[%s4089 + $0x4] sm:$0xf]
    %v4092 = vld [vmem:[%s4089 + $0x8] sm:$0xf]
    %v4093 = vld [vmem:[%s4089 + $0xc] sm:$0xf]
    %s4094 = scalar_lea.vmem %s45, 1
    %v4095 = vld [vmem:[%s4094] sm:$0x1]
    %v4097 = vlaneseq
    %v4098 = vshrl.u32 %v4097, 7
    %v4099 = vsub.s32 0, %v4098
    %v4100 = vrot.slane %v4095, %v4099
    %v4106 = vunpack.c.l.b16 %v4090
    %v4107 = vunpack.c.l.b16 %v4091
    %v4108 = vunpack.c.l.b16 %v4092
    %v4109 = vunpack.c.l.b16 %v4093
    %v4110 = vpack.c.b16 %v4107, %v4106
    %v4111 = vpack.c.b16 %v4109, %v4108
    %4114 = vmatprep.subr.bf16.mxu0 0
    %4115 = vmatpush1.bf16.msra.mxu0 %v4110
    %4116 = vmatprep.subr.bf16.mxu0 0
    %4117 = vmatpush1.bf16.msra.mxu0 %v4111
    %4118 = vmatprep.subr.bf16.mxu0 0
    %4119 = vmatpush1.bf16.msra.mxu0 0
    %4120 = vmatprep.subr.bf16.mxu0 0
    %4121 = vmatpush1.bf16.msra.mxu0 0
    %4122 = vmatprep.subr.bf16.mxu0 0
    %4123 = vmatpush1.bf16.msra.mxu0 0
    %4124 = vmatprep.subr.bf16.mxu0 0
    %4125 = vmatpush1.bf16.msra.mxu0 0
    %4126 = vmatprep.subr.bf16.mxu0 0
    %4127 = vmatpush1.bf16.msra.mxu0 0
    %4128 = vmatprep.subr.bf16.mxu0 0
    %4129 = vmatpush1.bf16.msra.mxu0 0
    %4130 = vmatprep.subr.bf16.mxu0 0
    %4131 = vmatpush1.bf16.msra.mxu0 0
    %4132 = vmatprep.subr.bf16.mxu0 0
    %4133 = vmatpush1.bf16.msra.mxu0 0
    %4134 = vmatprep.subr.bf16.mxu0 0
    %4135 = vmatpush1.bf16.msra.mxu0 0
    %4136 = vmatprep.subr.bf16.mxu0 0
    %4137 = vmatpush1.bf16.msra.mxu0 0
    %4138 = vmatprep.subr.bf16.mxu0 0
    %4139 = vmatpush1.bf16.msra.mxu0 0
    %4140 = vmatprep.subr.bf16.mxu0 0
    %4141 = vmatpush1.bf16.msra.mxu0 0
    %4142 = vmatprep.subr.bf16.mxu0 0
    %4143 = vmatpush1.bf16.msra.mxu0 0
    %4144 = vmatprep.subr.bf16.mxu0 0
    %4145 = vmatpush1.bf16.msra.mxu0 0
    %4146 = vmatprep.mubr.bf16.mxu0 0
    %4147 = vmatmul.mubr.bf16.gmra.mrb[0].mxu0 %v3461
    %v4148 = vpop.f32.mrb[0].mxu0
    %v4149 = vadd.f32 %v4100, %v4148
    %v4150 = vpop.f32.mrb[0].mxu0
    %v4151 = vpop.f32.mrb[0].mxu0
    %v4152 = vadd.f32 %v4100, %v4151
    %v4153 = vpop.f32.mrb[0].mxu0
    %4154 = vdwg.mxu0
    %v4156 = vsel %vm352, %v4017, 0
    %v4159 = vsel %vm352, %v4083, 0
    %4161 = vmatprep.subr.mxu0 0.0
    %4162 = vmatpush1.xpose.msra.mxu0 %v4159
    %4163 = vmatprep.subr.mxu0 0.0
    %4164 = vmatpush1.xpose.msra.mxu0 0.0
    %4165 = vmatprep.subr.mxu0 0.0
    %4166 = vmatpush1.xpose.msra.mxu0 0.0
    %4167 = vmatprep.subr.mxu0 0.0
    %4168 = vmatpush1.xpose.msra.mxu0 0.0
    %4169 = vmatprep.subr.mxu0 0.0
    %4170 = vmatpush1.xpose.msra.mxu0 0.0
    %4171 = vmatprep.subr.mxu0 0.0
    %4172 = vmatpush1.xpose.msra.mxu0 0.0
    %4173 = vmatprep.subr.mxu0 0.0
    %4174 = vmatpush1.xpose.msra.mxu0 0.0
    %4175 = vmatprep.subr.mxu0 0.0
    %4176 = vmatpush1.xpose.msra.mxu0 0.0
    %4177 = vmatprep.subr.mxu0 0.0
    %4178 = vmatpush1.xpose.msra.mxu0 0.0
    %4179 = vmatprep.subr.mxu0 0.0
    %4180 = vmatpush1.xpose.msra.mxu0 0.0
    %4181 = vmatprep.subr.mxu0 0.0
    %4182 = vmatpush1.xpose.msra.mxu0 0.0
    %4183 = vmatprep.subr.mxu0 0.0
    %4184 = vmatpush1.xpose.msra.mxu0 0.0
    %4185 = vmatprep.subr.mxu0 0.0
    %4186 = vmatpush1.xpose.msra.mxu0 0.0
    %4187 = vmatprep.subr.mxu0 0.0
    %4188 = vmatpush1.xpose.msra.mxu0 0.0
    %4189 = vmatprep.subr.mxu0 0.0
    %4190 = vmatpush1.xpose.msra.mxu0 0.0
    %4191 = vmatprep.subr.mxu0 0.0
    %4192 = vmatpush1.xpose.msra.mxu0 0.0
    %4193 = vmatprep.subr.mxu0 0.0
    %4194 = vmatpush1.xpose.msra.mxu0 0.0
    %4195 = vmatprep.subr.mxu0 0.0
    %4196 = vmatpush1.xpose.msra.mxu0 0.0
    %4197 = vmatprep.subr.mxu0 0.0
    %4198 = vmatpush1.xpose.msra.mxu0 0.0
    %4199 = vmatprep.subr.mxu0 0.0
    %4200 = vmatpush1.xpose.msra.mxu0 0.0
    %4201 = vmatprep.subr.mxu0 0.0
    %4202 = vmatpush1.xpose.msra.mxu0 0.0
    %4203 = vmatprep.subr.mxu0 0.0
    %4204 = vmatpush1.xpose.msra.mxu0 0.0
    %4205 = vmatprep.subr.mxu0 0.0
    %4206 = vmatpush1.xpose.msra.mxu0 0.0
    %4207 = vmatprep.subr.mxu0 0.0
    %4208 = vmatpush1.xpose.msra.mxu0 0.0
    %4209 = vmatprep.subr.mxu0 0.0
    %4210 = vmatpush1.xpose.msra.mxu0 0.0
    %4211 = vmatprep.subr.mxu0 0.0
    %4212 = vmatpush1.xpose.msra.mxu0 0.0
    %4213 = vmatprep.subr.mxu0 0.0
    %4214 = vmatpush1.xpose.msra.mxu0 0.0
    %4215 = vmatprep.subr.mxu0 0.0
    %4216 = vmatpush1.xpose.msra.mxu0 0.0
    %4217 = vmatprep.subr.mxu0 0.0
    %4218 = vmatpush1.xpose.msra.mxu0 0.0
    %4219 = vmatprep.subr.mxu0 0.0
    %4220 = vmatpush1.xpose.msra.mxu0 0.0
    %4221 = vmatprep.subr.mxu0 0.0
    %4222 = vmatpush1.xpose.msra.mxu0 0.0
    %4223 = vmatprep.subr.mxu0 0.0
    %4224 = vmatpush1.xpose.msra.mxu0 0.0
    %4225 = vmatprep.mubr.f32.mxu0 0.0
    %4226 = vmatmul.mubr.f32.gmra.mrb[0].mxu0 %v4156
    %v4227 = vpop.f32.mrb[0].mxu0
    %v4228 = vadd.f32 0.0, %v4227
    %v4229 = vpop.f32.mrb[0].mxu0
    %4230 = vdwg.mxu0
    %v4232 = vsel %vm352, %v4020, 0
    %v4235 = vsel %vm352, %v4086, 0
    %4237 = vmatprep.subr.mxu0 0.0
    %4238 = vmatpush1.xpose.msra.mxu0 %v4235
    %4239 = vmatprep.subr.mxu0 0.0
    %4240 = vmatpush1.xpose.msra.mxu0 0.0
    %4241 = vmatprep.subr.mxu0 0.0
    %4242 = vmatpush1.xpose.msra.mxu0 0.0
    %4243 = vmatprep.subr.mxu0 0.0
    %4244 = vmatpush1.xpose.msra.mxu0 0.0
    %4245 = vmatprep.subr.mxu0 0.0
    %4246 = vmatpush1.xpose.msra.mxu0 0.0
    %4247 = vmatprep.subr.mxu0 0.0
    %4248 = vmatpush1.xpose.msra.mxu0 0.0
    %4249 = vmatprep.subr.mxu0 0.0
    %4250 = vmatpush1.xpose.msra.mxu0 0.0
    %4251 = vmatprep.subr.mxu0 0.0
    %4252 = vmatpush1.xpose.msra.mxu0 0.0
    %4253 = vmatprep.subr.mxu0 0.0
    %4254 = vmatpush1.xpose.msra.mxu0 0.0
    %4255 = vmatprep.subr.mxu0 0.0
    %4256 = vmatpush1.xpose.msra.mxu0 0.0
    %4257 = vmatprep.subr.mxu0 0.0
    %4258 = vmatpush1.xpose.msra.mxu0 0.0
    %4259 = vmatprep.subr.mxu0 0.0
    %4260 = vmatpush1.xpose.msra.mxu0 0.0
    %4261 = vmatprep.subr.mxu0 0.0
    %4262 = vmatpush1.xpose.msra.mxu0 0.0
    %4263 = vmatprep.subr.mxu0 0.0
    %4264 = vmatpush1.xpose.msra.mxu0 0.0
    %4265 = vmatprep.subr.mxu0 0.0
    %4266 = vmatpush1.xpose.msra.mxu0 0.0
    %4267 = vmatprep.subr.mxu0 0.0
    %4268 = vmatpush1.xpose.msra.mxu0 0.0
    %4269 = vmatprep.subr.mxu0 0.0
    %4270 = vmatpush1.xpose.msra.mxu0 0.0
    %4271 = vmatprep.subr.mxu0 0.0
    %4272 = vmatpush1.xpose.msra.mxu0 0.0
    %4273 = vmatprep.subr.mxu0 0.0
    %4274 = vmatpush1.xpose.msra.mxu0 0.0
    %4275 = vmatprep.subr.mxu0 0.0
    %4276 = vmatpush1.xpose.msra.mxu0 0.0
    %4277 = vmatprep.subr.mxu0 0.0
    %4278 = vmatpush1.xpose.msra.mxu0 0.0
    %4279 = vmatprep.subr.mxu0 0.0
    %4280 = vmatpush1.xpose.msra.mxu0 0.0
    %4281 = vmatprep.subr.mxu0 0.0
    %4282 = vmatpush1.xpose.msra.mxu0 0.0
    %4283 = vmatprep.subr.mxu0 0.0
    %4284 = vmatpush1.xpose.msra.mxu0 0.0
    %4285 = vmatprep.subr.mxu0 0.0
    %4286 = vmatpush1.xpose.msra.mxu0 0.0
    %4287 = vmatprep.subr.mxu0 0.0
    %4288 = vmatpush1.xpose.msra.mxu0 0.0
    %4289 = vmatprep.subr.mxu0 0.0
    %4290 = vmatpush1.xpose.msra.mxu0 0.0
    %4291 = vmatprep.subr.mxu0 0.0
    %4292 = vmatpush1.xpose.msra.mxu0 0.0
    %4293 = vmatprep.subr.mxu0 0.0
    %4294 = vmatpush1.xpose.msra.mxu0 0.0
    %4295 = vmatprep.subr.mxu0 0.0
    %4296 = vmatpush1.xpose.msra.mxu0 0.0
    %4297 = vmatprep.subr.mxu0 0.0
    %4298 = vmatpush1.xpose.msra.mxu0 0.0
    %4299 = vmatprep.subr.mxu0 0.0
    %4300 = vmatpush1.xpose.msra.mxu0 0.0
    %4301 = vmatprep.mubr.f32.mxu0 0.0
    %4302 = vmatmul.mubr.f32.gmra.mrb[0].mxu0 %v4232
    %v4303 = vpop.f32.mrb[0].mxu0
    %v4304 = vadd.f32 0.0, %v4303
    %v4305 = vpop.f32.mrb[0].mxu0
    %4306 = vdwg.mxu0
    %v4307 = vmul.f32 %v4228, 0.25
    %v4308 = vmul.f32 %v4304, 0.25
    %v4309 = vsel %vm507, %v4307, -inf
    %4310 = vmax.xlane.f32.xlu0 %v4309
    %v4311 = vpop.xlane.xlu0 %4310
    %v4312 = vsel %vm507, %v4308, -inf
    %4313 = vmax.xlane.f32.xlu0 %v4312
    %v4314 = vpop.xlane.xlu0 %4313
    %v4315 = vsub.f32 %v4307, %v4311
    %v4316 = vsub.f32 %v4308, %v4314
    %v4317 = vmul.f32 %v4315, 1.442695
    %v4318 = vpow.pop %v4317
    %v4319 = vmul.f32 %v4316, 1.442695
    %v4320 = vpow.pop %v4319
    %v4321 = vsel %vm507, %v4318, 0.0
    %4322 = vadd.xlane.f32.xlu0 %v4321
    %v4323 = vpop.xlane.xlu0 %4322
    %v4324 = vsel %vm507, %v4320, 0.0
    %4325 = vadd.xlane.f32.xlu0 %v4324
    %v4326 = vpop.xlane.xlu0 %4325
    %v4327 = vrcp.pop %v4323
    %v4328 = vrcp.pop %v4326
    %v4329 = vmul.f32 %v4318, %v4327
    %v4330 = vmul.f32 %v4320, %v4328
    %v4332 = vsel %vm507, %v4329, 0
    %4334 = vmatprep.subr.mxu0 0.0
    %4335 = vmatpush1.msra.mxu0 %v4149
    %4336 = vmatprep.subr.mxu0 0.0
    %4337 = vmatpush1.msra.mxu0 0.0
    %4338 = vmatprep.subr.mxu0 0.0
    %4339 = vmatpush1.msra.mxu0 0.0
    %4340 = vmatprep.subr.mxu0 0.0
    %4341 = vmatpush1.msra.mxu0 0.0
    %4342 = vmatprep.subr.mxu0 0.0
    %4343 = vmatpush1.msra.mxu0 0.0
    %4344 = vmatprep.subr.mxu0 0.0
    %4345 = vmatpush1.msra.mxu0 0.0
    %4346 = vmatprep.subr.mxu0 0.0
    %4347 = vmatpush1.msra.mxu0 0.0
    %4348 = vmatprep.subr.mxu0 0.0
    %4349 = vmatpush1.msra.mxu0 0.0
    %4350 = vmatprep.subr.mxu0 0.0
    %4351 = vmatpush1.msra.mxu0 0.0
    %4352 = vmatprep.subr.mxu0 0.0
    %4353 = vmatpush1.msra.mxu0 0.0
    %4354 = vmatprep.subr.mxu0 0.0
    %4355 = vmatpush1.msra.mxu0 0.0
    %4356 = vmatprep.subr.mxu0 0.0
    %4357 = vmatpush1.msra.mxu0 0.0
    %4358 = vmatprep.subr.mxu0 0.0
    %4359 = vmatpush1.msra.mxu0 0.0
    %4360 = vmatprep.subr.mxu0 0.0
    %4361 = vmatpush1.msra.mxu0 0.0
    %4362 = vmatprep.subr.mxu0 0.0
    %4363 = vmatpush1.msra.mxu0 0.0
    %4364 = vmatprep.subr.mxu0 0.0
    %4365 = vmatpush1.msra.mxu0 0.0
    %4366 = vmatprep.subr.mxu0 0.0
    %4367 = vmatpush1.msra.mxu0 0.0
    %4368 = vmatprep.subr.mxu0 0.0
    %4369 = vmatpush1.msra.mxu0 0.0
    %4370 = vmatprep.subr.mxu0 0.0
    %4371 = vmatpush1.msra.mxu0 0.0
    %4372 = vmatprep.subr.mxu0 0.0
    %4373 = vmatpush1.msra.mxu0 0.0
    %4374 = vmatprep.subr.mxu0 0.0
    %4375 = vmatpush1.msra.mxu0 0.0
    %4376 = vmatprep.subr.mxu0 0.0
    %4377 = vmatpush1.msra.mxu0 0.0
    %4378 = vmatprep.subr.mxu0 0.0
    %4379 = vmatpush1.msra.mxu0 0.0
    %4380 = vmatprep.subr.mxu0 0.0
    %4381 = vmatpush1.msra.mxu0 0.0
    %4382 = vmatprep.subr.mxu0 0.0
    %4383 = vmatpush1.msra.mxu0 0.0
    %4384 = vmatprep.subr.mxu0 0.0
    %4385 = vmatpush1.msra.mxu0 0.0
    %4386 = vmatprep.subr.mxu0 0.0
    %4387 = vmatpush1.msra.mxu0 0.0
    %4388 = vmatprep.subr.mxu0 0.0
    %4389 = vmatpush1.msra.mxu0 0.0
    %4390 = vmatprep.subr.mxu0 0.0
    %4391 = vmatpush1.msra.mxu0 0.0
    %4392 = vmatprep.subr.mxu0 0.0
    %4393 = vmatpush1.msra.mxu0 0.0
    %4394 = vmatprep.subr.mxu0 0.0
    %4395 = vmatpush1.msra.mxu0 0.0
    %4396 = vmatprep.subr.mxu0 0.0
    %4397 = vmatpush1.msra.mxu0 0.0
    %4398 = vmatprep.mubr.f32.mxu0 0.0
    %4399 = vmatmul.mubr.f32.gmra.mrb[0].mxu0 %v4332
    %v4400 = vpop.f32.mrb[0].mxu0
    %v4401 = vadd.f32 0.0, %v4400
    %v4402 = vpop.f32.mrb[0].mxu0
    %4403 = vdwg.mxu0
    %v4405 = vsel %vm507, %v4330, 0
    %4407 = vmatprep.subr.mxu0 0.0
    %4408 = vmatpush1.msra.mxu0 %v4152
    %4409 = vmatprep.subr.mxu0 0.0
    %4410 = vmatpush1.msra.mxu0 0.0
    %4411 = vmatprep.subr.mxu0 0.0
    %4412 = vmatpush1.msra.mxu0 0.0
    %4413 = vmatprep.subr.mxu0 0.0
    %4414 = vmatpush1.msra.mxu0 0.0
    %4415 = vmatprep.subr.mxu0 0.0
    %4416 = vmatpush1.msra.mxu0 0.0
    %4417 = vmatprep.subr.mxu0 0.0
    %4418 = vmatpush1.msra.mxu0 0.0
    %4419 = vmatprep.subr.mxu0 0.0
    %4420 = vmatpush1.msra.mxu0 0.0
    %4421 = vmatprep.subr.mxu0 0.0
    %4422 = vmatpush1.msra.mxu0 0.0
    %4423 = vmatprep.subr.mxu0 0.0
    %4424 = vmatpush1.msra.mxu0 0.0
    %4425 = vmatprep.subr.mxu0 0.0
    %4426 = vmatpush1.msra.mxu0 0.0
    %4427 = vmatprep.subr.mxu0 0.0
    %4428 = vmatpush1.msra.mxu0 0.0
    %4429 = vmatprep.subr.mxu0 0.0
    %4430 = vmatpush1.msra.mxu0 0.0
    %4431 = vmatprep.subr.mxu0 0.0
    %4432 = vmatpush1.msra.mxu0 0.0
    %4433 = vmatprep.subr.mxu0 0.0
    %4434 = vmatpush1.msra.mxu0 0.0
    %4435 = vmatprep.subr.mxu0 0.0
    %4436 = vmatpush1.msra.mxu0 0.0
    %4437 = vmatprep.subr.mxu0 0.0
    %4438 = vmatpush1.msra.mxu0 0.0
    %4439 = vmatprep.subr.mxu0 0.0
    %4440 = vmatpush1.msra.mxu0 0.0
    %4441 = vmatprep.subr.mxu0 0.0
    %4442 = vmatpush1.msra.mxu0 0.0
    %4443 = vmatprep.subr.mxu0 0.0
    %4444 = vmatpush1.msra.mxu0 0.0
    %4445 = vmatprep.subr.mxu0 0.0
    %4446 = vmatpush1.msra.mxu0 0.0
    %4447 = vmatprep.subr.mxu0 0.0
    %4448 = vmatpush1.msra.mxu0 0.0
    %4449 = vmatprep.subr.mxu0 0.0
    %4450 = vmatpush1.msra.mxu0 0.0
    %4451 = vmatprep.subr.mxu0 0.0
    %4452 = vmatpush1.msra.mxu0 0.0
    %4453 = vmatprep.subr.mxu0 0.0
    %4454 = vmatpush1.msra.mxu0 0.0
    %4455 = vmatprep.subr.mxu0 0.0
    %4456 = vmatpush1.msra.mxu0 0.0
    %4457 = vmatprep.subr.mxu0 0.0
    %4458 = vmatpush1.msra.mxu0 0.0
    %4459 = vmatprep.subr.mxu0 0.0
    %4460 = vmatpush1.msra.mxu0 0.0
    %4461 = vmatprep.subr.mxu0 0.0
    %4462 = vmatpush1.msra.mxu0 0.0
    %4463 = vmatprep.subr.mxu0 0.0
    %4464 = vmatpush1.msra.mxu0 0.0
    %4465 = vmatprep.subr.mxu0 0.0
    %4466 = vmatpush1.msra.mxu0 0.0
    %4467 = vmatprep.subr.mxu0 0.0
    %4468 = vmatpush1.msra.mxu0 0.0
    %4469 = vmatprep.subr.mxu0 0.0
    %4470 = vmatpush1.msra.mxu0 0.0
    %4471 = vmatprep.mubr.f32.mxu0 0.0
    %4472 = vmatmul.mubr.f32.gmra.mrb[0].mxu0 %v4405
    %v4473 = vpop.f32.mrb[0].mxu0
    %v4474 = vadd.f32 0.0, %v4473
    %v4475 = vpop.f32.mrb[0].mxu0
    %4476 = vdwg.mxu0
    %s4477 = scalar_lea.vmem %s47, 8
    %v4478 = vld [vmem:[%s4477] sm:$0xf]
    %v4479 = vld [vmem:[%s4477 + $0x4] sm:$0xf]
    %v4480 = vpack.c.bf16 %v4474, %v4401
    %v4483 = vunpack.c.l.b16 %v4478
    %v4484 = vunpack.c.l.b16 %v4479
    %v4485 = vpack.c.b16 %v4484, %v4483
    %v4488 = vsel %vm352, %v4480, 0
    %4490 = vmatprep.subr.bf16.mxu0 0
    %4491 = vmatpush1.bf16.msra.mxu0 %v4485
    %4492 = vmatprep.subr.bf16.mxu0 0
    %4493 = vmatpush1.bf16.msra.mxu0 0
    %4494 = vmatprep.subr.bf16.mxu0 0
    %4495 = vmatpush1.bf16.msra.mxu0 0
    %4496 = vmatprep.subr.bf16.mxu0 0
    %4497 = vmatpush1.bf16.msra.mxu0 0
    %4498 = vmatprep.subr.bf16.mxu0 0
    %4499 = vmatpush1.bf16.msra.mxu0 0
    %4500 = vmatprep.subr.bf16.mxu0 0
    %4501 = vmatpush1.bf16.msra.mxu0 0
    %4502 = vmatprep.subr.bf16.mxu0 0
    %4503 = vmatpush1.bf16.msra.mxu0 0
    %4504 = vmatprep.subr.bf16.mxu0 0
    %4505 = vmatpush1.bf16.msra.mxu0 0
    %4506 = vmatprep.subr.bf16.mxu0 0
    %4507 = vmatpush1.bf16.msra.mxu0 0
    %4508 = vmatprep.subr.bf16.mxu0 0
    %4509 = vmatpush1.bf16.msra.mxu0 0
    %4510 = vmatprep.subr.bf16.mxu0 0
    %4511 = vmatpush1.bf16.msra.mxu0 0
    %4512 = vmatprep.subr.bf16.mxu0 0
    %4513 = vmatpush1.bf16.msra.mxu0 0
    %4514 = vmatprep.subr.bf16.mxu0 0
    %4515 = vmatpush1.bf16.msra.mxu0 0
    %4516 = vmatprep.subr.bf16.mxu0 0
    %4517 = vmatpush1.bf16.msra.mxu0 0
    %4518 = vmatprep.subr.bf16.mxu0 0
    %4519 = vmatpush1.bf16.msra.mxu0 0
    %4520 = vmatprep.subr.bf16.mxu0 0
    %4521 = vmatpush1.bf16.msra.mxu0 0
    %4522 = vmatprep.mubr.bf16.mxu0 0
    %4523 = vmatmul.mubr.bf16.gmra.mrb[0].mxu0 %v4488
    %v4524 = vpop.f32.mrb[0].mxu0
    %v4525 = vadd.f32 0.0, %v4524
    %v4526 = vpop.f32.mrb[0].mxu0
    %v4527 = vpop.f32.mrb[0].mxu0
    %v4528 = vadd.f32 0.0, %v4527
    %v4529 = vpop.f32.mrb[0].mxu0
    %4530 = vdwg.mxu0
    %v4533 = vunpack.c.l.b16 %v3954
    %v4534 = vunpack.c.l.b16 %v3955
    %v4535 = vpack.c.b16 %v4534, %v4533
    %v4538 = vsel %vm352, %v3956, 0
    %4540 = vmatprep.subr.bf16.mxu0 0
    %4541 = vmatpush1.bf16.msra.mxu0 %v4535
    %4542 = vmatprep.subr.bf16.mxu0 0
    %4543 = vmatpush1.bf16.msra.mxu0 0
    %4544 = vmatprep.subr.bf16.mxu0 0
    %4545 = vmatpush1.bf16.msra.mxu0 0
    %4546 = vmatprep.subr.bf16.mxu0 0
    %4547 = vmatpush1.bf16.msra.mxu0 0
    %4548 = vmatprep.subr.bf16.mxu0 0
    %4549 = vmatpush1.bf16.msra.mxu0 0
    %4550 = vmatprep.subr.bf16.mxu0 0
    %4551 = vmatpush1.bf16.msra.mxu0 0
    %4552 = vmatprep.subr.bf16.mxu0 0
    %4553 = vmatpush1.bf16.msra.mxu0 0
    %4554 = vmatprep.subr.bf16.mxu0 0
    %4555 = vmatpush1.bf16.msra.mxu0 0
    %4556 = vmatprep.subr.bf16.mxu0 0
    %4557 = vmatpush1.bf16.msra.mxu0 0
    %4558 = vmatprep.subr.bf16.mxu0 0
    %4559 = vmatpush1.bf16.msra.mxu0 0
    %4560 = vmatprep.subr.bf16.mxu0 0
    %4561 = vmatpush1.bf16.msra.mxu0 0
    %4562 = vmatprep.subr.bf16.mxu0 0
    %4563 = vmatpush1.bf16.msra.mxu0 0
    %4564 = vmatprep.subr.bf16.mxu0 0
    %4565 = vmatpush1.bf16.msra.mxu0 0
    %4566 = vmatprep.subr.bf16.mxu0 0
    %4567 = vmatpush1.bf16.msra.mxu0 0
    %4568 = vmatprep.subr.bf16.mxu0 0
    %4569 = vmatpush1.bf16.msra.mxu0 0
    %4570 = vmatprep.subr.bf16.mxu0 0
    %4571 = vmatpush1.bf16.msra.mxu0 0
    %4572 = vmatprep.mubr.bf16.mxu0 0
    %4573 = vmatmul.mubr.bf16.gmra.mrb[0].mxu0 %v4538
    %v4574 = vpop.f32.mrb[0].mxu0
    %v4575 = vadd.f32 %v4525, %v4574
    %v4576 = vpop.f32.mrb[0].mxu0
    %v4577 = vpop.f32.mrb[0].mxu0
    %v4578 = vadd.f32 %v4528, %v4577
    %v4579 = vpop.f32.mrb[0].mxu0
    %4580 = vdwg.mxu0
    %v4581 = vld [vmem:[%s49] sm:$0x1]
    %v4583 = vlaneseq
    %v4584 = vshrl.u32 %v4583, 7
    %v4585 = vsub.s32 0, %v4584
    %v4586 = vrot.slane %v4581, %v4585
    %v4588 = vadd.f32 %v4575, %v4586
    %v4589 = vadd.f32 %v4578, %v4586
    %v4590 = vadd.f32 %v3434, %v4588
    %v4591 = vadd.f32 %v3435, %v4589
    %v4592 = vld [vmem:[%s51] sm:$0x1]
    %v4593 = vld [vmem:[%s53] sm:$0x1]
    %v4594 = vsel %vm179, %v4590, 0.0
    %4595 = vadd.xlane.f32.xlu0 %v4594
    %v4596 = vpop.xlane.xlu0 %4595
    %v4597 = vsel %vm179, %v4591, 0.0
    %4598 = vadd.xlane.f32.xlu0 %v4597
    %v4599 = vpop.xlane.xlu0 %4598
    %v4600 = vmul.f32 %v4596, %v1322
    %v4601 = vmul.f32 %v4599, %v1322
    %v4602 = vsub.f32 %v4590, %v4600
    %v4603 = vsub.f32 %v4591, %v4601
    %v4604 = vmul.f32 %v4602, %v4602
    %v4605 = vmul.f32 %v4603, %v4603
    %v4606 = vsel %vm179, %v4604, 0.0
    %4607 = vadd.xlane.f32.xlu0 %v4606
    %v4608 = vpop.xlane.xlu0 %4607
    %v4609 = vsel %vm179, %v4605, 0.0
    %4610 = vadd.xlane.f32.xlu0 %v4609
    %v4611 = vpop.xlane.xlu0 %4610
    %v4612 = vmul.f32 %v4608, %v1322
    %v4613 = vmul.f32 %v4611, %v1322
    %v4614 = vadd.f32 %v4612, 1e-05
    %v4615 = vadd.f32 %v4613, 1e-05
    %v4616 = vrsqrt.pop %v4614
    %v4617 = vrsqrt.pop %v4615
    %v4618 = vmul.f32 %v4602, %v4616
    %v4619 = vmul.f32 %v4603, %v4617
    %v4621 = vlaneseq
    %v4622 = vshrl.u32 %v4621, 7
    %v4623 = vsub.s32 0, %v4622
    %v4624 = vrot.slane %v4592, %v4623
    %v4626 = vmul.f32 %v4618, %v4624
    %v4627 = vmul.f32 %v4619, %v4624
    %v4629 = vlaneseq
    %v4630 = vshrl.u32 %v4629, 7
    %v4631 = vsub.s32 0, %v4630
    %v4632 = vrot.slane %v4593, %v4631
    %v4634 = vadd.f32 %v4626, %v4632
    %v4635 = vadd.f32 %v4627, %v4632
    %v4636 = vld [vmem:[%s55] sm:$0xff]
    %v4637 = vld [vmem:[%s55 + $0x8] sm:$0xff]
    %v4638 = vld [vmem:[%s55 + $0x10] sm:$0xff]
    %v4639 = vld [vmem:[%s55 + $0x18] sm:$0xff]
    %v4640 = vld [vmem:[%s55 + $0x20] sm:$0xff]
    %v4641 = vld [vmem:[%s55 + $0x28] sm:$0xff]
    %v4642 = vld [vmem:[%s55 + $0x30] sm:$0xff]
    %v4643 = vld [vmem:[%s55 + $0x38] sm:$0xff]
    %v4644 = vld [vmem:[%s55 + $0x40] sm:$0xff]
    %v4645 = vld [vmem:[%s55 + $0x48] sm:$0xff]
    %v4646 = vld [vmem:[%s55 + $0x50] sm:$0xff]
    %v4647 = vld [vmem:[%s55 + $0x58] sm:$0xff]
    %v4648 = vld [vmem:[%s55 + $0x60] sm:$0xff]
    %v4649 = vld [vmem:[%s55 + $0x68] sm:$0xff]
    %v4650 = vld [vmem:[%s55 + $0x70] sm:$0xff]
    %v4651 = vld [vmem:[%s55 + $0x78] sm:$0xff]
    %v4652 = vld [vmem:[%s55 + $0x80] sm:$0xff]
    %v4653 = vld [vmem:[%s55 + $0x88] sm:$0xff]
    %v4654 = vld [vmem:[%s55 + $0x90] sm:$0xff]
    %v4655 = vld [vmem:[%s55 + $0x98] sm:$0xff]
    %v4656 = vld [vmem:[%s55 + $0xa0] sm:$0xff]
    %v4657 = vld [vmem:[%s55 + $0xa8] sm:$0xff]
    %v4658 = vld [vmem:[%s55 + $0xb0] sm:$0xff]
    %v4659 = vld [vmem:[%s55 + $0xb8] sm:$0xff]
    %v4660 = vld [vmem:[%s55 + $0xc0] sm:$0xff]
    %v4661 = vld [vmem:[%s55 + $0xc8] sm:$0xff]
    %v4662 = vld [vmem:[%s55 + $0xd0] sm:$0xff]
    %v4663 = vld [vmem:[%s55 + $0xd8] sm:$0xff]
    %v4664 = vld [vmem:[%s55 + $0xe0] sm:$0xff]
    %v4665 = vld [vmem:[%s55 + $0xe8] sm:$0xff]
    %v4666 = vld [vmem:[%s55 + $0xf0] sm:$0xff]
    %v4667 = vld [vmem:[%s55 + $0xf8] sm:$0xff]
    %v4668 = vld [vmem:[%s57] sm:$0xff]
    %v4669 = vld [vmem:[%s57 + $0x8] sm:$0xff]
    %v4670 = vpack.c.bf16 %v4635, %v4634
    %v4673 = vlaneseq
    %v4674 = vshrl.u32 %v4673, 7
    %v4675 = vsub.s32 0, %v4674
    %v4676 = vrot.slane %v4668, %v4675
    %v4677 = vlaneseq
    %v4678 = vshrl.u32 %v4677, 7
    %v4679 = vsub.s32 1, %v4678
    %v4680 = vrot.slane %v4668, %v4679
    %v4681 = vlaneseq
    %v4682 = vshrl.u32 %v4681, 7
    %v4683 = vsub.s32 2, %v4682
    %v4684 = vrot.slane %v4668, %v4683
    %v4685 = vlaneseq
    %v4686 = vshrl.u32 %v4685, 7
    %v4687 = vsub.s32 3, %v4686
    %v4688 = vrot.slane %v4668, %v4687
    %v4689 = vlaneseq
    %v4690 = vshrl.u32 %v4689, 7
    %v4691 = vsub.s32 4, %v4690
    %v4692 = vrot.slane %v4668, %v4691
    %v4693 = vlaneseq
    %v4694 = vshrl.u32 %v4693, 7
    %v4695 = vsub.s32 5, %v4694
    %v4696 = vrot.slane %v4668, %v4695
    %v4697 = vlaneseq
    %v4698 = vshrl.u32 %v4697, 7
    %v4699 = vsub.s32 6, %v4698
    %v4700 = vrot.slane %v4668, %v4699
    %v4701 = vlaneseq
    %v4702 = vshrl.u32 %v4701, 7
    %v4703 = vsub.s32 7, %v4702
    %v4704 = vrot.slane %v4668, %v4703
    %v4705 = vlaneseq
    %v4706 = vshrl.u32 %v4705, 7
    %v4707 = vsub.s32 0, %v4706
    %v4708 = vrot.slane %v4669, %v4707
    %v4709 = vlaneseq
    %v4710 = vshrl.u32 %v4709, 7
    %v4711 = vsub.s32 1, %v4710
    %v4712 = vrot.slane %v4669, %v4711
    %v4713 = vlaneseq
    %v4714 = vshrl.u32 %v4713, 7
    %v4715 = vsub.s32 2, %v4714
    %v4716 = vrot.slane %v4669, %v4715
    %v4717 = vlaneseq
    %v4718 = vshrl.u32 %v4717, 7
    %v4719 = vsub.s32 3, %v4718
    %v4720 = vrot.slane %v4669, %v4719
    %v4721 = vlaneseq
    %v4722 = vshrl.u32 %v4721, 7
    %v4723 = vsub.s32 4, %v4722
    %v4724 = vrot.slane %v4669, %v4723
    %v4725 = vlaneseq
    %v4726 = vshrl.u32 %v4725, 7
    %v4727 = vsub.s32 5, %v4726
    %v4728 = vrot.slane %v4669, %v4727
    %v4729 = vlaneseq
    %v4730 = vshrl.u32 %v4729, 7
    %v4731 = vsub.s32 6, %v4730
    %v4732 = vrot.slane %v4669, %v4731
    %v4733 = vlaneseq
    %v4734 = vshrl.u32 %v4733, 7
    %v4735 = vsub.s32 7, %v4734
    %v4736 = vrot.slane %v4669, %v4735
    %v4785 = vunpack.c.l.b16 %v4636
    %v4786 = vunpack.c.h.b16 %v4636
    %v4787 = vunpack.c.l.b16 %v4637
    %v4788 = vunpack.c.h.b16 %v4637
    %v4789 = vunpack.c.l.b16 %v4638
    %v4790 = vunpack.c.h.b16 %v4638
    %v4791 = vunpack.c.l.b16 %v4639
    %v4792 = vunpack.c.h.b16 %v4639
    %v4793 = vunpack.c.l.b16 %v4640
    %v4794 = vunpack.c.h.b16 %v4640
    %v4795 = vunpack.c.l.b16 %v4641
    %v4796 = vunpack.c.h.b16 %v4641
    %v4797 = vunpack.c.l.b16 %v4642
    %v4798 = vunpack.c.h.b16 %v4642
    %v4799 = vunpack.c.l.b16 %v4643
    %v4800 = vunpack.c.h.b16 %v4643
    %v4801 = vunpack.c.l.b16 %v4644
    %v4802 = vunpack.c.h.b16 %v4644
    %v4803 = vunpack.c.l.b16 %v4645
    %v4804 = vunpack.c.h.b16 %v4645
    %v4805 = vunpack.c.l.b16 %v4646
    %v4806 = vunpack.c.h.b16 %v4646
    %v4807 = vunpack.c.l.b16 %v4647
    %v4808 = vunpack.c.h.b16 %v4647
    %v4809 = vunpack.c.l.b16 %v4648
    %v4810 = vunpack.c.h.b16 %v4648
    %v4811 = vunpack.c.l.b16 %v4649
    %v4812 = vunpack.c.h.b16 %v4649
    %v4813 = vunpack.c.l.b16 %v4650
    %v4814 = vunpack.c.h.b16 %v4650
    %v4815 = vunpack.c.l.b16 %v4651
    %v4816 = vunpack.c.h.b16 %v4651
    %v4817 = vunpack.c.l.b16 %v4652
    %v4818 = vunpack.c.h.b16 %v4652
    %v4819 = vunpack.c.l.b16 %v4653
    %v4820 = vunpack.c.h.b16 %v4653
    %v4821 = vunpack.c.l.b16 %v4654
    %v4822 = vunpack.c.h.b16 %v4654
    %v4823 = vunpack.c.l.b16 %v4655
    %v4824 = vunpack.c.h.b16 %v4655
    %v4825 = vunpack.c.l.b16 %v4656
    %v4826 = vunpack.c.h.b16 %v4656
    %v4827 = vunpack.c.l.b16 %v4657
    %v4828 = vunpack.c.h.b16 %v4657
    %v4829 = vunpack.c.l.b16 %v4658
    %v4830 = vunpack.c.h.b16 %v4658
    %v4831 = vunpack.c.l.b16 %v4659
    %v4832 = vunpack.c.h.b16 %v4659
    %v4833 = vunpack.c.l.b16 %v4660
    %v4834 = vunpack.c.h.b16 %v4660
    %v4835 = vunpack.c.l.b16 %v4661
    %v4836 = vunpack.c.h.b16 %v4661
    %v4837 = vunpack.c.l.b16 %v4662
    %v4838 = vunpack.c.h.b16 %v4662
    %v4839 = vunpack.c.l.b16 %v4663
    %v4840 = vunpack.c.h.b16 %v4663
    %v4841 = vunpack.c.l.b16 %v4664
    %v4842 = vunpack.c.h.b16 %v4664
    %v4843 = vunpack.c.l.b16 %v4665
    %v4844 = vunpack.c.h.b16 %v4665
    %v4845 = vunpack.c.l.b16 %v4666
    %v4846 = vunpack.c.h.b16 %v4666
    %v4847 = vunpack.c.l.b16 %v4667
    %v4848 = vunpack.c.h.b16 %v4667
    %v4849 = vpack.c.b16 %v4801, %v4785
    %v4850 = vpack.c.b16 %v4802, %v4786
    %v4851 = vpack.c.b16 %v4803, %v4787
    %v4852 = vpack.c.b16 %v4804, %v4788
    %v4853 = vpack.c.b16 %v4805, %v4789
    %v4854 = vpack.c.b16 %v4806, %v4790
    %v4855 = vpack.c.b16 %v4807, %v4791
    %v4856 = vpack.c.b16 %v4808, %v4792
    %v4857 = vpack.c.b16 %v4809, %v4793
    %v4858 = vpack.c.b16 %v4810, %v4794
    %v4859 = vpack.c.b16 %v4811, %v4795
    %v4860 = vpack.c.b16 %v4812, %v4796
    %v4861 = vpack.c.b16 %v4813, %v4797
    %v4862 = vpack.c.b16 %v4814, %v4798
    %v4863 = vpack.c.b16 %v4815, %v4799
    %v4864 = vpack.c.b16 %v4816, %v4800
    %v4865 = vpack.c.b16 %v4833, %v4817
    %v4866 = vpack.c.b16 %v4834, %v4818
    %v4867 = vpack.c.b16 %v4835, %v4819
    %v4868 = vpack.c.b16 %v4836, %v4820
    %v4869 = vpack.c.b16 %v4837, %v4821
    %v4870 = vpack.c.b16 %v4838, %v4822
    %v4871 = vpack.c.b16 %v4839, %v4823
    %v4872 = vpack.c.b16 %v4840, %v4824
    %v4873 = vpack.c.b16 %v4841, %v4825
    %v4874 = vpack.c.b16 %v4842, %v4826
    %v4875 = vpack.c.b16 %v4843, %v4827
    %v4876 = vpack.c.b16 %v4844, %v4828
    %v4877 = vpack.c.b16 %v4845, %v4829
    %v4878 = vpack.c.b16 %v4846, %v4830
    %v4879 = vpack.c.b16 %v4847, %v4831
    %v4880 = vpack.c.b16 %v4848, %v4832
    %v4914 = vsel %vm179, %v4670, 0
    %4916 = vmatprep.subr.bf16.mxu0 %v4850
    %4917 = vmatpush1.bf16.msra.mxu0 %v4849
    %4918 = vmatprep.subr.bf16.mxu0 %v4866
    %4919 = vmatpush1.bf16.msra.mxu0 %v4865
    %4920 = vmatprep.subr.bf16.mxu0 0
    %4921 = vmatpush1.bf16.msra.mxu0 0
    %4922 = vmatprep.subr.bf16.mxu0 0
    %4923 = vmatpush1.bf16.msra.mxu0 0
    %4924 = vmatprep.subr.bf16.mxu0 0
    %4925 = vmatpush1.bf16.msra.mxu0 0
    %4926 = vmatprep.subr.bf16.mxu0 0
    %4927 = vmatpush1.bf16.msra.mxu0 0
    %4928 = vmatprep.subr.bf16.mxu0 0
    %4929 = vmatpush1.bf16.msra.mxu0 0
    %4930 = vmatprep.subr.bf16.mxu0 0
    %4931 = vmatpush1.bf16.msra.mxu0 0
    %4932 = vmatprep.subr.bf16.mxu0 0
    %4933 = vmatpush1.bf16.msra.mxu0 0
    %4934 = vmatprep.subr.bf16.mxu0 0
    %4935 = vmatpush1.bf16.msra.mxu0 0
    %4936 = vmatprep.subr.bf16.mxu0 0
    %4937 = vmatpush1.bf16.msra.mxu0 0
    %4938 = vmatprep.subr.bf16.mxu0 0
    %4939 = vmatpush1.bf16.msra.mxu0 0
    %4940 = vmatprep.subr.bf16.mxu0 0
    %4941 = vmatpush1.bf16.msra.mxu0 0
    %4942 = vmatprep.subr.bf16.mxu0 0
    %4943 = vmatpush1.bf16.msra.mxu0 0
    %4944 = vmatprep.subr.bf16.mxu0 0
    %4945 = vmatpush1.bf16.msra.mxu0 0
    %4946 = vmatprep.subr.bf16.mxu0 0
    %4947 = vmatpush1.bf16.msra.mxu0 0
    %4948 = vmatprep.mubr.bf16.mxu0 0
    %4949 = vmatmul.mubr.bf16.gmra.mrb[0].mxu0 %v4914
    %v4950 = vpop.f32.mrb[0].mxu0
    %v4951 = vadd.f32 %v4676, %v4950
    %v4952 = vpop.f32.mrb[0].mxu0
    %v4953 = vadd.f32 %v4680, %v4952
    %v4954 = vpop.f32.mrb[0].mxu0
    %v4955 = vadd.f32 %v4676, %v4954
    %v4956 = vpop.f32.mrb[0].mxu0
    %v4957 = vadd.f32 %v4680, %v4956
    %4958 = vdwg.mxu0
    %4959 = vmatprep.subr.bf16.mxu0 %v4852
    %4960 = vmatpush1.bf16.msra.mxu0 %v4851
    %4961 = vmatprep.subr.bf16.mxu0 %v4868
    %4962 = vmatpush1.bf16.msra.mxu0 %v4867
    %4963 = vmatprep.subr.bf16.mxu0 0
    %4964 = vmatpush1.bf16.msra.mxu0 0
    %4965 = vmatprep.subr.bf16.mxu0 0
    %4966 = vmatpush1.bf16.msra.mxu0 0
    %4967 = vmatprep.subr.bf16.mxu0 0
    %4968 = vmatpush1.bf16.msra.mxu0 0
    %4969 = vmatprep.subr.bf16.mxu0 0
    %4970 = vmatpush1.bf16.msra.mxu0 0
    %4971 = vmatprep.subr.bf16.mxu0 0
    %4972 = vmatpush1.bf16.msra.mxu0 0
    %4973 = vmatprep.subr.bf16.mxu0 0
    %4974 = vmatpush1.bf16.msra.mxu0 0
    %4975 = vmatprep.subr.bf16.mxu0 0
    %4976 = vmatpush1.bf16.msra.mxu0 0
    %4977 = vmatprep.subr.bf16.mxu0 0
    %4978 = vmatpush1.bf16.msra.mxu0 0
    %4979 = vmatprep.subr.bf16.mxu0 0
    %4980 = vmatpush1.bf16.msra.mxu0 0
    %4981 = vmatprep.subr.bf16.mxu0 0
    %4982 = vmatpush1.bf16.msra.mxu0 0
    %4983 = vmatprep.subr.bf16.mxu0 0
    %4984 = vmatpush1.bf16.msra.mxu0 0
    %4985 = vmatprep.subr.bf16.mxu0 0
    %4986 = vmatpush1.bf16.msra.mxu0 0
    %4987 = vmatprep.subr.bf16.mxu0 0
    %4988 = vmatpush1.bf16.msra.mxu0 0
    %4989 = vmatprep.subr.bf16.mxu0 0
    %4990 = vmatpush1.bf16.msra.mxu0 0
    %4991 = vmatprep.mubr.bf16.mxu0 0
    %4992 = vmatmul.mubr.bf16.gmra.mrb[0].mxu0 %v4914
    %v4993 = vpop.f32.mrb[0].mxu0
    %v4994 = vadd.f32 %v4684, %v4993
    %v4995 = vpop.f32.mrb[0].mxu0
    %v4996 = vadd.f32 %v4688, %v4995
    %v4997 = vpop.f32.mrb[0].mxu0
    %v4998 = vadd.f32 %v4684, %v4997
    %v4999 = vpop.f32.mrb[0].mxu0
    %v5000 = vadd.f32 %v4688, %v4999
    %5001 = vdwg.mxu0
    %5002 = vmatprep.subr.bf16.mxu0 %v4854
    %5003 = vmatpush1.bf16.msra.mxu0 %v4853
    %5004 = vmatprep.subr.bf16.mxu0 %v4870
    %5005 = vmatpush1.bf16.msra.mxu0 %v4869
    %5006 = vmatprep.subr.bf16.mxu0 0
    %5007 = vmatpush1.bf16.msra.mxu0 0
    %5008 = vmatprep.subr.bf16.mxu0 0
    %5009 = vmatpush1.bf16.msra.mxu0 0
    %5010 = vmatprep.subr.bf16.mxu0 0
    %5011 = vmatpush1.bf16.msra.mxu0 0
    %5012 = vmatprep.subr.bf16.mxu0 0
    %5013 = vmatpush1.bf16.msra.mxu0 0
    %5014 = vmatprep.subr.bf16.mxu0 0
    %5015 = vmatpush1.bf16.msra.mxu0 0
    %5016 = vmatprep.subr.bf16.mxu0 0
    %5017 = vmatpush1.bf16.msra.mxu0 0
    %5018 = vmatprep.subr.bf16.mxu0 0
    %5019 = vmatpush1.bf16.msra.mxu0 0
    %5020 = vmatprep.subr.bf16.mxu0 0
    %5021 = vmatpush1.bf16.msra.mxu0 0
    %5022 = vmatprep.subr.bf16.mxu0 0
    %5023 = vmatpush1.bf16.msra.mxu0 0
    %5024 = vmatprep.subr.bf16.mxu0 0
    %5025 = vmatpush1.bf16.msra.mxu0 0
    %5026 = vmatprep.subr.bf16.mxu0 0
    %5027 = vmatpush1.bf16.msra.mxu0 0
    %5028 = vmatprep.subr.bf16.mxu0 0
    %5029 = vmatpush1.bf16.msra.mxu0 0
    %5030 = vmatprep.subr.bf16.mxu0 0
    %5031 = vmatpush1.bf16.msra.mxu0 0
    %5032 = vmatprep.subr.bf16.mxu0 0
    %5033 = vmatpush1.bf16.msra.mxu0 0
    %5034 = vmatprep.mubr.bf16.mxu0 0
    %5035 = vmatmul.mubr.bf16.gmra.mrb[0].mxu0 %v4914
    %v5036 = vpop.f32.mrb[0].mxu0
    %v5037 = vadd.f32 %v4692, %v5036
    %v5038 = vpop.f32.mrb[0].mxu0
    %v5039 = vadd.f32 %v4696, %v5038
    %v5040 = vpop.f32.mrb[0].mxu0
    %v5041 = vadd.f32 %v4692, %v5040
    %v5042 = vpop.f32.mrb[0].mxu0
    %v5043 = vadd.f32 %v4696, %v5042
    %5044 = vdwg.mxu0
    %5045 = vmatprep.subr.bf16.mxu0 %v4856
    %5046 = vmatpush1.bf16.msra.mxu0 %v4855
    %5047 = vmatprep.subr.bf16.mxu0 %v4872
    %5048 = vmatpush1.bf16.msra.mxu0 %v4871
    %5049 = vmatprep.subr.bf16.mxu0 0
    %5050 = vmatpush1.bf16.msra.mxu0 0
    %5051 = vmatprep.subr.bf16.mxu0 0
    %5052 = vmatpush1.bf16.msra.mxu0 0
    %5053 = vmatprep.subr.bf16.mxu0 0
    %5054 = vmatpush1.bf16.msra.mxu0 0
    %5055 = vmatprep.subr.bf16.mxu0 0
    %5056 = vmatpush1.bf16.msra.mxu0 0
    %5057 = vmatprep.subr.bf16.mxu0 0
    %5058 = vmatpush1.bf16.msra.mxu0 0
    %5059 = vmatprep.subr.bf16.mxu0 0
    %5060 = vmatpush1.bf16.msra.mxu0 0
    %5061 = vmatprep.subr.bf16.mxu0 0
    %5062 = vmatpush1.bf16.msra.mxu0 0
    %5063 = vmatprep.subr.bf16.mxu0 0
    %5064 = vmatpush1.bf16.msra.mxu0 0
    %5065 = vmatprep.subr.bf16.mxu0 0
    %5066 = vmatpush1.bf16.msra.mxu0 0
    %5067 = vmatprep.subr.bf16.mxu0 0
    %5068 = vmatpush1.bf16.msra.mxu0 0
    %5069 = vmatprep.subr.bf16.mxu0 0
    %5070 = vmatpush1.bf16.msra.mxu0 0
    %5071 = vmatprep.subr.bf16.mxu0 0
    %5072 = vmatpush1.bf16.msra.mxu0 0
    %5073 = vmatprep.subr.bf16.mxu0 0
    %5074 = vmatpush1.bf16.msra.mxu0 0
    %5075 = vmatprep.subr.bf16.mxu0 0
    %5076 = vmatpush1.bf16.msra.mxu0 0
    %5077 = vmatprep.mubr.bf16.mxu0 0
    %5078 = vmatmul.mubr.bf16.gmra.mrb[0].mxu0 %v4914
    %v5079 = vpop.f32.mrb[0].mxu0
    %v5080 = vadd.f32 %v4700, %v5079
    %v5081 = vpop.f32.mrb[0].mxu0
    %v5082 = vadd.f32 %v4704, %v5081
    %v5083 = vpop.f32.mrb[0].mxu0
    %v5084 = vadd.f32 %v4700, %v5083
    %v5085 = vpop.f32.mrb[0].mxu0
    %v5086 = vadd.f32 %v4704, %v5085
    %5087 = vdwg.mxu0
    %5088 = vmatprep.subr.bf16.mxu0 %v4858
    %5089 = vmatpush1.bf16.msra.mxu0 %v4857
    %5090 = vmatprep.subr.bf16.mxu0 %v4874
    %5091 = vmatpush1.bf16.msra.mxu0 %v4873
    %5092 = vmatprep.subr.bf16.mxu0 0
    %5093 = vmatpush1.bf16.msra.mxu0 0
    %5094 = vmatprep.subr.bf16.mxu0 0
    %5095 = vmatpush1.bf16.msra.mxu0 0
    %5096 = vmatprep.subr.bf16.mxu0 0
    %5097 = vmatpush1.bf16.msra.mxu0 0
    %5098 = vmatprep.subr.bf16.mxu0 0
    %5099 = vmatpush1.bf16.msra.mxu0 0
    %5100 = vmatprep.subr.bf16.mxu0 0
    %5101 = vmatpush1.bf16.msra.mxu0 0
    %5102 = vmatprep.subr.bf16.mxu0 0
    %5103 = vmatpush1.bf16.msra.mxu0 0
    %5104 = vmatprep.subr.bf16.mxu0 0
    %5105 = vmatpush1.bf16.msra.mxu0 0
    %5106 = vmatprep.subr.bf16.mxu0 0
    %5107 = vmatpush1.bf16.msra.mxu0 0
    %5108 = vmatprep.subr.bf16.mxu0 0
    %5109 = vmatpush1.bf16.msra.mxu0 0
    %5110 = vmatprep.subr.bf16.mxu0 0
    %5111 = vmatpush1.bf16.msra.mxu0 0
    %5112 = vmatprep.subr.bf16.mxu0 0
    %5113 = vmatpush1.bf16.msra.mxu0 0
    %5114 = vmatprep.subr.bf16.mxu0 0
    %5115 = vmatpush1.bf16.msra.mxu0 0
    %5116 = vmatprep.subr.bf16.mxu0 0
    %5117 = vmatpush1.bf16.msra.mxu0 0
    %5118 = vmatprep.subr.bf16.mxu0 0
    %5119 = vmatpush1.bf16.msra.mxu0 0
    %5120 = vmatprep.mubr.bf16.mxu0 0
    %5121 = vmatmul.mubr.bf16.gmra.mrb[0].mxu0 %v4914
    %v5122 = vpop.f32.mrb[0].mxu0
    %v5123 = vadd.f32 %v4708, %v5122
    %v5124 = vpop.f32.mrb[0].mxu0
    %v5125 = vadd.f32 %v4712, %v5124
    %v5126 = vpop.f32.mrb[0].mxu0
    %v5127 = vadd.f32 %v4708, %v5126
    %v5128 = vpop.f32.mrb[0].mxu0
    %v5129 = vadd.f32 %v4712, %v5128
    %5130 = vdwg.mxu0
    %5131 = vmatprep.subr.bf16.mxu0 %v4860
    %5132 = vmatpush1.bf16.msra.mxu0 %v4859
    %5133 = vmatprep.subr.bf16.mxu0 %v4876
    %5134 = vmatpush1.bf16.msra.mxu0 %v4875
    %5135 = vmatprep.subr.bf16.mxu0 0
    %5136 = vmatpush1.bf16.msra.mxu0 0
    %5137 = vmatprep.subr.bf16.mxu0 0
    %5138 = vmatpush1.bf16.msra.mxu0 0
    %5139 = vmatprep.subr.bf16.mxu0 0
    %5140 = vmatpush1.bf16.msra.mxu0 0
    %5141 = vmatprep.subr.bf16.mxu0 0
    %5142 = vmatpush1.bf16.msra.mxu0 0
    %5143 = vmatprep.subr.bf16.mxu0 0
    %5144 = vmatpush1.bf16.msra.mxu0 0
    %5145 = vmatprep.subr.bf16.mxu0 0
    %5146 = vmatpush1.bf16.msra.mxu0 0
    %5147 = vmatprep.subr.bf16.mxu0 0
    %5148 = vmatpush1.bf16.msra.mxu0 0
    %5149 = vmatprep.subr.bf16.mxu0 0
    %5150 = vmatpush1.bf16.msra.mxu0 0
    %5151 = vmatprep.subr.bf16.mxu0 0
    %5152 = vmatpush1.bf16.msra.mxu0 0
    %5153 = vmatprep.subr.bf16.mxu0 0
    %5154 = vmatpush1.bf16.msra.mxu0 0
    %5155 = vmatprep.subr.bf16.mxu0 0
    %5156 = vmatpush1.bf16.msra.mxu0 0
    %5157 = vmatprep.subr.bf16.mxu0 0
    %5158 = vmatpush1.bf16.msra.mxu0 0
    %5159 = vmatprep.subr.bf16.mxu0 0
    %5160 = vmatpush1.bf16.msra.mxu0 0
    %5161 = vmatprep.subr.bf16.mxu0 0
    %5162 = vmatpush1.bf16.msra.mxu0 0
    %5163 = vmatprep.mubr.bf16.mxu0 0
    %5164 = vmatmul.mubr.bf16.gmra.mrb[0].mxu0 %v4914
    %v5165 = vpop.f32.mrb[0].mxu0
    %v5166 = vadd.f32 %v4716, %v5165
    %v5167 = vpop.f32.mrb[0].mxu0
    %v5168 = vadd.f32 %v4720, %v5167
    %v5169 = vpop.f32.mrb[0].mxu0
    %v5170 = vadd.f32 %v4716, %v5169
    %v5171 = vpop.f32.mrb[0].mxu0
    %v5172 = vadd.f32 %v4720, %v5171
    %5173 = vdwg.mxu0
    %5174 = vmatprep.subr.bf16.mxu0 %v4862
    %5175 = vmatpush1.bf16.msra.mxu0 %v4861
    %5176 = vmatprep.subr.bf16.mxu0 %v4878
    %5177 = vmatpush1.bf16.msra.mxu0 %v4877
    %5178 = vmatprep.subr.bf16.mxu0 0
    %5179 = vmatpush1.bf16.msra.mxu0 0
    %5180 = vmatprep.subr.bf16.mxu0 0
    %5181 = vmatpush1.bf16.msra.mxu0 0
    %5182 = vmatprep.subr.bf16.mxu0 0
    %5183 = vmatpush1.bf16.msra.mxu0 0
    %5184 = vmatprep.subr.bf16.mxu0 0
    %5185 = vmatpush1.bf16.msra.mxu0 0
    %5186 = vmatprep.subr.bf16.mxu0 0
    %5187 = vmatpush1.bf16.msra.mxu0 0
    %5188 = vmatprep.subr.bf16.mxu0 0
    %5189 = vmatpush1.bf16.msra.mxu0 0
    %5190 = vmatprep.subr.bf16.mxu0 0
    %5191 = vmatpush1.bf16.msra.mxu0 0
    %5192 = vmatprep.subr.bf16.mxu0 0
    %5193 = vmatpush1.bf16.msra.mxu0 0
    %5194 = vmatprep.subr.bf16.mxu0 0
    %5195 = vmatpush1.bf16.msra.mxu0 0
    %5196 = vmatprep.subr.bf16.mxu0 0
    %5197 = vmatpush1.bf16.msra.mxu0 0
    %5198 = vmatprep.subr.bf16.mxu0 0
    %5199 = vmatpush1.bf16.msra.mxu0 0
    %5200 = vmatprep.subr.bf16.mxu0 0
    %5201 = vmatpush1.bf16.msra.mxu0 0
    %5202 = vmatprep.subr.bf16.mxu0 0
    %5203 = vmatpush1.bf16.msra.mxu0 0
    %5204 = vmatprep.subr.bf16.mxu0 0
    %5205 = vmatpush1.bf16.msra.mxu0 0
    %5206 = vmatprep.mubr.bf16.mxu0 0
    %5207 = vmatmul.mubr.bf16.gmra.mrb[0].mxu0 %v4914
    %v5208 = vpop.f32.mrb[0].mxu0
    %v5209 = vadd.f32 %v4724, %v5208
    %v5210 = vpop.f32.mrb[0].mxu0
    %v5211 = vadd.f32 %v4728, %v5210
    %v5212 = vpop.f32.mrb[0].mxu0
    %v5213 = vadd.f32 %v4724, %v5212
    %v5214 = vpop.f32.mrb[0].mxu0
    %v5215 = vadd.f32 %v4728, %v5214
    %5216 = vdwg.mxu0
    %5217 = vmatprep.subr.bf16.mxu0 %v4864
    %5218 = vmatpush1.bf16.msra.mxu0 %v4863
    %5219 = vmatprep.subr.bf16.mxu0 %v4880
    %5220 = vmatpush1.bf16.msra.mxu0 %v4879
    %5221 = vmatprep.subr.bf16.mxu0 0
    %5222 = vmatpush1.bf16.msra.mxu0 0
    %5223 = vmatprep.subr.bf16.mxu0 0
    %5224 = vmatpush1.bf16.msra.mxu0 0
    %5225 = vmatprep.subr.bf16.mxu0 0
    %5226 = vmatpush1.bf16.msra.mxu0 0
    %5227 = vmatprep.subr.bf16.mxu0 0
    %5228 = vmatpush1.bf16.msra.mxu0 0
    %5229 = vmatprep.subr.bf16.mxu0 0
    %5230 = vmatpush1.bf16.msra.mxu0 0
    %5231 = vmatprep.subr.bf16.mxu0 0
    %5232 = vmatpush1.bf16.msra.mxu0 0
    %5233 = vmatprep.subr.bf16.mxu0 0
    %5234 = vmatpush1.bf16.msra.mxu0 0
    %5235 = vmatprep.subr.bf16.mxu0 0
    %5236 = vmatpush1.bf16.msra.mxu0 0
    %5237 = vmatprep.subr.bf16.mxu0 0
    %5238 = vmatpush1.bf16.msra.mxu0 0
    %5239 = vmatprep.subr.bf16.mxu0 0
    %5240 = vmatpush1.bf16.msra.mxu0 0
    %5241 = vmatprep.subr.bf16.mxu0 0
    %5242 = vmatpush1.bf16.msra.mxu0 0
    %5243 = vmatprep.subr.bf16.mxu0 0
    %5244 = vmatpush1.bf16.msra.mxu0 0
    %5245 = vmatprep.subr.bf16.mxu0 0
    %5246 = vmatpush1.bf16.msra.mxu0 0
    %5247 = vmatprep.subr.bf16.mxu0 0
    %5248 = vmatpush1.bf16.msra.mxu0 0
    %5249 = vmatprep.mubr.bf16.mxu0 0
    %5250 = vmatmul.mubr.bf16.gmra.mrb[0].mxu0 %v4914
    %v5251 = vpop.f32.mrb[0].mxu0
    %v5252 = vadd.f32 %v4732, %v5251
    %v5253 = vpop.f32.mrb[0].mxu0
    %v5254 = vadd.f32 %v4736, %v5253
    %v5255 = vpop.f32.mrb[0].mxu0
    %v5256 = vadd.f32 %v4732, %v5255
    %v5257 = vpop.f32.mrb[0].mxu0
    %v5258 = vadd.f32 %v4736, %v5257
    %5259 = vdwg.mxu0
    %v5260 = vmax.f32 %v4951, 0.0
    %v5261 = vmax.f32 %v4953, 0.0
    %v5262 = vmax.f32 %v4994, 0.0
    %v5263 = vmax.f32 %v4996, 0.0
    %v5264 = vmax.f32 %v5037, 0.0
    %v5265 = vmax.f32 %v5039, 0.0
    %v5266 = vmax.f32 %v5080, 0.0
    %v5267 = vmax.f32 %v5082, 0.0
    %v5268 = vmax.f32 %v5123, 0.0
    %v5269 = vmax.f32 %v5125, 0.0
    %v5270 = vmax.f32 %v5166, 0.0
    %v5271 = vmax.f32 %v5168, 0.0
    %v5272 = vmax.f32 %v5209, 0.0
    %v5273 = vmax.f32 %v5211, 0.0
    %v5274 = vmax.f32 %v5252, 0.0
    %v5275 = vmax.f32 %v5254, 0.0
    %v5276 = vmax.f32 %v4955, 0.0
    %v5277 = vmax.f32 %v4957, 0.0
    %v5278 = vmax.f32 %v4998, 0.0
    %v5279 = vmax.f32 %v5000, 0.0
    %v5280 = vmax.f32 %v5041, 0.0
    %v5281 = vmax.f32 %v5043, 0.0
    %v5282 = vmax.f32 %v5084, 0.0
    %v5283 = vmax.f32 %v5086, 0.0
    %v5284 = vmax.f32 %v5127, 0.0
    %v5285 = vmax.f32 %v5129, 0.0
    %v5286 = vmax.f32 %v5170, 0.0
    %v5287 = vmax.f32 %v5172, 0.0
    %v5288 = vmax.f32 %v5213, 0.0
    %v5289 = vmax.f32 %v5215, 0.0
    %v5290 = vmax.f32 %v5256, 0.0
    %v5291 = vmax.f32 %v5258, 0.0
    %v5292 = vld [vmem:[%s59] sm:$0xf]
    %v5293 = vld [vmem:[%s59 + $0x4] sm:$0xf]
    %v5294 = vld [vmem:[%s59 + $0x8] sm:$0xf]
    %v5295 = vld [vmem:[%s59 + $0xc] sm:$0xf]
    %v5296 = vld [vmem:[%s59 + $0x10] sm:$0xf]
    %v5297 = vld [vmem:[%s59 + $0x14] sm:$0xf]
    %v5298 = vld [vmem:[%s59 + $0x18] sm:$0xf]
    %v5299 = vld [vmem:[%s59 + $0x1c] sm:$0xf]
    %v5300 = vld [vmem:[%s59 + $0x20] sm:$0xf]
    %v5301 = vld [vmem:[%s59 + $0x24] sm:$0xf]
    %v5302 = vld [vmem:[%s59 + $0x28] sm:$0xf]
    %v5303 = vld [vmem:[%s59 + $0x2c] sm:$0xf]
    %v5304 = vld [vmem:[%s59 + $0x30] sm:$0xf]
    %v5305 = vld [vmem:[%s59 + $0x34] sm:$0xf]
    %v5306 = vld [vmem:[%s59 + $0x38] sm:$0xf]
    %v5307 = vld [vmem:[%s59 + $0x3c] sm:$0xf]
    %v5308 = vld [vmem:[%s59 + $0x40] sm:$0xf]
    %v5309 = vld [vmem:[%s59 + $0x44] sm:$0xf]
    %v5310 = vld [vmem:[%s59 + $0x48] sm:$0xf]
    %v5311 = vld [vmem:[%s59 + $0x4c] sm:$0xf]
    %v5312 = vld [vmem:[%s59 + $0x50] sm:$0xf]
    %v5313 = vld [vmem:[%s59 + $0x54] sm:$0xf]
    %v5314 = vld [vmem:[%s59 + $0x58] sm:$0xf]
    %v5315 = vld [vmem:[%s59 + $0x5c] sm:$0xf]
    %v5316 = vld [vmem:[%s59 + $0x60] sm:$0xf]
    %v5317 = vld [vmem:[%s59 + $0x64] sm:$0xf]
    %v5318 = vld [vmem:[%s59 + $0x68] sm:$0xf]
    %v5319 = vld [vmem:[%s59 + $0x6c] sm:$0xf]
    %v5320 = vld [vmem:[%s59 + $0x70] sm:$0xf]
    %v5321 = vld [vmem:[%s59 + $0x74] sm:$0xf]
    %v5322 = vld [vmem:[%s59 + $0x78] sm:$0xf]
    %v5323 = vld [vmem:[%s59 + $0x7c] sm:$0xf]
    %v5324 = vld [vmem:[%s59 + $0x80] sm:$0xf]
    %v5325 = vld [vmem:[%s59 + $0x84] sm:$0xf]
    %v5326 = vld [vmem:[%s59 + $0x88] sm:$0xf]
    %v5327 = vld [vmem:[%s59 + $0x8c] sm:$0xf]
    %v5328 = vld [vmem:[%s59 + $0x90] sm:$0xf]
    %v5329 = vld [vmem:[%s59 + $0x94] sm:$0xf]
    %v5330 = vld [vmem:[%s59 + $0x98] sm:$0xf]
    %v5331 = vld [vmem:[%s59 + $0x9c] sm:$0xf]
    %v5332 = vld [vmem:[%s59 + $0xa0] sm:$0xf]
    %v5333 = vld [vmem:[%s59 + $0xa4] sm:$0xf]
    %v5334 = vld [vmem:[%s59 + $0xa8] sm:$0xf]
    %v5335 = vld [vmem:[%s59 + $0xac] sm:$0xf]
    %v5336 = vld [vmem:[%s59 + $0xb0] sm:$0xf]
    %v5337 = vld [vmem:[%s59 + $0xb4] sm:$0xf]
    %v5338 = vld [vmem:[%s59 + $0xb8] sm:$0xf]
    %v5339 = vld [vmem:[%s59 + $0xbc] sm:$0xf]
    %v5340 = vld [vmem:[%s59 + $0xc0] sm:$0xf]
    %v5341 = vld [vmem:[%s59 + $0xc4] sm:$0xf]
    %v5342 = vld [vmem:[%s59 + $0xc8] sm:$0xf]
    %v5343 = vld [vmem:[%s59 + $0xcc] sm:$0xf]
    %v5344 = vld [vmem:[%s59 + $0xd0] sm:$0xf]
    %v5345 = vld [vmem:[%s59 + $0xd4] sm:$0xf]
    %v5346 = vld [vmem:[%s59 + $0xd8] sm:$0xf]
    %v5347 = vld [vmem:[%s59 + $0xdc] sm:$0xf]
    %v5348 = vld [vmem:[%s59 + $0xe0] sm:$0xf]
    %v5349 = vld [vmem:[%s59 + $0xe4] sm:$0xf]
    %v5350 = vld [vmem:[%s59 + $0xe8] sm:$0xf]
    %v5351 = vld [vmem:[%s59 + $0xec] sm:$0xf]
    %v5352 = vld [vmem:[%s59 + $0xf0] sm:$0xf]
    %v5353 = vld [vmem:[%s59 + $0xf4] sm:$0xf]
    %v5354 = vld [vmem:[%s59 + $0xf8] sm:$0xf]
    %v5355 = vld [vmem:[%s59 + $0xfc] sm:$0xf]
    %v5356 = vld [vmem:[%s59 + $0x100] sm:$0xf]
    %v5357 = vld [vmem:[%s59 + $0x104] sm:$0xf]
    %v5358 = vld [vmem:[%s59 + $0x108] sm:$0xf]
    %v5359 = vld [vmem:[%s59 + $0x10c] sm:$0xf]
    %v5360 = vld [vmem:[%s59 + $0x110] sm:$0xf]
    %v5361 = vld [vmem:[%s59 + $0x114] sm:$0xf]
    %v5362 = vld [vmem:[%s59 + $0x118] sm:$0xf]
    %v5363 = vld [vmem:[%s59 + $0x11c] sm:$0xf]
    %v5364 = vld [vmem:[%s59 + $0x120] sm:$0xf]
    %v5365 = vld [vmem:[%s59 + $0x124] sm:$0xf]
    %v5366 = vld [vmem:[%s59 + $0x128] sm:$0xf]
    %v5367 = vld [vmem:[%s59 + $0x12c] sm:$0xf]
    %v5368 = vld [vmem:[%s59 + $0x130] sm:$0xf]
    %v5369 = vld [vmem:[%s59 + $0x134] sm:$0xf]
    %v5370 = vld [vmem:[%s59 + $0x138] sm:$0xf]
    %v5371 = vld [vmem:[%s59 + $0x13c] sm:$0xf]
    %v5372 = vld [vmem:[%s59 + $0x140] sm:$0xf]
    %v5373 = vld [vmem:[%s59 + $0x144] sm:$0xf]
    %v5374 = vld [vmem:[%s59 + $0x148] sm:$0xf]
    %v5375 = vld [vmem:[%s59 + $0x14c] sm:$0xf]
    %v5376 = vld [vmem:[%s59 + $0x150] sm:$0xf]
    %v5377 = vld [vmem:[%s59 + $0x154] sm:$0xf]
    %v5378 = vld [vmem:[%s59 + $0x158] sm:$0xf]
    %v5379 = vld [vmem:[%s59 + $0x15c] sm:$0xf]
    %v5380 = vld [vmem:[%s59 + $0x160] sm:$0xf]
    %v5381 = vld [vmem:[%s59 + $0x164] sm:$0xf]
    %v5382 = vld [vmem:[%s59 + $0x168] sm:$0xf]
    %v5383 = vld [vmem:[%s59 + $0x16c] sm:$0xf]
    %v5384 = vld [vmem:[%s59 + $0x170] sm:$0xf]
    %v5385 = vld [vmem:[%s59 + $0x174] sm:$0xf]
    %v5386 = vld [vmem:[%s59 + $0x178] sm:$0xf]
    %v5387 = vld [vmem:[%s59 + $0x17c] sm:$0xf]
    %v5388 = vld [vmem:[%s59 + $0x180] sm:$0xf]
    %v5389 = vld [vmem:[%s59 + $0x184] sm:$0xf]
    %v5390 = vld [vmem:[%s59 + $0x188] sm:$0xf]
    %v5391 = vld [vmem:[%s59 + $0x18c] sm:$0xf]
    %v5392 = vld [vmem:[%s59 + $0x190] sm:$0xf]
    %v5393 = vld [vmem:[%s59 + $0x194] sm:$0xf]
    %v5394 = vld [vmem:[%s59 + $0x198] sm:$0xf]
    %v5395 = vld [vmem:[%s59 + $0x19c] sm:$0xf]
    %v5396 = vld [vmem:[%s59 + $0x1a0] sm:$0xf]
    %v5397 = vld [vmem:[%s59 + $0x1a4] sm:$0xf]
    %v5398 = vld [vmem:[%s59 + $0x1a8] sm:$0xf]
    %v5399 = vld [vmem:[%s59 + $0x1ac] sm:$0xf]
    %v5400 = vld [vmem:[%s59 + $0x1b0] sm:$0xf]
    %v5401 = vld [vmem:[%s59 + $0x1b4] sm:$0xf]
    %v5402 = vld [vmem:[%s59 + $0x1b8] sm:$0xf]
    %v5403 = vld [vmem:[%s59 + $0x1bc] sm:$0xf]
    %v5404 = vld [vmem:[%s59 + $0x1c0] sm:$0xf]
    %v5405 = vld [vmem:[%s59 + $0x1c4] sm:$0xf]
    %v5406 = vld [vmem:[%s59 + $0x1c8] sm:$0xf]
    %v5407 = vld [vmem:[%s59 + $0x1cc] sm:$0xf]
    %v5408 = vld [vmem:[%s59 + $0x1d0] sm:$0xf]
    %v5409 = vld [vmem:[%s59 + $0x1d4] sm:$0xf]
    %v5410 = vld [vmem:[%s59 + $0x1d8] sm:$0xf]
    %v5411 = vld [vmem:[%s59 + $0x1dc] sm:$0xf]
    %v5412 = vld [vmem:[%s59 + $0x1e0] sm:$0xf]
    %v5413 = vld [vmem:[%s59 + $0x1e4] sm:$0xf]
    %v5414 = vld [vmem:[%s59 + $0x1e8] sm:$0xf]
    %v5415 = vld [vmem:[%s59 + $0x1ec] sm:$0xf]
    %v5416 = vld [vmem:[%s59 + $0x1f0] sm:$0xf]
    %v5417 = vld [vmem:[%s59 + $0x1f4] sm:$0xf]
    %v5418 = vld [vmem:[%s59 + $0x1f8] sm:$0xf]
    %v5419 = vld [vmem:[%s59 + $0x1fc] sm:$0xf]
    %v5420 = vld [vmem:[%s59 + $0x200] sm:$0xf]
    %v5421 = vld [vmem:[%s59 + $0x204] sm:$0xf]
    %v5422 = vld [vmem:[%s59 + $0x208] sm:$0xf]
    %v5423 = vld [vmem:[%s59 + $0x20c] sm:$0xf]
    %v5424 = vld [vmem:[%s59 + $0x210] sm:$0xf]
    %v5425 = vld [vmem:[%s59 + $0x214] sm:$0xf]
    %v5426 = vld [vmem:[%s59 + $0x218] sm:$0xf]
    %v5427 = vld [vmem:[%s59 + $0x21c] sm:$0xf]
    %v5428 = vld [vmem:[%s59 + $0x220] sm:$0xf]
    %v5429 = vld [vmem:[%s59 + $0x224] sm:$0xf]
    %v5430 = vld [vmem:[%s59 + $0x228] sm:$0xf]
    %v5431 = vld [vmem:[%s59 + $0x22c] sm:$0xf]
    %v5432 = vld [vmem:[%s59 + $0x230] sm:$0xf]
    %v5433 = vld [vmem:[%s59 + $0x234] sm:$0xf]
    %v5434 = vld [vmem:[%s59 + $0x238] sm:$0xf]
    %v5435 = vld [vmem:[%s59 + $0x23c] sm:$0xf]
    %v5436 = vld [vmem:[%s59 + $0x240] sm:$0xf]
    %v5437 = vld [vmem:[%s59 + $0x244] sm:$0xf]
    %v5438 = vld [vmem:[%s59 + $0x248] sm:$0xf]
    %v5439 = vld [vmem:[%s59 + $0x24c] sm:$0xf]
    %v5440 = vld [vmem:[%s59 + $0x250] sm:$0xf]
    %v5441 = vld [vmem:[%s59 + $0x254] sm:$0xf]
    %v5442 = vld [vmem:[%s59 + $0x258] sm:$0xf]
    %v5443 = vld [vmem:[%s59 + $0x25c] sm:$0xf]
    %v5444 = vld [vmem:[%s59 + $0x260] sm:$0xf]
    %v5445 = vld [vmem:[%s59 + $0x264] sm:$0xf]
    %v5446 = vld [vmem:[%s59 + $0x268] sm:$0xf]
    %v5447 = vld [vmem:[%s59 + $0x26c] sm:$0xf]
    %v5448 = vld [vmem:[%s59 + $0x270] sm:$0xf]
    %v5449 = vld [vmem:[%s59 + $0x274] sm:$0xf]
    %v5450 = vld [vmem:[%s59 + $0x278] sm:$0xf]
    %v5451 = vld [vmem:[%s59 + $0x27c] sm:$0xf]
    %v5452 = vld [vmem:[%s59 + $0x280] sm:$0xf]
    %v5453 = vld [vmem:[%s59 + $0x284] sm:$0xf]
    %v5454 = vld [vmem:[%s59 + $0x288] sm:$0xf]
    %v5455 = vld [vmem:[%s59 + $0x28c] sm:$0xf]
    %v5456 = vld [vmem:[%s59 + $0x290] sm:$0xf]
    %v5457 = vld [vmem:[%s59 + $0x294] sm:$0xf]
    %v5458 = vld [vmem:[%s59 + $0x298] sm:$0xf]
    %v5459 = vld [vmem:[%s59 + $0x29c] sm:$0xf]
    %v5460 = vld [vmem:[%s59 + $0x2a0] sm:$0xf]
    %v5461 = vld [vmem:[%s59 + $0x2a4] sm:$0xf]
    %v5462 = vld [vmem:[%s59 + $0x2a8] sm:$0xf]
    %v5463 = vld [vmem:[%s59 + $0x2ac] sm:$0xf]
    %v5464 = vld [vmem:[%s59 + $0x2b0] sm:$0xf]
    %v5465 = vld [vmem:[%s59 + $0x2b4] sm:$0xf]
    %v5466 = vld [vmem:[%s59 + $0x2b8] sm:$0xf]
    %v5467 = vld [vmem:[%s59 + $0x2bc] sm:$0xf]
    %v5468 = vld [vmem:[%s59 + $0x2c0] sm:$0xf]
    %v5469 = vld [vmem:[%s59 + $0x2c4] sm:$0xf]
    %v5470 = vld [vmem:[%s59 + $0x2c8] sm:$0xf]
    %v5471 = vld [vmem:[%s59 + $0x2cc] sm:$0xf]
    %v5472 = vld [vmem:[%s59 + $0x2d0] sm:$0xf]
    %v5473 = vld [vmem:[%s59 + $0x2d4] sm:$0xf]
    %v5474 = vld [vmem:[%s59 + $0x2d8] sm:$0xf]
    %v5475 = vld [vmem:[%s59 + $0x2dc] sm:$0xf]
    %v5476 = vld [vmem:[%s59 + $0x2e0] sm:$0xf]
    %v5477 = vld [vmem:[%s59 + $0x2e4] sm:$0xf]
    %v5478 = vld [vmem:[%s59 + $0x2e8] sm:$0xf]
    %v5479 = vld [vmem:[%s59 + $0x2ec] sm:$0xf]
    %v5480 = vld [vmem:[%s59 + $0x2f0] sm:$0xf]
    %v5481 = vld [vmem:[%s59 + $0x2f4] sm:$0xf]
    %v5482 = vld [vmem:[%s59 + $0x2f8] sm:$0xf]
    %v5483 = vld [vmem:[%s59 + $0x2fc] sm:$0xf]
    %v5484 = vld [vmem:[%s59 + $0x300] sm:$0xf]
    %v5485 = vld [vmem:[%s59 + $0x304] sm:$0xf]
    %v5486 = vld [vmem:[%s59 + $0x308] sm:$0xf]
    %v5487 = vld [vmem:[%s59 + $0x30c] sm:$0xf]
    %v5488 = vld [vmem:[%s59 + $0x310] sm:$0xf]
    %v5489 = vld [vmem:[%s59 + $0x314] sm:$0xf]
    %v5490 = vld [vmem:[%s59 + $0x318] sm:$0xf]
    %v5491 = vld [vmem:[%s59 + $0x31c] sm:$0xf]
    %v5492 = vld [vmem:[%s59 + $0x320] sm:$0xf]
    %v5493 = vld [vmem:[%s59 + $0x324] sm:$0xf]
    %v5494 = vld [vmem:[%s59 + $0x328] sm:$0xf]
    %v5495 = vld [vmem:[%s59 + $0x32c] sm:$0xf]
    %v5496 = vld [vmem:[%s59 + $0x330] sm:$0xf]
    %v5497 = vld [vmem:[%s59 + $0x334] sm:$0xf]
    %v5498 = vld [vmem:[%s59 + $0x338] sm:$0xf]
    %v5499 = vld [vmem:[%s59 + $0x33c] sm:$0xf]
    %v5500 = vld [vmem:[%s59 + $0x340] sm:$0xf]
    %v5501 = vld [vmem:[%s59 + $0x344] sm:$0xf]
    %v5502 = vld [vmem:[%s59 + $0x348] sm:$0xf]
    %v5503 = vld [vmem:[%s59 + $0x34c] sm:$0xf]
    %v5504 = vld [vmem:[%s59 + $0x350] sm:$0xf]
    %v5505 = vld [vmem:[%s59 + $0x354] sm:$0xf]
    %v5506 = vld [vmem:[%s59 + $0x358] sm:$0xf]
    %v5507 = vld [vmem:[%s59 + $0x35c] sm:$0xf]
    %v5508 = vld [vmem:[%s59 + $0x360] sm:$0xf]
    %v5509 = vld [vmem:[%s59 + $0x364] sm:$0xf]
    %v5510 = vld [vmem:[%s59 + $0x368] sm:$0xf]
    %v5511 = vld [vmem:[%s59 + $0x36c] sm:$0xf]
    %v5512 = vld [vmem:[%s59 + $0x370] sm:$0xf]
    %v5513 = vld [vmem:[%s59 + $0x374] sm:$0xf]
    %v5514 = vld [vmem:[%s59 + $0x378] sm:$0xf]
    %v5515 = vld [vmem:[%s59 + $0x37c] sm:$0xf]
    %v5516 = vld [vmem:[%s59 + $0x380] sm:$0xf]
    %v5517 = vld [vmem:[%s59 + $0x384] sm:$0xf]
    %v5518 = vld [vmem:[%s59 + $0x388] sm:$0xf]
    %v5519 = vld [vmem:[%s59 + $0x38c] sm:$0xf]
    %v5520 = vld [vmem:[%s59 + $0x390] sm:$0xf]
    %v5521 = vld [vmem:[%s59 + $0x394] sm:$0xf]
    %v5522 = vld [vmem:[%s59 + $0x398] sm:$0xf]
    %v5523 = vld [vmem:[%s59 + $0x39c] sm:$0xf]
    %v5524 = vld [vmem:[%s59 + $0x3a0] sm:$0xf]
    %v5525 = vld [vmem:[%s59 + $0x3a4] sm:$0xf]
    %v5526 = vld [vmem:[%s59 + $0x3a8] sm:$0xf]
    %v5527 = vld [vmem:[%s59 + $0x3ac] sm:$0xf]
    %v5528 = vld [vmem:[%s59 + $0x3b0] sm:$0xf]
    %v5529 = vld [vmem:[%s59 + $0x3b4] sm:$0xf]
    %v5530 = vld [vmem:[%s59 + $0x3b8] sm:$0xf]
    %v5531 = vld [vmem:[%s59 + $0x3bc] sm:$0xf]
    %v5532 = vld [vmem:[%s59 + $0x3c0] sm:$0xf]
    %v5533 = vld [vmem:[%s59 + $0x3c4] sm:$0xf]
    %v5534 = vld [vmem:[%s59 + $0x3c8] sm:$0xf]
    %v5535 = vld [vmem:[%s59 + $0x3cc] sm:$0xf]
    %v5536 = vld [vmem:[%s59 + $0x3d0] sm:$0xf]
    %v5537 = vld [vmem:[%s59 + $0x3d4] sm:$0xf]
    %v5538 = vld [vmem:[%s59 + $0x3d8] sm:$0xf]
    %v5539 = vld [vmem:[%s59 + $0x3dc] sm:$0xf]
    %v5540 = vld [vmem:[%s59 + $0x3e0] sm:$0xf]
    %v5541 = vld [vmem:[%s59 + $0x3e4] sm:$0xf]
    %v5542 = vld [vmem:[%s59 + $0x3e8] sm:$0xf]
    %v5543 = vld [vmem:[%s59 + $0x3ec] sm:$0xf]
    %v5544 = vld [vmem:[%s59 + $0x3f0] sm:$0xf]
    %v5545 = vld [vmem:[%s59 + $0x3f4] sm:$0xf]
    %v5546 = vld [vmem:[%s59 + $0x3f8] sm:$0xf]
    %v5547 = vld [vmem:[%s59 + $0x3fc] sm:$0xf]
    %v5548 = vld [vmem:[%s61] sm:$0x1]
    %v5549 = vpack.c.bf16 %v5276, %v5260
    %v5550 = vpack.c.bf16 %v5277, %v5261
    %v5551 = vpack.c.bf16 %v5278, %v5262
    %v5552 = vpack.c.bf16 %v5279, %v5263
    %v5553 = vpack.c.bf16 %v5280, %v5264
    %v5554 = vpack.c.bf16 %v5281, %v5265
    %v5555 = vpack.c.bf16 %v5282, %v5266
    %v5556 = vpack.c.bf16 %v5283, %v5267
    %v5557 = vpack.c.bf16 %v5284, %v5268
    %v5558 = vpack.c.bf16 %v5285, %v5269
    %v5559 = vpack.c.bf16 %v5286, %v5270
    %v5560 = vpack.c.bf16 %v5287, %v5271
    %v5561 = vpack.c.bf16 %v5288, %v5272
    %v5562 = vpack.c.bf16 %v5289, %v5273
    %v5563 = vpack.c.bf16 %v5290, %v5274
    %v5564 = vpack.c.bf16 %v5291, %v5275
    %v5566 = vlaneseq
    %v5567 = vshrl.u32 %v5566, 7
    %v5568 = vsub.s32 0, %v5567
    %v5569 = vrot.slane %v5548, %v5568
    %v5827 = vunpack.c.l.b16 %v5292
    %v5828 = vunpack.c.l.b16 %v5293
    %v5829 = vunpack.c.l.b16 %v5294
    %v5830 = vunpack.c.l.b16 %v5295
    %v5831 = vunpack.c.l.b16 %v5296
    %v5832 = vunpack.c.l.b16 %v5297
    %v5833 = vunpack.c.l.b16 %v5298
    %v5834 = vunpack.c.l.b16 %v5299
    %v5835 = vunpack.c.l.b16 %v5300
    %v5836 = vunpack.c.l.b16 %v5301
    %v5837 = vunpack.c.l.b16 %v5302
    %v5838 = vunpack.c.l.b16 %v5303
    %v5839 = vunpack.c.l.b16 %v5304
    %v5840 = vunpack.c.l.b16 %v5305
    %v5841 = vunpack.c.l.b16 %v5306
    %v5842 = vunpack.c.l.b16 %v5307
    %v5843 = vunpack.c.l.b16 %v5308
    %v5844 = vunpack.c.l.b16 %v5309
    %v5845 = vunpack.c.l.b16 %v5310
    %v5846 = vunpack.c.l.b16 %v5311
    %v5847 = vunpack.c.l.b16 %v5312
    %v5848 = vunpack.c.l.b16 %v5313
    %v5849 = vunpack.c.l.b16 %v5314
    %v5850 = vunpack.c.l.b16 %v5315
    %v5851 = vunpack.c.l.b16 %v5316
    %v5852 = vunpack.c.l.b16 %v5317
    %v5853 = vunpack.c.l.b16 %v5318
    %v5854 = vunpack.c.l.b16 %v5319
    %v5855 = vunpack.c.l.b16 %v5320
    %v5856 = vunpack.c.l.b16 %v5321
    %v5857 = vunpack.c.l.b16 %v5322
    %v5858 = vunpack.c.l.b16 %v5323
    %v5859 = vunpack.c.l.b16 %v5324
    %v5860 = vunpack.c.l.b16 %v5325
    %v5861 = vunpack.c.l.b16 %v5326
    %v5862 = vunpack.c.l.b16 %v5327
    %v5863 = vunpack.c.l.b16 %v5328
    %v5864 = vunpack.c.l.b16 %v5329
    %v5865 = vunpack.c.l.b16 %v5330
    %v5866 = vunpack.c.l.b16 %v5331
    %v5867 = vunpack.c.l.b16 %v5332
    %v5868 = vunpack.c.l.b16 %v5333
    %v5869 = vunpack.c.l.b16 %v5334
    %v5870 = vunpack.c.l.b16 %v5335
    %v5871 = vunpack.c.l.b16 %v5336
    %v5872 = vunpack.c.l.b16 %v5337
    %v5873 = vunpack.c.l.b16 %v5338
    %v5874 = vunpack.c.l.b16 %v5339
    %v5875 = vunpack.c.l.b16 %v5340
    %v5876 = vunpack.c.l.b16 %v5341
    %v5877 = vunpack.c.l.b16 %v5342
    %v5878 = vunpack.c.l.b16 %v5343
    %v5879 = vunpack.c.l.b16 %v5344
    %v5880 = vunpack.c.l.b16 %v5345
    %v5881 = vunpack.c.l.b16 %v5346
    %v5882 = vunpack.c.l.b16 %v5347
    %v5883 = vunpack.c.l.b16 %v5348
    %v5884 = vunpack.c.l.b16 %v5349
    %v5885 = vunpack.c.l.b16 %v5350
    %v5886 = vunpack.c.l.b16 %v5351
    %v5887 = vunpack.c.l.b16 %v5352
    %v5888 = vunpack.c.l.b16 %v5353
    %v5889 = vunpack.c.l.b16 %v5354
    %v5890 = vunpack.c.l.b16 %v5355
    %v5891 = vunpack.c.l.b16 %v5356
    %v5892 = vunpack.c.l.b16 %v5357
    %v5893 = vunpack.c.l.b16 %v5358
    %v5894 = vunpack.c.l.b16 %v5359
    %v5895 = vunpack.c.l.b16 %v5360
    %v5896 = vunpack.c.l.b16 %v5361
    %v5897 = vunpack.c.l.b16 %v5362
    %v5898 = vunpack.c.l.b16 %v5363
    %v5899 = vunpack.c.l.b16 %v5364
    %v5900 = vunpack.c.l.b16 %v5365
    %v5901 = vunpack.c.l.b16 %v5366
    %v5902 = vunpack.c.l.b16 %v5367
    %v5903 = vunpack.c.l.b16 %v5368
    %v5904 = vunpack.c.l.b16 %v5369
    %v5905 = vunpack.c.l.b16 %v5370
    %v5906 = vunpack.c.l.b16 %v5371
    %v5907 = vunpack.c.l.b16 %v5372
    %v5908 = vunpack.c.l.b16 %v5373
    %v5909 = vunpack.c.l.b16 %v5374
    %v5910 = vunpack.c.l.b16 %v5375
    %v5911 = vunpack.c.l.b16 %v5376
    %v5912 = vunpack.c.l.b16 %v5377
    %v5913 = vunpack.c.l.b16 %v5378
    %v5914 = vunpack.c.l.b16 %v5379
    %v5915 = vunpack.c.l.b16 %v5380
    %v5916 = vunpack.c.l.b16 %v5381
    %v5917 = vunpack.c.l.b16 %v5382
    %v5918 = vunpack.c.l.b16 %v5383
    %v5919 = vunpack.c.l.b16 %v5384
    %v5920 = vunpack.c.l.b16 %v5385
    %v5921 = vunpack.c.l.b16 %v5386
    %v5922 = vunpack.c.l.b16 %v5387
    %v5923 = vunpack.c.l.b16 %v5388
    %v5924 = vunpack.c.l.b16 %v5389
    %v5925 = vunpack.c.l.b16 %v5390
    %v5926 = vunpack.c.l.b16 %v5391
    %v5927 = vunpack.c.l.b16 %v5392
    %v5928 = vunpack.c.l.b16 %v5393
    %v5929 = vunpack.c.l.b16 %v5394
    %v5930 = vunpack.c.l.b16 %v5395
    %v5931 = vunpack.c.l.b16 %v5396
    %v5932 = vunpack.c.l.b16 %v5397
    %v5933 = vunpack.c.l.b16 %v5398
    %v5934 = vunpack.c.l.b16 %v5399
    %v5935 = vunpack.c.l.b16 %v5400
    %v5936 = vunpack.c.l.b16 %v5401
    %v5937 = vunpack.c.l.b16 %v5402
    %v5938 = vunpack.c.l.b16 %v5403
    %v5939 = vunpack.c.l.b16 %v5404
    %v5940 = vunpack.c.l.b16 %v5405
    %v5941 = vunpack.c.l.b16 %v5406
    %v5942 = vunpack.c.l.b16 %v5407
    %v5943 = vunpack.c.l.b16 %v5408
    %v5944 = vunpack.c.l.b16 %v5409
    %v5945 = vunpack.c.l.b16 %v5410
    %v5946 = vunpack.c.l.b16 %v5411
    %v5947 = vunpack.c.l.b16 %v5412
    %v5948 = vunpack.c.l.b16 %v5413
    %v5949 = vunpack.c.l.b16 %v5414
    %v5950 = vunpack.c.l.b16 %v5415
    %v5951 = vunpack.c.l.b16 %v5416
    %v5952 = vunpack.c.l.b16 %v5417
    %v5953 = vunpack.c.l.b16 %v5418
    %v5954 = vunpack.c.l.b16 %v5419
    %v5955 = vunpack.c.l.b16 %v5420
    %v5956 = vunpack.c.l.b16 %v5421
    %v5957 = vunpack.c.l.b16 %v5422
    %v5958 = vunpack.c.l.b16 %v5423
    %v5959 = vunpack.c.l.b16 %v5424
    %v5960 = vunpack.c.l.b16 %v5425
    %v5961 = vunpack.c.l.b16 %v5426
    %v5962 = vunpack.c.l.b16 %v5427
    %v5963 = vunpack.c.l.b16 %v5428
    %v5964 = vunpack.c.l.b16 %v5429
    %v5965 = vunpack.c.l.b16 %v5430
    %v5966 = vunpack.c.l.b16 %v5431
    %v5967 = vunpack.c.l.b16 %v5432
    %v5968 = vunpack.c.l.b16 %v5433
    %v5969 = vunpack.c.l.b16 %v5434
    %v5970 = vunpack.c.l.b16 %v5435
    %v5971 = vunpack.c.l.b16 %v5436
    %v5972 = vunpack.c.l.b16 %v5437
    %v5973 = vunpack.c.l.b16 %v5438
    %v5974 = vunpack.c.l.b16 %v5439
    %v5975 = vunpack.c.l.b16 %v5440
    %v5976 = vunpack.c.l.b16 %v5441
    %v5977 = vunpack.c.l.b16 %v5442
    %v5978 = vunpack.c.l.b16 %v5443
    %v5979 = vunpack.c.l.b16 %v5444
    %v5980 = vunpack.c.l.b16 %v5445
    %v5981 = vunpack.c.l.b16 %v5446
    %v5982 = vunpack.c.l.b16 %v5447
    %v5983 = vunpack.c.l.b16 %v5448
    %v5984 = vunpack.c.l.b16 %v5449
    %v5985 = vunpack.c.l.b16 %v5450
    %v5986 = vunpack.c.l.b16 %v5451
    %v5987 = vunpack.c.l.b16 %v5452
    %v5988 = vunpack.c.l.b16 %v5453
    %v5989 = vunpack.c.l.b16 %v5454
    %v5990 = vunpack.c.l.b16 %v5455
    %v5991 = vunpack.c.l.b16 %v5456
    %v5992 = vunpack.c.l.b16 %v5457
    %v5993 = vunpack.c.l.b16 %v5458
    %v5994 = vunpack.c.l.b16 %v5459
    %v5995 = vunpack.c.l.b16 %v5460
    %v5996 = vunpack.c.l.b16 %v5461
    %v5997 = vunpack.c.l.b16 %v5462
    %v5998 = vunpack.c.l.b16 %v5463
    %v5999 = vunpack.c.l.b16 %v5464
    %v6000 = vunpack.c.l.b16 %v5465
    %v6001 = vunpack.c.l.b16 %v5466
    %v6002 = vunpack.c.l.b16 %v5467
    %v6003 = vunpack.c.l.b16 %v5468
    %v6004 = vunpack.c.l.b16 %v5469
    %v6005 = vunpack.c.l.b16 %v5470
    %v6006 = vunpack.c.l.b16 %v5471
    %v6007 = vunpack.c.l.b16 %v5472
    %v6008 = vunpack.c.l.b16 %v5473
    %v6009 = vunpack.c.l.b16 %v5474
    %v6010 = vunpack.c.l.b16 %v5475
    %v6011 = vunpack.c.l.b16 %v5476
    %v6012 = vunpack.c.l.b16 %v5477
    %v6013 = vunpack.c.l.b16 %v5478
    %v6014 = vunpack.c.l.b16 %v5479
    %v6015 = vunpack.c.l.b16 %v5480
    %v6016 = vunpack.c.l.b16 %v5481
    %v6017 = vunpack.c.l.b16 %v5482
    %v6018 = vunpack.c.l.b16 %v5483
    %v6019 = vunpack.c.l.b16 %v5484
    %v6020 = vunpack.c.l.b16 %v5485
    %v6021 = vunpack.c.l.b16 %v5486
    %v6022 = vunpack.c.l.b16 %v5487
    %v6023 = vunpack.c.l.b16 %v5488
    %v6024 = vunpack.c.l.b16 %v5489
    %v6025 = vunpack.c.l.b16 %v5490
    %v6026 = vunpack.c.l.b16 %v5491
    %v6027 = vunpack.c.l.b16 %v5492
    %v6028 = vunpack.c.l.b16 %v5493
    %v6029 = vunpack.c.l.b16 %v5494
    %v6030 = vunpack.c.l.b16 %v5495
    %v6031 = vunpack.c.l.b16 %v5496
    %v6032 = vunpack.c.l.b16 %v5497
    %v6033 = vunpack.c.l.b16 %v5498
    %v6034 = vunpack.c.l.b16 %v5499
    %v6035 = vunpack.c.l.b16 %v5500
    %v6036 = vunpack.c.l.b16 %v5501
    %v6037 = vunpack.c.l.b16 %v5502
    %v6038 = vunpack.c.l.b16 %v5503
    %v6039 = vunpack.c.l.b16 %v5504
    %v6040 = vunpack.c.l.b16 %v5505
    %v6041 = vunpack.c.l.b16 %v5506
    %v6042 = vunpack.c.l.b16 %v5507
    %v6043 = vunpack.c.l.b16 %v5508
    %v6044 = vunpack.c.l.b16 %v5509
    %v6045 = vunpack.c.l.b16 %v5510
    %v6046 = vunpack.c.l.b16 %v5511
    %v6047 = vunpack.c.l.b16 %v5512
    %v6048 = vunpack.c.l.b16 %v5513
    %v6049 = vunpack.c.l.b16 %v5514
    %v6050 = vunpack.c.l.b16 %v5515
    %v6051 = vunpack.c.l.b16 %v5516
    %v6052 = vunpack.c.l.b16 %v5517
    %v6053 = vunpack.c.l.b16 %v5518
    %v6054 = vunpack.c.l.b16 %v5519
    %v6055 = vunpack.c.l.b16 %v5520
    %v6056 = vunpack.c.l.b16 %v5521
    %v6057 = vunpack.c.l.b16 %v5522
    %v6058 = vunpack.c.l.b16 %v5523
    %v6059 = vunpack.c.l.b16 %v5524
    %v6060 = vunpack.c.l.b16 %v5525
    %v6061 = vunpack.c.l.b16 %v5526
    %v6062 = vunpack.c.l.b16 %v5527
    %v6063 = vunpack.c.l.b16 %v5528
    %v6064 = vunpack.c.l.b16 %v5529
    %v6065 = vunpack.c.l.b16 %v5530
    %v6066 = vunpack.c.l.b16 %v5531
    %v6067 = vunpack.c.l.b16 %v5532
    %v6068 = vunpack.c.l.b16 %v5533
    %v6069 = vunpack.c.l.b16 %v5534
    %v6070 = vunpack.c.l.b16 %v5535
    %v6071 = vunpack.c.l.b16 %v5536
    %v6072 = vunpack.c.l.b16 %v5537
    %v6073 = vunpack.c.l.b16 %v5538
    %v6074 = vunpack.c.l.b16 %v5539
    %v6075 = vunpack.c.l.b16 %v5540
    %v6076 = vunpack.c.l.b16 %v5541
    %v6077 = vunpack.c.l.b16 %v5542
    %v6078 = vunpack.c.l.b16 %v5543
    %v6079 = vunpack.c.l.b16 %v5544
    %v6080 = vunpack.c.l.b16 %v5545
    %v6081 = vunpack.c.l.b16 %v5546
    %v6082 = vunpack.c.l.b16 %v5547
    %v6083 = vpack.c.b16 %v5828, %v5827
    %v6084 = vpack.c.b16 %v5830, %v5829
    %v6085 = vpack.c.b16 %v5832, %v5831
    %v6086 = vpack.c.b16 %v5834, %v5833
    %v6087 = vpack.c.b16 %v5836, %v5835
    %v6088 = vpack.c.b16 %v5838, %v5837
    %v6089 = vpack.c.b16 %v5840, %v5839
    %v6090 = vpack.c.b16 %v5842, %v5841
    %v6091 = vpack.c.b16 %v5844, %v5843
    %v6092 = vpack.c.b16 %v5846, %v5845
    %v6093 = vpack.c.b16 %v5848, %v5847
    %v6094 = vpack.c.b16 %v5850, %v5849
    %v6095 = vpack.c.b16 %v5852, %v5851
    %v6096 = vpack.c.b16 %v5854, %v5853
    %v6097 = vpack.c.b16 %v5856, %v5855
    %v6098 = vpack.c.b16 %v5858, %v5857
    %v6099 = vpack.c.b16 %v5860, %v5859
    %v6100 = vpack.c.b16 %v5862, %v5861
    %v6101 = vpack.c.b16 %v5864, %v5863
    %v6102 = vpack.c.b16 %v5866, %v5865
    %v6103 = vpack.c.b16 %v5868, %v5867
    %v6104 = vpack.c.b16 %v5870, %v5869
    %v6105 = vpack.c.b16 %v5872, %v5871
    %v6106 = vpack.c.b16 %v5874, %v5873
    %v6107 = vpack.c.b16 %v5876, %v5875
    %v6108 = vpack.c.b16 %v5878, %v5877
    %v6109 = vpack.c.b16 %v5880, %v5879
    %v6110 = vpack.c.b16 %v5882, %v5881
    %v6111 = vpack.c.b16 %v5884, %v5883
    %v6112 = vpack.c.b16 %v5886, %v5885
    %v6113 = vpack.c.b16 %v5888, %v5887
    %v6114 = vpack.c.b16 %v5890, %v5889
    %v6115 = vpack.c.b16 %v5892, %v5891
    %v6116 = vpack.c.b16 %v5894, %v5893
    %v6117 = vpack.c.b16 %v5896, %v5895
    %v6118 = vpack.c.b16 %v5898, %v5897
    %v6119 = vpack.c.b16 %v5900, %v5899
    %v6120 = vpack.c.b16 %v5902, %v5901
    %v6121 = vpack.c.b16 %v5904, %v5903
    %v6122 = vpack.c.b16 %v5906, %v5905
    %v6123 = vpack.c.b16 %v5908, %v5907
    %v6124 = vpack.c.b16 %v5910, %v5909
    %v6125 = vpack.c.b16 %v5912, %v5911
    %v6126 = vpack.c.b16 %v5914, %v5913
    %v6127 = vpack.c.b16 %v5916, %v5915
    %v6128 = vpack.c.b16 %v5918, %v5917
    %v6129 = vpack.c.b16 %v5920, %v5919
    %v6130 = vpack.c.b16 %v5922, %v5921
    %v6131 = vpack.c.b16 %v5924, %v5923
    %v6132 = vpack.c.b16 %v5926, %v5925
    %v6133 = vpack.c.b16 %v5928, %v5927
    %v6134 = vpack.c.b16 %v5930, %v5929
    %v6135 = vpack.c.b16 %v5932, %v5931
    %v6136 = vpack.c.b16 %v5934, %v5933
    %v6137 = vpack.c.b16 %v5936, %v5935
    %v6138 = vpack.c.b16 %v5938, %v5937
    %v6139 = vpack.c.b16 %v5940, %v5939
    %v6140 = vpack.c.b16 %v5942, %v5941
    %v6141 = vpack.c.b16 %v5944, %v5943
    %v6142 = vpack.c.b16 %v5946, %v5945
    %v6143 = vpack.c.b16 %v5948, %v5947
    %v6144 = vpack.c.b16 %v5950, %v5949
    %v6145 = vpack.c.b16 %v5952, %v5951
    %v6146 = vpack.c.b16 %v5954, %v5953
    %v6147 = vpack.c.b16 %v5956, %v5955
    %v6148 = vpack.c.b16 %v5958, %v5957
    %v6149 = vpack.c.b16 %v5960, %v5959
    %v6150 = vpack.c.b16 %v5962, %v5961
    %v6151 = vpack.c.b16 %v5964, %v5963
    %v6152 = vpack.c.b16 %v5966, %v5965
    %v6153 = vpack.c.b16 %v5968, %v5967
    %v6154 = vpack.c.b16 %v5970, %v5969
    %v6155 = vpack.c.b16 %v5972, %v5971
    %v6156 = vpack.c.b16 %v5974, %v5973
    %v6157 = vpack.c.b16 %v5976, %v5975
    %v6158 = vpack.c.b16 %v5978, %v5977
    %v6159 = vpack.c.b16 %v5980, %v5979
    %v6160 = vpack.c.b16 %v5982, %v5981
    %v6161 = vpack.c.b16 %v5984, %v5983
    %v6162 = vpack.c.b16 %v5986, %v5985
    %v6163 = vpack.c.b16 %v5988, %v5987
    %v6164 = vpack.c.b16 %v5990, %v5989
    %v6165 = vpack.c.b16 %v5992, %v5991
    %v6166 = vpack.c.b16 %v5994, %v5993
    %v6167 = vpack.c.b16 %v5996, %v5995
    %v6168 = vpack.c.b16 %v5998, %v5997
    %v6169 = vpack.c.b16 %v6000, %v5999
    %v6170 = vpack.c.b16 %v6002, %v6001
    %v6171 = vpack.c.b16 %v6004, %v6003
    %v6172 = vpack.c.b16 %v6006, %v6005
    %v6173 = vpack.c.b16 %v6008, %v6007
    %v6174 = vpack.c.b16 %v6010, %v6009
    %v6175 = vpack.c.b16 %v6012, %v6011
    %v6176 = vpack.c.b16 %v6014, %v6013
    %v6177 = vpack.c.b16 %v6016, %v6015
    %v6178 = vpack.c.b16 %v6018, %v6017
    %v6179 = vpack.c.b16 %v6020, %v6019
    %v6180 = vpack.c.b16 %v6022, %v6021
    %v6181 = vpack.c.b16 %v6024, %v6023
    %v6182 = vpack.c.b16 %v6026, %v6025
    %v6183 = vpack.c.b16 %v6028, %v6027
    %v6184 = vpack.c.b16 %v6030, %v6029
    %v6185 = vpack.c.b16 %v6032, %v6031
    %v6186 = vpack.c.b16 %v6034, %v6033
    %v6187 = vpack.c.b16 %v6036, %v6035
    %v6188 = vpack.c.b16 %v6038, %v6037
    %v6189 = vpack.c.b16 %v6040, %v6039
    %v6190 = vpack.c.b16 %v6042, %v6041
    %v6191 = vpack.c.b16 %v6044, %v6043
    %v6192 = vpack.c.b16 %v6046, %v6045
    %v6193 = vpack.c.b16 %v6048, %v6047
    %v6194 = vpack.c.b16 %v6050, %v6049
    %v6195 = vpack.c.b16 %v6052, %v6051
    %v6196 = vpack.c.b16 %v6054, %v6053
    %v6197 = vpack.c.b16 %v6056, %v6055
    %v6198 = vpack.c.b16 %v6058, %v6057
    %v6199 = vpack.c.b16 %v6060, %v6059
    %v6200 = vpack.c.b16 %v6062, %v6061
    %v6201 = vpack.c.b16 %v6064, %v6063
    %v6202 = vpack.c.b16 %v6066, %v6065
    %v6203 = vpack.c.b16 %v6068, %v6067
    %v6204 = vpack.c.b16 %v6070, %v6069
    %v6205 = vpack.c.b16 %v6072, %v6071
    %v6206 = vpack.c.b16 %v6074, %v6073
    %v6207 = vpack.c.b16 %v6076, %v6075
    %v6208 = vpack.c.b16 %v6078, %v6077
    %v6209 = vpack.c.b16 %v6080, %v6079
    %v6210 = vpack.c.b16 %v6082, %v6081
    %6339 = vmatprep.subr.bf16.mxu0 0
    %6340 = vmatpush1.bf16.msra.mxu0 %v6083
    %6341 = vmatprep.subr.bf16.mxu0 0
    %6342 = vmatpush1.bf16.msra.mxu0 %v6084
    %6343 = vmatprep.subr.bf16.mxu0 0
    %6344 = vmatpush1.bf16.msra.mxu0 %v6085
    %6345 = vmatprep.subr.bf16.mxu0 0
    %6346 = vmatpush1.bf16.msra.mxu0 %v6086
    %6347 = vmatprep.subr.bf16.mxu0 0
    %6348 = vmatpush1.bf16.msra.mxu0 %v6087
    %6349 = vmatprep.subr.bf16.mxu0 0
    %6350 = vmatpush1.bf16.msra.mxu0 %v6088
    %6351 = vmatprep.subr.bf16.mxu0 0
    %6352 = vmatpush1.bf16.msra.mxu0 %v6089
    %6353 = vmatprep.subr.bf16.mxu0 0
    %6354 = vmatpush1.bf16.msra.mxu0 %v6090
    %6355 = vmatprep.subr.bf16.mxu0 0
    %6356 = vmatpush1.bf16.msra.mxu0 %v6091
    %6357 = vmatprep.subr.bf16.mxu0 0
    %6358 = vmatpush1.bf16.msra.mxu0 %v6092
    %6359 = vmatprep.subr.bf16.mxu0 0
    %6360 = vmatpush1.bf16.msra.mxu0 %v6093
    %6361 = vmatprep.subr.bf16.mxu0 0
    %6362 = vmatpush1.bf16.msra.mxu0 %v6094
    %6363 = vmatprep.subr.bf16.mxu0 0
    %6364 = vmatpush1.bf16.msra.mxu0 %v6095
    %6365 = vmatprep.subr.bf16.mxu0 0
    %6366 = vmatpush1.bf16.msra.mxu0 %v6096
    %6367 = vmatprep.subr.bf16.mxu0 0
    %6368 = vmatpush1.bf16.msra.mxu0 %v6097
    %6369 = vmatprep.subr.bf16.mxu0 0
    %6370 = vmatpush1.bf16.msra.mxu0 %v6098
    %6371 = vmatprep.mubr.bf16.mxu0 %v5550
    %6372 = vmatmul.mubr.bf16.gmra.mrb[0].mxu0 %v5549
    %v6373 = vpop.f32.mrb[0].mxu0
    %v6374 = vadd.f32 %v5569, %v6373
    %v6375 = vpop.f32.mrb[0].mxu0
    %v6376 = vpop.f32.mrb[0].mxu0
    %v6377 = vadd.f32 %v5569, %v6376
    %v6378 = vpop.f32.mrb[0].mxu0
    %6379 = vdwg.mxu0
    %6380 = vmatprep.subr.bf16.mxu0 0
    %6381 = vmatpush1.bf16.msra.mxu0 %v6099
    %6382 = vmatprep.subr.bf16.mxu0 0
    %6383 = vmatpush1.bf16.msra.mxu0 %v6100
    %6384 = vmatprep.subr.bf16.mxu0 0
    %6385 = vmatpush1.bf16.msra.mxu0 %v6101
    %6386 = vmatprep.subr.bf16.mxu0 0
    %6387 = vmatpush1.bf16.msra.mxu0 %v6102
    %6388 = vmatprep.subr.bf16.mxu0 0
    %6389 = vmatpush1.bf16.msra.mxu0 %v6103
    %6390 = vmatprep.subr.bf16.mxu0 0
    %6391 = vmatpush1.bf16.msra.mxu0 %v6104
    %6392 = vmatprep.subr.bf16.mxu0 0
    %6393 = vmatpush1.bf16.msra.mxu0 %v6105
    %6394 = vmatprep.subr.bf16.mxu0 0
    %6395 = vmatpush1.bf16.msra.mxu0 %v6106
    %6396 = vmatprep.subr.bf16.mxu0 0
    %6397 = vmatpush1.bf16.msra.mxu0 %v6107
    %6398 = vmatprep.subr.bf16.mxu0 0
    %6399 = vmatpush1.bf16.msra.mxu0 %v6108
    %6400 = vmatprep.subr.bf16.mxu0 0
    %6401 = vmatpush1.bf16.msra.mxu0 %v6109
    %6402 = vmatprep.subr.bf16.mxu0 0
    %6403 = vmatpush1.bf16.msra.mxu0 %v6110
    %6404 = vmatprep.subr.bf16.mxu0 0
    %6405 = vmatpush1.bf16.msra.mxu0 %v6111
    %6406 = vmatprep.subr.bf16.mxu0 0
    %6407 = vmatpush1.bf16.msra.mxu0 %v6112
    %6408 = vmatprep.subr.bf16.mxu0 0
    %6409 = vmatpush1.bf16.msra.mxu0 %v6113
    %6410 = vmatprep.subr.bf16.mxu0 0
    %6411 = vmatpush1.bf16.msra.mxu0 %v6114
    %6412 = vmatprep.mubr.bf16.mxu0 %v5552
    %6413 = vmatmul.mubr.bf16.gmra.mrb[0].mxu0 %v5551
    %v6414 = vpop.f32.mrb[0].mxu0
    %v6415 = vadd.f32 %v6374, %v6414
    %v6416 = vpop.f32.mrb[0].mxu0
    %v6417 = vpop.f32.mrb[0].mxu0
    %v6418 = vadd.f32 %v6377, %v6417
    %v6419 = vpop.f32.mrb[0].mxu0
    %6420 = vdwg.mxu0
    %6421 = vmatprep.subr.bf16.mxu0 0
    %6422 = vmatpush1.bf16.msra.mxu0 %v6115
    %6423 = vmatprep.subr.bf16.mxu0 0
    %6424 = vmatpush1.bf16.msra.mxu0 %v6116
    %6425 = vmatprep.subr.bf16.mxu0 0
    %6426 = vmatpush1.bf16.msra.mxu0 %v6117
    %6427 = vmatprep.subr.bf16.mxu0 0
    %6428 = vmatpush1.bf16.msra.mxu0 %v6118
    %6429 = vmatprep.subr.bf16.mxu0 0
    %6430 = vmatpush1.bf16.msra.mxu0 %v6119
    %6431 = vmatprep.subr.bf16.mxu0 0
    %6432 = vmatpush1.bf16.msra.mxu0 %v6120
    %6433 = vmatprep.subr.bf16.mxu0 0
    %6434 = vmatpush1.bf16.msra.mxu0 %v6121
    %6435 = vmatprep.subr.bf16.mxu0 0
    %6436 = vmatpush1.bf16.msra.mxu0 %v6122
    %6437 = vmatprep.subr.bf16.mxu0 0
    %6438 = vmatpush1.bf16.msra.mxu0 %v6123
    %6439 = vmatprep.subr.bf16.mxu0 0
    %6440 = vmatpush1.bf16.msra.mxu0 %v6124
    %6441 = vmatprep.subr.bf16.mxu0 0
    %6442 = vmatpush1.bf16.msra.mxu0 %v6125
    %6443 = vmatprep.subr.bf16.mxu0 0
    %6444 = vmatpush1.bf16.msra.mxu0 %v6126
    %6445 = vmatprep.subr.bf16.mxu0 0
    %6446 = vmatpush1.bf16.msra.mxu0 %v6127
    %6447 = vmatprep.subr.bf16.mxu0 0
    %6448 = vmatpush1.bf16.msra.mxu0 %v6128
    %6449 = vmatprep.subr.bf16.mxu0 0
    %6450 = vmatpush1.bf16.msra.mxu0 %v6129
    %6451 = vmatprep.subr.bf16.mxu0 0
    %6452 = vmatpush1.bf16.msra.mxu0 %v6130
    %6453 = vmatprep.mubr.bf16.mxu0 %v5554
    %6454 = vmatmul.mubr.bf16.gmra.mrb[0].mxu0 %v5553
    %v6455 = vpop.f32.mrb[0].mxu0
    %v6456 = vadd.f32 %v6415, %v6455
    %v6457 = vpop.f32.mrb[0].mxu0
    %v6458 = vpop.f32.mrb[0].mxu0
    %v6459 = vadd.f32 %v6418, %v6458
    %v6460 = vpop.f32.mrb[0].mxu0
    %6461 = vdwg.mxu0
    %6462 = vmatprep.subr.bf16.mxu0 0
    %6463 = vmatpush1.bf16.msra.mxu0 %v6131
    %6464 = vmatprep.subr.bf16.mxu0 0
    %6465 = vmatpush1.bf16.msra.mxu0 %v6132
    %6466 = vmatprep.subr.bf16.mxu0 0
    %6467 = vmatpush1.bf16.msra.mxu0 %v6133
    %6468 = vmatprep.subr.bf16.mxu0 0
    %6469 = vmatpush1.bf16.msra.mxu0 %v6134
    %6470 = vmatprep.subr.bf16.mxu0 0
    %6471 = vmatpush1.bf16.msra.mxu0 %v6135
    %6472 = vmatprep.subr.bf16.mxu0 0
    %6473 = vmatpush1.bf16.msra.mxu0 %v6136
    %6474 = vmatprep.subr.bf16.mxu0 0
    %6475 = vmatpush1.bf16.msra.mxu0 %v6137
    %6476 = vmatprep.subr.bf16.mxu0 0
    %6477 = vmatpush1.bf16.msra.mxu0 %v6138
    %6478 = vmatprep.subr.bf16.mxu0 0
    %6479 = vmatpush1.bf16.msra.mxu0 %v6139
    %6480 = vmatprep.subr.bf16.mxu0 0
    %6481 = vmatpush1.bf16.msra.mxu0 %v6140
    %6482 = vmatprep.subr.bf16.mxu0 0
    %6483 = vmatpush1.bf16.msra.mxu0 %v6141
    %6484 = vmatprep.subr.bf16.mxu0 0
    %6485 = vmatpush1.bf16.msra.mxu0 %v6142
    %6486 = vmatprep.subr.bf16.mxu0 0
    %6487 = vmatpush1.bf16.msra.mxu0 %v6143
    %6488 = vmatprep.subr.bf16.mxu0 0
    %6489 = vmatpush1.bf16.msra.mxu0 %v6144
    %6490 = vmatprep.subr.bf16.mxu0 0
    %6491 = vmatpush1.bf16.msra.mxu0 %v6145
    %6492 = vmatprep.subr.bf16.mxu0 0
    %6493 = vmatpush1.bf16.msra.mxu0 %v6146
    %6494 = vmatprep.mubr.bf16.mxu0 %v5556
    %6495 = vmatmul.mubr.bf16.gmra.mrb[0].mxu0 %v5555
    %v6496 = vpop.f32.mrb[0].mxu0
    %v6497 = vadd.f32 %v6456, %v6496
    %v6498 = vpop.f32.mrb[0].mxu0
    %v6499 = vpop.f32.mrb[0].mxu0
    %v6500 = vadd.f32 %v6459, %v6499
    %v6501 = vpop.f32.mrb[0].mxu0
    %6502 = vdwg.mxu0
    %6503 = vmatprep.subr.bf16.mxu0 0
    %6504 = vmatpush1.bf16.msra.mxu0 %v6147
    %6505 = vmatprep.subr.bf16.mxu0 0
    %6506 = vmatpush1.bf16.msra.mxu0 %v6148
    %6507 = vmatprep.subr.bf16.mxu0 0
    %6508 = vmatpush1.bf16.msra.mxu0 %v6149
    %6509 = vmatprep.subr.bf16.mxu0 0
    %6510 = vmatpush1.bf16.msra.mxu0 %v6150
    %6511 = vmatprep.subr.bf16.mxu0 0
    %6512 = vmatpush1.bf16.msra.mxu0 %v6151
    %6513 = vmatprep.subr.bf16.mxu0 0
    %6514 = vmatpush1.bf16.msra.mxu0 %v6152
    %6515 = vmatprep.subr.bf16.mxu0 0
    %6516 = vmatpush1.bf16.msra.mxu0 %v6153
    %6517 = vmatprep.subr.bf16.mxu0 0
    %6518 = vmatpush1.bf16.msra.mxu0 %v6154
    %6519 = vmatprep.subr.bf16.mxu0 0
    %6520 = vmatpush1.bf16.msra.mxu0 %v6155
    %6521 = vmatprep.subr.bf16.mxu0 0
    %6522 = vmatpush1.bf16.msra.mxu0 %v6156
    %6523 = vmatprep.subr.bf16.mxu0 0
    %6524 = vmatpush1.bf16.msra.mxu0 %v6157
    %6525 = vmatprep.subr.bf16.mxu0 0
    %6526 = vmatpush1.bf16.msra.mxu0 %v6158
    %6527 = vmatprep.subr.bf16.mxu0 0
    %6528 = vmatpush1.bf16.msra.mxu0 %v6159
    %6529 = vmatprep.subr.bf16.mxu0 0
    %6530 = vmatpush1.bf16.msra.mxu0 %v6160
    %6531 = vmatprep.subr.bf16.mxu0 0
    %6532 = vmatpush1.bf16.msra.mxu0 %v6161
    %6533 = vmatprep.subr.bf16.mxu0 0
    %6534 = vmatpush1.bf16.msra.mxu0 %v6162
    %6535 = vmatprep.mubr.bf16.mxu0 %v5558
    %6536 = vmatmul.mubr.bf16.gmra.mrb[0].mxu0 %v5557
    %v6537 = vpop.f32.mrb[0].mxu0
    %v6538 = vadd.f32 %v6497, %v6537
    %v6539 = vpop.f32.mrb[0].mxu0
    %v6540 = vpop.f32.mrb[0].mxu0
    %v6541 = vadd.f32 %v6500, %v6540
    %v6542 = vpop.f32.mrb[0].mxu0
    %6543 = vdwg.mxu0
    %6544 = vmatprep.subr.bf16.mxu0 0
    %6545 = vmatpush1.bf16.msra.mxu0 %v6163
    %6546 = vmatprep.subr.bf16.mxu0 0
    %6547 = vmatpush1.bf16.msra.mxu0 %v6164
    %6548 = vmatprep.subr.bf16.mxu0 0
    %6549 = vmatpush1.bf16.msra.mxu0 %v6165
    %6550 = vmatprep.subr.bf16.mxu0 0
    %6551 = vmatpush1.bf16.msra.mxu0 %v6166
    %6552 = vmatprep.subr.bf16.mxu0 0
    %6553 = vmatpush1.bf16.msra.mxu0 %v6167
    %6554 = vmatprep.subr.bf16.mxu0 0
    %6555 = vmatpush1.bf16.msra.mxu0 %v6168
    %6556 = vmatprep.subr.bf16.mxu0 0
    %6557 = vmatpush1.bf16.msra.mxu0 %v6169
    %6558 = vmatprep.subr.bf16.mxu0 0
    %6559 = vmatpush1.bf16.msra.mxu0 %v6170
    %6560 = vmatprep.subr.bf16.mxu0 0
    %6561 = vmatpush1.bf16.msra.mxu0 %v6171
    %6562 = vmatprep.subr.bf16.mxu0 0
    %6563 = vmatpush1.bf16.msra.mxu0 %v6172
    %6564 = vmatprep.subr.bf16.mxu0 0
    %6565 = vmatpush1.bf16.msra.mxu0 %v6173
    %6566 = vmatprep.subr.bf16.mxu0 0
    %6567 = vmatpush1.bf16.msra.mxu0 %v6174
    %6568 = vmatprep.subr.bf16.mxu0 0
    %6569 = vmatpush1.bf16.msra.mxu0 %v6175
    %6570 = vmatprep.subr.bf16.mxu0 0
    %6571 = vmatpush1.bf16.msra.mxu0 %v6176
    %6572 = vmatprep.subr.bf16.mxu0 0
    %6573 = vmatpush1.bf16.msra.mxu0 %v6177
    %6574 = vmatprep.subr.bf16.mxu0 0
    %6575 = vmatpush1.bf16.msra.mxu0 %v6178
    %6576 = vmatprep.mubr.bf16.mxu0 %v5560
    %6577 = vmatmul.mubr.bf16.gmra.mrb[0].mxu0 %v5559
    %v6578 = vpop.f32.mrb[0].mxu0
    %v6579 = vadd.f32 %v6538, %v6578
    %v6580 = vpop.f32.mrb[0].mxu0
    %v6581 = vpop.f32.mrb[0].mxu0
    %v6582 = vadd.f32 %v6541, %v6581
    %v6583 = vpop.f32.mrb[0].mxu0
    %6584 = vdwg.mxu0
    %6585 = vmatprep.subr.bf16.mxu0 0
    %6586 = vmatpush1.bf16.msra.mxu0 %v6179
    %6587 = vmatprep.subr.bf16.mxu0 0
    %6588 = vmatpush1.bf16.msra.mxu0 %v6180
    %6589 = vmatprep.subr.bf16.mxu0 0
    %6590 = vmatpush1.bf16.msra.mxu0 %v6181
    %6591 = vmatprep.subr.bf16.mxu0 0
    %6592 = vmatpush1.bf16.msra.mxu0 %v6182
    %6593 = vmatprep.subr.bf16.mxu0 0
    %6594 = vmatpush1.bf16.msra.mxu0 %v6183
    %6595 = vmatprep.subr.bf16.mxu0 0
    %6596 = vmatpush1.bf16.msra.mxu0 %v6184
    %6597 = vmatprep.subr.bf16.mxu0 0
    %6598 = vmatpush1.bf16.msra.mxu0 %v6185
    %6599 = vmatprep.subr.bf16.mxu0 0
    %6600 = vmatpush1.bf16.msra.mxu0 %v6186
    %6601 = vmatprep.subr.bf16.mxu0 0
    %6602 = vmatpush1.bf16.msra.mxu0 %v6187
    %6603 = vmatprep.subr.bf16.mxu0 0
    %6604 = vmatpush1.bf16.msra.mxu0 %v6188
    %6605 = vmatprep.subr.bf16.mxu0 0
    %6606 = vmatpush1.bf16.msra.mxu0 %v6189
    %6607 = vmatprep.subr.bf16.mxu0 0
    %6608 = vmatpush1.bf16.msra.mxu0 %v6190
    %6609 = vmatprep.subr.bf16.mxu0 0
    %6610 = vmatpush1.bf16.msra.mxu0 %v6191
    %6611 = vmatprep.subr.bf16.mxu0 0
    %6612 = vmatpush1.bf16.msra.mxu0 %v6192
    %6613 = vmatprep.subr.bf16.mxu0 0
    %6614 = vmatpush1.bf16.msra.mxu0 %v6193
    %6615 = vmatprep.subr.bf16.mxu0 0
    %6616 = vmatpush1.bf16.msra.mxu0 %v6194
    %6617 = vmatprep.mubr.bf16.mxu0 %v5562
    %6618 = vmatmul.mubr.bf16.gmra.mrb[0].mxu0 %v5561
    %v6619 = vpop.f32.mrb[0].mxu0
    %v6620 = vadd.f32 %v6579, %v6619
    %v6621 = vpop.f32.mrb[0].mxu0
    %v6622 = vpop.f32.mrb[0].mxu0
    %v6623 = vadd.f32 %v6582, %v6622
    %v6624 = vpop.f32.mrb[0].mxu0
    %6625 = vdwg.mxu0
    %6626 = vmatprep.subr.bf16.mxu0 0
    %6627 = vmatpush1.bf16.msra.mxu0 %v6195
    %6628 = vmatprep.subr.bf16.mxu0 0
    %6629 = vmatpush1.bf16.msra.mxu0 %v6196
    %6630 = vmatprep.subr.bf16.mxu0 0
    %6631 = vmatpush1.bf16.msra.mxu0 %v6197
    %6632 = vmatprep.subr.bf16.mxu0 0
    %6633 = vmatpush1.bf16.msra.mxu0 %v6198
    %6634 = vmatprep.subr.bf16.mxu0 0
    %6635 = vmatpush1.bf16.msra.mxu0 %v6199
    %6636 = vmatprep.subr.bf16.mxu0 0
    %6637 = vmatpush1.bf16.msra.mxu0 %v6200
    %6638 = vmatprep.subr.bf16.mxu0 0
    %6639 = vmatpush1.bf16.msra.mxu0 %v6201
    %6640 = vmatprep.subr.bf16.mxu0 0
    %6641 = vmatpush1.bf16.msra.mxu0 %v6202
    %6642 = vmatprep.subr.bf16.mxu0 0
    %6643 = vmatpush1.bf16.msra.mxu0 %v6203
    %6644 = vmatprep.subr.bf16.mxu0 0
    %6645 = vmatpush1.bf16.msra.mxu0 %v6204
    %6646 = vmatprep.subr.bf16.mxu0 0
    %6647 = vmatpush1.bf16.msra.mxu0 %v6205
    %6648 = vmatprep.subr.bf16.mxu0 0
    %6649 = vmatpush1.bf16.msra.mxu0 %v6206
    %6650 = vmatprep.subr.bf16.mxu0 0
    %6651 = vmatpush1.bf16.msra.mxu0 %v6207
    %6652 = vmatprep.subr.bf16.mxu0 0
    %6653 = vmatpush1.bf16.msra.mxu0 %v6208
    %6654 = vmatprep.subr.bf16.mxu0 0
    %6655 = vmatpush1.bf16.msra.mxu0 %v6209
    %6656 = vmatprep.subr.bf16.mxu0 0
    %6657 = vmatpush1.bf16.msra.mxu0 %v6210
    %6658 = vmatprep.mubr.bf16.mxu0 %v5564
    %6659 = vmatmul.mubr.bf16.gmra.mrb[0].mxu0 %v5563
    %v6660 = vpop.f32.mrb[0].mxu0
    %v6661 = vadd.f32 %v6620, %v6660
    %v6662 = vpop.f32.mrb[0].mxu0
    %v6663 = vpop.f32.mrb[0].mxu0
    %v6664 = vadd.f32 %v6623, %v6663
    %v6665 = vpop.f32.mrb[0].mxu0
    %6666 = vdwg.mxu0
    %v6667 = vadd.f32 %v4634, %v6661
    %v6668 = vadd.f32 %v4635, %v6664
    %v6669 = vld [vmem:[%s63] sm:$0x1]
    %v6670 = vld [vmem:[%s65] sm:$0x1]
    %v6671 = vsel %vm179, %v6667, 0.0
    %6672 = vadd.xlane.f32.xlu0 %v6671
    %v6673 = vpop.xlane.xlu0 %6672
    %v6674 = vsel %vm179, %v6668, 0.0
    %6675 = vadd.xlane.f32.xlu0 %v6674
    %v6676 = vpop.xlane.xlu0 %6675
    %v6677 = vmul.f32 %v6673, %v1322
    %v6678 = vmul.f32 %v6676, %v1322
    %v6679 = vsub.f32 %v6667, %v6677
    %v6680 = vsub.f32 %v6668, %v6678
    %v6681 = vmul.f32 %v6679, %v6679
    %v6682 = vmul.f32 %v6680, %v6680
    %v6683 = vsel %vm179, %v6681, 0.0
    %6684 = vadd.xlane.f32.xlu0 %v6683
    %v6685 = vpop.xlane.xlu0 %6684
    %v6686 = vsel %vm179, %v6682, 0.0
    %6687 = vadd.xlane.f32.xlu0 %v6686
    %v6688 = vpop.xlane.xlu0 %6687
    %v6689 = vmul.f32 %v6685, %v1322
    %v6690 = vmul.f32 %v6688, %v1322
    %v6691 = vadd.f32 %v6689, 1e-05
    %v6692 = vadd.f32 %v6690, 1e-05
    %v6693 = vrsqrt.pop %v6691
    %v6694 = vrsqrt.pop %v6692
    %v6695 = vmul.f32 %v6679, %v6693
    %v6696 = vmul.f32 %v6680, %v6694
    %v6698 = vlaneseq
    %v6699 = vshrl.u32 %v6698, 7
    %v6700 = vsub.s32 0, %v6699
    %v6701 = vrot.slane %v6669, %v6700
    %v6703 = vmul.f32 %v6695, %v6701
    %v6704 = vmul.f32 %v6696, %v6701
    %v6706 = vlaneseq
    %v6707 = vshrl.u32 %v6706, 7
    %v6708 = vsub.s32 0, %v6707
    %v6709 = vrot.slane %v6670, %v6708
    %v6711 = vadd.f32 %v6703, %v6709
    %v6712 = vadd.f32 %v6704, %v6709
    %6713 = vst.msk [vmem:[%s71] sm:$0xff] %vm179, %v6711
    %6714 = vst.msk [vmem:[%s71 + $0x8] sm:$0xff] %vm179, %v6712
    %v6715 = vsel %vm179, %v6711, -inf
    %v6716 = vrot.slane %v6715, 4
    %v6717 = vmax.f32 %v6715, %v6716
    %v6718 = vrot.slane %v6717, 2
    %v6719 = vmax.f32 %v6717, %v6718
    %v6720 = vrot.slane %v6719, 1
    %v6721 = vmax.f32 %v6719, %v6720
    %v6722 = vsel %vm179, %v6712, -inf
    %v6723 = vrot.slane %v6722, 4
    %v6724 = vmax.f32 %v6722, %v6723
    %v6725 = vrot.slane %v6724, 2
    %v6726 = vmax.f32 %v6724, %v6725
    %v6727 = vrot.slane %v6726, 1
    %v6728 = vmax.f32 %v6726, %v6727
    %vm6731 = vcmask 1041409
    %v6732 = vsel %vm6731, %v6728, %v6721
    %vm6734 = vcmask 254976
    %6735 = vst.msk [vmem:[#allocation2] sm:$0x3] %vm6734, %v6732
    %v6736 = vld [vmem:[%s67] sm:$0xf]
    %v6737 = vld [vmem:[%s67 + $0x4] sm:$0xf]
    %v6738 = vld [vmem:[%s67 + $0x8] sm:$0xf]
    %v6739 = vld [vmem:[%s67 + $0xc] sm:$0xf]
    %v6740 = vld [vmem:[%s69] sm:$0x1]
    %v6741 = vpack.c.bf16 %v6721, %v6721
    %v6742 = vpack.c.bf16 %v6728, %v6728
    %v6744 = vlaneseq
    %v6745 = vshrl.u32 %v6744, 7
    %v6746 = vsub.s32 0, %v6745
    %v6747 = vrot.slane %v6740, %v6746
    %v6751 = vunpack.c.l.b16 %v6741
    %v6752 = vunpack.c.l.b16 %v6742
    %v6753 = vsel %vm6731, %v6752, %v6751
    %v6754 = vpack.c.b16 %v6753, %v6753
    %v6759 = vunpack.c.l.b16 %v6736
    %v6760 = vunpack.c.l.b16 %v6737
    %v6761 = vunpack.c.l.b16 %v6738
    %v6762 = vunpack.c.l.b16 %v6739
    %v6763 = vpack.c.b16 %v6760, %v6759
    %v6764 = vpack.c.b16 %v6762, %v6761
    %v6768 = vsel %vm179, %v6754, 0
    %6770 = vmatprep.subr.bf16.mxu0 0
    %6771 = vmatpush1.bf16.msra.mxu0 %v6763
    %6772 = vmatprep.subr.bf16.mxu0 0
    %6773 = vmatpush1.bf16.msra.mxu0 %v6764
    %6774 = vmatprep.subr.bf16.mxu0 0
    %6775 = vmatpush1.bf16.msra.mxu0 0
    %6776 = vmatprep.subr.bf16.mxu0 0
    %6777 = vmatpush1.bf16.msra.mxu0 0
    %6778 = vmatprep.subr.bf16.mxu0 0
    %6779 = vmatpush1.bf16.msra.mxu0 0
    %6780 = vmatprep.subr.bf16.mxu0 0
    %6781 = vmatpush1.bf16.msra.mxu0 0
    %6782 = vmatprep.subr.bf16.mxu0 0
    %6783 = vmatpush1.bf16.msra.mxu0 0
    %6784 = vmatprep.subr.bf16.mxu0 0
    %6785 = vmatpush1.bf16.msra.mxu0 0
    %6786 = vmatprep.subr.bf16.mxu0 0
    %6787 = vmatpush1.bf16.msra.mxu0 0
    %6788 = vmatprep.subr.bf16.mxu0 0
    %6789 = vmatpush1.bf16.msra.mxu0 0
    %6790 = vmatprep.subr.bf16.mxu0 0
    %6791 = vmatpush1.bf16.msra.mxu0 0
    %6792 = vmatprep.subr.bf16.mxu0 0
    %6793 = vmatpush1.bf16.msra.mxu0 0
    %6794 = vmatprep.subr.bf16.mxu0 0
    %6795 = vmatpush1.bf16.msra.mxu0 0
    %6796 = vmatprep.subr.bf16.mxu0 0
    %6797 = vmatpush1.bf16.msra.mxu0 0
    %6798 = vmatprep.subr.bf16.mxu0 0
    %6799 = vmatpush1.bf16.msra.mxu0 0
    %6800 = vmatprep.subr.bf16.mxu0 0
    %6801 = vmatpush1.bf16.msra.mxu0 0
    %6802 = vmatprep.mubr.bf16.mxu0 0
    %6803 = vmatmul.mubr.bf16.gmra.mrb[0].mxu0 %v6768
    %v6804 = vpop.f32.mrb[0].mxu0
    %v6805 = vadd.f32 %v6747, %v6804
    %v6806 = vpop.f32.mrb[0].mxu0
    %v6807 = vpop.f32.mrb[0].mxu0
    %v6808 = vpop.f32.mrb[0].mxu0
    %6809 = vdwg.mxu0
    %6810 = vst [vmem:[%s75] sm:$0x3] %v6805
    // Predicated region
    $region142: #{forward.2} parent=1 // pred_check
      _
    $region143: #{forward.2} parent=1 // pred_check_branch
      %6812 = sbr.rel (0) target = $region145
    $region144: #{forward.2} parent=1 // pred_region
      _
    $region145: #{forward.2} parent=1 // pred_fallthru
      _
    // Predicated region
    $region146: #{forward.2} parent=1 // pred_check
      _
    $region147: #{forward.2} parent=1 // pred_check_branch
      %6814 = sbr.rel (0) target = $region149
    $region148: #{forward.2} parent=1 // pred_region
      %s6816 = ssub.s32 32, 32
      %6817 = vsyncadd [#allocation3], %s6816
      %s6819 = sshll.u32 [#allocation2], 4
      %s6820 = int_to_ptr.vmem [resolvable:$true] %s6819
      %6822 = dma.vmem_to_hbm [thread:$0]  %s6820, 32, %s73, [#allocation3]
    $region149: #{forward.2} parent=1 // pred_fallthru
      _
    // Predicated region
    $region150: #{forward.2} parent=1 // pred_check
      _
    $region151: #{forward.2} parent=1 // pred_check_branch
      %6824 = sbr.rel (0) target = $region153
    $region152: #{forward.2} parent=1 // pred_region
      _
    $region153: #{forward.2} parent=1 // pred_fallthru
      _
    // Predicated region
    $region154: #{forward.2} parent=1 // pred_check
      _
    $region155: #{forward.2} parent=1 // pred_check_branch
      %6826 = sbr.rel (0) target = $region157
    $region156: #{forward.2} parent=1 // pred_region
      _
    $region157: #{forward.2} parent=1 // pred_fallthru
      _
    // Predicated region
    $region158: #{forward.2} parent=1 // pred_check
      _
    $region159: #{forward.2} parent=1 // pred_check_branch
      %6828 = sbr.rel (0) target = $region161
    $region160: #{forward.2} parent=1 // pred_region
      %6829 = dma.done [#allocation3], 32
    $region161: #{forward.2} parent=1 // pred_fallthru
      _
    // Predicated region
    $region162: #{forward.2} parent=1 // pred_check
      _
    $region163: #{forward.2} parent=1 // pred_check_branch
      %6831 = sbr.rel (0) target = $region165
    $region164: #{forward.2} parent=1 // pred_region
      _
    $region165: #{forward.2} parent=1 // pred_fallthru
      _
    %6832 = vsyncpa [#allocation3], 1

</llo_original>
